<compile_context>
chip_gen: v6e
topology: v6e:2x2x1
jax: 0.10.0
libtpu: 0.0.40
codegen_flags: <defaults>
</compile_context>

<pallas_src>
import jax
import jax.numpy as jnp
from jax import lax
from jax.experimental import pallas as pl
from jax.experimental.pallas import tpu as pltpu


TB = 8            # batch tile (sublane aligned)
C1P = 128         # conv1 out-channels, padded (6 real)
C2P = 128         # conv2 out-channels, padded (12 real)
K1 = 25           # conv1 im2col depth (1 in-ch * 5 * 5)
K2P = 25 * C1P    # conv2 im2col depth, channel-padded (real taps: 25 * 6)


# ------------------------------ fused kernel --------------------------------

def _gate_cnn_kernel(p1_ref, w1_ref, b1_ref, w2_ref, b2_ref,
                     fw1_ref, fb1_ref, fw2_ref, fb2_ref, fw3_ref, fb3_ref,
                     o_ref):
    f32, bf16 = jnp.float32, jnp.bfloat16

    # ---- conv1 (+ReLU +2x2 maxpool): ONE matmul over all 16 pooled slabs ----
    # p1 slab s = 4*e + f holds conv1 output positions (oh, ow) = (4r+e, 4c+f);
    # rows inside a slab are ordered (r*6 + c, n).
    p1 = p1_ref[...]                                        # (16, 36, TB, 25)
    l1 = p1.reshape(16 * 36 * TB, K1).astype(bf16)
    y1 = jnp.dot(l1, w1_ref[...], preferred_element_type=f32)   # (4608, C1P)
    y1 = y1.reshape(16, 36, TB, C1P)

    # pooled position (2r+p, 2c+q) = max over slabs e = 2p+di, f = 2q+dj.
    # bias/ReLU commute with max -> applied once after the max.
    b1 = b1_ref[...]
    h1 = []                                     # h1[p][q]: (6, 6, TB, C1P) f32
    for p in range(2):
        row = []
        for q in range(2):
            s00 = y1[4 * (2 * p + 0) + (2 * q + 0)]
            s01 = y1[4 * (2 * p + 0) + (2 * q + 1)]
            s10 = y1[4 * (2 * p + 1) + (2 * q + 0)]
            s11 = y1[4 * (2 * p + 1) + (2 * q + 1)]
            m = jnp.maximum(jnp.maximum(s00, s01), jnp.maximum(s10, s11))
            m = jnp.maximum(m + b1, 0.0)                     # (36, TB, C1P)
            row.append(m.reshape(6, 6, TB, C1P))
        h1.append(row)

    # ---- conv2 (+ReLU +2x2 maxpool): in-kernel im2col + ONE matmul ----------
    # Channels stay 128-padded so every lane concat is tile aligned; the
    # padded weight rows are zero, so the extra lanes contribute nothing.
    slab_rows = []
    for d2i in range(2):
        for d2j in range(2):
            taps = []
            for ki in range(5):
                for kj in range(5):
                    a, b = d2i + ki, d2j + kj
                    piece = h1[a % 2][b % 2][a // 2:a // 2 + 4,
                                             b // 2:b // 2 + 4]   # (4,4,TB,C1P)
                    taps.append(piece.reshape(16 * TB, C1P))
            slab_rows.append(
                jnp.concatenate(taps, axis=-1).astype(bf16))      # (128, K2P)
    l2 = jnp.concatenate(slab_rows, axis=0)                       # (512, K2P)
    y2 = jnp.dot(l2, w2_ref[...], preferred_element_type=f32)     # (512, C2P)

    n2 = 16 * TB                                                  # rows / slab
    m2 = jnp.maximum(jnp.maximum(y2[0 * n2:1 * n2], y2[1 * n2:2 * n2]),
                     jnp.maximum(y2[2 * n2:3 * n2], y2[3 * n2:4 * n2]))
    h2 = jnp.maximum(m2 + b2_ref[...], 0.0)                       # (128, C2P)

    # ---- flatten + MLP head (fc1 -> relu -> fc2 -> relu -> fc3 -> sigmoid) --
    # features ordered (pool position, channel); channel dim kept 128-padded so
    # the concat is lane aligned and fc1's padded weight absorbs the zero lanes.
    feat = jnp.concatenate([h2[i * TB:(i + 1) * TB] for i in range(16)],
                           axis=-1)                               # (TB, 2048)
    a1 = jnp.dot(feat, fw1_ref[...], preferred_element_type=f32) + fb1_ref[...]
    a1 = jnp.maximum(a1, 0.0)
    # TODO(synk): Dropout2d on conv2 / Dropout after fc1 are eval-mode
    # identities here; training would use pltpu.prng_seed / prng_random_bits.
    a2 = jnp.dot(a1, fw2_ref[...], preferred_element_type=f32) + fb2_ref[...]
    a2 = jnp.maximum(a2, 0.0)
    z = jnp.dot(a2, fw3_ref[...], preferred_element_type=f32) + fb3_ref[...]
    o_ref[...] = pl.reciprocal(1.0 + jnp.exp(-z), approx=True)    # sigmoid


# ------------------------------ host wrapper ---------------------------------

def _pack_params(p):
    """Zero-pad all weights/biases to 128-lane-dense layouts."""
    f32, bf16 = jnp.float32, jnp.bfloat16
    w1p = jnp.zeros((K1, C1P), f32).at[:, :6].set(p["w1"]).astype(bf16)
    b1p = jnp.zeros((1, C1P), f32).at[0, :6].set(p["b1"])
    w2p = (jnp.zeros((25, C1P, C2P), f32)
           .at[:, :6, :12].set(p["w2"].reshape(25, 6, 12))
           .reshape(K2P, C2P).astype(bf16))
    b2p = jnp.zeros((1, C2P), f32).at[0, :12].set(p["b2"])
    fw1 = (jnp.zeros((16, C2P, 128), f32)
           .at[:, :12, :84].set(p["fc1_w"].reshape(16, 12, 84))
           .reshape(16 * C2P, 128))
    fb1 = jnp.zeros((1, 128), f32).at[0, :84].set(p["fc1_b"])
    fw2 = jnp.zeros((128, 128), f32).at[:84, :42].set(p["fc2_w"])
    fb2 = jnp.zeros((1, 128), f32).at[0, :42].set(p["fc2_b"])
    fw3 = jnp.zeros((128, 128), f32).at[:42, :1].set(p["fc3_w"])
    fb3 = jnp.zeros((1, 128), f32).at[0, :1].set(p["fc3_b"])
    return w1p, b1p, w2p, b2p, fw1, fb1, fw2, fb2, fw3, fb3


def gate_cnn_fashion_forward(x, params):
    """x: (N, 1, 28, 28) float32 -> (N, 1) float32."""
    N = x.shape[0]
    Np = ((N + TB - 1) // TB) * TB
    xs = x.reshape(N, 28, 28).astype(jnp.float32)
    if Np != N:
        xs = jnp.concatenate(
            [xs, jnp.zeros((Np - N, 28, 28), jnp.float32)], axis=0)

    # Pooled-slab im2col for conv1 (pure data movement, no arithmetic):
    # P1[s=4e+f, r*6+c, n, 5ki+kj] = x[n, 4r+e+ki, 4c+f+kj]
    cols = jnp.stack([xs[:, ki:ki + 24, kj:kj + 24]
                      for ki in range(5) for kj in range(5)],
                     axis=-1)                                 # (Np, 24, 24, 25)
    p1 = jnp.stack([cols[:, e::4, f::4, :]
                    for e in range(4) for f in range(4)],
                   axis=0)                                    # (16, Np, 6, 6, 25)
    p1 = p1.reshape(16, Np, 36, 25).transpose(0, 2, 1, 3)     # (16, 36, Np, 25)

    packed = _pack_params(params)

    def wspec(shape):
        return pl.BlockSpec(shape, lambda i: (0, 0))          # resident weights

    out = pl.pallas_call(
        _gate_cnn_kernel,
        out_shape=jax.ShapeDtypeStruct((Np, 128), jnp.float32),
        grid=(Np // TB,),
        in_specs=[
            pl.BlockSpec((16, 36, TB, K1), lambda i: (0, 0, i, 0)),
            wspec((K1, C1P)), wspec((1, C1P)),
            wspec((K2P, C2P)), wspec((1, C2P)),
            wspec((16 * C2P, 128)), wspec((1, 128)),
            wspec((128, 128)), wspec((1, 128)),
            wspec((128, 128)), wspec((1, 128)),
        ],
        out_specs=pl.BlockSpec((TB, 128), lambda i: (i, 0)),
        compiler_params=pltpu.CompilerParams(
            dimension_semantics=("parallel",),
            vmem_limit_bytes=48 * 1024 * 1024),
    )(p1, *packed)
    return out[:N, :1]


# ------------------------- params & pure-JAX reference -----------------------

def init_params(key):
    ks = jax.random.split(key, 10)

    def n(k, shape, scale):
        return (scale * jax.random.normal(k, shape)).astype(jnp.float32)

    return dict(
        w1=n(ks[0], (25, 6), 0.2),          b1=n(ks[1], (6,), 0.1),
        w2=n(ks[2], (5, 5, 6, 12), 0.08),   b2=n(ks[3], (12,), 0.1),
        fc1_w=n(ks[4], (192, 84), 0.07),    fc1_b=n(ks[5], (84,), 0.1),
        fc2_w=n(ks[6], (84, 42), 0.1),      fc2_b=n(ks[7], (42,), 0.1),
        fc3_w=n(ks[8], (42, 1), 0.15),      fc3_b=n(ks[9], (1,), 0.1),
    )


def reference_forward(x, params):
    """Pure-JAX (f32) reference mirroring the PyTorch forward in eval mode."""
    N = x.shape[0]
    y = x.reshape(N, 28, 28, 1)                               # NHWC (Cin = 1)

    def conv(inp, wmat, b, shape):
        w = wmat.reshape(shape)                               # HWIO
        z = lax.conv_general_dilated(
            inp, w, (1, 1), "VALID",
            dimension_numbers=("NHWC", "HWIO", "NHWC"))
        return z + b

    def pool(inp):
        return lax.reduce_window(inp, -jnp.inf, lax.max,
                                 (1, 2, 2, 1), (1, 2, 2, 1), "VALID")

    y = pool(jnp.maximum(conv(y, params["w1"], params["b1"], (5, 5, 1, 6)), 0.0))
    y = pool(jnp.maximum(conv(y, params["w2"], params["b2"], (5, 5, 6, 12)), 0.0))
    f = y.reshape(N, 192)
    f = jnp.maximum(f @ params["fc1_w"] + params["fc1_b"], 0.0)
    f = jnp.maximum(f @ params["fc2_w"] + params["fc2_b"], 0.0)
    z = f @ params["fc3_w"] + params["fc3_b"]
    return jax.nn.sigmoid(z)


if __name__ == "__main__":
    key = jax.random.PRNGKey(0)
    k_x, k_p = jax.random.split(key)
    x = jax.random.normal(k_x, (2, 1, 28, 28), dtype=jnp.float32)
    params = init_params(k_p)

    out = jax.block_until_ready(jax.jit(gate_cnn_fashion_forward)(x, params))
    ref = jax.block_until_ready(reference_forward(x, params))

    assert out.shape == (2, 1), out.shape
    assert jnp.allclose(out, ref, atol=3e-2, rtol=3e-2), (out, ref)
    print("KERNEL_OK")
</pallas_src>

<mosaic_0001>
module attributes {stable_mosaic.version = 11 : i64} {
  func.func @_gate_cnn_kernel(%arg0: i32, %arg1: memref<16x36x8x25xf32, #tpu.memory_space<vmem>>, %arg2: memref<25x128xbf16, #tpu.memory_space<vmem>>, %arg3: memref<1x128xf32, #tpu.memory_space<vmem>>, %arg4: memref<3200x128xbf16, #tpu.memory_space<vmem>>, %arg5: memref<1x128xf32, #tpu.memory_space<vmem>>, %arg6: memref<2048x128xf32, #tpu.memory_space<vmem>>, %arg7: memref<1x128xf32, #tpu.memory_space<vmem>>, %arg8: memref<128x128xf32, #tpu.memory_space<vmem>>, %arg9: memref<1x128xf32, #tpu.memory_space<vmem>>, %arg10: memref<128x128xf32, #tpu.memory_space<vmem>>, %arg11: memref<1x128xf32, #tpu.memory_space<vmem>>, %arg12: memref<8x128xf32, #tpu.memory_space<vmem>>) attributes {dimension_semantics = [#tpu.dimension_semantics<parallel>], iteration_bounds = array<i64: 1>, scalar_prefetch = 0 : i64, scratch_operands = 0 : i64, tpu.core_type = #tpu.core_type<tc>, window_params = [{transform_indices = @transform_0, window_bounds = array<i64: 16, 36, 8, 25>}, {pipeline_mode = #tpu.pipeline_mode<synchronous>, transform_indices = @transform_1, window_bounds = array<i64: 25, 128>}, {pipeline_mode = #tpu.pipeline_mode<synchronous>, transform_indices = @transform_2, window_bounds = array<i64: 1, 128>}, {pipeline_mode = #tpu.pipeline_mode<synchronous>, transform_indices = @transform_3, window_bounds = array<i64: 3200, 128>}, {pipeline_mode = #tpu.pipeline_mode<synchronous>, transform_indices = @transform_4, window_bounds = array<i64: 1, 128>}, {pipeline_mode = #tpu.pipeline_mode<synchronous>, transform_indices = @transform_5, window_bounds = array<i64: 2048, 128>}, {pipeline_mode = #tpu.pipeline_mode<synchronous>, transform_indices = @transform_6, window_bounds = array<i64: 1, 128>}, {pipeline_mode = #tpu.pipeline_mode<synchronous>, transform_indices = @transform_7, window_bounds = array<i64: 128, 128>}, {pipeline_mode = #tpu.pipeline_mode<synchronous>, transform_indices = @transform_8, window_bounds = array<i64: 1, 128>}, {pipeline_mode = #tpu.pipeline_mode<synchronous>, transform_indices = @transform_9, window_bounds = array<i64: 128, 128>}, {pipeline_mode = #tpu.pipeline_mode<synchronous>, transform_indices = @transform_10, window_bounds = array<i64: 1, 128>}, {transform_indices = @transform_11, window_bounds = array<i64: 8, 128>}]} {
    %c0 = arith.constant 0 : index
    %c0_0 = arith.constant 0 : index
    %c0_1 = arith.constant 0 : index
    %c0_2 = arith.constant 0 : index
    %0 = vector.load %arg1[%c0, %c0_0, %c0_1, %c0_2] : memref<16x36x8x25xf32, #tpu.memory_space<vmem>>, vector<16x36x8x25xf32>
    %1 = vector.shape_cast %0 : vector<16x36x8x25xf32> to vector<4608x25xf32>
    %2 = arith.truncf %1 : vector<4608x25xf32> to vector<4608x25xbf16>
    %c0_3 = arith.constant 0 : index
    %c0_4 = arith.constant 0 : index
    %3 = vector.load %arg2[%c0_3, %c0_4] : memref<25x128xbf16, #tpu.memory_space<vmem>>, vector<25x128xbf16>
    %cst = arith.constant dense<0.000000e+00> : vector<4608x128xf32>
    %4 = tpu.matmul %2, %3, %cst {dimension_numbers = #tpu.dot_dimension_numbers<[1], [0], [0], [1], [0, 0, 1, 1], [], []>} : vector<4608x25xbf16>, vector<25x128xbf16>, vector<4608x128xf32> -> vector<4608x128xf32>
    %5 = vector.shape_cast %4 : vector<4608x128xf32> to vector<16x36x8x128xf32>
    %c0_5 = arith.constant 0 : index
    %c0_6 = arith.constant 0 : index
    %6 = vector.load %arg3[%c0_5, %c0_6] : memref<1x128xf32, #tpu.memory_space<vmem>>, vector<1x128xf32>
    %7 = vector.extract_strided_slice %5 {offsets = [0, 0, 0, 0], sizes = [1, 36, 8, 128], strides = [1, 1, 1, 1]} : vector<16x36x8x128xf32> to vector<1x36x8x128xf32>
    %8 = vector.shape_cast %7 : vector<1x36x8x128xf32> to vector<36x8x128xf32>
    %9 = vector.extract_strided_slice %5 {offsets = [1, 0, 0, 0], sizes = [1, 36, 8, 128], strides = [1, 1, 1, 1]} : vector<16x36x8x128xf32> to vector<1x36x8x128xf32>
    %10 = vector.shape_cast %9 : vector<1x36x8x128xf32> to vector<36x8x128xf32>
    %11 = vector.extract_strided_slice %5 {offsets = [4, 0, 0, 0], sizes = [1, 36, 8, 128], strides = [1, 1, 1, 1]} : vector<16x36x8x128xf32> to vector<1x36x8x128xf32>
    %12 = vector.shape_cast %11 : vector<1x36x8x128xf32> to vector<36x8x128xf32>
    %13 = vector.extract_strided_slice %5 {offsets = [5, 0, 0, 0], sizes = [1, 36, 8, 128], strides = [1, 1, 1, 1]} : vector<16x36x8x128xf32> to vector<1x36x8x128xf32>
    %14 = vector.shape_cast %13 : vector<1x36x8x128xf32> to vector<36x8x128xf32>
    %15 = arith.maximumf %8, %10 : vector<36x8x128xf32>
    %16 = arith.maximumf %12, %14 : vector<36x8x128xf32>
    %17 = arith.maximumf %15, %16 : vector<36x8x128xf32>
    %18 = vector.shape_cast %6 : vector<1x128xf32> to vector<1x1x128xf32>
    %19 = vector.broadcast %18 : vector<1x1x128xf32> to vector<36x8x128xf32>
    %20 = arith.addf %17, %19 : vector<36x8x128xf32>
    %cst_7 = arith.constant 0.000000e+00 : f32
    %21 = vector.broadcast %cst_7 : f32 to vector<36x8x128xf32>
    %22 = arith.maximumf %20, %21 : vector<36x8x128xf32>
    %23 = vector.shape_cast %22 : vector<36x8x128xf32> to vector<6x6x8x128xf32>
    %24 = vector.extract_strided_slice %5 {offsets = [2, 0, 0, 0], sizes = [1, 36, 8, 128], strides = [1, 1, 1, 1]} : vector<16x36x8x128xf32> to vector<1x36x8x128xf32>
    %25 = vector.shape_cast %24 : vector<1x36x8x128xf32> to vector<36x8x128xf32>
    %26 = vector.extract_strided_slice %5 {offsets = [3, 0, 0, 0], sizes = [1, 36, 8, 128], strides = [1, 1, 1, 1]} : vector<16x36x8x128xf32> to vector<1x36x8x128xf32>
    %27 = vector.shape_cast %26 : vector<1x36x8x128xf32> to vector<36x8x128xf32>
    %28 = vector.extract_strided_slice %5 {offsets = [6, 0, 0, 0], sizes = [1, 36, 8, 128], strides = [1, 1, 1, 1]} : vector<16x36x8x128xf32> to vector<1x36x8x128xf32>
    %29 = vector.shape_cast %28 : vector<1x36x8x128xf32> to vector<36x8x128xf32>
    %30 = vector.extract_strided_slice %5 {offsets = [7, 0, 0, 0], sizes = [1, 36, 8, 128], strides = [1, 1, 1, 1]} : vector<16x36x8x128xf32> to vector<1x36x8x128xf32>
    %31 = vector.shape_cast %30 : vector<1x36x8x128xf32> to vector<36x8x128xf32>
    %32 = arith.maximumf %25, %27 : vector<36x8x128xf32>
    %33 = arith.maximumf %29, %31 : vector<36x8x128xf32>
    %34 = arith.maximumf %32, %33 : vector<36x8x128xf32>
    %35 = vector.shape_cast %6 : vector<1x128xf32> to vector<1x1x128xf32>
    %36 = vector.broadcast %35 : vector<1x1x128xf32> to vector<36x8x128xf32>
    %37 = arith.addf %34, %36 : vector<36x8x128xf32>
    %cst_8 = arith.constant 0.000000e+00 : f32
    %38 = vector.broadcast %cst_8 : f32 to vector<36x8x128xf32>
    %39 = arith.maximumf %37, %38 : vector<36x8x128xf32>
    %40 = vector.shape_cast %39 : vector<36x8x128xf32> to vector<6x6x8x128xf32>
    %41 = vector.extract_strided_slice %5 {offsets = [8, 0, 0, 0], sizes = [1, 36, 8, 128], strides = [1, 1, 1, 1]} : vector<16x36x8x128xf32> to vector<1x36x8x128xf32>
    %42 = vector.shape_cast %41 : vector<1x36x8x128xf32> to vector<36x8x128xf32>
    %43 = vector.extract_strided_slice %5 {offsets = [9, 0, 0, 0], sizes = [1, 36, 8, 128], strides = [1, 1, 1, 1]} : vector<16x36x8x128xf32> to vector<1x36x8x128xf32>
    %44 = vector.shape_cast %43 : vector<1x36x8x128xf32> to vector<36x8x128xf32>
    %45 = vector.extract_strided_slice %5 {offsets = [12, 0, 0, 0], sizes = [1, 36, 8, 128], strides = [1, 1, 1, 1]} : vector<16x36x8x128xf32> to vector<1x36x8x128xf32>
    %46 = vector.shape_cast %45 : vector<1x36x8x128xf32> to vector<36x8x128xf32>
    %47 = vector.extract_strided_slice %5 {offsets = [13, 0, 0, 0], sizes = [1, 36, 8, 128], strides = [1, 1, 1, 1]} : vector<16x36x8x128xf32> to vector<1x36x8x128xf32>
    %48 = vector.shape_cast %47 : vector<1x36x8x128xf32> to vector<36x8x128xf32>
    %49 = arith.maximumf %42, %44 : vector<36x8x128xf32>
    %50 = arith.maximumf %46, %48 : vector<36x8x128xf32>
    %51 = arith.maximumf %49, %50 : vector<36x8x128xf32>
    %52 = vector.shape_cast %6 : vector<1x128xf32> to vector<1x1x128xf32>
    %53 = vector.broadcast %52 : vector<1x1x128xf32> to vector<36x8x128xf32>
    %54 = arith.addf %51, %53 : vector<36x8x128xf32>
    %cst_9 = arith.constant 0.000000e+00 : f32
    %55 = vector.broadcast %cst_9 : f32 to vector<36x8x128xf32>
    %56 = arith.maximumf %54, %55 : vector<36x8x128xf32>
    %57 = vector.shape_cast %56 : vector<36x8x128xf32> to vector<6x6x8x128xf32>
    %58 = vector.extract_strided_slice %5 {offsets = [10, 0, 0, 0], sizes = [1, 36, 8, 128], strides = [1, 1, 1, 1]} : vector<16x36x8x128xf32> to vector<1x36x8x128xf32>
    %59 = vector.shape_cast %58 : vector<1x36x8x128xf32> to vector<36x8x128xf32>
    %60 = vector.extract_strided_slice %5 {offsets = [11, 0, 0, 0], sizes = [1, 36, 8, 128], strides = [1, 1, 1, 1]} : vector<16x36x8x128xf32> to vector<1x36x8x128xf32>
    %61 = vector.shape_cast %60 : vector<1x36x8x128xf32> to vector<36x8x128xf32>
    %62 = vector.extract_strided_slice %5 {offsets = [14, 0, 0, 0], sizes = [1, 36, 8, 128], strides = [1, 1, 1, 1]} : vector<16x36x8x128xf32> to vector<1x36x8x128xf32>
    %63 = vector.shape_cast %62 : vector<1x36x8x128xf32> to vector<36x8x128xf32>
    %64 = vector.extract_strided_slice %5 {offsets = [15, 0, 0, 0], sizes = [1, 36, 8, 128], strides = [1, 1, 1, 1]} : vector<16x36x8x128xf32> to vector<1x36x8x128xf32>
    %65 = vector.shape_cast %64 : vector<1x36x8x128xf32> to vector<36x8x128xf32>
    %66 = arith.maximumf %59, %61 : vector<36x8x128xf32>
    %67 = arith.maximumf %63, %65 : vector<36x8x128xf32>
    %68 = arith.maximumf %66, %67 : vector<36x8x128xf32>
    %69 = vector.shape_cast %6 : vector<1x128xf32> to vector<1x1x128xf32>
    %70 = vector.broadcast %69 : vector<1x1x128xf32> to vector<36x8x128xf32>
    %71 = arith.addf %68, %70 : vector<36x8x128xf32>
    %cst_10 = arith.constant 0.000000e+00 : f32
    %72 = vector.broadcast %cst_10 : f32 to vector<36x8x128xf32>
    %73 = arith.maximumf %71, %72 : vector<36x8x128xf32>
    %74 = vector.shape_cast %73 : vector<36x8x128xf32> to vector<6x6x8x128xf32>
    %75 = vector.extract_strided_slice %23 {offsets = [0, 0, 0, 0], sizes = [4, 4, 8, 128], strides = [1, 1, 1, 1]} : vector<6x6x8x128xf32> to vector<4x4x8x128xf32>
    %76 = vector.shape_cast %75 : vector<4x4x8x128xf32> to vector<128x128xf32>
    %77 = vector.extract_strided_slice %40 {offsets = [0, 0, 0, 0], sizes = [4, 4, 8, 128], strides = [1, 1, 1, 1]} : vector<6x6x8x128xf32> to vector<4x4x8x128xf32>
    %78 = vector.shape_cast %77 : vector<4x4x8x128xf32> to vector<128x128xf32>
    %79 = vector.extract_strided_slice %23 {offsets = [0, 1, 0, 0], sizes = [4, 4, 8, 128], strides = [1, 1, 1, 1]} : vector<6x6x8x128xf32> to vector<4x4x8x128xf32>
    %80 = vector.shape_cast %79 : vector<4x4x8x128xf32> to vector<128x128xf32>
    %81 = vector.extract_strided_slice %40 {offsets = [0, 1, 0, 0], sizes = [4, 4, 8, 128], strides = [1, 1, 1, 1]} : vector<6x6x8x128xf32> to vector<4x4x8x128xf32>
    %82 = vector.shape_cast %81 : vector<4x4x8x128xf32> to vector<128x128xf32>
    %83 = vector.extract_strided_slice %23 {offsets = [0, 2, 0, 0], sizes = [4, 4, 8, 128], strides = [1, 1, 1, 1]} : vector<6x6x8x128xf32> to vector<4x4x8x128xf32>
    %84 = vector.shape_cast %83 : vector<4x4x8x128xf32> to vector<128x128xf32>
    %85 = vector.extract_strided_slice %57 {offsets = [0, 0, 0, 0], sizes = [4, 4, 8, 128], strides = [1, 1, 1, 1]} : vector<6x6x8x128xf32> to vector<4x4x8x128xf32>
    %86 = vector.shape_cast %85 : vector<4x4x8x128xf32> to vector<128x128xf32>
    %87 = vector.extract_strided_slice %74 {offsets = [0, 0, 0, 0], sizes = [4, 4, 8, 128], strides = [1, 1, 1, 1]} : vector<6x6x8x128xf32> to vector<4x4x8x128xf32>
    %88 = vector.shape_cast %87 : vector<4x4x8x128xf32> to vector<128x128xf32>
    %89 = vector.extract_strided_slice %57 {offsets = [0, 1, 0, 0], sizes = [4, 4, 8, 128], strides = [1, 1, 1, 1]} : vector<6x6x8x128xf32> to vector<4x4x8x128xf32>
    %90 = vector.shape_cast %89 : vector<4x4x8x128xf32> to vector<128x128xf32>
    %91 = vector.extract_strided_slice %74 {offsets = [0, 1, 0, 0], sizes = [4, 4, 8, 128], strides = [1, 1, 1, 1]} : vector<6x6x8x128xf32> to vector<4x4x8x128xf32>
    %92 = vector.shape_cast %91 : vector<4x4x8x128xf32> to vector<128x128xf32>
    %93 = vector.extract_strided_slice %57 {offsets = [0, 2, 0, 0], sizes = [4, 4, 8, 128], strides = [1, 1, 1, 1]} : vector<6x6x8x128xf32> to vector<4x4x8x128xf32>
    %94 = vector.shape_cast %93 : vector<4x4x8x128xf32> to vector<128x128xf32>
    %95 = vector.extract_strided_slice %23 {offsets = [1, 0, 0, 0], sizes = [4, 4, 8, 128], strides = [1, 1, 1, 1]} : vector<6x6x8x128xf32> to vector<4x4x8x128xf32>
    %96 = vector.shape_cast %95 : vector<4x4x8x128xf32> to vector<128x128xf32>
    %97 = vector.extract_strided_slice %40 {offsets = [1, 0, 0, 0], sizes = [4, 4, 8, 128], strides = [1, 1, 1, 1]} : vector<6x6x8x128xf32> to vector<4x4x8x128xf32>
    %98 = vector.shape_cast %97 : vector<4x4x8x128xf32> to vector<128x128xf32>
    %99 = vector.extract_strided_slice %23 {offsets = [1, 1, 0, 0], sizes = [4, 4, 8, 128], strides = [1, 1, 1, 1]} : vector<6x6x8x128xf32> to vector<4x4x8x128xf32>
    %100 = vector.shape_cast %99 : vector<4x4x8x128xf32> to vector<128x128xf32>
    %101 = vector.extract_strided_slice %40 {offsets = [1, 1, 0, 0], sizes = [4, 4, 8, 128], strides = [1, 1, 1, 1]} : vector<6x6x8x128xf32> to vector<4x4x8x128xf32>
    %102 = vector.shape_cast %101 : vector<4x4x8x128xf32> to vector<128x128xf32>
    %103 = vector.extract_strided_slice %23 {offsets = [1, 2, 0, 0], sizes = [4, 4, 8, 128], strides = [1, 1, 1, 1]} : vector<6x6x8x128xf32> to vector<4x4x8x128xf32>
    %104 = vector.shape_cast %103 : vector<4x4x8x128xf32> to vector<128x128xf32>
    %105 = vector.extract_strided_slice %57 {offsets = [1, 0, 0, 0], sizes = [4, 4, 8, 128], strides = [1, 1, 1, 1]} : vector<6x6x8x128xf32> to vector<4x4x8x128xf32>
    %106 = vector.shape_cast %105 : vector<4x4x8x128xf32> to vector<128x128xf32>
    %107 = vector.extract_strided_slice %74 {offsets = [1, 0, 0, 0], sizes = [4, 4, 8, 128], strides = [1, 1, 1, 1]} : vector<6x6x8x128xf32> to vector<4x4x8x128xf32>
    %108 = vector.shape_cast %107 : vector<4x4x8x128xf32> to vector<128x128xf32>
    %109 = vector.extract_strided_slice %57 {offsets = [1, 1, 0, 0], sizes = [4, 4, 8, 128], strides = [1, 1, 1, 1]} : vector<6x6x8x128xf32> to vector<4x4x8x128xf32>
    %110 = vector.shape_cast %109 : vector<4x4x8x128xf32> to vector<128x128xf32>
    %111 = vector.extract_strided_slice %74 {offsets = [1, 1, 0, 0], sizes = [4, 4, 8, 128], strides = [1, 1, 1, 1]} : vector<6x6x8x128xf32> to vector<4x4x8x128xf32>
    %112 = vector.shape_cast %111 : vector<4x4x8x128xf32> to vector<128x128xf32>
    %113 = vector.extract_strided_slice %57 {offsets = [1, 2, 0, 0], sizes = [4, 4, 8, 128], strides = [1, 1, 1, 1]} : vector<6x6x8x128xf32> to vector<4x4x8x128xf32>
    %114 = vector.shape_cast %113 : vector<4x4x8x128xf32> to vector<128x128xf32>
    %115 = vector.extract_strided_slice %23 {offsets = [2, 0, 0, 0], sizes = [4, 4, 8, 128], strides = [1, 1, 1, 1]} : vector<6x6x8x128xf32> to vector<4x4x8x128xf32>
    %116 = vector.shape_cast %115 : vector<4x4x8x128xf32> to vector<128x128xf32>
    %117 = vector.extract_strided_slice %40 {offsets = [2, 0, 0, 0], sizes = [4, 4, 8, 128], strides = [1, 1, 1, 1]} : vector<6x6x8x128xf32> to vector<4x4x8x128xf32>
    %118 = vector.shape_cast %117 : vector<4x4x8x128xf32> to vector<128x128xf32>
    %119 = vector.extract_strided_slice %23 {offsets = [2, 1, 0, 0], sizes = [4, 4, 8, 128], strides = [1, 1, 1, 1]} : vector<6x6x8x128xf32> to vector<4x4x8x128xf32>
    %120 = vector.shape_cast %119 : vector<4x4x8x128xf32> to vector<128x128xf32>
    %121 = vector.extract_strided_slice %40 {offsets = [2, 1, 0, 0], sizes = [4, 4, 8, 128], strides = [1, 1, 1, 1]} : vector<6x6x8x128xf32> to vector<4x4x8x128xf32>
    %122 = vector.shape_cast %121 : vector<4x4x8x128xf32> to vector<128x128xf32>
    %123 = vector.extract_strided_slice %23 {offsets = [2, 2, 0, 0], sizes = [4, 4, 8, 128], strides = [1, 1, 1, 1]} : vector<6x6x8x128xf32> to vector<4x4x8x128xf32>
    %124 = vector.shape_cast %123 : vector<4x4x8x128xf32> to vector<128x128xf32>
    %125 = tpu.concatenate %76, %78, %80, %82, %84, %86, %88, %90, %92, %94, %96, %98, %100, %102, %104, %106 in 1 : vector<128x128xf32>, vector<128x128xf32>, vector<128x128xf32>, vector<128x128xf32>, vector<128x128xf32>, vector<128x128xf32>, vector<128x128xf32>, vector<128x128xf32>, vector<128x128xf32>, vector<128x128xf32>, vector<128x128xf32>, vector<128x128xf32>, vector<128x128xf32>, vector<128x128xf32>, vector<128x128xf32>, vector<128x128xf32> -> vector<128x2048xf32>
    %126 = tpu.concatenate %108, %110, %112, %114, %116, %118, %120, %122, %124 in 1 : vector<128x128xf32>, vector<128x128xf32>, vector<128x128xf32>, vector<128x128xf32>, vector<128x128xf32>, vector<128x128xf32>, vector<128x128xf32>, vector<128x128xf32>, vector<128x128xf32> -> vector<128x1152xf32>
    %127 = tpu.concatenate %125, %126 in 1 : vector<128x2048xf32>, vector<128x1152xf32> -> vector<128x3200xf32>
    %128 = arith.truncf %127 : vector<128x3200xf32> to vector<128x3200xbf16>
    %129 = vector.extract_strided_slice %40 {offsets = [0, 0, 0, 0], sizes = [4, 4, 8, 128], strides = [1, 1, 1, 1]} : vector<6x6x8x128xf32> to vector<4x4x8x128xf32>
    %130 = vector.shape_cast %129 : vector<4x4x8x128xf32> to vector<128x128xf32>
    %131 = vector.extract_strided_slice %23 {offsets = [0, 1, 0, 0], sizes = [4, 4, 8, 128], strides = [1, 1, 1, 1]} : vector<6x6x8x128xf32> to vector<4x4x8x128xf32>
    %132 = vector.shape_cast %131 : vector<4x4x8x128xf32> to vector<128x128xf32>
    %133 = vector.extract_strided_slice %40 {offsets = [0, 1, 0, 0], sizes = [4, 4, 8, 128], strides = [1, 1, 1, 1]} : vector<6x6x8x128xf32> to vector<4x4x8x128xf32>
    %134 = vector.shape_cast %133 : vector<4x4x8x128xf32> to vector<128x128xf32>
    %135 = vector.extract_strided_slice %23 {offsets = [0, 2, 0, 0], sizes = [4, 4, 8, 128], strides = [1, 1, 1, 1]} : vector<6x6x8x128xf32> to vector<4x4x8x128xf32>
    %136 = vector.shape_cast %135 : vector<4x4x8x128xf32> to vector<128x128xf32>
    %137 = vector.extract_strided_slice %40 {offsets = [0, 2, 0, 0], sizes = [4, 4, 8, 128], strides = [1, 1, 1, 1]} : vector<6x6x8x128xf32> to vector<4x4x8x128xf32>
    %138 = vector.shape_cast %137 : vector<4x4x8x128xf32> to vector<128x128xf32>
    %139 = vector.extract_strided_slice %74 {offsets = [0, 0, 0, 0], sizes = [4, 4, 8, 128], strides = [1, 1, 1, 1]} : vector<6x6x8x128xf32> to vector<4x4x8x128xf32>
    %140 = vector.shape_cast %139 : vector<4x4x8x128xf32> to vector<128x128xf32>
    %141 = vector.extract_strided_slice %57 {offsets = [0, 1, 0, 0], sizes = [4, 4, 8, 128], strides = [1, 1, 1, 1]} : vector<6x6x8x128xf32> to vector<4x4x8x128xf32>
    %142 = vector.shape_cast %141 : vector<4x4x8x128xf32> to vector<128x128xf32>
    %143 = vector.extract_strided_slice %74 {offsets = [0, 1, 0, 0], sizes = [4, 4, 8, 128], strides = [1, 1, 1, 1]} : vector<6x6x8x128xf32> to vector<4x4x8x128xf32>
    %144 = vector.shape_cast %143 : vector<4x4x8x128xf32> to vector<128x128xf32>
    %145 = vector.extract_strided_slice %57 {offsets = [0, 2, 0, 0], sizes = [4, 4, 8, 128], strides = [1, 1, 1, 1]} : vector<6x6x8x128xf32> to vector<4x4x8x128xf32>
    %146 = vector.shape_cast %145 : vector<4x4x8x128xf32> to vector<128x128xf32>
    %147 = vector.extract_strided_slice %74 {offsets = [0, 2, 0, 0], sizes = [4, 4, 8, 128], strides = [1, 1, 1, 1]} : vector<6x6x8x128xf32> to vector<4x4x8x128xf32>
    %148 = vector.shape_cast %147 : vector<4x4x8x128xf32> to vector<128x128xf32>
    %149 = vector.extract_strided_slice %40 {offsets = [1, 0, 0, 0], sizes = [4, 4, 8, 128], strides = [1, 1, 1, 1]} : vector<6x6x8x128xf32> to vector<4x4x8x128xf32>
    %150 = vector.shape_cast %149 : vector<4x4x8x128xf32> to vector<128x128xf32>
    %151 = vector.extract_strided_slice %23 {offsets = [1, 1, 0, 0], sizes = [4, 4, 8, 128], strides = [1, 1, 1, 1]} : vector<6x6x8x128xf32> to vector<4x4x8x128xf32>
    %152 = vector.shape_cast %151 : vector<4x4x8x128xf32> to vector<128x128xf32>
    %153 = vector.extract_strided_slice %40 {offsets = [1, 1, 0, 0], sizes = [4, 4, 8, 128], strides = [1, 1, 1, 1]} : vector<6x6x8x128xf32> to vector<4x4x8x128xf32>
    %154 = vector.shape_cast %153 : vector<4x4x8x128xf32> to vector<128x128xf32>
    %155 = vector.extract_strided_slice %23 {offsets = [1, 2, 0, 0], sizes = [4, 4, 8, 128], strides = [1, 1, 1, 1]} : vector<6x6x8x128xf32> to vector<4x4x8x128xf32>
    %156 = vector.shape_cast %155 : vector<4x4x8x128xf32> to vector<128x128xf32>
    %157 = vector.extract_strided_slice %40 {offsets = [1, 2, 0, 0], sizes = [4, 4, 8, 128], strides = [1, 1, 1, 1]} : vector<6x6x8x128xf32> to vector<4x4x8x128xf32>
    %158 = vector.shape_cast %157 : vector<4x4x8x128xf32> to vector<128x128xf32>
    %159 = vector.extract_strided_slice %74 {offsets = [1, 0, 0, 0], sizes = [4, 4, 8, 128], strides = [1, 1, 1, 1]} : vector<6x6x8x128xf32> to vector<4x4x8x128xf32>
    %160 = vector.shape_cast %159 : vector<4x4x8x128xf32> to vector<128x128xf32>
    %161 = vector.extract_strided_slice %57 {offsets = [1, 1, 0, 0], sizes = [4, 4, 8, 128], strides = [1, 1, 1, 1]} : vector<6x6x8x128xf32> to vector<4x4x8x128xf32>
    %162 = vector.shape_cast %161 : vector<4x4x8x128xf32> to vector<128x128xf32>
    %163 = vector.extract_strided_slice %74 {offsets = [1, 1, 0, 0], sizes = [4, 4, 8, 128], strides = [1, 1, 1, 1]} : vector<6x6x8x128xf32> to vector<4x4x8x128xf32>
    %164 = vector.shape_cast %163 : vector<4x4x8x128xf32> to vector<128x128xf32>
    %165 = vector.extract_strided_slice %57 {offsets = [1, 2, 0, 0], sizes = [4, 4, 8, 128], strides = [1, 1, 1, 1]} : vector<6x6x8x128xf32> to vector<4x4x8x128xf32>
    %166 = vector.shape_cast %165 : vector<4x4x8x128xf32> to vector<128x128xf32>
    %167 = vector.extract_strided_slice %74 {offsets = [1, 2, 0, 0], sizes = [4, 4, 8, 128], strides = [1, 1, 1, 1]} : vector<6x6x8x128xf32> to vector<4x4x8x128xf32>
    %168 = vector.shape_cast %167 : vector<4x4x8x128xf32> to vector<128x128xf32>
    %169 = vector.extract_strided_slice %40 {offsets = [2, 0, 0, 0], sizes = [4, 4, 8, 128], strides = [1, 1, 1, 1]} : vector<6x6x8x128xf32> to vector<4x4x8x128xf32>
    %170 = vector.shape_cast %169 : vector<4x4x8x128xf32> to vector<128x128xf32>
    %171 = vector.extract_strided_slice %23 {offsets = [2, 1, 0, 0], sizes = [4, 4, 8, 128], strides = [1, 1, 1, 1]} : vector<6x6x8x128xf32> to vector<4x4x8x128xf32>
    %172 = vector.shape_cast %171 : vector<4x4x8x128xf32> to vector<128x128xf32>
    %173 = vector.extract_strided_slice %40 {offsets = [2, 1, 0, 0], sizes = [4, 4, 8, 128], strides = [1, 1, 1, 1]} : vector<6x6x8x128xf32> to vector<4x4x8x128xf32>
    %174 = vector.shape_cast %173 : vector<4x4x8x128xf32> to vector<128x128xf32>
    %175 = vector.extract_strided_slice %23 {offsets = [2, 2, 0, 0], sizes = [4, 4, 8, 128], strides = [1, 1, 1, 1]} : vector<6x6x8x128xf32> to vector<4x4x8x128xf32>
    %176 = vector.shape_cast %175 : vector<4x4x8x128xf32> to vector<128x128xf32>
    %177 = vector.extract_strided_slice %40 {offsets = [2, 2, 0, 0], sizes = [4, 4, 8, 128], strides = [1, 1, 1, 1]} : vector<6x6x8x128xf32> to vector<4x4x8x128xf32>
    %178 = vector.shape_cast %177 : vector<4x4x8x128xf32> to vector<128x128xf32>
    %179 = tpu.concatenate %130, %132, %134, %136, %138, %140, %142, %144, %146, %148, %150, %152, %154, %156, %158, %160 in 1 : vector<128x128xf32>, vector<128x128xf32>, vector<128x128xf32>, vector<128x128xf32>, vector<128x128xf32>, vector<128x128xf32>, vector<128x128xf32>, vector<128x128xf32>, vector<128x128xf32>, vector<128x128xf32>, vector<128x128xf32>, vector<128x128xf32>, vector<128x128xf32>, vector<128x128xf32>, vector<128x128xf32>, vector<128x128xf32> -> vector<128x2048xf32>
    %180 = tpu.concatenate %162, %164, %166, %168, %170, %172, %174, %176, %178 in 1 : vector<128x128xf32>, vector<128x128xf32>, vector<128x128xf32>, vector<128x128xf32>, vector<128x128xf32>, vector<128x128xf32>, vector<128x128xf32>, vector<128x128xf32>, vector<128x128xf32> -> vector<128x1152xf32>
    %181 = tpu.concatenate %179, %180 in 1 : vector<128x2048xf32>, vector<128x1152xf32> -> vector<128x3200xf32>
    %182 = arith.truncf %181 : vector<128x3200xf32> to vector<128x3200xbf16>
    %183 = vector.extract_strided_slice %57 {offsets = [0, 0, 0, 0], sizes = [4, 4, 8, 128], strides = [1, 1, 1, 1]} : vector<6x6x8x128xf32> to vector<4x4x8x128xf32>
    %184 = vector.shape_cast %183 : vector<4x4x8x128xf32> to vector<128x128xf32>
    %185 = vector.extract_strided_slice %74 {offsets = [0, 0, 0, 0], sizes = [4, 4, 8, 128], strides = [1, 1, 1, 1]} : vector<6x6x8x128xf32> to vector<4x4x8x128xf32>
    %186 = vector.shape_cast %185 : vector<4x4x8x128xf32> to vector<128x128xf32>
    %187 = vector.extract_strided_slice %57 {offsets = [0, 1, 0, 0], sizes = [4, 4, 8, 128], strides = [1, 1, 1, 1]} : vector<6x6x8x128xf32> to vector<4x4x8x128xf32>
    %188 = vector.shape_cast %187 : vector<4x4x8x128xf32> to vector<128x128xf32>
    %189 = vector.extract_strided_slice %74 {offsets = [0, 1, 0, 0], sizes = [4, 4, 8, 128], strides = [1, 1, 1, 1]} : vector<6x6x8x128xf32> to vector<4x4x8x128xf32>
    %190 = vector.shape_cast %189 : vector<4x4x8x128xf32> to vector<128x128xf32>
    %191 = vector.extract_strided_slice %57 {offsets = [0, 2, 0, 0], sizes = [4, 4, 8, 128], strides = [1, 1, 1, 1]} : vector<6x6x8x128xf32> to vector<4x4x8x128xf32>
    %192 = vector.shape_cast %191 : vector<4x4x8x128xf32> to vector<128x128xf32>
    %193 = vector.extract_strided_slice %23 {offsets = [1, 0, 0, 0], sizes = [4, 4, 8, 128], strides = [1, 1, 1, 1]} : vector<6x6x8x128xf32> to vector<4x4x8x128xf32>
    %194 = vector.shape_cast %193 : vector<4x4x8x128xf32> to vector<128x128xf32>
    %195 = vector.extract_strided_slice %40 {offsets = [1, 0, 0, 0], sizes = [4, 4, 8, 128], strides = [1, 1, 1, 1]} : vector<6x6x8x128xf32> to vector<4x4x8x128xf32>
    %196 = vector.shape_cast %195 : vector<4x4x8x128xf32> to vector<128x128xf32>
    %197 = vector.extract_strided_slice %23 {offsets = [1, 1, 0, 0], sizes = [4, 4, 8, 128], strides = [1, 1, 1, 1]} : vector<6x6x8x128xf32> to vector<4x4x8x128xf32>
    %198 = vector.shape_cast %197 : vector<4x4x8x128xf32> to vector<128x128xf32>
    %199 = vector.extract_strided_slice %40 {offsets = [1, 1, 0, 0], sizes = [4, 4, 8, 128], strides = [1, 1, 1, 1]} : vector<6x6x8x128xf32> to vector<4x4x8x128xf32>
    %200 = vector.shape_cast %199 : vector<4x4x8x128xf32> to vector<128x128xf32>
    %201 = vector.extract_strided_slice %23 {offsets = [1, 2, 0, 0], sizes = [4, 4, 8, 128], strides = [1, 1, 1, 1]} : vector<6x6x8x128xf32> to vector<4x4x8x128xf32>
    %202 = vector.shape_cast %201 : vector<4x4x8x128xf32> to vector<128x128xf32>
    %203 = vector.extract_strided_slice %57 {offsets = [1, 0, 0, 0], sizes = [4, 4, 8, 128], strides = [1, 1, 1, 1]} : vector<6x6x8x128xf32> to vector<4x4x8x128xf32>
    %204 = vector.shape_cast %203 : vector<4x4x8x128xf32> to vector<128x128xf32>
    %205 = vector.extract_strided_slice %74 {offsets = [1, 0, 0, 0], sizes = [4, 4, 8, 128], strides = [1, 1, 1, 1]} : vector<6x6x8x128xf32> to vector<4x4x8x128xf32>
    %206 = vector.shape_cast %205 : vector<4x4x8x128xf32> to vector<128x128xf32>
    %207 = vector.extract_strided_slice %57 {offsets = [1, 1, 0, 0], sizes = [4, 4, 8, 128], strides = [1, 1, 1, 1]} : vector<6x6x8x128xf32> to vector<4x4x8x128xf32>
    %208 = vector.shape_cast %207 : vector<4x4x8x128xf32> to vector<128x128xf32>
    %209 = vector.extract_strided_slice %74 {offsets = [1, 1, 0, 0], sizes = [4, 4, 8, 128], strides = [1, 1, 1, 1]} : vector<6x6x8x128xf32> to vector<4x4x8x128xf32>
    %210 = vector.shape_cast %209 : vector<4x4x8x128xf32> to vector<128x128xf32>
    %211 = vector.extract_strided_slice %57 {offsets = [1, 2, 0, 0], sizes = [4, 4, 8, 128], strides = [1, 1, 1, 1]} : vector<6x6x8x128xf32> to vector<4x4x8x128xf32>
    %212 = vector.shape_cast %211 : vector<4x4x8x128xf32> to vector<128x128xf32>
    %213 = vector.extract_strided_slice %23 {offsets = [2, 0, 0, 0], sizes = [4, 4, 8, 128], strides = [1, 1, 1, 1]} : vector<6x6x8x128xf32> to vector<4x4x8x128xf32>
    %214 = vector.shape_cast %213 : vector<4x4x8x128xf32> to vector<128x128xf32>
    %215 = vector.extract_strided_slice %40 {offsets = [2, 0, 0, 0], sizes = [4, 4, 8, 128], strides = [1, 1, 1, 1]} : vector<6x6x8x128xf32> to vector<4x4x8x128xf32>
    %216 = vector.shape_cast %215 : vector<4x4x8x128xf32> to vector<128x128xf32>
    %217 = vector.extract_strided_slice %23 {offsets = [2, 1, 0, 0], sizes = [4, 4, 8, 128], strides = [1, 1, 1, 1]} : vector<6x6x8x128xf32> to vector<4x4x8x128xf32>
    %218 = vector.shape_cast %217 : vector<4x4x8x128xf32> to vector<128x128xf32>
    %219 = vector.extract_strided_slice %40 {offsets = [2, 1, 0, 0], sizes = [4, 4, 8, 128], strides = [1, 1, 1, 1]} : vector<6x6x8x128xf32> to vector<4x4x8x128xf32>
    %220 = vector.shape_cast %219 : vector<4x4x8x128xf32> to vector<128x128xf32>
    %221 = vector.extract_strided_slice %23 {offsets = [2, 2, 0, 0], sizes = [4, 4, 8, 128], strides = [1, 1, 1, 1]} : vector<6x6x8x128xf32> to vector<4x4x8x128xf32>
    %222 = vector.shape_cast %221 : vector<4x4x8x128xf32> to vector<128x128xf32>
    %223 = vector.extract_strided_slice %57 {offsets = [2, 0, 0, 0], sizes = [4, 4, 8, 128], strides = [1, 1, 1, 1]} : vector<6x6x8x128xf32> to vector<4x4x8x128xf32>
    %224 = vector.shape_cast %223 : vector<4x4x8x128xf32> to vector<128x128xf32>
    %225 = vector.extract_strided_slice %74 {offsets = [2, 0, 0, 0], sizes = [4, 4, 8, 128], strides = [1, 1, 1, 1]} : vector<6x6x8x128xf32> to vector<4x4x8x128xf32>
    %226 = vector.shape_cast %225 : vector<4x4x8x128xf32> to vector<128x128xf32>
    %227 = vector.extract_strided_slice %57 {offsets = [2, 1, 0, 0], sizes = [4, 4, 8, 128], strides = [1, 1, 1, 1]} : vector<6x6x8x128xf32> to vector<4x4x8x128xf32>
    %228 = vector.shape_cast %227 : vector<4x4x8x128xf32> to vector<128x128xf32>
    %229 = vector.extract_strided_slice %74 {offsets = [2, 1, 0, 0], sizes = [4, 4, 8, 128], strides = [1, 1, 1, 1]} : vector<6x6x8x128xf32> to vector<4x4x8x128xf32>
    %230 = vector.shape_cast %229 : vector<4x4x8x128xf32> to vector<128x128xf32>
    %231 = vector.extract_strided_slice %57 {offsets = [2, 2, 0, 0], sizes = [4, 4, 8, 128], strides = [1, 1, 1, 1]} : vector<6x6x8x128xf32> to vector<4x4x8x128xf32>
    %232 = vector.shape_cast %231 : vector<4x4x8x128xf32> to vector<128x128xf32>
    %233 = tpu.concatenate %184, %186, %188, %190, %192, %194, %196, %198, %200, %202, %204, %206, %208, %210, %212, %214 in 1 : vector<128x128xf32>, vector<128x128xf32>, vector<128x128xf32>, vector<128x128xf32>, vector<128x128xf32>, vector<128x128xf32>, vector<128x128xf32>, vector<128x128xf32>, vector<128x128xf32>, vector<128x128xf32>, vector<128x128xf32>, vector<128x128xf32>, vector<128x128xf32>, vector<128x128xf32>, vector<128x128xf32>, vector<128x128xf32> -> vector<128x2048xf32>
    %234 = tpu.concatenate %216, %218, %220, %222, %224, %226, %228, %230, %232 in 1 : vector<128x128xf32>, vector<128x128xf32>, vector<128x128xf32>, vector<128x128xf32>, vector<128x128xf32>, vector<128x128xf32>, vector<128x128xf32>, vector<128x128xf32>, vector<128x128xf32> -> vector<128x1152xf32>
    %235 = tpu.concatenate %233, %234 in 1 : vector<128x2048xf32>, vector<128x1152xf32> -> vector<128x3200xf32>
    %236 = arith.truncf %235 : vector<128x3200xf32> to vector<128x3200xbf16>
    %237 = vector.extract_strided_slice %74 {offsets = [0, 0, 0, 0], sizes = [4, 4, 8, 128], strides = [1, 1, 1, 1]} : vector<6x6x8x128xf32> to vector<4x4x8x128xf32>
    %238 = vector.shape_cast %237 : vector<4x4x8x128xf32> to vector<128x128xf32>
    %239 = vector.extract_strided_slice %57 {offsets = [0, 1, 0, 0], sizes = [4, 4, 8, 128], strides = [1, 1, 1, 1]} : vector<6x6x8x128xf32> to vector<4x4x8x128xf32>
    %240 = vector.shape_cast %239 : vector<4x4x8x128xf32> to vector<128x128xf32>
    %241 = vector.extract_strided_slice %74 {offsets = [0, 1, 0, 0], sizes = [4, 4, 8, 128], strides = [1, 1, 1, 1]} : vector<6x6x8x128xf32> to vector<4x4x8x128xf32>
    %242 = vector.shape_cast %241 : vector<4x4x8x128xf32> to vector<128x128xf32>
    %243 = vector.extract_strided_slice %57 {offsets = [0, 2, 0, 0], sizes = [4, 4, 8, 128], strides = [1, 1, 1, 1]} : vector<6x6x8x128xf32> to vector<4x4x8x128xf32>
    %244 = vector.shape_cast %243 : vector<4x4x8x128xf32> to vector<128x128xf32>
    %245 = vector.extract_strided_slice %74 {offsets = [0, 2, 0, 0], sizes = [4, 4, 8, 128], strides = [1, 1, 1, 1]} : vector<6x6x8x128xf32> to vector<4x4x8x128xf32>
    %246 = vector.shape_cast %245 : vector<4x4x8x128xf32> to vector<128x128xf32>
    %247 = vector.extract_strided_slice %40 {offsets = [1, 0, 0, 0], sizes = [4, 4, 8, 128], strides = [1, 1, 1, 1]} : vector<6x6x8x128xf32> to vector<4x4x8x128xf32>
    %248 = vector.shape_cast %247 : vector<4x4x8x128xf32> to vector<128x128xf32>
    %249 = vector.extract_strided_slice %23 {offsets = [1, 1, 0, 0], sizes = [4, 4, 8, 128], strides = [1, 1, 1, 1]} : vector<6x6x8x128xf32> to vector<4x4x8x128xf32>
    %250 = vector.shape_cast %249 : vector<4x4x8x128xf32> to vector<128x128xf32>
    %251 = vector.extract_strided_slice %40 {offsets = [1, 1, 0, 0], sizes = [4, 4, 8, 128], strides = [1, 1, 1, 1]} : vector<6x6x8x128xf32> to vector<4x4x8x128xf32>
    %252 = vector.shape_cast %251 : vector<4x4x8x128xf32> to vector<128x128xf32>
    %253 = vector.extract_strided_slice %23 {offsets = [1, 2, 0, 0], sizes = [4, 4, 8, 128], strides = [1, 1, 1, 1]} : vector<6x6x8x128xf32> to vector<4x4x8x128xf32>
    %254 = vector.shape_cast %253 : vector<4x4x8x128xf32> to vector<128x128xf32>
    %255 = vector.extract_strided_slice %40 {offsets = [1, 2, 0, 0], sizes = [4, 4, 8, 128], strides = [1, 1, 1, 1]} : vector<6x6x8x128xf32> to vector<4x4x8x128xf32>
    %256 = vector.shape_cast %255 : vector<4x4x8x128xf32> to vector<128x128xf32>
    %257 = vector.extract_strided_slice %74 {offsets = [1, 0, 0, 0], sizes = [4, 4, 8, 128], strides = [1, 1, 1, 1]} : vector<6x6x8x128xf32> to vector<4x4x8x128xf32>
    %258 = vector.shape_cast %257 : vector<4x4x8x128xf32> to vector<128x128xf32>
    %259 = vector.extract_strided_slice %57 {offsets = [1, 1, 0, 0], sizes = [4, 4, 8, 128], strides = [1, 1, 1, 1]} : vector<6x6x8x128xf32> to vector<4x4x8x128xf32>
    %260 = vector.shape_cast %259 : vector<4x4x8x128xf32> to vector<128x128xf32>
    %261 = vector.extract_strided_slice %74 {offsets = [1, 1, 0, 0], sizes = [4, 4, 8, 128], strides = [1, 1, 1, 1]} : vector<6x6x8x128xf32> to vector<4x4x8x128xf32>
    %262 = vector.shape_cast %261 : vector<4x4x8x128xf32> to vector<128x128xf32>
    %263 = vector.extract_strided_slice %57 {offsets = [1, 2, 0, 0], sizes = [4, 4, 8, 128], strides = [1, 1, 1, 1]} : vector<6x6x8x128xf32> to vector<4x4x8x128xf32>
    %264 = vector.shape_cast %263 : vector<4x4x8x128xf32> to vector<128x128xf32>
    %265 = vector.extract_strided_slice %74 {offsets = [1, 2, 0, 0], sizes = [4, 4, 8, 128], strides = [1, 1, 1, 1]} : vector<6x6x8x128xf32> to vector<4x4x8x128xf32>
    %266 = vector.shape_cast %265 : vector<4x4x8x128xf32> to vector<128x128xf32>
    %267 = vector.extract_strided_slice %40 {offsets = [2, 0, 0, 0], sizes = [4, 4, 8, 128], strides = [1, 1, 1, 1]} : vector<6x6x8x128xf32> to vector<4x4x8x128xf32>
    %268 = vector.shape_cast %267 : vector<4x4x8x128xf32> to vector<128x128xf32>
    %269 = vector.extract_strided_slice %23 {offsets = [2, 1, 0, 0], sizes = [4, 4, 8, 128], strides = [1, 1, 1, 1]} : vector<6x6x8x128xf32> to vector<4x4x8x128xf32>
    %270 = vector.shape_cast %269 : vector<4x4x8x128xf32> to vector<128x128xf32>
    %271 = vector.extract_strided_slice %40 {offsets = [2, 1, 0, 0], sizes = [4, 4, 8, 128], strides = [1, 1, 1, 1]} : vector<6x6x8x128xf32> to vector<4x4x8x128xf32>
    %272 = vector.shape_cast %271 : vector<4x4x8x128xf32> to vector<128x128xf32>
    %273 = vector.extract_strided_slice %23 {offsets = [2, 2, 0, 0], sizes = [4, 4, 8, 128], strides = [1, 1, 1, 1]} : vector<6x6x8x128xf32> to vector<4x4x8x128xf32>
    %274 = vector.shape_cast %273 : vector<4x4x8x128xf32> to vector<128x128xf32>
    %275 = vector.extract_strided_slice %40 {offsets = [2, 2, 0, 0], sizes = [4, 4, 8, 128], strides = [1, 1, 1, 1]} : vector<6x6x8x128xf32> to vector<4x4x8x128xf32>
    %276 = vector.shape_cast %275 : vector<4x4x8x128xf32> to vector<128x128xf32>
    %277 = vector.extract_strided_slice %74 {offsets = [2, 0, 0, 0], sizes = [4, 4, 8, 128], strides = [1, 1, 1, 1]} : vector<6x6x8x128xf32> to vector<4x4x8x128xf32>
    %278 = vector.shape_cast %277 : vector<4x4x8x128xf32> to vector<128x128xf32>
    %279 = vector.extract_strided_slice %57 {offsets = [2, 1, 0, 0], sizes = [4, 4, 8, 128], strides = [1, 1, 1, 1]} : vector<6x6x8x128xf32> to vector<4x4x8x128xf32>
    %280 = vector.shape_cast %279 : vector<4x4x8x128xf32> to vector<128x128xf32>
    %281 = vector.extract_strided_slice %74 {offsets = [2, 1, 0, 0], sizes = [4, 4, 8, 128], strides = [1, 1, 1, 1]} : vector<6x6x8x128xf32> to vector<4x4x8x128xf32>
    %282 = vector.shape_cast %281 : vector<4x4x8x128xf32> to vector<128x128xf32>
    %283 = vector.extract_strided_slice %57 {offsets = [2, 2, 0, 0], sizes = [4, 4, 8, 128], strides = [1, 1, 1, 1]} : vector<6x6x8x128xf32> to vector<4x4x8x128xf32>
    %284 = vector.shape_cast %283 : vector<4x4x8x128xf32> to vector<128x128xf32>
    %285 = vector.extract_strided_slice %74 {offsets = [2, 2, 0, 0], sizes = [4, 4, 8, 128], strides = [1, 1, 1, 1]} : vector<6x6x8x128xf32> to vector<4x4x8x128xf32>
    %286 = vector.shape_cast %285 : vector<4x4x8x128xf32> to vector<128x128xf32>
    %287 = tpu.concatenate %238, %240, %242, %244, %246, %248, %250, %252, %254, %256, %258, %260, %262, %264, %266, %268 in 1 : vector<128x128xf32>, vector<128x128xf32>, vector<128x128xf32>, vector<128x128xf32>, vector<128x128xf32>, vector<128x128xf32>, vector<128x128xf32>, vector<128x128xf32>, vector<128x128xf32>, vector<128x128xf32>, vector<128x128xf32>, vector<128x128xf32>, vector<128x128xf32>, vector<128x128xf32>, vector<128x128xf32>, vector<128x128xf32> -> vector<128x2048xf32>
    %288 = tpu.concatenate %270, %272, %274, %276, %278, %280, %282, %284, %286 in 1 : vector<128x128xf32>, vector<128x128xf32>, vector<128x128xf32>, vector<128x128xf32>, vector<128x128xf32>, vector<128x128xf32>, vector<128x128xf32>, vector<128x128xf32>, vector<128x128xf32> -> vector<128x1152xf32>
    %289 = tpu.concatenate %287, %288 in 1 : vector<128x2048xf32>, vector<128x1152xf32> -> vector<128x3200xf32>
    %290 = arith.truncf %289 : vector<128x3200xf32> to vector<128x3200xbf16>
    %291 = tpu.concatenate %128, %182, %236, %290 in 0 : vector<128x3200xbf16>, vector<128x3200xbf16>, vector<128x3200xbf16>, vector<128x3200xbf16> -> vector<512x3200xbf16>
    %c0_11 = arith.constant 0 : index
    %c0_12 = arith.constant 0 : index
    %292 = vector.load %arg4[%c0_11, %c0_12] : memref<3200x128xbf16, #tpu.memory_space<vmem>>, vector<3200x128xbf16>
    %cst_13 = arith.constant dense<0.000000e+00> : vector<512x128xf32>
    %293 = tpu.matmul %291, %292, %cst_13 {dimension_numbers = #tpu.dot_dimension_numbers<[1], [0], [0], [1], [0, 0, 1, 1], [], []>} : vector<512x3200xbf16>, vector<3200x128xbf16>, vector<512x128xf32> -> vector<512x128xf32>
    %294 = vector.extract_strided_slice %293 {offsets = [0, 0], sizes = [128, 128], strides = [1, 1]} : vector<512x128xf32> to vector<128x128xf32>
    %295 = vector.extract_strided_slice %293 {offsets = [128, 0], sizes = [128, 128], strides = [1, 1]} : vector<512x128xf32> to vector<128x128xf32>
    %296 = arith.maximumf %294, %295 : vector<128x128xf32>
    %297 = vector.extract_strided_slice %293 {offsets = [256, 0], sizes = [128, 128], strides = [1, 1]} : vector<512x128xf32> to vector<128x128xf32>
    %298 = vector.extract_strided_slice %293 {offsets = [384, 0], sizes = [128, 128], strides = [1, 1]} : vector<512x128xf32> to vector<128x128xf32>
    %299 = arith.maximumf %297, %298 : vector<128x128xf32>
    %300 = arith.maximumf %296, %299 : vector<128x128xf32>
    %c0_14 = arith.constant 0 : index
    %c0_15 = arith.constant 0 : index
    %301 = vector.load %arg5[%c0_14, %c0_15] : memref<1x128xf32, #tpu.memory_space<vmem>>, vector<1x128xf32>
    %302 = vector.broadcast %301 : vector<1x128xf32> to vector<128x128xf32>
    %303 = arith.addf %300, %302 : vector<128x128xf32>
    %cst_16 = arith.constant 0.000000e+00 : f32
    %304 = vector.broadcast %cst_16 : f32 to vector<128x128xf32>
    %305 = arith.maximumf %303, %304 : vector<128x128xf32>
    %306 = vector.extract_strided_slice %305 {offsets = [0, 0], sizes = [8, 128], strides = [1, 1]} : vector<128x128xf32> to vector<8x128xf32>
    %307 = vector.extract_strided_slice %305 {offsets = [8, 0], sizes = [8, 128], strides = [1, 1]} : vector<128x128xf32> to vector<8x128xf32>
    %308 = vector.extract_strided_slice %305 {offsets = [16, 0], sizes = [8, 128], strides = [1, 1]} : vector<128x128xf32> to vector<8x128xf32>
    %309 = vector.extract_strided_slice %305 {offsets = [24, 0], sizes = [8, 128], strides = [1, 1]} : vector<128x128xf32> to vector<8x128xf32>
    %310 = vector.extract_strided_slice %305 {offsets = [32, 0], sizes = [8, 128], strides = [1, 1]} : vector<128x128xf32> to vector<8x128xf32>
    %311 = vector.extract_strided_slice %305 {offsets = [40, 0], sizes = [8, 128], strides = [1, 1]} : vector<128x128xf32> to vector<8x128xf32>
    %312 = vector.extract_strided_slice %305 {offsets = [48, 0], sizes = [8, 128], strides = [1, 1]} : vector<128x128xf32> to vector<8x128xf32>
    %313 = vector.extract_strided_slice %305 {offsets = [56, 0], sizes = [8, 128], strides = [1, 1]} : vector<128x128xf32> to vector<8x128xf32>
    %314 = vector.extract_strided_slice %305 {offsets = [64, 0], sizes = [8, 128], strides = [1, 1]} : vector<128x128xf32> to vector<8x128xf32>
    %315 = vector.extract_strided_slice %305 {offsets = [72, 0], sizes = [8, 128], strides = [1, 1]} : vector<128x128xf32> to vector<8x128xf32>
    %316 = vector.extract_strided_slice %305 {offsets = [80, 0], sizes = [8, 128], strides = [1, 1]} : vector<128x128xf32> to vector<8x128xf32>
    %317 = vector.extract_strided_slice %305 {offsets = [88, 0], sizes = [8, 128], strides = [1, 1]} : vector<128x128xf32> to vector<8x128xf32>
    %318 = vector.extract_strided_slice %305 {offsets = [96, 0], sizes = [8, 128], strides = [1, 1]} : vector<128x128xf32> to vector<8x128xf32>
    %319 = vector.extract_strided_slice %305 {offsets = [104, 0], sizes = [8, 128], strides = [1, 1]} : vector<128x128xf32> to vector<8x128xf32>
    %320 = vector.extract_strided_slice %305 {offsets = [112, 0], sizes = [8, 128], strides = [1, 1]} : vector<128x128xf32> to vector<8x128xf32>
    %321 = vector.extract_strided_slice %305 {offsets = [120, 0], sizes = [8, 128], strides = [1, 1]} : vector<128x128xf32> to vector<8x128xf32>
    %322 = tpu.concatenate %306, %307, %308, %309, %310, %311, %312, %313, %314, %315, %316, %317, %318, %319, %320, %321 in 1 : vector<8x128xf32>, vector<8x128xf32>, vector<8x128xf32>, vector<8x128xf32>, vector<8x128xf32>, vector<8x128xf32>, vector<8x128xf32>, vector<8x128xf32>, vector<8x128xf32>, vector<8x128xf32>, vector<8x128xf32>, vector<8x128xf32>, vector<8x128xf32>, vector<8x128xf32>, vector<8x128xf32>, vector<8x128xf32> -> vector<8x2048xf32>
    %c0_17 = arith.constant 0 : index
    %c0_18 = arith.constant 0 : index
    %323 = vector.load %arg6[%c0_17, %c0_18] : memref<2048x128xf32, #tpu.memory_space<vmem>>, vector<2048x128xf32>
    %cst_19 = arith.constant dense<0.000000e+00> : vector<8x128xf32>
    %324 = tpu.matmul %322, %323, %cst_19 {dimension_numbers = #tpu.dot_dimension_numbers<[1], [0], [0], [1], [0, 0, 1, 1], [], []>} : vector<8x2048xf32>, vector<2048x128xf32>, vector<8x128xf32> -> vector<8x128xf32>
    %c0_20 = arith.constant 0 : index
    %c0_21 = arith.constant 0 : index
    %325 = vector.load %arg7[%c0_20, %c0_21] : memref<1x128xf32, #tpu.memory_space<vmem>>, vector<1x128xf32>
    %326 = vector.broadcast %325 : vector<1x128xf32> to vector<8x128xf32>
    %327 = arith.addf %324, %326 : vector<8x128xf32>
    %cst_22 = arith.constant 0.000000e+00 : f32
    %328 = vector.broadcast %cst_22 : f32 to vector<8x128xf32>
    %329 = arith.maximumf %327, %328 : vector<8x128xf32>
    %c0_23 = arith.constant 0 : index
    %c0_24 = arith.constant 0 : index
    %330 = vector.load %arg8[%c0_23, %c0_24] : memref<128x128xf32, #tpu.memory_space<vmem>>, vector<128x128xf32>
    %cst_25 = arith.constant dense<0.000000e+00> : vector<8x128xf32>
    %331 = tpu.matmul %329, %330, %cst_25 {dimension_numbers = #tpu.dot_dimension_numbers<[1], [0], [0], [1], [0, 0, 1, 1], [], []>} : vector<8x128xf32>, vector<128x128xf32>, vector<8x128xf32> -> vector<8x128xf32>
    %c0_26 = arith.constant 0 : index
    %c0_27 = arith.constant 0 : index
    %332 = vector.load %arg9[%c0_26, %c0_27] : memref<1x128xf32, #tpu.memory_space<vmem>>, vector<1x128xf32>
    %333 = vector.broadcast %332 : vector<1x128xf32> to vector<8x128xf32>
    %334 = arith.addf %331, %333 : vector<8x128xf32>
    %cst_28 = arith.constant 0.000000e+00 : f32
    %335 = vector.broadcast %cst_28 : f32 to vector<8x128xf32>
    %336 = arith.maximumf %334, %335 : vector<8x128xf32>
    %c0_29 = arith.constant 0 : index
    %c0_30 = arith.constant 0 : index
    %337 = vector.load %arg10[%c0_29, %c0_30] : memref<128x128xf32, #tpu.memory_space<vmem>>, vector<128x128xf32>
    %cst_31 = arith.constant dense<0.000000e+00> : vector<8x128xf32>
    %338 = tpu.matmul %336, %337, %cst_31 {dimension_numbers = #tpu.dot_dimension_numbers<[1], [0], [0], [1], [0, 0, 1, 1], [], []>} : vector<8x128xf32>, vector<128x128xf32>, vector<8x128xf32> -> vector<8x128xf32>
    %c0_32 = arith.constant 0 : index
    %c0_33 = arith.constant 0 : index
    %339 = vector.load %arg11[%c0_32, %c0_33] : memref<1x128xf32, #tpu.memory_space<vmem>>, vector<1x128xf32>
    %340 = vector.broadcast %339 : vector<1x128xf32> to vector<8x128xf32>
    %341 = arith.addf %338, %340 : vector<8x128xf32>
    %cst_34 = arith.constant 0.000000e+00 : f32
    %342 = vector.broadcast %cst_34 : f32 to vector<8x128xf32>
    %343 = arith.subf %342, %341 : vector<8x128xf32>
    %344 = math.exp %343 : vector<8x128xf32>
    %cst_35 = arith.constant 1.000000e+00 : f32
    %345 = vector.broadcast %cst_35 : f32 to vector<8x128xf32>
    %346 = arith.addf %345, %344 : vector<8x128xf32>
    %347 = tpu.reciprocal %346 {approx = true} : vector<8x128xf32> -> vector<8x128xf32>
    %c0_36 = arith.constant 0 : index
    %c0_37 = arith.constant 0 : index
    %348 = vector.load %arg12[%c0_36, %c0_37] : memref<8x128xf32, #tpu.memory_space<vmem>>, vector<8x128xf32>
    tpu.vector_store %arg12[%c0_36, %c0_37], %347 {strides = array<i32>} : memref<8x128xf32, #tpu.memory_space<vmem>>, vector<8x128xf32>,
    return
  }
  func.func @transform_0(%arg0: i32) -> (i32, i32, i32, i32) {
    %c0_i32 = arith.constant 0 : i32
    %c0_i32_0 = arith.constant 0 : i32
    %c0_i32_1 = arith.constant 0 : i32
    %c0_i32_2 = arith.constant 0 : i32
    return %c0_i32, %c0_i32_0, %arg0, %c0_i32_1 : i32, i32, i32, i32
  }
  func.func @transform_1(%arg0: i32) -> (i32, i32) {
    %c0_i32 = arith.constant 0 : i32
    %c0_i32_0 = arith.constant 0 : i32
    %c0_i32_1 = arith.constant 0 : i32
    return %c0_i32, %c0_i32_0 : i32, i32
  }
  func.func @transform_2(%arg0: i32) -> (i32, i32) {
    %c0_i32 = arith.constant 0 : i32
    %c0_i32_0 = arith.constant 0 : i32
    %c0_i32_1 = arith.constant 0 : i32
    return %c0_i32, %c0_i32_0 : i32, i32
  }
  func.func @transform_3(%arg0: i32) -> (i32, i32) {
    %c0_i32 = arith.constant 0 : i32
    %c0_i32_0 = arith.constant 0 : i32
    %c0_i32_1 = arith.constant 0 : i32
    return %c0_i32, %c0_i32_0 : i32, i32
  }
  func.func @transform_4(%arg0: i32) -> (i32, i32) {
    %c0_i32 = arith.constant 0 : i32
    %c0_i32_0 = arith.constant 0 : i32
    %c0_i32_1 = arith.constant 0 : i32
    return %c0_i32, %c0_i32_0 : i32, i32
  }
  func.func @transform_5(%arg0: i32) -> (i32, i32) {
    %c0_i32 = arith.constant 0 : i32
    %c0_i32_0 = arith.constant 0 : i32
    %c0_i32_1 = arith.constant 0 : i32
    return %c0_i32, %c0_i32_0 : i32, i32
  }
  func.func @transform_6(%arg0: i32) -> (i32, i32) {
    %c0_i32 = arith.constant 0 : i32
    %c0_i32_0 = arith.constant 0 : i32
    %c0_i32_1 = arith.constant 0 : i32
    return %c0_i32, %c0_i32_0 : i32, i32
  }
  func.func @transform_7(%arg0: i32) -> (i32, i32) {
    %c0_i32 = arith.constant 0 : i32
    %c0_i32_0 = arith.constant 0 : i32
    %c0_i32_1 = arith.constant 0 : i32
    return %c0_i32, %c0_i32_0 : i32, i32
  }
  func.func @transform_8(%arg0: i32) -> (i32, i32) {
    %c0_i32 = arith.constant 0 : i32
    %c0_i32_0 = arith.constant 0 : i32
    %c0_i32_1 = arith.constant 0 : i32
    return %c0_i32, %c0_i32_0 : i32, i32
  }
  func.func @transform_9(%arg0: i32) -> (i32, i32) {
    %c0_i32 = arith.constant 0 : i32
    %c0_i32_0 = arith.constant 0 : i32
    %c0_i32_1 = arith.constant 0 : i32
    return %c0_i32, %c0_i32_0 : i32, i32
  }
  func.func @transform_10(%arg0: i32) -> (i32, i32) {
    %c0_i32 = arith.constant 0 : i32
    %c0_i32_0 = arith.constant 0 : i32
    %c0_i32_1 = arith.constant 0 : i32
    return %c0_i32, %c0_i32_0 : i32, i32
  }
  func.func @transform_11(%arg0: i32) -> (i32, i32) {
    %c0_i32 = arith.constant 0 : i32
    %c0_i32_0 = arith.constant 0 : i32
    return %arg0, %c0_i32 : i32, i32
  }
}

</mosaic_0001>

<llo_original>
// kernel: gate_cnn_fashion_forward.1
$region0: #{gate_cnn_fashion_forward.1}
  #allocation0 [shape = 'u32[]', space=smem, size = 0x4, offset = 0x4, fixed_abs, tag = 'smem constant byte address 0x4 - core index']
  #allocation1 [shape = 'u32[144,128]{1,0:T(1,128)}', space=vmem, size = 0x12000, scoped, tag = 'internal scratch']
  %s0 = inlined_call_operand.vmem [shape: f32[16,36,8,25], index: 0, kind: input, shape index: {}]
  %s1 = inlined_call_operand.vmem [shape: bf16[25,128], index: 1, kind: input, shape index: {}]
  %s2 = inlined_call_operand.vmem [shape: f32[1,128], index: 2, kind: input, shape index: {}]
  %s3 = inlined_call_operand.vmem [shape: bf16[3200,128], index: 3, kind: input, shape index: {}]
  %s4 = inlined_call_operand.vmem [shape: f32[1,128], index: 4, kind: input, shape index: {}]
  %s5 = inlined_call_operand.vmem [shape: f32[2048,128], index: 5, kind: input, shape index: {}]
  %s6 = inlined_call_operand.vmem [shape: f32[1,128], index: 6, kind: input, shape index: {}]
  %s7 = inlined_call_operand.vmem [shape: f32[128,128], index: 7, kind: input, shape index: {}]
  %s8 = inlined_call_operand.vmem [shape: f32[1,128], index: 8, kind: input, shape index: {}]
  %s9 = inlined_call_operand.vmem [shape: f32[128,128], index: 9, kind: input, shape index: {}]
  %s10 = inlined_call_operand.vmem [shape: f32[1,128], index: 10, kind: input, shape index: {}]
  %s11 = inlined_call_operand.vmem [shape: f32[8,128], index: 11, kind: output, shape index: {}]
  %s12 = sld [smem:[#allocation0]]
  $region54: #{gate_cnn_fashion_forward.1} parent=0
    _
  %s14 = ssub.s32 1, %s12
  %s15 = scalar_select 0, %s14, %s12
  // Predicated region
  $region2: #{gate_cnn_fashion_forward.1} parent=0 // pred_check
    _
  $region3: #{gate_cnn_fashion_forward.1} parent=0 // pred_check_branch
    %17 = sbr.rel (0) target = $region5
  $region4: #{gate_cnn_fashion_forward.1} parent=0 // pred_region
    _
  $region5: #{gate_cnn_fashion_forward.1} parent=0 // pred_fallthru
    _
  // Predicated region
  $region6: #{gate_cnn_fashion_forward.1} parent=0 // pred_check
    _
  $region7: #{gate_cnn_fashion_forward.1} parent=0 // pred_check_branch
    %19 = sbr.rel (0) target = $region9
  $region8: #{gate_cnn_fashion_forward.1} parent=0 // pred_region
    _
  $region9: #{gate_cnn_fashion_forward.1} parent=0 // pred_fallthru
    _
  // Predicated region
  $region10: #{gate_cnn_fashion_forward.1} parent=0 // pred_check
    _
  $region11: #{gate_cnn_fashion_forward.1} parent=0 // pred_check_branch
    %21 = sbr.rel (0) target = $region13
  $region12: #{gate_cnn_fashion_forward.1} parent=0 // pred_region
    _
  $region13: #{gate_cnn_fashion_forward.1} parent=0 // pred_fallthru
    _
  // Predicated region
  $region14: #{gate_cnn_fashion_forward.1} parent=0 // pred_check
    _
  $region15: #{gate_cnn_fashion_forward.1} parent=0 // pred_check_branch
    %23 = sbr.rel (0) target = $region17
  $region16: #{gate_cnn_fashion_forward.1} parent=0 // pred_region
    _
  $region17: #{gate_cnn_fashion_forward.1} parent=0 // pred_fallthru
    _
  // Predicated region
  $region18: #{gate_cnn_fashion_forward.1} parent=0 // pred_check
    _
  $region19: #{gate_cnn_fashion_forward.1} parent=0 // pred_check_branch
    %25 = sbr.rel (0) target = $region21
  $region20: #{gate_cnn_fashion_forward.1} parent=0 // pred_region
    _
  $region21: #{gate_cnn_fashion_forward.1} parent=0 // pred_fallthru
    _
  // Predicated region
  $region22: #{gate_cnn_fashion_forward.1} parent=0 // pred_check
    _
  $region23: #{gate_cnn_fashion_forward.1} parent=0 // pred_check_branch
    %27 = sbr.rel (0) target = $region25
  $region24: #{gate_cnn_fashion_forward.1} parent=0 // pred_region
    _
  $region25: #{gate_cnn_fashion_forward.1} parent=0 // pred_fallthru
    _
  // Predicated region
  $region26: #{gate_cnn_fashion_forward.1} parent=0 // pred_check
    _
  $region27: #{gate_cnn_fashion_forward.1} parent=0 // pred_check_branch
    %29 = sbr.rel (0) target = $region29
  $region28: #{gate_cnn_fashion_forward.1} parent=0 // pred_region
    _
  $region29: #{gate_cnn_fashion_forward.1} parent=0 // pred_fallthru
    _
  // Predicated region
  $region30: #{gate_cnn_fashion_forward.1} parent=0 // pred_check
    _
  $region31: #{gate_cnn_fashion_forward.1} parent=0 // pred_check_branch
    %31 = sbr.rel (0) target = $region33
  $region32: #{gate_cnn_fashion_forward.1} parent=0 // pred_region
    _
  $region33: #{gate_cnn_fashion_forward.1} parent=0 // pred_fallthru
    _
  // Predicated region
  $region34: #{gate_cnn_fashion_forward.1} parent=0 // pred_check
    _
  $region35: #{gate_cnn_fashion_forward.1} parent=0 // pred_check_branch
    %33 = sbr.rel (0) target = $region37
  $region36: #{gate_cnn_fashion_forward.1} parent=0 // pred_region
    _
  $region37: #{gate_cnn_fashion_forward.1} parent=0 // pred_fallthru
    _
  // Predicated region
  $region38: #{gate_cnn_fashion_forward.1} parent=0 // pred_check
    _
  $region39: #{gate_cnn_fashion_forward.1} parent=0 // pred_check_branch
    %35 = sbr.rel (0) target = $region41
  $region40: #{gate_cnn_fashion_forward.1} parent=0 // pred_region
    _
  $region41: #{gate_cnn_fashion_forward.1} parent=0 // pred_fallthru
    _
  // Predicated region
  $region42: #{gate_cnn_fashion_forward.1} parent=0 // pred_check
    _
  $region43: #{gate_cnn_fashion_forward.1} parent=0 // pred_check_branch
    %37 = sbr.rel (0) target = $region45
  $region44: #{gate_cnn_fashion_forward.1} parent=0 // pred_region
    _
  $region45: #{gate_cnn_fashion_forward.1} parent=0 // pred_fallthru
    _
  %v39 = vld [vmem:[%s0] sm:$0xff]
  %v40 = vld [vmem:[%s0 + $0x8] sm:$0xff]
  %v41 = vld [vmem:[%s0 + $0x10] sm:$0xff]
  %v42 = vld [vmem:[%s0 + $0x18] sm:$0xff]
  %v43 = vld [vmem:[%s0 + $0x20] sm:$0xff]
  %v44 = vld [vmem:[%s0 + $0x28] sm:$0xff]
  %v45 = vld [vmem:[%s0 + $0x30] sm:$0xff]
  %v46 = vld [vmem:[%s0 + $0x38] sm:$0xff]
  %v47 = vld [vmem:[%s0 + $0x40] sm:$0xff]
  %v48 = vld [vmem:[%s0 + $0x48] sm:$0xff]
  %v49 = vld [vmem:[%s0 + $0x50] sm:$0xff]
  %v50 = vld [vmem:[%s0 + $0x58] sm:$0xff]
  %v51 = vld [vmem:[%s0 + $0x60] sm:$0xff]
  %v52 = vld [vmem:[%s0 + $0x68] sm:$0xff]
  %v53 = vld [vmem:[%s0 + $0x70] sm:$0xff]
  %v54 = vld [vmem:[%s0 + $0x78] sm:$0xff]
  %v55 = vld [vmem:[%s0 + $0x80] sm:$0xff]
  %v56 = vld [vmem:[%s0 + $0x88] sm:$0xff]
  %v57 = vld [vmem:[%s0 + $0x90] sm:$0xff]
  %v58 = vld [vmem:[%s0 + $0x98] sm:$0xff]
  %v59 = vld [vmem:[%s0 + $0xa0] sm:$0xff]
  %v60 = vld [vmem:[%s0 + $0xa8] sm:$0xff]
  %v61 = vld [vmem:[%s0 + $0xb0] sm:$0xff]
  %v62 = vld [vmem:[%s0 + $0xb8] sm:$0xff]
  %v63 = vld [vmem:[%s0 + $0xc0] sm:$0xff]
  %v64 = vld [vmem:[%s0 + $0xc8] sm:$0xff]
  %v65 = vld [vmem:[%s0 + $0xd0] sm:$0xff]
  %v66 = vld [vmem:[%s0 + $0xd8] sm:$0xff]
  %v67 = vld [vmem:[%s0 + $0xe0] sm:$0xff]
  %v68 = vld [vmem:[%s0 + $0xe8] sm:$0xff]
  %v69 = vld [vmem:[%s0 + $0xf0] sm:$0xff]
  %v70 = vld [vmem:[%s0 + $0xf8] sm:$0xff]
  %v71 = vld [vmem:[%s0 + $0x100] sm:$0xff]
  %v72 = vld [vmem:[%s0 + $0x108] sm:$0xff]
  %v73 = vld [vmem:[%s0 + $0x110] sm:$0xff]
  %v74 = vld [vmem:[%s0 + $0x118] sm:$0xff]
  %v75 = vld [vmem:[%s0 + $0x120] sm:$0xff]
  %v76 = vld [vmem:[%s0 + $0x128] sm:$0xff]
  %v77 = vld [vmem:[%s0 + $0x130] sm:$0xff]
  %v78 = vld [vmem:[%s0 + $0x138] sm:$0xff]
  %v79 = vld [vmem:[%s0 + $0x140] sm:$0xff]
  %v80 = vld [vmem:[%s0 + $0x148] sm:$0xff]
  %v81 = vld [vmem:[%s0 + $0x150] sm:$0xff]
  %v82 = vld [vmem:[%s0 + $0x158] sm:$0xff]
  %v83 = vld [vmem:[%s0 + $0x160] sm:$0xff]
  %v84 = vld [vmem:[%s0 + $0x168] sm:$0xff]
  %v85 = vld [vmem:[%s0 + $0x170] sm:$0xff]
  %v86 = vld [vmem:[%s0 + $0x178] sm:$0xff]
  %v87 = vld [vmem:[%s0 + $0x180] sm:$0xff]
  %v88 = vld [vmem:[%s0 + $0x188] sm:$0xff]
  %v89 = vld [vmem:[%s0 + $0x190] sm:$0xff]
  %v90 = vld [vmem:[%s0 + $0x198] sm:$0xff]
  %v91 = vld [vmem:[%s0 + $0x1a0] sm:$0xff]
  %v92 = vld [vmem:[%s0 + $0x1a8] sm:$0xff]
  %v93 = vld [vmem:[%s0 + $0x1b0] sm:$0xff]
  %v94 = vld [vmem:[%s0 + $0x1b8] sm:$0xff]
  %v95 = vld [vmem:[%s0 + $0x1c0] sm:$0xff]
  %v96 = vld [vmem:[%s0 + $0x1c8] sm:$0xff]
  %v97 = vld [vmem:[%s0 + $0x1d0] sm:$0xff]
  %v98 = vld [vmem:[%s0 + $0x1d8] sm:$0xff]
  %v99 = vld [vmem:[%s0 + $0x1e0] sm:$0xff]
  %v100 = vld [vmem:[%s0 + $0x1e8] sm:$0xff]
  %v101 = vld [vmem:[%s0 + $0x1f0] sm:$0xff]
  %v102 = vld [vmem:[%s0 + $0x1f8] sm:$0xff]
  %v103 = vld [vmem:[%s0 + $0x200] sm:$0xff]
  %v104 = vld [vmem:[%s0 + $0x208] sm:$0xff]
  %v105 = vld [vmem:[%s0 + $0x210] sm:$0xff]
  %v106 = vld [vmem:[%s0 + $0x218] sm:$0xff]
  %v107 = vld [vmem:[%s0 + $0x220] sm:$0xff]
  %v108 = vld [vmem:[%s0 + $0x228] sm:$0xff]
  %v109 = vld [vmem:[%s0 + $0x230] sm:$0xff]
  %v110 = vld [vmem:[%s0 + $0x238] sm:$0xff]
  %v111 = vld [vmem:[%s0 + $0x240] sm:$0xff]
  %v112 = vld [vmem:[%s0 + $0x248] sm:$0xff]
  %v113 = vld [vmem:[%s0 + $0x250] sm:$0xff]
  %v114 = vld [vmem:[%s0 + $0x258] sm:$0xff]
  %v115 = vld [vmem:[%s0 + $0x260] sm:$0xff]
  %v116 = vld [vmem:[%s0 + $0x268] sm:$0xff]
  %v117 = vld [vmem:[%s0 + $0x270] sm:$0xff]
  %v118 = vld [vmem:[%s0 + $0x278] sm:$0xff]
  %v119 = vld [vmem:[%s0 + $0x280] sm:$0xff]
  %v120 = vld [vmem:[%s0 + $0x288] sm:$0xff]
  %v121 = vld [vmem:[%s0 + $0x290] sm:$0xff]
  %v122 = vld [vmem:[%s0 + $0x298] sm:$0xff]
  %v123 = vld [vmem:[%s0 + $0x2a0] sm:$0xff]
  %v124 = vld [vmem:[%s0 + $0x2a8] sm:$0xff]
  %v125 = vld [vmem:[%s0 + $0x2b0] sm:$0xff]
  %v126 = vld [vmem:[%s0 + $0x2b8] sm:$0xff]
  %v127 = vld [vmem:[%s0 + $0x2c0] sm:$0xff]
  %v128 = vld [vmem:[%s0 + $0x2c8] sm:$0xff]
  %v129 = vld [vmem:[%s0 + $0x2d0] sm:$0xff]
  %v130 = vld [vmem:[%s0 + $0x2d8] sm:$0xff]
  %v131 = vld [vmem:[%s0 + $0x2e0] sm:$0xff]
  %v132 = vld [vmem:[%s0 + $0x2e8] sm:$0xff]
  %v133 = vld [vmem:[%s0 + $0x2f0] sm:$0xff]
  %v134 = vld [vmem:[%s0 + $0x2f8] sm:$0xff]
  %v135 = vld [vmem:[%s0 + $0x300] sm:$0xff]
  %v136 = vld [vmem:[%s0 + $0x308] sm:$0xff]
  %v137 = vld [vmem:[%s0 + $0x310] sm:$0xff]
  %v138 = vld [vmem:[%s0 + $0x318] sm:$0xff]
  %v139 = vld [vmem:[%s0 + $0x320] sm:$0xff]
  %v140 = vld [vmem:[%s0 + $0x328] sm:$0xff]
  %v141 = vld [vmem:[%s0 + $0x330] sm:$0xff]
  %v142 = vld [vmem:[%s0 + $0x338] sm:$0xff]
  %v143 = vld [vmem:[%s0 + $0x340] sm:$0xff]
  %v144 = vld [vmem:[%s0 + $0x348] sm:$0xff]
  %v145 = vld [vmem:[%s0 + $0x350] sm:$0xff]
  %v146 = vld [vmem:[%s0 + $0x358] sm:$0xff]
  %v147 = vld [vmem:[%s0 + $0x360] sm:$0xff]
  %v148 = vld [vmem:[%s0 + $0x368] sm:$0xff]
  %v149 = vld [vmem:[%s0 + $0x370] sm:$0xff]
  %v150 = vld [vmem:[%s0 + $0x378] sm:$0xff]
  %v151 = vld [vmem:[%s0 + $0x380] sm:$0xff]
  %v152 = vld [vmem:[%s0 + $0x388] sm:$0xff]
  %v153 = vld [vmem:[%s0 + $0x390] sm:$0xff]
  %v154 = vld [vmem:[%s0 + $0x398] sm:$0xff]
  %v155 = vld [vmem:[%s0 + $0x3a0] sm:$0xff]
  %v156 = vld [vmem:[%s0 + $0x3a8] sm:$0xff]
  %v157 = vld [vmem:[%s0 + $0x3b0] sm:$0xff]
  %v158 = vld [vmem:[%s0 + $0x3b8] sm:$0xff]
  %v159 = vld [vmem:[%s0 + $0x3c0] sm:$0xff]
  %v160 = vld [vmem:[%s0 + $0x3c8] sm:$0xff]
  %v161 = vld [vmem:[%s0 + $0x3d0] sm:$0xff]
  %v162 = vld [vmem:[%s0 + $0x3d8] sm:$0xff]
  %v163 = vld [vmem:[%s0 + $0x3e0] sm:$0xff]
  %v164 = vld [vmem:[%s0 + $0x3e8] sm:$0xff]
  %v165 = vld [vmem:[%s0 + $0x3f0] sm:$0xff]
  %v166 = vld [vmem:[%s0 + $0x3f8] sm:$0xff]
  %v167 = vld [vmem:[%s0 + $0x400] sm:$0xff]
  %v168 = vld [vmem:[%s0 + $0x408] sm:$0xff]
  %v169 = vld [vmem:[%s0 + $0x410] sm:$0xff]
  %v170 = vld [vmem:[%s0 + $0x418] sm:$0xff]
  %v171 = vld [vmem:[%s0 + $0x420] sm:$0xff]
  %v172 = vld [vmem:[%s0 + $0x428] sm:$0xff]
  %v173 = vld [vmem:[%s0 + $0x430] sm:$0xff]
  %v174 = vld [vmem:[%s0 + $0x438] sm:$0xff]
  %v175 = vld [vmem:[%s0 + $0x440] sm:$0xff]
  %v176 = vld [vmem:[%s0 + $0x448] sm:$0xff]
  %v177 = vld [vmem:[%s0 + $0x450] sm:$0xff]
  %v178 = vld [vmem:[%s0 + $0x458] sm:$0xff]
  %v179 = vld [vmem:[%s0 + $0x460] sm:$0xff]
  %v180 = vld [vmem:[%s0 + $0x468] sm:$0xff]
  %v181 = vld [vmem:[%s0 + $0x470] sm:$0xff]
  %v182 = vld [vmem:[%s0 + $0x478] sm:$0xff]
  %v183 = vld [vmem:[%s0 + $0x480] sm:$0xff]
  %v184 = vld [vmem:[%s0 + $0x488] sm:$0xff]
  %v185 = vld [vmem:[%s0 + $0x490] sm:$0xff]
  %v186 = vld [vmem:[%s0 + $0x498] sm:$0xff]
  %v187 = vld [vmem:[%s0 + $0x4a0] sm:$0xff]
  %v188 = vld [vmem:[%s0 + $0x4a8] sm:$0xff]
  %v189 = vld [vmem:[%s0 + $0x4b0] sm:$0xff]
  %v190 = vld [vmem:[%s0 + $0x4b8] sm:$0xff]
  %v191 = vld [vmem:[%s0 + $0x4c0] sm:$0xff]
  %v192 = vld [vmem:[%s0 + $0x4c8] sm:$0xff]
  %v193 = vld [vmem:[%s0 + $0x4d0] sm:$0xff]
  %v194 = vld [vmem:[%s0 + $0x4d8] sm:$0xff]
  %v195 = vld [vmem:[%s0 + $0x4e0] sm:$0xff]
  %v196 = vld [vmem:[%s0 + $0x4e8] sm:$0xff]
  %v197 = vld [vmem:[%s0 + $0x4f0] sm:$0xff]
  %v198 = vld [vmem:[%s0 + $0x4f8] sm:$0xff]
  %v199 = vld [vmem:[%s0 + $0x500] sm:$0xff]
  %v200 = vld [vmem:[%s0 + $0x508] sm:$0xff]
  %v201 = vld [vmem:[%s0 + $0x510] sm:$0xff]
  %v202 = vld [vmem:[%s0 + $0x518] sm:$0xff]
  %v203 = vld [vmem:[%s0 + $0x520] sm:$0xff]
  %v204 = vld [vmem:[%s0 + $0x528] sm:$0xff]
  %v205 = vld [vmem:[%s0 + $0x530] sm:$0xff]
  %v206 = vld [vmem:[%s0 + $0x538] sm:$0xff]
  %v207 = vld [vmem:[%s0 + $0x540] sm:$0xff]
  %v208 = vld [vmem:[%s0 + $0x548] sm:$0xff]
  %v209 = vld [vmem:[%s0 + $0x550] sm:$0xff]
  %v210 = vld [vmem:[%s0 + $0x558] sm:$0xff]
  %v211 = vld [vmem:[%s0 + $0x560] sm:$0xff]
  %v212 = vld [vmem:[%s0 + $0x568] sm:$0xff]
  %v213 = vld [vmem:[%s0 + $0x570] sm:$0xff]
  %v214 = vld [vmem:[%s0 + $0x578] sm:$0xff]
  %v215 = vld [vmem:[%s0 + $0x580] sm:$0xff]
  %v216 = vld [vmem:[%s0 + $0x588] sm:$0xff]
  %v217 = vld [vmem:[%s0 + $0x590] sm:$0xff]
  %v218 = vld [vmem:[%s0 + $0x598] sm:$0xff]
  %v219 = vld [vmem:[%s0 + $0x5a0] sm:$0xff]
  %v220 = vld [vmem:[%s0 + $0x5a8] sm:$0xff]
  %v221 = vld [vmem:[%s0 + $0x5b0] sm:$0xff]
  %v222 = vld [vmem:[%s0 + $0x5b8] sm:$0xff]
  %v223 = vld [vmem:[%s0 + $0x5c0] sm:$0xff]
  %v224 = vld [vmem:[%s0 + $0x5c8] sm:$0xff]
  %v225 = vld [vmem:[%s0 + $0x5d0] sm:$0xff]
  %v226 = vld [vmem:[%s0 + $0x5d8] sm:$0xff]
  %v227 = vld [vmem:[%s0 + $0x5e0] sm:$0xff]
  %v228 = vld [vmem:[%s0 + $0x5e8] sm:$0xff]
  %v229 = vld [vmem:[%s0 + $0x5f0] sm:$0xff]
  %v230 = vld [vmem:[%s0 + $0x5f8] sm:$0xff]
  %v231 = vld [vmem:[%s0 + $0x600] sm:$0xff]
  %v232 = vld [vmem:[%s0 + $0x608] sm:$0xff]
  %v233 = vld [vmem:[%s0 + $0x610] sm:$0xff]
  %v234 = vld [vmem:[%s0 + $0x618] sm:$0xff]
  %v235 = vld [vmem:[%s0 + $0x620] sm:$0xff]
  %v236 = vld [vmem:[%s0 + $0x628] sm:$0xff]
  %v237 = vld [vmem:[%s0 + $0x630] sm:$0xff]
  %v238 = vld [vmem:[%s0 + $0x638] sm:$0xff]
  %v239 = vld [vmem:[%s0 + $0x640] sm:$0xff]
  %v240 = vld [vmem:[%s0 + $0x648] sm:$0xff]
  %v241 = vld [vmem:[%s0 + $0x650] sm:$0xff]
  %v242 = vld [vmem:[%s0 + $0x658] sm:$0xff]
  %v243 = vld [vmem:[%s0 + $0x660] sm:$0xff]
  %v244 = vld [vmem:[%s0 + $0x668] sm:$0xff]
  %v245 = vld [vmem:[%s0 + $0x670] sm:$0xff]
  %v246 = vld [vmem:[%s0 + $0x678] sm:$0xff]
  %v247 = vld [vmem:[%s0 + $0x680] sm:$0xff]
  %v248 = vld [vmem:[%s0 + $0x688] sm:$0xff]
  %v249 = vld [vmem:[%s0 + $0x690] sm:$0xff]
  %v250 = vld [vmem:[%s0 + $0x698] sm:$0xff]
  %v251 = vld [vmem:[%s0 + $0x6a0] sm:$0xff]
  %v252 = vld [vmem:[%s0 + $0x6a8] sm:$0xff]
  %v253 = vld [vmem:[%s0 + $0x6b0] sm:$0xff]
  %v254 = vld [vmem:[%s0 + $0x6b8] sm:$0xff]
  %v255 = vld [vmem:[%s0 + $0x6c0] sm:$0xff]
  %v256 = vld [vmem:[%s0 + $0x6c8] sm:$0xff]
  %v257 = vld [vmem:[%s0 + $0x6d0] sm:$0xff]
  %v258 = vld [vmem:[%s0 + $0x6d8] sm:$0xff]
  %v259 = vld [vmem:[%s0 + $0x6e0] sm:$0xff]
  %v260 = vld [vmem:[%s0 + $0x6e8] sm:$0xff]
  %v261 = vld [vmem:[%s0 + $0x6f0] sm:$0xff]
  %v262 = vld [vmem:[%s0 + $0x6f8] sm:$0xff]
  %v263 = vld [vmem:[%s0 + $0x700] sm:$0xff]
  %v264 = vld [vmem:[%s0 + $0x708] sm:$0xff]
  %v265 = vld [vmem:[%s0 + $0x710] sm:$0xff]
  %v266 = vld [vmem:[%s0 + $0x718] sm:$0xff]
  %v267 = vld [vmem:[%s0 + $0x720] sm:$0xff]
  %v268 = vld [vmem:[%s0 + $0x728] sm:$0xff]
  %v269 = vld [vmem:[%s0 + $0x730] sm:$0xff]
  %v270 = vld [vmem:[%s0 + $0x738] sm:$0xff]
  %v271 = vld [vmem:[%s0 + $0x740] sm:$0xff]
  %v272 = vld [vmem:[%s0 + $0x748] sm:$0xff]
  %v273 = vld [vmem:[%s0 + $0x750] sm:$0xff]
  %v274 = vld [vmem:[%s0 + $0x758] sm:$0xff]
  %v275 = vld [vmem:[%s0 + $0x760] sm:$0xff]
  %v276 = vld [vmem:[%s0 + $0x768] sm:$0xff]
  %v277 = vld [vmem:[%s0 + $0x770] sm:$0xff]
  %v278 = vld [vmem:[%s0 + $0x778] sm:$0xff]
  %v279 = vld [vmem:[%s0 + $0x780] sm:$0xff]
  %v280 = vld [vmem:[%s0 + $0x788] sm:$0xff]
  %v281 = vld [vmem:[%s0 + $0x790] sm:$0xff]
  %v282 = vld [vmem:[%s0 + $0x798] sm:$0xff]
  %v283 = vld [vmem:[%s0 + $0x7a0] sm:$0xff]
  %v284 = vld [vmem:[%s0 + $0x7a8] sm:$0xff]
  %v285 = vld [vmem:[%s0 + $0x7b0] sm:$0xff]
  %v286 = vld [vmem:[%s0 + $0x7b8] sm:$0xff]
  %v287 = vld [vmem:[%s0 + $0x7c0] sm:$0xff]
  %v288 = vld [vmem:[%s0 + $0x7c8] sm:$0xff]
  %v289 = vld [vmem:[%s0 + $0x7d0] sm:$0xff]
  %v290 = vld [vmem:[%s0 + $0x7d8] sm:$0xff]
  %v291 = vld [vmem:[%s0 + $0x7e0] sm:$0xff]
  %v292 = vld [vmem:[%s0 + $0x7e8] sm:$0xff]
  %v293 = vld [vmem:[%s0 + $0x7f0] sm:$0xff]
  %v294 = vld [vmem:[%s0 + $0x7f8] sm:$0xff]
  %v295 = vld [vmem:[%s0 + $0x800] sm:$0xff]
  %v296 = vld [vmem:[%s0 + $0x808] sm:$0xff]
  %v297 = vld [vmem:[%s0 + $0x810] sm:$0xff]
  %v298 = vld [vmem:[%s0 + $0x818] sm:$0xff]
  %v299 = vld [vmem:[%s0 + $0x820] sm:$0xff]
  %v300 = vld [vmem:[%s0 + $0x828] sm:$0xff]
  %v301 = vld [vmem:[%s0 + $0x830] sm:$0xff]
  %v302 = vld [vmem:[%s0 + $0x838] sm:$0xff]
  %v303 = vld [vmem:[%s0 + $0x840] sm:$0xff]
  %v304 = vld [vmem:[%s0 + $0x848] sm:$0xff]
  %v305 = vld [vmem:[%s0 + $0x850] sm:$0xff]
  %v306 = vld [vmem:[%s0 + $0x858] sm:$0xff]
  %v307 = vld [vmem:[%s0 + $0x860] sm:$0xff]
  %v308 = vld [vmem:[%s0 + $0x868] sm:$0xff]
  %v309 = vld [vmem:[%s0 + $0x870] sm:$0xff]
  %v310 = vld [vmem:[%s0 + $0x878] sm:$0xff]
  %v311 = vld [vmem:[%s0 + $0x880] sm:$0xff]
  %v312 = vld [vmem:[%s0 + $0x888] sm:$0xff]
  %v313 = vld [vmem:[%s0 + $0x890] sm:$0xff]
  %v314 = vld [vmem:[%s0 + $0x898] sm:$0xff]
  %v315 = vld [vmem:[%s0 + $0x8a0] sm:$0xff]
  %v316 = vld [vmem:[%s0 + $0x8a8] sm:$0xff]
  %v317 = vld [vmem:[%s0 + $0x8b0] sm:$0xff]
  %v318 = vld [vmem:[%s0 + $0x8b8] sm:$0xff]
  %v319 = vld [vmem:[%s0 + $0x8c0] sm:$0xff]
  %v320 = vld [vmem:[%s0 + $0x8c8] sm:$0xff]
  %v321 = vld [vmem:[%s0 + $0x8d0] sm:$0xff]
  %v322 = vld [vmem:[%s0 + $0x8d8] sm:$0xff]
  %v323 = vld [vmem:[%s0 + $0x8e0] sm:$0xff]
  %v324 = vld [vmem:[%s0 + $0x8e8] sm:$0xff]
  %v325 = vld [vmem:[%s0 + $0x8f0] sm:$0xff]
  %v326 = vld [vmem:[%s0 + $0x8f8] sm:$0xff]
  %v327 = vld [vmem:[%s0 + $0x900] sm:$0xff]
  %v328 = vld [vmem:[%s0 + $0x908] sm:$0xff]
  %v329 = vld [vmem:[%s0 + $0x910] sm:$0xff]
  %v330 = vld [vmem:[%s0 + $0x918] sm:$0xff]
  %v331 = vld [vmem:[%s0 + $0x920] sm:$0xff]
  %v332 = vld [vmem:[%s0 + $0x928] sm:$0xff]
  %v333 = vld [vmem:[%s0 + $0x930] sm:$0xff]
  %v334 = vld [vmem:[%s0 + $0x938] sm:$0xff]
  %v335 = vld [vmem:[%s0 + $0x940] sm:$0xff]
  %v336 = vld [vmem:[%s0 + $0x948] sm:$0xff]
  %v337 = vld [vmem:[%s0 + $0x950] sm:$0xff]
  %v338 = vld [vmem:[%s0 + $0x958] sm:$0xff]
  %v339 = vld [vmem:[%s0 + $0x960] sm:$0xff]
  %v340 = vld [vmem:[%s0 + $0x968] sm:$0xff]
  %v341 = vld [vmem:[%s0 + $0x970] sm:$0xff]
  %v342 = vld [vmem:[%s0 + $0x978] sm:$0xff]
  %v343 = vld [vmem:[%s0 + $0x980] sm:$0xff]
  %v344 = vld [vmem:[%s0 + $0x988] sm:$0xff]
  %v345 = vld [vmem:[%s0 + $0x990] sm:$0xff]
  %v346 = vld [vmem:[%s0 + $0x998] sm:$0xff]
  %v347 = vld [vmem:[%s0 + $0x9a0] sm:$0xff]
  %v348 = vld [vmem:[%s0 + $0x9a8] sm:$0xff]
  %v349 = vld [vmem:[%s0 + $0x9b0] sm:$0xff]
  %v350 = vld [vmem:[%s0 + $0x9b8] sm:$0xff]
  %v351 = vld [vmem:[%s0 + $0x9c0] sm:$0xff]
  %v352 = vld [vmem:[%s0 + $0x9c8] sm:$0xff]
  %v353 = vld [vmem:[%s0 + $0x9d0] sm:$0xff]
  %v354 = vld [vmem:[%s0 + $0x9d8] sm:$0xff]
  %v355 = vld [vmem:[%s0 + $0x9e0] sm:$0xff]
  %v356 = vld [vmem:[%s0 + $0x9e8] sm:$0xff]
  %v357 = vld [vmem:[%s0 + $0x9f0] sm:$0xff]
  %v358 = vld [vmem:[%s0 + $0x9f8] sm:$0xff]
  %v359 = vld [vmem:[%s0 + $0xa00] sm:$0xff]
  %v360 = vld [vmem:[%s0 + $0xa08] sm:$0xff]
  %v361 = vld [vmem:[%s0 + $0xa10] sm:$0xff]
  %v362 = vld [vmem:[%s0 + $0xa18] sm:$0xff]
  %v363 = vld [vmem:[%s0 + $0xa20] sm:$0xff]
  %v364 = vld [vmem:[%s0 + $0xa28] sm:$0xff]
  %v365 = vld [vmem:[%s0 + $0xa30] sm:$0xff]
  %v366 = vld [vmem:[%s0 + $0xa38] sm:$0xff]
  %v367 = vld [vmem:[%s0 + $0xa40] sm:$0xff]
  %v368 = vld [vmem:[%s0 + $0xa48] sm:$0xff]
  %v369 = vld [vmem:[%s0 + $0xa50] sm:$0xff]
  %v370 = vld [vmem:[%s0 + $0xa58] sm:$0xff]
  %v371 = vld [vmem:[%s0 + $0xa60] sm:$0xff]
  %v372 = vld [vmem:[%s0 + $0xa68] sm:$0xff]
  %v373 = vld [vmem:[%s0 + $0xa70] sm:$0xff]
  %v374 = vld [vmem:[%s0 + $0xa78] sm:$0xff]
  %v375 = vld [vmem:[%s0 + $0xa80] sm:$0xff]
  %v376 = vld [vmem:[%s0 + $0xa88] sm:$0xff]
  %v377 = vld [vmem:[%s0 + $0xa90] sm:$0xff]
  %v378 = vld [vmem:[%s0 + $0xa98] sm:$0xff]
  %v379 = vld [vmem:[%s0 + $0xaa0] sm:$0xff]
  %v380 = vld [vmem:[%s0 + $0xaa8] sm:$0xff]
  %v381 = vld [vmem:[%s0 + $0xab0] sm:$0xff]
  %v382 = vld [vmem:[%s0 + $0xab8] sm:$0xff]
  %v383 = vld [vmem:[%s0 + $0xac0] sm:$0xff]
  %v384 = vld [vmem:[%s0 + $0xac8] sm:$0xff]
  %v385 = vld [vmem:[%s0 + $0xad0] sm:$0xff]
  %v386 = vld [vmem:[%s0 + $0xad8] sm:$0xff]
  %v387 = vld [vmem:[%s0 + $0xae0] sm:$0xff]
  %v388 = vld [vmem:[%s0 + $0xae8] sm:$0xff]
  %v389 = vld [vmem:[%s0 + $0xaf0] sm:$0xff]
  %v390 = vld [vmem:[%s0 + $0xaf8] sm:$0xff]
  %v391 = vld [vmem:[%s0 + $0xb00] sm:$0xff]
  %v392 = vld [vmem:[%s0 + $0xb08] sm:$0xff]
  %v393 = vld [vmem:[%s0 + $0xb10] sm:$0xff]
  %v394 = vld [vmem:[%s0 + $0xb18] sm:$0xff]
  %v395 = vld [vmem:[%s0 + $0xb20] sm:$0xff]
  %v396 = vld [vmem:[%s0 + $0xb28] sm:$0xff]
  %v397 = vld [vmem:[%s0 + $0xb30] sm:$0xff]
  %v398 = vld [vmem:[%s0 + $0xb38] sm:$0xff]
  %v399 = vld [vmem:[%s0 + $0xb40] sm:$0xff]
  %v400 = vld [vmem:[%s0 + $0xb48] sm:$0xff]
  %v401 = vld [vmem:[%s0 + $0xb50] sm:$0xff]
  %v402 = vld [vmem:[%s0 + $0xb58] sm:$0xff]
  %v403 = vld [vmem:[%s0 + $0xb60] sm:$0xff]
  %v404 = vld [vmem:[%s0 + $0xb68] sm:$0xff]
  %v405 = vld [vmem:[%s0 + $0xb70] sm:$0xff]
  %v406 = vld [vmem:[%s0 + $0xb78] sm:$0xff]
  %v407 = vld [vmem:[%s0 + $0xb80] sm:$0xff]
  %v408 = vld [vmem:[%s0 + $0xb88] sm:$0xff]
  %v409 = vld [vmem:[%s0 + $0xb90] sm:$0xff]
  %v410 = vld [vmem:[%s0 + $0xb98] sm:$0xff]
  %v411 = vld [vmem:[%s0 + $0xba0] sm:$0xff]
  %v412 = vld [vmem:[%s0 + $0xba8] sm:$0xff]
  %v413 = vld [vmem:[%s0 + $0xbb0] sm:$0xff]
  %v414 = vld [vmem:[%s0 + $0xbb8] sm:$0xff]
  %v415 = vld [vmem:[%s0 + $0xbc0] sm:$0xff]
  %v416 = vld [vmem:[%s0 + $0xbc8] sm:$0xff]
  %v417 = vld [vmem:[%s0 + $0xbd0] sm:$0xff]
  %v418 = vld [vmem:[%s0 + $0xbd8] sm:$0xff]
  %v419 = vld [vmem:[%s0 + $0xbe0] sm:$0xff]
  %v420 = vld [vmem:[%s0 + $0xbe8] sm:$0xff]
  %v421 = vld [vmem:[%s0 + $0xbf0] sm:$0xff]
  %v422 = vld [vmem:[%s0 + $0xbf8] sm:$0xff]
  %v423 = vld [vmem:[%s0 + $0xc00] sm:$0xff]
  %v424 = vld [vmem:[%s0 + $0xc08] sm:$0xff]
  %v425 = vld [vmem:[%s0 + $0xc10] sm:$0xff]
  %v426 = vld [vmem:[%s0 + $0xc18] sm:$0xff]
  %v427 = vld [vmem:[%s0 + $0xc20] sm:$0xff]
  %v428 = vld [vmem:[%s0 + $0xc28] sm:$0xff]
  %v429 = vld [vmem:[%s0 + $0xc30] sm:$0xff]
  %v430 = vld [vmem:[%s0 + $0xc38] sm:$0xff]
  %v431 = vld [vmem:[%s0 + $0xc40] sm:$0xff]
  %v432 = vld [vmem:[%s0 + $0xc48] sm:$0xff]
  %v433 = vld [vmem:[%s0 + $0xc50] sm:$0xff]
  %v434 = vld [vmem:[%s0 + $0xc58] sm:$0xff]
  %v435 = vld [vmem:[%s0 + $0xc60] sm:$0xff]
  %v436 = vld [vmem:[%s0 + $0xc68] sm:$0xff]
  %v437 = vld [vmem:[%s0 + $0xc70] sm:$0xff]
  %v438 = vld [vmem:[%s0 + $0xc78] sm:$0xff]
  %v439 = vld [vmem:[%s0 + $0xc80] sm:$0xff]
  %v440 = vld [vmem:[%s0 + $0xc88] sm:$0xff]
  %v441 = vld [vmem:[%s0 + $0xc90] sm:$0xff]
  %v442 = vld [vmem:[%s0 + $0xc98] sm:$0xff]
  %v443 = vld [vmem:[%s0 + $0xca0] sm:$0xff]
  %v444 = vld [vmem:[%s0 + $0xca8] sm:$0xff]
  %v445 = vld [vmem:[%s0 + $0xcb0] sm:$0xff]
  %v446 = vld [vmem:[%s0 + $0xcb8] sm:$0xff]
  %v447 = vld [vmem:[%s0 + $0xcc0] sm:$0xff]
  %v448 = vld [vmem:[%s0 + $0xcc8] sm:$0xff]
  %v449 = vld [vmem:[%s0 + $0xcd0] sm:$0xff]
  %v450 = vld [vmem:[%s0 + $0xcd8] sm:$0xff]
  %v451 = vld [vmem:[%s0 + $0xce0] sm:$0xff]
  %v452 = vld [vmem:[%s0 + $0xce8] sm:$0xff]
  %v453 = vld [vmem:[%s0 + $0xcf0] sm:$0xff]
  %v454 = vld [vmem:[%s0 + $0xcf8] sm:$0xff]
  %v455 = vld [vmem:[%s0 + $0xd00] sm:$0xff]
  %v456 = vld [vmem:[%s0 + $0xd08] sm:$0xff]
  %v457 = vld [vmem:[%s0 + $0xd10] sm:$0xff]
  %v458 = vld [vmem:[%s0 + $0xd18] sm:$0xff]
  %v459 = vld [vmem:[%s0 + $0xd20] sm:$0xff]
  %v460 = vld [vmem:[%s0 + $0xd28] sm:$0xff]
  %v461 = vld [vmem:[%s0 + $0xd30] sm:$0xff]
  %v462 = vld [vmem:[%s0 + $0xd38] sm:$0xff]
  %v463 = vld [vmem:[%s0 + $0xd40] sm:$0xff]
  %v464 = vld [vmem:[%s0 + $0xd48] sm:$0xff]
  %v465 = vld [vmem:[%s0 + $0xd50] sm:$0xff]
  %v466 = vld [vmem:[%s0 + $0xd58] sm:$0xff]
  %v467 = vld [vmem:[%s0 + $0xd60] sm:$0xff]
  %v468 = vld [vmem:[%s0 + $0xd68] sm:$0xff]
  %v469 = vld [vmem:[%s0 + $0xd70] sm:$0xff]
  %v470 = vld [vmem:[%s0 + $0xd78] sm:$0xff]
  %v471 = vld [vmem:[%s0 + $0xd80] sm:$0xff]
  %v472 = vld [vmem:[%s0 + $0xd88] sm:$0xff]
  %v473 = vld [vmem:[%s0 + $0xd90] sm:$0xff]
  %v474 = vld [vmem:[%s0 + $0xd98] sm:$0xff]
  %v475 = vld [vmem:[%s0 + $0xda0] sm:$0xff]
  %v476 = vld [vmem:[%s0 + $0xda8] sm:$0xff]
  %v477 = vld [vmem:[%s0 + $0xdb0] sm:$0xff]
  %v478 = vld [vmem:[%s0 + $0xdb8] sm:$0xff]
  %v479 = vld [vmem:[%s0 + $0xdc0] sm:$0xff]
  %v480 = vld [vmem:[%s0 + $0xdc8] sm:$0xff]
  %v481 = vld [vmem:[%s0 + $0xdd0] sm:$0xff]
  %v482 = vld [vmem:[%s0 + $0xdd8] sm:$0xff]
  %v483 = vld [vmem:[%s0 + $0xde0] sm:$0xff]
  %v484 = vld [vmem:[%s0 + $0xde8] sm:$0xff]
  %v485 = vld [vmem:[%s0 + $0xdf0] sm:$0xff]
  %v486 = vld [vmem:[%s0 + $0xdf8] sm:$0xff]
  %v487 = vld [vmem:[%s0 + $0xe00] sm:$0xff]
  %v488 = vld [vmem:[%s0 + $0xe08] sm:$0xff]
  %v489 = vld [vmem:[%s0 + $0xe10] sm:$0xff]
  %v490 = vld [vmem:[%s0 + $0xe18] sm:$0xff]
  %v491 = vld [vmem:[%s0 + $0xe20] sm:$0xff]
  %v492 = vld [vmem:[%s0 + $0xe28] sm:$0xff]
  %v493 = vld [vmem:[%s0 + $0xe30] sm:$0xff]
  %v494 = vld [vmem:[%s0 + $0xe38] sm:$0xff]
  %v495 = vld [vmem:[%s0 + $0xe40] sm:$0xff]
  %v496 = vld [vmem:[%s0 + $0xe48] sm:$0xff]
  %v497 = vld [vmem:[%s0 + $0xe50] sm:$0xff]
  %v498 = vld [vmem:[%s0 + $0xe58] sm:$0xff]
  %v499 = vld [vmem:[%s0 + $0xe60] sm:$0xff]
  %v500 = vld [vmem:[%s0 + $0xe68] sm:$0xff]
  %v501 = vld [vmem:[%s0 + $0xe70] sm:$0xff]
  %v502 = vld [vmem:[%s0 + $0xe78] sm:$0xff]
  %v503 = vld [vmem:[%s0 + $0xe80] sm:$0xff]
  %v504 = vld [vmem:[%s0 + $0xe88] sm:$0xff]
  %v505 = vld [vmem:[%s0 + $0xe90] sm:$0xff]
  %v506 = vld [vmem:[%s0 + $0xe98] sm:$0xff]
  %v507 = vld [vmem:[%s0 + $0xea0] sm:$0xff]
  %v508 = vld [vmem:[%s0 + $0xea8] sm:$0xff]
  %v509 = vld [vmem:[%s0 + $0xeb0] sm:$0xff]
  %v510 = vld [vmem:[%s0 + $0xeb8] sm:$0xff]
  %v511 = vld [vmem:[%s0 + $0xec0] sm:$0xff]
  %v512 = vld [vmem:[%s0 + $0xec8] sm:$0xff]
  %v513 = vld [vmem:[%s0 + $0xed0] sm:$0xff]
  %v514 = vld [vmem:[%s0 + $0xed8] sm:$0xff]
  %v515 = vld [vmem:[%s0 + $0xee0] sm:$0xff]
  %v516 = vld [vmem:[%s0 + $0xee8] sm:$0xff]
  %v517 = vld [vmem:[%s0 + $0xef0] sm:$0xff]
  %v518 = vld [vmem:[%s0 + $0xef8] sm:$0xff]
  %v519 = vld [vmem:[%s0 + $0xf00] sm:$0xff]
  %v520 = vld [vmem:[%s0 + $0xf08] sm:$0xff]
  %v521 = vld [vmem:[%s0 + $0xf10] sm:$0xff]
  %v522 = vld [vmem:[%s0 + $0xf18] sm:$0xff]
  %v523 = vld [vmem:[%s0 + $0xf20] sm:$0xff]
  %v524 = vld [vmem:[%s0 + $0xf28] sm:$0xff]
  %v525 = vld [vmem:[%s0 + $0xf30] sm:$0xff]
  %v526 = vld [vmem:[%s0 + $0xf38] sm:$0xff]
  %v527 = vld [vmem:[%s0 + $0xf40] sm:$0xff]
  %v528 = vld [vmem:[%s0 + $0xf48] sm:$0xff]
  %v529 = vld [vmem:[%s0 + $0xf50] sm:$0xff]
  %v530 = vld [vmem:[%s0 + $0xf58] sm:$0xff]
  %v531 = vld [vmem:[%s0 + $0xf60] sm:$0xff]
  %v532 = vld [vmem:[%s0 + $0xf68] sm:$0xff]
  %v533 = vld [vmem:[%s0 + $0xf70] sm:$0xff]
  %v534 = vld [vmem:[%s0 + $0xf78] sm:$0xff]
  %v535 = vld [vmem:[%s0 + $0xf80] sm:$0xff]
  %v536 = vld [vmem:[%s0 + $0xf88] sm:$0xff]
  %v537 = vld [vmem:[%s0 + $0xf90] sm:$0xff]
  %v538 = vld [vmem:[%s0 + $0xf98] sm:$0xff]
  %v539 = vld [vmem:[%s0 + $0xfa0] sm:$0xff]
  %v540 = vld [vmem:[%s0 + $0xfa8] sm:$0xff]
  %v541 = vld [vmem:[%s0 + $0xfb0] sm:$0xff]
  %v542 = vld [vmem:[%s0 + $0xfb8] sm:$0xff]
  %v543 = vld [vmem:[%s0 + $0xfc0] sm:$0xff]
  %v544 = vld [vmem:[%s0 + $0xfc8] sm:$0xff]
  %v545 = vld [vmem:[%s0 + $0xfd0] sm:$0xff]
  %v546 = vld [vmem:[%s0 + $0xfd8] sm:$0xff]
  %v547 = vld [vmem:[%s0 + $0xfe0] sm:$0xff]
  %v548 = vld [vmem:[%s0 + $0xfe8] sm:$0xff]
  %v549 = vld [vmem:[%s0 + $0xff0] sm:$0xff]
  %v550 = vld [vmem:[%s0 + $0xff8] sm:$0xff]
  %v551 = vld [vmem:[%s0 + $0x1000] sm:$0xff]
  %v552 = vld [vmem:[%s0 + $0x1008] sm:$0xff]
  %v553 = vld [vmem:[%s0 + $0x1010] sm:$0xff]
  %v554 = vld [vmem:[%s0 + $0x1018] sm:$0xff]
  %v555 = vld [vmem:[%s0 + $0x1020] sm:$0xff]
  %v556 = vld [vmem:[%s0 + $0x1028] sm:$0xff]
  %v557 = vld [vmem:[%s0 + $0x1030] sm:$0xff]
  %v558 = vld [vmem:[%s0 + $0x1038] sm:$0xff]
  %v559 = vld [vmem:[%s0 + $0x1040] sm:$0xff]
  %v560 = vld [vmem:[%s0 + $0x1048] sm:$0xff]
  %v561 = vld [vmem:[%s0 + $0x1050] sm:$0xff]
  %v562 = vld [vmem:[%s0 + $0x1058] sm:$0xff]
  %v563 = vld [vmem:[%s0 + $0x1060] sm:$0xff]
  %v564 = vld [vmem:[%s0 + $0x1068] sm:$0xff]
  %v565 = vld [vmem:[%s0 + $0x1070] sm:$0xff]
  %v566 = vld [vmem:[%s0 + $0x1078] sm:$0xff]
  %v567 = vld [vmem:[%s0 + $0x1080] sm:$0xff]
  %v568 = vld [vmem:[%s0 + $0x1088] sm:$0xff]
  %v569 = vld [vmem:[%s0 + $0x1090] sm:$0xff]
  %v570 = vld [vmem:[%s0 + $0x1098] sm:$0xff]
  %v571 = vld [vmem:[%s0 + $0x10a0] sm:$0xff]
  %v572 = vld [vmem:[%s0 + $0x10a8] sm:$0xff]
  %v573 = vld [vmem:[%s0 + $0x10b0] sm:$0xff]
  %v574 = vld [vmem:[%s0 + $0x10b8] sm:$0xff]
  %v575 = vld [vmem:[%s0 + $0x10c0] sm:$0xff]
  %v576 = vld [vmem:[%s0 + $0x10c8] sm:$0xff]
  %v577 = vld [vmem:[%s0 + $0x10d0] sm:$0xff]
  %v578 = vld [vmem:[%s0 + $0x10d8] sm:$0xff]
  %v579 = vld [vmem:[%s0 + $0x10e0] sm:$0xff]
  %v580 = vld [vmem:[%s0 + $0x10e8] sm:$0xff]
  %v581 = vld [vmem:[%s0 + $0x10f0] sm:$0xff]
  %v582 = vld [vmem:[%s0 + $0x10f8] sm:$0xff]
  %v583 = vld [vmem:[%s0 + $0x1100] sm:$0xff]
  %v584 = vld [vmem:[%s0 + $0x1108] sm:$0xff]
  %v585 = vld [vmem:[%s0 + $0x1110] sm:$0xff]
  %v586 = vld [vmem:[%s0 + $0x1118] sm:$0xff]
  %v587 = vld [vmem:[%s0 + $0x1120] sm:$0xff]
  %v588 = vld [vmem:[%s0 + $0x1128] sm:$0xff]
  %v589 = vld [vmem:[%s0 + $0x1130] sm:$0xff]
  %v590 = vld [vmem:[%s0 + $0x1138] sm:$0xff]
  %v591 = vld [vmem:[%s0 + $0x1140] sm:$0xff]
  %v592 = vld [vmem:[%s0 + $0x1148] sm:$0xff]
  %v593 = vld [vmem:[%s0 + $0x1150] sm:$0xff]
  %v594 = vld [vmem:[%s0 + $0x1158] sm:$0xff]
  %v595 = vld [vmem:[%s0 + $0x1160] sm:$0xff]
  %v596 = vld [vmem:[%s0 + $0x1168] sm:$0xff]
  %v597 = vld [vmem:[%s0 + $0x1170] sm:$0xff]
  %v598 = vld [vmem:[%s0 + $0x1178] sm:$0xff]
  %v599 = vld [vmem:[%s0 + $0x1180] sm:$0xff]
  %v600 = vld [vmem:[%s0 + $0x1188] sm:$0xff]
  %v601 = vld [vmem:[%s0 + $0x1190] sm:$0xff]
  %v602 = vld [vmem:[%s0 + $0x1198] sm:$0xff]
  %v603 = vld [vmem:[%s0 + $0x11a0] sm:$0xff]
  %v604 = vld [vmem:[%s0 + $0x11a8] sm:$0xff]
  %v605 = vld [vmem:[%s0 + $0x11b0] sm:$0xff]
  %v606 = vld [vmem:[%s0 + $0x11b8] sm:$0xff]
  %v607 = vld [vmem:[%s0 + $0x11c0] sm:$0xff]
  %v608 = vld [vmem:[%s0 + $0x11c8] sm:$0xff]
  %v609 = vld [vmem:[%s0 + $0x11d0] sm:$0xff]
  %v610 = vld [vmem:[%s0 + $0x11d8] sm:$0xff]
  %v611 = vld [vmem:[%s0 + $0x11e0] sm:$0xff]
  %v612 = vld [vmem:[%s0 + $0x11e8] sm:$0xff]
  %v613 = vld [vmem:[%s0 + $0x11f0] sm:$0xff]
  %v614 = vld [vmem:[%s0 + $0x11f8] sm:$0xff]
  %v615 = vpack.c.bf16 %v40, %v39
  %v616 = vpack.c.bf16 %v42, %v41
  %v617 = vpack.c.bf16 %v44, %v43
  %v618 = vpack.c.bf16 %v46, %v45
  %v619 = vpack.c.bf16 %v48, %v47
  %v620 = vpack.c.bf16 %v50, %v49
  %v621 = vpack.c.bf16 %v52, %v51
  %v622 = vpack.c.bf16 %v54, %v53
  %v623 = vpack.c.bf16 %v56, %v55
  %v624 = vpack.c.bf16 %v58, %v57
  %v625 = vpack.c.bf16 %v60, %v59
  %v626 = vpack.c.bf16 %v62, %v61
  %v627 = vpack.c.bf16 %v64, %v63
  %v628 = vpack.c.bf16 %v66, %v65
  %v629 = vpack.c.bf16 %v68, %v67
  %v630 = vpack.c.bf16 %v70, %v69
  %v631 = vpack.c.bf16 %v72, %v71
  %v632 = vpack.c.bf16 %v74, %v73
  %v633 = vpack.c.bf16 %v76, %v75
  %v634 = vpack.c.bf16 %v78, %v77
  %v635 = vpack.c.bf16 %v80, %v79
  %v636 = vpack.c.bf16 %v82, %v81
  %v637 = vpack.c.bf16 %v84, %v83
  %v638 = vpack.c.bf16 %v86, %v85
  %v639 = vpack.c.bf16 %v88, %v87
  %v640 = vpack.c.bf16 %v90, %v89
  %v641 = vpack.c.bf16 %v92, %v91
  %v642 = vpack.c.bf16 %v94, %v93
  %v643 = vpack.c.bf16 %v96, %v95
  %v644 = vpack.c.bf16 %v98, %v97
  %v645 = vpack.c.bf16 %v100, %v99
  %v646 = vpack.c.bf16 %v102, %v101
  %v647 = vpack.c.bf16 %v104, %v103
  %v648 = vpack.c.bf16 %v106, %v105
  %v649 = vpack.c.bf16 %v108, %v107
  %v650 = vpack.c.bf16 %v110, %v109
  %v651 = vpack.c.bf16 %v112, %v111
  %v652 = vpack.c.bf16 %v114, %v113
  %v653 = vpack.c.bf16 %v116, %v115
  %v654 = vpack.c.bf16 %v118, %v117
  %v655 = vpack.c.bf16 %v120, %v119
  %v656 = vpack.c.bf16 %v122, %v121
  %v657 = vpack.c.bf16 %v124, %v123
  %v658 = vpack.c.bf16 %v126, %v125
  %v659 = vpack.c.bf16 %v128, %v127
  %v660 = vpack.c.bf16 %v130, %v129
  %v661 = vpack.c.bf16 %v132, %v131
  %v662 = vpack.c.bf16 %v134, %v133
  %v663 = vpack.c.bf16 %v136, %v135
  %v664 = vpack.c.bf16 %v138, %v137
  %v665 = vpack.c.bf16 %v140, %v139
  %v666 = vpack.c.bf16 %v142, %v141
  %v667 = vpack.c.bf16 %v144, %v143
  %v668 = vpack.c.bf16 %v146, %v145
  %v669 = vpack.c.bf16 %v148, %v147
  %v670 = vpack.c.bf16 %v150, %v149
  %v671 = vpack.c.bf16 %v152, %v151
  %v672 = vpack.c.bf16 %v154, %v153
  %v673 = vpack.c.bf16 %v156, %v155
  %v674 = vpack.c.bf16 %v158, %v157
  %v675 = vpack.c.bf16 %v160, %v159
  %v676 = vpack.c.bf16 %v162, %v161
  %v677 = vpack.c.bf16 %v164, %v163
  %v678 = vpack.c.bf16 %v166, %v165
  %v679 = vpack.c.bf16 %v168, %v167
  %v680 = vpack.c.bf16 %v170, %v169
  %v681 = vpack.c.bf16 %v172, %v171
  %v682 = vpack.c.bf16 %v174, %v173
  %v683 = vpack.c.bf16 %v176, %v175
  %v684 = vpack.c.bf16 %v178, %v177
  %v685 = vpack.c.bf16 %v180, %v179
  %v686 = vpack.c.bf16 %v182, %v181
  %v687 = vpack.c.bf16 %v184, %v183
  %v688 = vpack.c.bf16 %v186, %v185
  %v689 = vpack.c.bf16 %v188, %v187
  %v690 = vpack.c.bf16 %v190, %v189
  %v691 = vpack.c.bf16 %v192, %v191
  %v692 = vpack.c.bf16 %v194, %v193
  %v693 = vpack.c.bf16 %v196, %v195
  %v694 = vpack.c.bf16 %v198, %v197
  %v695 = vpack.c.bf16 %v200, %v199
  %v696 = vpack.c.bf16 %v202, %v201
  %v697 = vpack.c.bf16 %v204, %v203
  %v698 = vpack.c.bf16 %v206, %v205
  %v699 = vpack.c.bf16 %v208, %v207
  %v700 = vpack.c.bf16 %v210, %v209
  %v701 = vpack.c.bf16 %v212, %v211
  %v702 = vpack.c.bf16 %v214, %v213
  %v703 = vpack.c.bf16 %v216, %v215
  %v704 = vpack.c.bf16 %v218, %v217
  %v705 = vpack.c.bf16 %v220, %v219
  %v706 = vpack.c.bf16 %v222, %v221
  %v707 = vpack.c.bf16 %v224, %v223
  %v708 = vpack.c.bf16 %v226, %v225
  %v709 = vpack.c.bf16 %v228, %v227
  %v710 = vpack.c.bf16 %v230, %v229
  %v711 = vpack.c.bf16 %v232, %v231
  %v712 = vpack.c.bf16 %v234, %v233
  %v713 = vpack.c.bf16 %v236, %v235
  %v714 = vpack.c.bf16 %v238, %v237
  %v715 = vpack.c.bf16 %v240, %v239
  %v716 = vpack.c.bf16 %v242, %v241
  %v717 = vpack.c.bf16 %v244, %v243
  %v718 = vpack.c.bf16 %v246, %v245
  %v719 = vpack.c.bf16 %v248, %v247
  %v720 = vpack.c.bf16 %v250, %v249
  %v721 = vpack.c.bf16 %v252, %v251
  %v722 = vpack.c.bf16 %v254, %v253
  %v723 = vpack.c.bf16 %v256, %v255
  %v724 = vpack.c.bf16 %v258, %v257
  %v725 = vpack.c.bf16 %v260, %v259
  %v726 = vpack.c.bf16 %v262, %v261
  %v727 = vpack.c.bf16 %v264, %v263
  %v728 = vpack.c.bf16 %v266, %v265
  %v729 = vpack.c.bf16 %v268, %v267
  %v730 = vpack.c.bf16 %v270, %v269
  %v731 = vpack.c.bf16 %v272, %v271
  %v732 = vpack.c.bf16 %v274, %v273
  %v733 = vpack.c.bf16 %v276, %v275
  %v734 = vpack.c.bf16 %v278, %v277
  %v735 = vpack.c.bf16 %v280, %v279
  %v736 = vpack.c.bf16 %v282, %v281
  %v737 = vpack.c.bf16 %v284, %v283
  %v738 = vpack.c.bf16 %v286, %v285
  %v739 = vpack.c.bf16 %v288, %v287
  %v740 = vpack.c.bf16 %v290, %v289
  %v741 = vpack.c.bf16 %v292, %v291
  %v742 = vpack.c.bf16 %v294, %v293
  %v743 = vpack.c.bf16 %v296, %v295
  %v744 = vpack.c.bf16 %v298, %v297
  %v745 = vpack.c.bf16 %v300, %v299
  %v746 = vpack.c.bf16 %v302, %v301
  %v747 = vpack.c.bf16 %v304, %v303
  %v748 = vpack.c.bf16 %v306, %v305
  %v749 = vpack.c.bf16 %v308, %v307
  %v750 = vpack.c.bf16 %v310, %v309
  %v751 = vpack.c.bf16 %v312, %v311
  %v752 = vpack.c.bf16 %v314, %v313
  %v753 = vpack.c.bf16 %v316, %v315
  %v754 = vpack.c.bf16 %v318, %v317
  %v755 = vpack.c.bf16 %v320, %v319
  %v756 = vpack.c.bf16 %v322, %v321
  %v757 = vpack.c.bf16 %v324, %v323
  %v758 = vpack.c.bf16 %v326, %v325
  %v759 = vpack.c.bf16 %v328, %v327
  %v760 = vpack.c.bf16 %v330, %v329
  %v761 = vpack.c.bf16 %v332, %v331
  %v762 = vpack.c.bf16 %v334, %v333
  %v763 = vpack.c.bf16 %v336, %v335
  %v764 = vpack.c.bf16 %v338, %v337
  %v765 = vpack.c.bf16 %v340, %v339
  %v766 = vpack.c.bf16 %v342, %v341
  %v767 = vpack.c.bf16 %v344, %v343
  %v768 = vpack.c.bf16 %v346, %v345
  %v769 = vpack.c.bf16 %v348, %v347
  %v770 = vpack.c.bf16 %v350, %v349
  %v771 = vpack.c.bf16 %v352, %v351
  %v772 = vpack.c.bf16 %v354, %v353
  %v773 = vpack.c.bf16 %v356, %v355
  %v774 = vpack.c.bf16 %v358, %v357
  %v775 = vpack.c.bf16 %v360, %v359
  %v776 = vpack.c.bf16 %v362, %v361
  %v777 = vpack.c.bf16 %v364, %v363
  %v778 = vpack.c.bf16 %v366, %v365
  %v779 = vpack.c.bf16 %v368, %v367
  %v780 = vpack.c.bf16 %v370, %v369
  %v781 = vpack.c.bf16 %v372, %v371
  %v782 = vpack.c.bf16 %v374, %v373
  %v783 = vpack.c.bf16 %v376, %v375
  %v784 = vpack.c.bf16 %v378, %v377
  %v785 = vpack.c.bf16 %v380, %v379
  %v786 = vpack.c.bf16 %v382, %v381
  %v787 = vpack.c.bf16 %v384, %v383
  %v788 = vpack.c.bf16 %v386, %v385
  %v789 = vpack.c.bf16 %v388, %v387
  %v790 = vpack.c.bf16 %v390, %v389
  %v791 = vpack.c.bf16 %v392, %v391
  %v792 = vpack.c.bf16 %v394, %v393
  %v793 = vpack.c.bf16 %v396, %v395
  %v794 = vpack.c.bf16 %v398, %v397
  %v795 = vpack.c.bf16 %v400, %v399
  %v796 = vpack.c.bf16 %v402, %v401
  %v797 = vpack.c.bf16 %v404, %v403
  %v798 = vpack.c.bf16 %v406, %v405
  %v799 = vpack.c.bf16 %v408, %v407
  %v800 = vpack.c.bf16 %v410, %v409
  %v801 = vpack.c.bf16 %v412, %v411
  %v802 = vpack.c.bf16 %v414, %v413
  %v803 = vpack.c.bf16 %v416, %v415
  %v804 = vpack.c.bf16 %v418, %v417
  %v805 = vpack.c.bf16 %v420, %v419
  %v806 = vpack.c.bf16 %v422, %v421
  %v807 = vpack.c.bf16 %v424, %v423
  %v808 = vpack.c.bf16 %v426, %v425
  %v809 = vpack.c.bf16 %v428, %v427
  %v810 = vpack.c.bf16 %v430, %v429
  %v811 = vpack.c.bf16 %v432, %v431
  %v812 = vpack.c.bf16 %v434, %v433
  %v813 = vpack.c.bf16 %v436, %v435
  %v814 = vpack.c.bf16 %v438, %v437
  %v815 = vpack.c.bf16 %v440, %v439
  %v816 = vpack.c.bf16 %v442, %v441
  %v817 = vpack.c.bf16 %v444, %v443
  %v818 = vpack.c.bf16 %v446, %v445
  %v819 = vpack.c.bf16 %v448, %v447
  %v820 = vpack.c.bf16 %v450, %v449
  %v821 = vpack.c.bf16 %v452, %v451
  %v822 = vpack.c.bf16 %v454, %v453
  %v823 = vpack.c.bf16 %v456, %v455
  %v824 = vpack.c.bf16 %v458, %v457
  %v825 = vpack.c.bf16 %v460, %v459
  %v826 = vpack.c.bf16 %v462, %v461
  %v827 = vpack.c.bf16 %v464, %v463
  %v828 = vpack.c.bf16 %v466, %v465
  %v829 = vpack.c.bf16 %v468, %v467
  %v830 = vpack.c.bf16 %v470, %v469
  %v831 = vpack.c.bf16 %v472, %v471
  %v832 = vpack.c.bf16 %v474, %v473
  %v833 = vpack.c.bf16 %v476, %v475
  %v834 = vpack.c.bf16 %v478, %v477
  %v835 = vpack.c.bf16 %v480, %v479
  %v836 = vpack.c.bf16 %v482, %v481
  %v837 = vpack.c.bf16 %v484, %v483
  %v838 = vpack.c.bf16 %v486, %v485
  %v839 = vpack.c.bf16 %v488, %v487
  %v840 = vpack.c.bf16 %v490, %v489
  %v841 = vpack.c.bf16 %v492, %v491
  %v842 = vpack.c.bf16 %v494, %v493
  %v843 = vpack.c.bf16 %v496, %v495
  %v844 = vpack.c.bf16 %v498, %v497
  %v845 = vpack.c.bf16 %v500, %v499
  %v846 = vpack.c.bf16 %v502, %v501
  %v847 = vpack.c.bf16 %v504, %v503
  %v848 = vpack.c.bf16 %v506, %v505
  %v849 = vpack.c.bf16 %v508, %v507
  %v850 = vpack.c.bf16 %v510, %v509
  %v851 = vpack.c.bf16 %v512, %v511
  %v852 = vpack.c.bf16 %v514, %v513
  %v853 = vpack.c.bf16 %v516, %v515
  %v854 = vpack.c.bf16 %v518, %v517
  %v855 = vpack.c.bf16 %v520, %v519
  %v856 = vpack.c.bf16 %v522, %v521
  %v857 = vpack.c.bf16 %v524, %v523
  %v858 = vpack.c.bf16 %v526, %v525
  %v859 = vpack.c.bf16 %v528, %v527
  %v860 = vpack.c.bf16 %v530, %v529
  %v861 = vpack.c.bf16 %v532, %v531
  %v862 = vpack.c.bf16 %v534, %v533
  %v863 = vpack.c.bf16 %v536, %v535
  %v864 = vpack.c.bf16 %v538, %v537
  %v865 = vpack.c.bf16 %v540, %v539
  %v866 = vpack.c.bf16 %v542, %v541
  %v867 = vpack.c.bf16 %v544, %v543
  %v868 = vpack.c.bf16 %v546, %v545
  %v869 = vpack.c.bf16 %v548, %v547
  %v870 = vpack.c.bf16 %v550, %v549
  %v871 = vpack.c.bf16 %v552, %v551
  %v872 = vpack.c.bf16 %v554, %v553
  %v873 = vpack.c.bf16 %v556, %v555
  %v874 = vpack.c.bf16 %v558, %v557
  %v875 = vpack.c.bf16 %v560, %v559
  %v876 = vpack.c.bf16 %v562, %v561
  %v877 = vpack.c.bf16 %v564, %v563
  %v878 = vpack.c.bf16 %v566, %v565
  %v879 = vpack.c.bf16 %v568, %v567
  %v880 = vpack.c.bf16 %v570, %v569
  %v881 = vpack.c.bf16 %v572, %v571
  %v882 = vpack.c.bf16 %v574, %v573
  %v883 = vpack.c.bf16 %v576, %v575
  %v884 = vpack.c.bf16 %v578, %v577
  %v885 = vpack.c.bf16 %v580, %v579
  %v886 = vpack.c.bf16 %v582, %v581
  %v887 = vpack.c.bf16 %v584, %v583
  %v888 = vpack.c.bf16 %v586, %v585
  %v889 = vpack.c.bf16 %v588, %v587
  %v890 = vpack.c.bf16 %v590, %v589
  %v891 = vpack.c.bf16 %v592, %v591
  %v892 = vpack.c.bf16 %v594, %v593
  %v893 = vpack.c.bf16 %v596, %v595
  %v894 = vpack.c.bf16 %v598, %v597
  %v895 = vpack.c.bf16 %v600, %v599
  %v896 = vpack.c.bf16 %v602, %v601
  %v897 = vpack.c.bf16 %v604, %v603
  %v898 = vpack.c.bf16 %v606, %v605
  %v899 = vpack.c.bf16 %v608, %v607
  %v900 = vpack.c.bf16 %v610, %v609
  %v901 = vpack.c.bf16 %v612, %v611
  %v902 = vpack.c.bf16 %v614, %v613
  %v903 = vld [vmem:[%s1] sm:$0xf]
  %v904 = vld [vmem:[%s1 + $0x4] sm:$0xf]
  %v905 = vld [vmem:[%s1 + $0x8] sm:$0xf]
  %v906 = vld [vmem:[%s1 + $0xc] sm:$0x1]
  %v911 = vunpack.c.l.b16 %v903
  %v912 = vunpack.c.l.b16 %v904
  %v913 = vunpack.c.l.b16 %v905
  %v914 = vunpack.c.l.b16 %v906
  %v915 = vpack.c.b16 %v912, %v911
  %v916 = vpack.c.b16 %v914, %v913
  %vm918 = vcmask 203776
  %v920 = vsel %vm918, %v615, 0
  %v923 = vsel %vm918, %v616, 0
  %v926 = vsel %vm918, %v617, 0
  %v929 = vsel %vm918, %v618, 0
  %v932 = vsel %vm918, %v619, 0
  %v935 = vsel %vm918, %v620, 0
  %v938 = vsel %vm918, %v621, 0
  %v941 = vsel %vm918, %v622, 0
  %v944 = vsel %vm918, %v623, 0
  %v947 = vsel %vm918, %v624, 0
  %v950 = vsel %vm918, %v625, 0
  %v953 = vsel %vm918, %v626, 0
  %v956 = vsel %vm918, %v627, 0
  %v959 = vsel %vm918, %v628, 0
  %v962 = vsel %vm918, %v629, 0
  %v965 = vsel %vm918, %v630, 0
  %v968 = vsel %vm918, %v631, 0
  %v971 = vsel %vm918, %v632, 0
  %v974 = vsel %vm918, %v633, 0
  %v977 = vsel %vm918, %v634, 0
  %v980 = vsel %vm918, %v635, 0
  %v983 = vsel %vm918, %v636, 0
  %v986 = vsel %vm918, %v637, 0
  %v989 = vsel %vm918, %v638, 0
  %v992 = vsel %vm918, %v639, 0
  %v995 = vsel %vm918, %v640, 0
  %v998 = vsel %vm918, %v641, 0
  %v1001 = vsel %vm918, %v642, 0
  %v1004 = vsel %vm918, %v643, 0
  %v1007 = vsel %vm918, %v644, 0
  %v1010 = vsel %vm918, %v645, 0
  %v1013 = vsel %vm918, %v646, 0
  %v1016 = vsel %vm918, %v647, 0
  %v1019 = vsel %vm918, %v648, 0
  %v1022 = vsel %vm918, %v649, 0
  %v1025 = vsel %vm918, %v650, 0
  %v1028 = vsel %vm918, %v651, 0
  %v1031 = vsel %vm918, %v652, 0
  %v1034 = vsel %vm918, %v653, 0
  %v1037 = vsel %vm918, %v654, 0
  %v1040 = vsel %vm918, %v655, 0
  %v1043 = vsel %vm918, %v656, 0
  %v1046 = vsel %vm918, %v657, 0
  %v1049 = vsel %vm918, %v658, 0
  %v1052 = vsel %vm918, %v659, 0
  %v1055 = vsel %vm918, %v660, 0
  %v1058 = vsel %vm918, %v661, 0
  %v1061 = vsel %vm918, %v662, 0
  %v1064 = vsel %vm918, %v663, 0
  %v1067 = vsel %vm918, %v664, 0
  %v1070 = vsel %vm918, %v665, 0
  %v1073 = vsel %vm918, %v666, 0
  %v1076 = vsel %vm918, %v667, 0
  %v1079 = vsel %vm918, %v668, 0
  %v1082 = vsel %vm918, %v669, 0
  %v1085 = vsel %vm918, %v670, 0
  %v1088 = vsel %vm918, %v671, 0
  %v1091 = vsel %vm918, %v672, 0
  %v1094 = vsel %vm918, %v673, 0
  %v1097 = vsel %vm918, %v674, 0
  %v1100 = vsel %vm918, %v675, 0
  %v1103 = vsel %vm918, %v676, 0
  %v1106 = vsel %vm918, %v677, 0
  %v1109 = vsel %vm918, %v678, 0
  %v1112 = vsel %vm918, %v679, 0
  %v1115 = vsel %vm918, %v680, 0
  %v1118 = vsel %vm918, %v681, 0
  %v1121 = vsel %vm918, %v682, 0
  %v1124 = vsel %vm918, %v683, 0
  %v1127 = vsel %vm918, %v684, 0
  %v1130 = vsel %vm918, %v685, 0
  %v1133 = vsel %vm918, %v686, 0
  %v1136 = vsel %vm918, %v687, 0
  %v1139 = vsel %vm918, %v688, 0
  %v1142 = vsel %vm918, %v689, 0
  %v1145 = vsel %vm918, %v690, 0
  %v1148 = vsel %vm918, %v691, 0
  %v1151 = vsel %vm918, %v692, 0
  %v1154 = vsel %vm918, %v693, 0
  %v1157 = vsel %vm918, %v694, 0
  %v1160 = vsel %vm918, %v695, 0
  %v1163 = vsel %vm918, %v696, 0
  %v1166 = vsel %vm918, %v697, 0
  %v1169 = vsel %vm918, %v698, 0
  %v1172 = vsel %vm918, %v699, 0
  %v1175 = vsel %vm918, %v700, 0
  %v1178 = vsel %vm918, %v701, 0
  %v1181 = vsel %vm918, %v702, 0
  %v1184 = vsel %vm918, %v703, 0
  %v1187 = vsel %vm918, %v704, 0
  %v1190 = vsel %vm918, %v705, 0
  %v1193 = vsel %vm918, %v706, 0
  %v1196 = vsel %vm918, %v707, 0
  %v1199 = vsel %vm918, %v708, 0
  %v1202 = vsel %vm918, %v709, 0
  %v1205 = vsel %vm918, %v710, 0
  %v1208 = vsel %vm918, %v711, 0
  %v1211 = vsel %vm918, %v712, 0
  %v1214 = vsel %vm918, %v713, 0
  %v1217 = vsel %vm918, %v714, 0
  %v1220 = vsel %vm918, %v715, 0
  %v1223 = vsel %vm918, %v716, 0
  %v1226 = vsel %vm918, %v717, 0
  %v1229 = vsel %vm918, %v718, 0
  %v1232 = vsel %vm918, %v719, 0
  %v1235 = vsel %vm918, %v720, 0
  %v1238 = vsel %vm918, %v721, 0
  %v1241 = vsel %vm918, %v722, 0
  %v1244 = vsel %vm918, %v723, 0
  %v1247 = vsel %vm918, %v724, 0
  %v1250 = vsel %vm918, %v725, 0
  %v1253 = vsel %vm918, %v726, 0
  %v1256 = vsel %vm918, %v727, 0
  %v1259 = vsel %vm918, %v728, 0
  %v1262 = vsel %vm918, %v729, 0
  %v1265 = vsel %vm918, %v730, 0
  %v1268 = vsel %vm918, %v731, 0
  %v1271 = vsel %vm918, %v732, 0
  %v1274 = vsel %vm918, %v733, 0
  %v1277 = vsel %vm918, %v734, 0
  %v1280 = vsel %vm918, %v735, 0
  %v1283 = vsel %vm918, %v736, 0
  %v1286 = vsel %vm918, %v737, 0
  %v1289 = vsel %vm918, %v738, 0
  %v1292 = vsel %vm918, %v739, 0
  %v1295 = vsel %vm918, %v740, 0
  %v1298 = vsel %vm918, %v741, 0
  %v1301 = vsel %vm918, %v742, 0
  %v1304 = vsel %vm918, %v743, 0
  %v1307 = vsel %vm918, %v744, 0
  %v1310 = vsel %vm918, %v745, 0
  %v1313 = vsel %vm918, %v746, 0
  %v1316 = vsel %vm918, %v747, 0
  %v1319 = vsel %vm918, %v748, 0
  %v1322 = vsel %vm918, %v749, 0
  %v1325 = vsel %vm918, %v750, 0
  %v1328 = vsel %vm918, %v751, 0
  %v1331 = vsel %vm918, %v752, 0
  %v1334 = vsel %vm918, %v753, 0
  %v1337 = vsel %vm918, %v754, 0
  %v1340 = vsel %vm918, %v755, 0
  %v1343 = vsel %vm918, %v756, 0
  %v1346 = vsel %vm918, %v757, 0
  %v1349 = vsel %vm918, %v758, 0
  %v1352 = vsel %vm918, %v759, 0
  %v1355 = vsel %vm918, %v760, 0
  %v1358 = vsel %vm918, %v761, 0
  %v1361 = vsel %vm918, %v762, 0
  %v1364 = vsel %vm918, %v763, 0
  %v1367 = vsel %vm918, %v764, 0
  %v1370 = vsel %vm918, %v765, 0
  %v1373 = vsel %vm918, %v766, 0
  %v1376 = vsel %vm918, %v767, 0
  %v1379 = vsel %vm918, %v768, 0
  %v1382 = vsel %vm918, %v769, 0
  %v1385 = vsel %vm918, %v770, 0
  %v1388 = vsel %vm918, %v771, 0
  %v1391 = vsel %vm918, %v772, 0
  %v1394 = vsel %vm918, %v773, 0
  %v1397 = vsel %vm918, %v774, 0
  %v1400 = vsel %vm918, %v775, 0
  %v1403 = vsel %vm918, %v776, 0
  %v1406 = vsel %vm918, %v777, 0
  %v1409 = vsel %vm918, %v778, 0
  %v1412 = vsel %vm918, %v779, 0
  %v1415 = vsel %vm918, %v780, 0
  %v1418 = vsel %vm918, %v781, 0
  %v1421 = vsel %vm918, %v782, 0
  %v1424 = vsel %vm918, %v783, 0
  %v1427 = vsel %vm918, %v784, 0
  %v1430 = vsel %vm918, %v785, 0
  %v1433 = vsel %vm918, %v786, 0
  %v1436 = vsel %vm918, %v787, 0
  %v1439 = vsel %vm918, %v788, 0
  %v1442 = vsel %vm918, %v789, 0
  %v1445 = vsel %vm918, %v790, 0
  %v1448 = vsel %vm918, %v791, 0
  %v1451 = vsel %vm918, %v792, 0
  %v1454 = vsel %vm918, %v793, 0
  %v1457 = vsel %vm918, %v794, 0
  %v1460 = vsel %vm918, %v795, 0
  %v1463 = vsel %vm918, %v796, 0
  %v1466 = vsel %vm918, %v797, 0
  %v1469 = vsel %vm918, %v798, 0
  %v1472 = vsel %vm918, %v799, 0
  %v1475 = vsel %vm918, %v800, 0
  %v1478 = vsel %vm918, %v801, 0
  %v1481 = vsel %vm918, %v802, 0
  %v1484 = vsel %vm918, %v803, 0
  %v1487 = vsel %vm918, %v804, 0
  %v1490 = vsel %vm918, %v805, 0
  %v1493 = vsel %vm918, %v806, 0
  %v1496 = vsel %vm918, %v807, 0
  %v1499 = vsel %vm918, %v808, 0
  %v1502 = vsel %vm918, %v809, 0
  %v1505 = vsel %vm918, %v810, 0
  %v1508 = vsel %vm918, %v811, 0
  %v1511 = vsel %vm918, %v812, 0
  %v1514 = vsel %vm918, %v813, 0
  %v1517 = vsel %vm918, %v814, 0
  %v1520 = vsel %vm918, %v815, 0
  %v1523 = vsel %vm918, %v816, 0
  %v1526 = vsel %vm918, %v817, 0
  %v1529 = vsel %vm918, %v818, 0
  %v1532 = vsel %vm918, %v819, 0
  %v1535 = vsel %vm918, %v820, 0
  %v1538 = vsel %vm918, %v821, 0
  %v1541 = vsel %vm918, %v822, 0
  %v1544 = vsel %vm918, %v823, 0
  %v1547 = vsel %vm918, %v824, 0
  %v1550 = vsel %vm918, %v825, 0
  %v1553 = vsel %vm918, %v826, 0
  %v1556 = vsel %vm918, %v827, 0
  %v1559 = vsel %vm918, %v828, 0
  %v1562 = vsel %vm918, %v829, 0
  %v1565 = vsel %vm918, %v830, 0
  %v1568 = vsel %vm918, %v831, 0
  %v1571 = vsel %vm918, %v832, 0
  %v1574 = vsel %vm918, %v833, 0
  %v1577 = vsel %vm918, %v834, 0
  %v1580 = vsel %vm918, %v835, 0
  %v1583 = vsel %vm918, %v836, 0
  %v1586 = vsel %vm918, %v837, 0
  %v1589 = vsel %vm918, %v838, 0
  %v1592 = vsel %vm918, %v839, 0
  %v1595 = vsel %vm918, %v840, 0
  %v1598 = vsel %vm918, %v841, 0
  %v1601 = vsel %vm918, %v842, 0
  %v1604 = vsel %vm918, %v843, 0
  %v1607 = vsel %vm918, %v844, 0
  %v1610 = vsel %vm918, %v845, 0
  %v1613 = vsel %vm918, %v846, 0
  %v1616 = vsel %vm918, %v847, 0
  %v1619 = vsel %vm918, %v848, 0
  %v1622 = vsel %vm918, %v849, 0
  %v1625 = vsel %vm918, %v850, 0
  %v1628 = vsel %vm918, %v851, 0
  %v1631 = vsel %vm918, %v852, 0
  %v1634 = vsel %vm918, %v853, 0
  %v1637 = vsel %vm918, %v854, 0
  %v1640 = vsel %vm918, %v855, 0
  %v1643 = vsel %vm918, %v856, 0
  %v1646 = vsel %vm918, %v857, 0
  %v1649 = vsel %vm918, %v858, 0
  %v1652 = vsel %vm918, %v859, 0
  %v1655 = vsel %vm918, %v860, 0
  %v1658 = vsel %vm918, %v861, 0
  %v1661 = vsel %vm918, %v862, 0
  %v1664 = vsel %vm918, %v863, 0
  %v1667 = vsel %vm918, %v864, 0
  %v1670 = vsel %vm918, %v865, 0
  %v1673 = vsel %vm918, %v866, 0
  %v1676 = vsel %vm918, %v867, 0
  %v1679 = vsel %vm918, %v868, 0
  %v1682 = vsel %vm918, %v869, 0
  %v1685 = vsel %vm918, %v870, 0
  %v1688 = vsel %vm918, %v871, 0
  %v1691 = vsel %vm918, %v872, 0
  %v1694 = vsel %vm918, %v873, 0
  %v1697 = vsel %vm918, %v874, 0
  %v1700 = vsel %vm918, %v875, 0
  %v1703 = vsel %vm918, %v876, 0
  %v1706 = vsel %vm918, %v877, 0
  %v1709 = vsel %vm918, %v878, 0
  %v1712 = vsel %vm918, %v879, 0
  %v1715 = vsel %vm918, %v880, 0
  %v1718 = vsel %vm918, %v881, 0
  %v1721 = vsel %vm918, %v882, 0
  %v1724 = vsel %vm918, %v883, 0
  %v1727 = vsel %vm918, %v884, 0
  %v1730 = vsel %vm918, %v885, 0
  %v1733 = vsel %vm918, %v886, 0
  %v1736 = vsel %vm918, %v887, 0
  %v1739 = vsel %vm918, %v888, 0
  %v1742 = vsel %vm918, %v889, 0
  %v1745 = vsel %vm918, %v890, 0
  %v1748 = vsel %vm918, %v891, 0
  %v1751 = vsel %vm918, %v892, 0
  %v1754 = vsel %vm918, %v893, 0
  %v1757 = vsel %vm918, %v894, 0
  %v1760 = vsel %vm918, %v895, 0
  %v1763 = vsel %vm918, %v896, 0
  %v1766 = vsel %vm918, %v897, 0
  %v1769 = vsel %vm918, %v898, 0
  %v1772 = vsel %vm918, %v899, 0
  %v1775 = vsel %vm918, %v900, 0
  %v1778 = vsel %vm918, %v901, 0
  %v1781 = vsel %vm918, %v902, 0
  %vm1783 = vcmask 1043456
  %vm1784 = vcmask 1044480
  %v1785 = vsel %vm1783, 4294967295, 65535
  %v1786 = vsel %vm1784, %v1785, 0
  %v1788 = vand.u32 %v916, %v1786
  %1790 = vmatprep.subr.bf16.mxu0 0
  %1791 = vmatpush1.bf16.msra.mxu0 0
  %1792 = vmatprep.subr.bf16.mxu0 0
  %1793 = vmatpush1.bf16.msra.mxu0 0
  %1794 = vmatprep.subr.bf16.mxu0 0
  %1795 = vmatpush1.bf16.msra.mxu0 0
  %1796 = vmatprep.subr.bf16.mxu0 0
  %1797 = vmatpush1.bf16.msra.mxu0 0
  %1798 = vmatprep.subr.bf16.mxu0 0
  %1799 = vmatpush1.bf16.msra.mxu0 0
  %1800 = vmatprep.subr.bf16.mxu0 0
  %1801 = vmatpush1.bf16.msra.mxu0 0
  %1802 = vmatprep.subr.bf16.mxu0 0
  %1803 = vmatpush1.bf16.msra.mxu0 %v1788
  %1804 = vmatprep.subr.bf16.mxu0 0
  %1805 = vmatpush1.bf16.msra.mxu0 %v915
  %1806 = vmatprep.subr.bf16.mxu0 0
  %1807 = vmatpush2.bf16.msra.mxu0 0
  %1808 = vmatprep.subr.bf16.mxu0 0
  %1809 = vmatpush2.bf16.msra.mxu0 0
  %1810 = vmatprep.subr.bf16.mxu0 0
  %1811 = vmatpush2.bf16.msra.mxu0 0
  %1812 = vmatprep.subr.bf16.mxu0 0
  %1813 = vmatpush2.bf16.msra.mxu0 0
  %1814 = vmatprep.subr.bf16.mxu0 0
  %1815 = vmatpush2.bf16.msra.mxu0 0
  %1816 = vmatprep.subr.bf16.mxu0 0
  %1817 = vmatpush2.bf16.msra.mxu0 0
  %1818 = vmatprep.subr.bf16.mxu0 0
  %1819 = vmatpush2.bf16.msra.mxu0 0
  %1820 = vmatprep.subr.bf16.mxu0 0
  %1821 = vmatpush2.bf16.msra.mxu0 0
  %1822 = vmatprep.mubr.bf16.mxu0 0
  %1823 = vmatmul.mubr.bf16.gmra.mxu0 %v920
  %v1824 = vpop.f32.mrf.mxu0
  %v1825 = vadd.f32 0.0, %v1824
  %v1826 = vpop.f32.mrf.mxu0
  %v1827 = vpop.f32.mrf.mxu0
  %v1828 = vadd.f32 0.0, %v1827
  %v1829 = vpop.f32.mrf.mxu0
  %1830 = vmatprep.mubr.bf16.mxu0 0
  %1831 = vmatmul.mubr.bf16.gmra.mxu0 %v923
  %v1832 = vpop.f32.mrf.mxu0
  %v1833 = vadd.f32 0.0, %v1832
  %v1834 = vpop.f32.mrf.mxu0
  %v1835 = vpop.f32.mrf.mxu0
  %v1836 = vadd.f32 0.0, %v1835
  %v1837 = vpop.f32.mrf.mxu0
  %1838 = vmatprep.mubr.bf16.mxu0 0
  %1839 = vmatmul.mubr.bf16.gmra.mxu0 %v926
  %v1840 = vpop.f32.mrf.mxu0
  %v1841 = vadd.f32 0.0, %v1840
  %v1842 = vpop.f32.mrf.mxu0
  %v1843 = vpop.f32.mrf.mxu0
  %v1844 = vadd.f32 0.0, %v1843
  %v1845 = vpop.f32.mrf.mxu0
  %1846 = vmatprep.mubr.bf16.mxu0 0
  %1847 = vmatmul.mubr.bf16.gmra.mxu0 %v929
  %v1848 = vpop.f32.mrf.mxu0
  %v1849 = vadd.f32 0.0, %v1848
  %v1850 = vpop.f32.mrf.mxu0
  %v1851 = vpop.f32.mrf.mxu0
  %v1852 = vadd.f32 0.0, %v1851
  %v1853 = vpop.f32.mrf.mxu0
  %1854 = vmatprep.mubr.bf16.mxu0 0
  %1855 = vmatmul.mubr.bf16.gmra.mxu0 %v932
  %v1856 = vpop.f32.mrf.mxu0
  %v1857 = vadd.f32 0.0, %v1856
  %v1858 = vpop.f32.mrf.mxu0
  %v1859 = vpop.f32.mrf.mxu0
  %v1860 = vadd.f32 0.0, %v1859
  %v1861 = vpop.f32.mrf.mxu0
  %1862 = vmatprep.mubr.bf16.mxu0 0
  %1863 = vmatmul.mubr.bf16.gmra.mxu0 %v935
  %v1864 = vpop.f32.mrf.mxu0
  %v1865 = vadd.f32 0.0, %v1864
  %v1866 = vpop.f32.mrf.mxu0
  %v1867 = vpop.f32.mrf.mxu0
  %v1868 = vadd.f32 0.0, %v1867
  %v1869 = vpop.f32.mrf.mxu0
  %1870 = vmatprep.mubr.bf16.mxu0 0
  %1871 = vmatmul.mubr.bf16.gmra.mxu0 %v938
  %v1872 = vpop.f32.mrf.mxu0
  %v1873 = vadd.f32 0.0, %v1872
  %v1874 = vpop.f32.mrf.mxu0
  %v1875 = vpop.f32.mrf.mxu0
  %v1876 = vadd.f32 0.0, %v1875
  %v1877 = vpop.f32.mrf.mxu0
  %1878 = vmatprep.mubr.bf16.mxu0 0
  %1879 = vmatmul.mubr.bf16.gmra.mxu0 %v941
  %v1880 = vpop.f32.mrf.mxu0
  %v1881 = vadd.f32 0.0, %v1880
  %v1882 = vpop.f32.mrf.mxu0
  %v1883 = vpop.f32.mrf.mxu0
  %v1884 = vadd.f32 0.0, %v1883
  %v1885 = vpop.f32.mrf.mxu0
  %1886 = vmatprep.mubr.bf16.mxu0 0
  %1887 = vmatmul.mubr.bf16.gmra.mxu0 %v944
  %v1888 = vpop.f32.mrf.mxu0
  %v1889 = vadd.f32 0.0, %v1888
  %v1890 = vpop.f32.mrf.mxu0
  %v1891 = vpop.f32.mrf.mxu0
  %v1892 = vadd.f32 0.0, %v1891
  %v1893 = vpop.f32.mrf.mxu0
  %1894 = vmatprep.mubr.bf16.mxu0 0
  %1895 = vmatmul.mubr.bf16.gmra.mxu0 %v947
  %v1896 = vpop.f32.mrf.mxu0
  %v1897 = vadd.f32 0.0, %v1896
  %v1898 = vpop.f32.mrf.mxu0
  %v1899 = vpop.f32.mrf.mxu0
  %v1900 = vadd.f32 0.0, %v1899
  %v1901 = vpop.f32.mrf.mxu0
  %1902 = vmatprep.mubr.bf16.mxu0 0
  %1903 = vmatmul.mubr.bf16.gmra.mxu0 %v950
  %v1904 = vpop.f32.mrf.mxu0
  %v1905 = vadd.f32 0.0, %v1904
  %v1906 = vpop.f32.mrf.mxu0
  %v1907 = vpop.f32.mrf.mxu0
  %v1908 = vadd.f32 0.0, %v1907
  %v1909 = vpop.f32.mrf.mxu0
  %1910 = vmatprep.mubr.bf16.mxu0 0
  %1911 = vmatmul.mubr.bf16.gmra.mxu0 %v953
  %v1912 = vpop.f32.mrf.mxu0
  %v1913 = vadd.f32 0.0, %v1912
  %v1914 = vpop.f32.mrf.mxu0
  %v1915 = vpop.f32.mrf.mxu0
  %v1916 = vadd.f32 0.0, %v1915
  %v1917 = vpop.f32.mrf.mxu0
  %1918 = vmatprep.mubr.bf16.mxu0 0
  %1919 = vmatmul.mubr.bf16.gmra.mxu0 %v956
  %v1920 = vpop.f32.mrf.mxu0
  %v1921 = vadd.f32 0.0, %v1920
  %v1922 = vpop.f32.mrf.mxu0
  %v1923 = vpop.f32.mrf.mxu0
  %v1924 = vadd.f32 0.0, %v1923
  %v1925 = vpop.f32.mrf.mxu0
  %1926 = vmatprep.mubr.bf16.mxu0 0
  %1927 = vmatmul.mubr.bf16.gmra.mxu0 %v959
  %v1928 = vpop.f32.mrf.mxu0
  %v1929 = vadd.f32 0.0, %v1928
  %v1930 = vpop.f32.mrf.mxu0
  %v1931 = vpop.f32.mrf.mxu0
  %v1932 = vadd.f32 0.0, %v1931
  %v1933 = vpop.f32.mrf.mxu0
  %1934 = vmatprep.mubr.bf16.mxu0 0
  %1935 = vmatmul.mubr.bf16.gmra.mxu0 %v962
  %v1936 = vpop.f32.mrf.mxu0
  %v1937 = vadd.f32 0.0, %v1936
  %v1938 = vpop.f32.mrf.mxu0
  %v1939 = vpop.f32.mrf.mxu0
  %v1940 = vadd.f32 0.0, %v1939
  %v1941 = vpop.f32.mrf.mxu0
  %1942 = vmatprep.mubr.bf16.mxu0 0
  %1943 = vmatmul.mubr.bf16.gmra.mxu0 %v965
  %v1944 = vpop.f32.mrf.mxu0
  %v1945 = vadd.f32 0.0, %v1944
  %v1946 = vpop.f32.mrf.mxu0
  %v1947 = vpop.f32.mrf.mxu0
  %v1948 = vadd.f32 0.0, %v1947
  %v1949 = vpop.f32.mrf.mxu0
  %1950 = vmatprep.mubr.bf16.mxu0 0
  %1951 = vmatmul.mubr.bf16.gmra.mxu0 %v968
  %v1952 = vpop.f32.mrf.mxu0
  %v1953 = vadd.f32 0.0, %v1952
  %v1954 = vpop.f32.mrf.mxu0
  %v1955 = vpop.f32.mrf.mxu0
  %v1956 = vadd.f32 0.0, %v1955
  %v1957 = vpop.f32.mrf.mxu0
  %1958 = vmatprep.mubr.bf16.mxu0 0
  %1959 = vmatmul.mubr.bf16.gmra.mxu0 %v971
  %v1960 = vpop.f32.mrf.mxu0
  %v1961 = vadd.f32 0.0, %v1960
  %v1962 = vpop.f32.mrf.mxu0
  %v1963 = vpop.f32.mrf.mxu0
  %v1964 = vadd.f32 0.0, %v1963
  %v1965 = vpop.f32.mrf.mxu0
  %1966 = vmatprep.mubr.bf16.mxu0 0
  %1967 = vmatmul.mubr.bf16.gmra.mxu0 %v974
  %v1968 = vpop.f32.mrf.mxu0
  %v1969 = vadd.f32 0.0, %v1968
  %v1970 = vpop.f32.mrf.mxu0
  %v1971 = vpop.f32.mrf.mxu0
  %v1972 = vadd.f32 0.0, %v1971
  %v1973 = vpop.f32.mrf.mxu0
  %1974 = vmatprep.mubr.bf16.mxu0 0
  %1975 = vmatmul.mubr.bf16.gmra.mxu0 %v977
  %v1976 = vpop.f32.mrf.mxu0
  %v1977 = vadd.f32 0.0, %v1976
  %v1978 = vpop.f32.mrf.mxu0
  %v1979 = vpop.f32.mrf.mxu0
  %v1980 = vadd.f32 0.0, %v1979
  %v1981 = vpop.f32.mrf.mxu0
  %1982 = vmatprep.mubr.bf16.mxu0 0
  %1983 = vmatmul.mubr.bf16.gmra.mxu0 %v980
  %v1984 = vpop.f32.mrf.mxu0
  %v1985 = vadd.f32 0.0, %v1984
  %v1986 = vpop.f32.mrf.mxu0
  %v1987 = vpop.f32.mrf.mxu0
  %v1988 = vadd.f32 0.0, %v1987
  %v1989 = vpop.f32.mrf.mxu0
  %1990 = vmatprep.mubr.bf16.mxu0 0
  %1991 = vmatmul.mubr.bf16.gmra.mxu0 %v983
  %v1992 = vpop.f32.mrf.mxu0
  %v1993 = vadd.f32 0.0, %v1992
  %v1994 = vpop.f32.mrf.mxu0
  %v1995 = vpop.f32.mrf.mxu0
  %v1996 = vadd.f32 0.0, %v1995
  %v1997 = vpop.f32.mrf.mxu0
  %1998 = vmatprep.mubr.bf16.mxu0 0
  %1999 = vmatmul.mubr.bf16.gmra.mxu0 %v986
  %v2000 = vpop.f32.mrf.mxu0
  %v2001 = vadd.f32 0.0, %v2000
  %v2002 = vpop.f32.mrf.mxu0
  %v2003 = vpop.f32.mrf.mxu0
  %v2004 = vadd.f32 0.0, %v2003
  %v2005 = vpop.f32.mrf.mxu0
  %2006 = vmatprep.mubr.bf16.mxu0 0
  %2007 = vmatmul.mubr.bf16.gmra.mxu0 %v989
  %v2008 = vpop.f32.mrf.mxu0
  %v2009 = vadd.f32 0.0, %v2008
  %v2010 = vpop.f32.mrf.mxu0
  %v2011 = vpop.f32.mrf.mxu0
  %v2012 = vadd.f32 0.0, %v2011
  %v2013 = vpop.f32.mrf.mxu0
  %2014 = vmatprep.mubr.bf16.mxu0 0
  %2015 = vmatmul.mubr.bf16.gmra.mxu0 %v992
  %v2016 = vpop.f32.mrf.mxu0
  %v2017 = vadd.f32 0.0, %v2016
  %v2018 = vpop.f32.mrf.mxu0
  %v2019 = vpop.f32.mrf.mxu0
  %v2020 = vadd.f32 0.0, %v2019
  %v2021 = vpop.f32.mrf.mxu0
  %2022 = vmatprep.mubr.bf16.mxu0 0
  %2023 = vmatmul.mubr.bf16.gmra.mxu0 %v995
  %v2024 = vpop.f32.mrf.mxu0
  %v2025 = vadd.f32 0.0, %v2024
  %v2026 = vpop.f32.mrf.mxu0
  %v2027 = vpop.f32.mrf.mxu0
  %v2028 = vadd.f32 0.0, %v2027
  %v2029 = vpop.f32.mrf.mxu0
  %2030 = vmatprep.mubr.bf16.mxu0 0
  %2031 = vmatmul.mubr.bf16.gmra.mxu0 %v998
  %v2032 = vpop.f32.mrf.mxu0
  %v2033 = vadd.f32 0.0, %v2032
  %v2034 = vpop.f32.mrf.mxu0
  %v2035 = vpop.f32.mrf.mxu0
  %v2036 = vadd.f32 0.0, %v2035
  %v2037 = vpop.f32.mrf.mxu0
  %2038 = vmatprep.mubr.bf16.mxu0 0
  %2039 = vmatmul.mubr.bf16.gmra.mxu0 %v1001
  %v2040 = vpop.f32.mrf.mxu0
  %v2041 = vadd.f32 0.0, %v2040
  %v2042 = vpop.f32.mrf.mxu0
  %v2043 = vpop.f32.mrf.mxu0
  %v2044 = vadd.f32 0.0, %v2043
  %v2045 = vpop.f32.mrf.mxu0
  %2046 = vmatprep.mubr.bf16.mxu0 0
  %2047 = vmatmul.mubr.bf16.gmra.mxu0 %v1004
  %v2048 = vpop.f32.mrf.mxu0
  %v2049 = vadd.f32 0.0, %v2048
  %v2050 = vpop.f32.mrf.mxu0
  %v2051 = vpop.f32.mrf.mxu0
  %v2052 = vadd.f32 0.0, %v2051
  %v2053 = vpop.f32.mrf.mxu0
  %2054 = vmatprep.mubr.bf16.mxu0 0
  %2055 = vmatmul.mubr.bf16.gmra.mxu0 %v1007
  %v2056 = vpop.f32.mrf.mxu0
  %v2057 = vadd.f32 0.0, %v2056
  %v2058 = vpop.f32.mrf.mxu0
  %v2059 = vpop.f32.mrf.mxu0
  %v2060 = vadd.f32 0.0, %v2059
  %v2061 = vpop.f32.mrf.mxu0
  %2062 = vmatprep.mubr.bf16.mxu0 0
  %2063 = vmatmul.mubr.bf16.gmra.mxu0 %v1010
  %v2064 = vpop.f32.mrf.mxu0
  %v2065 = vadd.f32 0.0, %v2064
  %v2066 = vpop.f32.mrf.mxu0
  %v2067 = vpop.f32.mrf.mxu0
  %v2068 = vadd.f32 0.0, %v2067
  %v2069 = vpop.f32.mrf.mxu0
  %2070 = vmatprep.mubr.bf16.mxu0 0
  %2071 = vmatmul.mubr.bf16.gmra.mxu0 %v1013
  %v2072 = vpop.f32.mrf.mxu0
  %v2073 = vadd.f32 0.0, %v2072
  %v2074 = vpop.f32.mrf.mxu0
  %v2075 = vpop.f32.mrf.mxu0
  %v2076 = vadd.f32 0.0, %v2075
  %v2077 = vpop.f32.mrf.mxu0
  %2078 = vmatprep.mubr.bf16.mxu0 0
  %2079 = vmatmul.mubr.bf16.gmra.mxu0 %v1016
  %v2080 = vpop.f32.mrf.mxu0
  %v2081 = vadd.f32 0.0, %v2080
  %v2082 = vpop.f32.mrf.mxu0
  %v2083 = vpop.f32.mrf.mxu0
  %v2084 = vadd.f32 0.0, %v2083
  %v2085 = vpop.f32.mrf.mxu0
  %2086 = vmatprep.mubr.bf16.mxu0 0
  %2087 = vmatmul.mubr.bf16.gmra.mxu0 %v1019
  %v2088 = vpop.f32.mrf.mxu0
  %v2089 = vadd.f32 0.0, %v2088
  %v2090 = vpop.f32.mrf.mxu0
  %v2091 = vpop.f32.mrf.mxu0
  %v2092 = vadd.f32 0.0, %v2091
  %v2093 = vpop.f32.mrf.mxu0
  %2094 = vmatprep.mubr.bf16.mxu0 0
  %2095 = vmatmul.mubr.bf16.gmra.mxu0 %v1022
  %v2096 = vpop.f32.mrf.mxu0
  %v2097 = vadd.f32 0.0, %v2096
  %v2098 = vpop.f32.mrf.mxu0
  %v2099 = vpop.f32.mrf.mxu0
  %v2100 = vadd.f32 0.0, %v2099
  %v2101 = vpop.f32.mrf.mxu0
  %2102 = vmatprep.mubr.bf16.mxu0 0
  %2103 = vmatmul.mubr.bf16.gmra.mxu0 %v1025
  %v2104 = vpop.f32.mrf.mxu0
  %v2105 = vadd.f32 0.0, %v2104
  %v2106 = vpop.f32.mrf.mxu0
  %v2107 = vpop.f32.mrf.mxu0
  %v2108 = vadd.f32 0.0, %v2107
  %v2109 = vpop.f32.mrf.mxu0
  %2110 = vmatprep.mubr.bf16.mxu0 0
  %2111 = vmatmul.mubr.bf16.gmra.mxu0 %v1028
  %v2112 = vpop.f32.mrf.mxu0
  %v2113 = vadd.f32 0.0, %v2112
  %v2114 = vpop.f32.mrf.mxu0
  %v2115 = vpop.f32.mrf.mxu0
  %v2116 = vadd.f32 0.0, %v2115
  %v2117 = vpop.f32.mrf.mxu0
  %2118 = vmatprep.mubr.bf16.mxu0 0
  %2119 = vmatmul.mubr.bf16.gmra.mxu0 %v1031
  %v2120 = vpop.f32.mrf.mxu0
  %v2121 = vadd.f32 0.0, %v2120
  %v2122 = vpop.f32.mrf.mxu0
  %v2123 = vpop.f32.mrf.mxu0
  %v2124 = vadd.f32 0.0, %v2123
  %v2125 = vpop.f32.mrf.mxu0
  %2126 = vmatprep.mubr.bf16.mxu0 0
  %2127 = vmatmul.mubr.bf16.gmra.mxu0 %v1034
  %v2128 = vpop.f32.mrf.mxu0
  %v2129 = vadd.f32 0.0, %v2128
  %v2130 = vpop.f32.mrf.mxu0
  %v2131 = vpop.f32.mrf.mxu0
  %v2132 = vadd.f32 0.0, %v2131
  %v2133 = vpop.f32.mrf.mxu0
  %2134 = vmatprep.mubr.bf16.mxu0 0
  %2135 = vmatmul.mubr.bf16.gmra.mxu0 %v1037
  %v2136 = vpop.f32.mrf.mxu0
  %v2137 = vadd.f32 0.0, %v2136
  %v2138 = vpop.f32.mrf.mxu0
  %v2139 = vpop.f32.mrf.mxu0
  %v2140 = vadd.f32 0.0, %v2139
  %v2141 = vpop.f32.mrf.mxu0
  %2142 = vmatprep.mubr.bf16.mxu0 0
  %2143 = vmatmul.mubr.bf16.gmra.mxu0 %v1040
  %v2144 = vpop.f32.mrf.mxu0
  %v2145 = vadd.f32 0.0, %v2144
  %v2146 = vpop.f32.mrf.mxu0
  %v2147 = vpop.f32.mrf.mxu0
  %v2148 = vadd.f32 0.0, %v2147
  %v2149 = vpop.f32.mrf.mxu0
  %2150 = vmatprep.mubr.bf16.mxu0 0
  %2151 = vmatmul.mubr.bf16.gmra.mxu0 %v1043
  %v2152 = vpop.f32.mrf.mxu0
  %v2153 = vadd.f32 0.0, %v2152
  %v2154 = vpop.f32.mrf.mxu0
  %v2155 = vpop.f32.mrf.mxu0
  %v2156 = vadd.f32 0.0, %v2155
  %v2157 = vpop.f32.mrf.mxu0
  %2158 = vmatprep.mubr.bf16.mxu0 0
  %2159 = vmatmul.mubr.bf16.gmra.mxu0 %v1046
  %v2160 = vpop.f32.mrf.mxu0
  %v2161 = vadd.f32 0.0, %v2160
  %v2162 = vpop.f32.mrf.mxu0
  %v2163 = vpop.f32.mrf.mxu0
  %v2164 = vadd.f32 0.0, %v2163
  %v2165 = vpop.f32.mrf.mxu0
  %2166 = vmatprep.mubr.bf16.mxu0 0
  %2167 = vmatmul.mubr.bf16.gmra.mxu0 %v1049
  %v2168 = vpop.f32.mrf.mxu0
  %v2169 = vadd.f32 0.0, %v2168
  %v2170 = vpop.f32.mrf.mxu0
  %v2171 = vpop.f32.mrf.mxu0
  %v2172 = vadd.f32 0.0, %v2171
  %v2173 = vpop.f32.mrf.mxu0
  %2174 = vmatprep.mubr.bf16.mxu0 0
  %2175 = vmatmul.mubr.bf16.gmra.mxu0 %v1052
  %v2176 = vpop.f32.mrf.mxu0
  %v2177 = vadd.f32 0.0, %v2176
  %v2178 = vpop.f32.mrf.mxu0
  %v2179 = vpop.f32.mrf.mxu0
  %v2180 = vadd.f32 0.0, %v2179
  %v2181 = vpop.f32.mrf.mxu0
  %2182 = vmatprep.mubr.bf16.mxu0 0
  %2183 = vmatmul.mubr.bf16.gmra.mxu0 %v1055
  %v2184 = vpop.f32.mrf.mxu0
  %v2185 = vadd.f32 0.0, %v2184
  %v2186 = vpop.f32.mrf.mxu0
  %v2187 = vpop.f32.mrf.mxu0
  %v2188 = vadd.f32 0.0, %v2187
  %v2189 = vpop.f32.mrf.mxu0
  %2190 = vmatprep.mubr.bf16.mxu0 0
  %2191 = vmatmul.mubr.bf16.gmra.mxu0 %v1058
  %v2192 = vpop.f32.mrf.mxu0
  %v2193 = vadd.f32 0.0, %v2192
  %v2194 = vpop.f32.mrf.mxu0
  %v2195 = vpop.f32.mrf.mxu0
  %v2196 = vadd.f32 0.0, %v2195
  %v2197 = vpop.f32.mrf.mxu0
  %2198 = vmatprep.mubr.bf16.mxu0 0
  %2199 = vmatmul.mubr.bf16.gmra.mxu0 %v1061
  %v2200 = vpop.f32.mrf.mxu0
  %v2201 = vadd.f32 0.0, %v2200
  %v2202 = vpop.f32.mrf.mxu0
  %v2203 = vpop.f32.mrf.mxu0
  %v2204 = vadd.f32 0.0, %v2203
  %v2205 = vpop.f32.mrf.mxu0
  %2206 = vmatprep.mubr.bf16.mxu0 0
  %2207 = vmatmul.mubr.bf16.gmra.mxu0 %v1064
  %v2208 = vpop.f32.mrf.mxu0
  %v2209 = vadd.f32 0.0, %v2208
  %v2210 = vpop.f32.mrf.mxu0
  %v2211 = vpop.f32.mrf.mxu0
  %v2212 = vadd.f32 0.0, %v2211
  %v2213 = vpop.f32.mrf.mxu0
  %2214 = vmatprep.mubr.bf16.mxu0 0
  %2215 = vmatmul.mubr.bf16.gmra.mxu0 %v1067
  %v2216 = vpop.f32.mrf.mxu0
  %v2217 = vadd.f32 0.0, %v2216
  %v2218 = vpop.f32.mrf.mxu0
  %v2219 = vpop.f32.mrf.mxu0
  %v2220 = vadd.f32 0.0, %v2219
  %v2221 = vpop.f32.mrf.mxu0
  %2222 = vmatprep.mubr.bf16.mxu0 0
  %2223 = vmatmul.mubr.bf16.gmra.mxu0 %v1070
  %v2224 = vpop.f32.mrf.mxu0
  %v2225 = vadd.f32 0.0, %v2224
  %v2226 = vpop.f32.mrf.mxu0
  %v2227 = vpop.f32.mrf.mxu0
  %v2228 = vadd.f32 0.0, %v2227
  %v2229 = vpop.f32.mrf.mxu0
  %2230 = vmatprep.mubr.bf16.mxu0 0
  %2231 = vmatmul.mubr.bf16.gmra.mxu0 %v1073
  %v2232 = vpop.f32.mrf.mxu0
  %v2233 = vadd.f32 0.0, %v2232
  %v2234 = vpop.f32.mrf.mxu0
  %v2235 = vpop.f32.mrf.mxu0
  %v2236 = vadd.f32 0.0, %v2235
  %v2237 = vpop.f32.mrf.mxu0
  %2238 = vmatprep.mubr.bf16.mxu0 0
  %2239 = vmatmul.mubr.bf16.gmra.mxu0 %v1076
  %v2240 = vpop.f32.mrf.mxu0
  %v2241 = vadd.f32 0.0, %v2240
  %v2242 = vpop.f32.mrf.mxu0
  %v2243 = vpop.f32.mrf.mxu0
  %v2244 = vadd.f32 0.0, %v2243
  %v2245 = vpop.f32.mrf.mxu0
  %2246 = vmatprep.mubr.bf16.mxu0 0
  %2247 = vmatmul.mubr.bf16.gmra.mxu0 %v1079
  %v2248 = vpop.f32.mrf.mxu0
  %v2249 = vadd.f32 0.0, %v2248
  %v2250 = vpop.f32.mrf.mxu0
  %v2251 = vpop.f32.mrf.mxu0
  %v2252 = vadd.f32 0.0, %v2251
  %v2253 = vpop.f32.mrf.mxu0
  %2254 = vmatprep.mubr.bf16.mxu0 0
  %2255 = vmatmul.mubr.bf16.gmra.mxu0 %v1082
  %v2256 = vpop.f32.mrf.mxu0
  %v2257 = vadd.f32 0.0, %v2256
  %v2258 = vpop.f32.mrf.mxu0
  %v2259 = vpop.f32.mrf.mxu0
  %v2260 = vadd.f32 0.0, %v2259
  %v2261 = vpop.f32.mrf.mxu0
  %2262 = vmatprep.mubr.bf16.mxu0 0
  %2263 = vmatmul.mubr.bf16.gmra.mxu0 %v1085
  %v2264 = vpop.f32.mrf.mxu0
  %v2265 = vadd.f32 0.0, %v2264
  %v2266 = vpop.f32.mrf.mxu0
  %v2267 = vpop.f32.mrf.mxu0
  %v2268 = vadd.f32 0.0, %v2267
  %v2269 = vpop.f32.mrf.mxu0
  %2270 = vmatprep.mubr.bf16.mxu0 0
  %2271 = vmatmul.mubr.bf16.gmra.mxu0 %v1088
  %v2272 = vpop.f32.mrf.mxu0
  %v2273 = vadd.f32 0.0, %v2272
  %v2274 = vpop.f32.mrf.mxu0
  %v2275 = vpop.f32.mrf.mxu0
  %v2276 = vadd.f32 0.0, %v2275
  %v2277 = vpop.f32.mrf.mxu0
  %2278 = vmatprep.mubr.bf16.mxu0 0
  %2279 = vmatmul.mubr.bf16.gmra.mxu0 %v1091
  %v2280 = vpop.f32.mrf.mxu0
  %v2281 = vadd.f32 0.0, %v2280
  %v2282 = vpop.f32.mrf.mxu0
  %v2283 = vpop.f32.mrf.mxu0
  %v2284 = vadd.f32 0.0, %v2283
  %v2285 = vpop.f32.mrf.mxu0
  %2286 = vmatprep.mubr.bf16.mxu0 0
  %2287 = vmatmul.mubr.bf16.gmra.mxu0 %v1094
  %v2288 = vpop.f32.mrf.mxu0
  %v2289 = vadd.f32 0.0, %v2288
  %v2290 = vpop.f32.mrf.mxu0
  %v2291 = vpop.f32.mrf.mxu0
  %v2292 = vadd.f32 0.0, %v2291
  %v2293 = vpop.f32.mrf.mxu0
  %2294 = vmatprep.mubr.bf16.mxu0 0
  %2295 = vmatmul.mubr.bf16.gmra.mxu0 %v1097
  %v2296 = vpop.f32.mrf.mxu0
  %v2297 = vadd.f32 0.0, %v2296
  %v2298 = vpop.f32.mrf.mxu0
  %v2299 = vpop.f32.mrf.mxu0
  %v2300 = vadd.f32 0.0, %v2299
  %v2301 = vpop.f32.mrf.mxu0
  %2302 = vmatprep.mubr.bf16.mxu0 0
  %2303 = vmatmul.mubr.bf16.gmra.mxu0 %v1100
  %v2304 = vpop.f32.mrf.mxu0
  %v2305 = vadd.f32 0.0, %v2304
  %v2306 = vpop.f32.mrf.mxu0
  %v2307 = vpop.f32.mrf.mxu0
  %v2308 = vadd.f32 0.0, %v2307
  %v2309 = vpop.f32.mrf.mxu0
  %2310 = vmatprep.mubr.bf16.mxu0 0
  %2311 = vmatmul.mubr.bf16.gmra.mxu0 %v1103
  %v2312 = vpop.f32.mrf.mxu0
  %v2313 = vadd.f32 0.0, %v2312
  %v2314 = vpop.f32.mrf.mxu0
  %v2315 = vpop.f32.mrf.mxu0
  %v2316 = vadd.f32 0.0, %v2315
  %v2317 = vpop.f32.mrf.mxu0
  %2318 = vmatprep.mubr.bf16.mxu0 0
  %2319 = vmatmul.mubr.bf16.gmra.mxu0 %v1106
  %v2320 = vpop.f32.mrf.mxu0
  %v2321 = vadd.f32 0.0, %v2320
  %v2322 = vpop.f32.mrf.mxu0
  %v2323 = vpop.f32.mrf.mxu0
  %v2324 = vadd.f32 0.0, %v2323
  %v2325 = vpop.f32.mrf.mxu0
  %2326 = vmatprep.mubr.bf16.mxu0 0
  %2327 = vmatmul.mubr.bf16.gmra.mxu0 %v1109
  %v2328 = vpop.f32.mrf.mxu0
  %v2329 = vadd.f32 0.0, %v2328
  %v2330 = vpop.f32.mrf.mxu0
  %v2331 = vpop.f32.mrf.mxu0
  %v2332 = vadd.f32 0.0, %v2331
  %v2333 = vpop.f32.mrf.mxu0
  %2334 = vmatprep.mubr.bf16.mxu0 0
  %2335 = vmatmul.mubr.bf16.gmra.mxu0 %v1112
  %v2336 = vpop.f32.mrf.mxu0
  %v2337 = vadd.f32 0.0, %v2336
  %v2338 = vpop.f32.mrf.mxu0
  %v2339 = vpop.f32.mrf.mxu0
  %v2340 = vadd.f32 0.0, %v2339
  %v2341 = vpop.f32.mrf.mxu0
  %2342 = vmatprep.mubr.bf16.mxu0 0
  %2343 = vmatmul.mubr.bf16.gmra.mxu0 %v1115
  %v2344 = vpop.f32.mrf.mxu0
  %v2345 = vadd.f32 0.0, %v2344
  %v2346 = vpop.f32.mrf.mxu0
  %v2347 = vpop.f32.mrf.mxu0
  %v2348 = vadd.f32 0.0, %v2347
  %v2349 = vpop.f32.mrf.mxu0
  %2350 = vmatprep.mubr.bf16.mxu0 0
  %2351 = vmatmul.mubr.bf16.gmra.mxu0 %v1118
  %v2352 = vpop.f32.mrf.mxu0
  %v2353 = vadd.f32 0.0, %v2352
  %v2354 = vpop.f32.mrf.mxu0
  %v2355 = vpop.f32.mrf.mxu0
  %v2356 = vadd.f32 0.0, %v2355
  %v2357 = vpop.f32.mrf.mxu0
  %2358 = vmatprep.mubr.bf16.mxu0 0
  %2359 = vmatmul.mubr.bf16.gmra.mxu0 %v1121
  %v2360 = vpop.f32.mrf.mxu0
  %v2361 = vadd.f32 0.0, %v2360
  %v2362 = vpop.f32.mrf.mxu0
  %v2363 = vpop.f32.mrf.mxu0
  %v2364 = vadd.f32 0.0, %v2363
  %v2365 = vpop.f32.mrf.mxu0
  %2366 = vmatprep.mubr.bf16.mxu0 0
  %2367 = vmatmul.mubr.bf16.gmra.mxu0 %v1124
  %v2368 = vpop.f32.mrf.mxu0
  %v2369 = vadd.f32 0.0, %v2368
  %v2370 = vpop.f32.mrf.mxu0
  %v2371 = vpop.f32.mrf.mxu0
  %v2372 = vadd.f32 0.0, %v2371
  %v2373 = vpop.f32.mrf.mxu0
  %2374 = vmatprep.mubr.bf16.mxu0 0
  %2375 = vmatmul.mubr.bf16.gmra.mxu0 %v1127
  %v2376 = vpop.f32.mrf.mxu0
  %v2377 = vadd.f32 0.0, %v2376
  %v2378 = vpop.f32.mrf.mxu0
  %v2379 = vpop.f32.mrf.mxu0
  %v2380 = vadd.f32 0.0, %v2379
  %v2381 = vpop.f32.mrf.mxu0
  %2382 = vmatprep.mubr.bf16.mxu0 0
  %2383 = vmatmul.mubr.bf16.gmra.mxu0 %v1130
  %v2384 = vpop.f32.mrf.mxu0
  %v2385 = vadd.f32 0.0, %v2384
  %v2386 = vpop.f32.mrf.mxu0
  %v2387 = vpop.f32.mrf.mxu0
  %v2388 = vadd.f32 0.0, %v2387
  %v2389 = vpop.f32.mrf.mxu0
  %2390 = vmatprep.mubr.bf16.mxu0 0
  %2391 = vmatmul.mubr.bf16.gmra.mxu0 %v1133
  %v2392 = vpop.f32.mrf.mxu0
  %v2393 = vadd.f32 0.0, %v2392
  %v2394 = vpop.f32.mrf.mxu0
  %v2395 = vpop.f32.mrf.mxu0
  %v2396 = vadd.f32 0.0, %v2395
  %v2397 = vpop.f32.mrf.mxu0
  %2398 = vmatprep.mubr.bf16.mxu0 0
  %2399 = vmatmul.mubr.bf16.gmra.mxu0 %v1136
  %v2400 = vpop.f32.mrf.mxu0
  %v2401 = vadd.f32 0.0, %v2400
  %v2402 = vpop.f32.mrf.mxu0
  %v2403 = vpop.f32.mrf.mxu0
  %v2404 = vadd.f32 0.0, %v2403
  %v2405 = vpop.f32.mrf.mxu0
  %2406 = vmatprep.mubr.bf16.mxu0 0
  %2407 = vmatmul.mubr.bf16.gmra.mxu0 %v1139
  %v2408 = vpop.f32.mrf.mxu0
  %v2409 = vadd.f32 0.0, %v2408
  %v2410 = vpop.f32.mrf.mxu0
  %v2411 = vpop.f32.mrf.mxu0
  %v2412 = vadd.f32 0.0, %v2411
  %v2413 = vpop.f32.mrf.mxu0
  %2414 = vmatprep.mubr.bf16.mxu0 0
  %2415 = vmatmul.mubr.bf16.gmra.mxu0 %v1142
  %v2416 = vpop.f32.mrf.mxu0
  %v2417 = vadd.f32 0.0, %v2416
  %v2418 = vpop.f32.mrf.mxu0
  %v2419 = vpop.f32.mrf.mxu0
  %v2420 = vadd.f32 0.0, %v2419
  %v2421 = vpop.f32.mrf.mxu0
  %2422 = vmatprep.mubr.bf16.mxu0 0
  %2423 = vmatmul.mubr.bf16.gmra.mxu0 %v1145
  %v2424 = vpop.f32.mrf.mxu0
  %v2425 = vadd.f32 0.0, %v2424
  %v2426 = vpop.f32.mrf.mxu0
  %v2427 = vpop.f32.mrf.mxu0
  %v2428 = vadd.f32 0.0, %v2427
  %v2429 = vpop.f32.mrf.mxu0
  %2430 = vmatprep.mubr.bf16.mxu0 0
  %2431 = vmatmul.mubr.bf16.gmra.mxu0 %v1148
  %v2432 = vpop.f32.mrf.mxu0
  %v2433 = vadd.f32 0.0, %v2432
  %v2434 = vpop.f32.mrf.mxu0
  %v2435 = vpop.f32.mrf.mxu0
  %v2436 = vadd.f32 0.0, %v2435
  %v2437 = vpop.f32.mrf.mxu0
  %2438 = vmatprep.mubr.bf16.mxu0 0
  %2439 = vmatmul.mubr.bf16.gmra.mxu0 %v1151
  %v2440 = vpop.f32.mrf.mxu0
  %v2441 = vadd.f32 0.0, %v2440
  %v2442 = vpop.f32.mrf.mxu0
  %v2443 = vpop.f32.mrf.mxu0
  %v2444 = vadd.f32 0.0, %v2443
  %v2445 = vpop.f32.mrf.mxu0
  %2446 = vmatprep.mubr.bf16.mxu0 0
  %2447 = vmatmul.mubr.bf16.gmra.mxu0 %v1154
  %v2448 = vpop.f32.mrf.mxu0
  %v2449 = vadd.f32 0.0, %v2448
  %v2450 = vpop.f32.mrf.mxu0
  %v2451 = vpop.f32.mrf.mxu0
  %v2452 = vadd.f32 0.0, %v2451
  %v2453 = vpop.f32.mrf.mxu0
  %2454 = vmatprep.mubr.bf16.mxu0 0
  %2455 = vmatmul.mubr.bf16.gmra.mxu0 %v1157
  %v2456 = vpop.f32.mrf.mxu0
  %v2457 = vadd.f32 0.0, %v2456
  %v2458 = vpop.f32.mrf.mxu0
  %v2459 = vpop.f32.mrf.mxu0
  %v2460 = vadd.f32 0.0, %v2459
  %v2461 = vpop.f32.mrf.mxu0
  %2462 = vmatprep.mubr.bf16.mxu0 0
  %2463 = vmatmul.mubr.bf16.gmra.mxu0 %v1160
  %v2464 = vpop.f32.mrf.mxu0
  %v2465 = vadd.f32 0.0, %v2464
  %v2466 = vpop.f32.mrf.mxu0
  %v2467 = vpop.f32.mrf.mxu0
  %v2468 = vadd.f32 0.0, %v2467
  %v2469 = vpop.f32.mrf.mxu0
  %2470 = vmatprep.mubr.bf16.mxu0 0
  %2471 = vmatmul.mubr.bf16.gmra.mxu0 %v1163
  %v2472 = vpop.f32.mrf.mxu0
  %v2473 = vadd.f32 0.0, %v2472
  %v2474 = vpop.f32.mrf.mxu0
  %v2475 = vpop.f32.mrf.mxu0
  %v2476 = vadd.f32 0.0, %v2475
  %v2477 = vpop.f32.mrf.mxu0
  %2478 = vmatprep.mubr.bf16.mxu0 0
  %2479 = vmatmul.mubr.bf16.gmra.mxu0 %v1166
  %v2480 = vpop.f32.mrf.mxu0
  %v2481 = vadd.f32 0.0, %v2480
  %v2482 = vpop.f32.mrf.mxu0
  %v2483 = vpop.f32.mrf.mxu0
  %v2484 = vadd.f32 0.0, %v2483
  %v2485 = vpop.f32.mrf.mxu0
  %2486 = vmatprep.mubr.bf16.mxu0 0
  %2487 = vmatmul.mubr.bf16.gmra.mxu0 %v1169
  %v2488 = vpop.f32.mrf.mxu0
  %v2489 = vadd.f32 0.0, %v2488
  %v2490 = vpop.f32.mrf.mxu0
  %v2491 = vpop.f32.mrf.mxu0
  %v2492 = vadd.f32 0.0, %v2491
  %v2493 = vpop.f32.mrf.mxu0
  %2494 = vmatprep.mubr.bf16.mxu0 0
  %2495 = vmatmul.mubr.bf16.gmra.mxu0 %v1172
  %v2496 = vpop.f32.mrf.mxu0
  %v2497 = vadd.f32 0.0, %v2496
  %v2498 = vpop.f32.mrf.mxu0
  %v2499 = vpop.f32.mrf.mxu0
  %v2500 = vadd.f32 0.0, %v2499
  %v2501 = vpop.f32.mrf.mxu0
  %2502 = vmatprep.mubr.bf16.mxu0 0
  %2503 = vmatmul.mubr.bf16.gmra.mxu0 %v1175
  %v2504 = vpop.f32.mrf.mxu0
  %v2505 = vadd.f32 0.0, %v2504
  %v2506 = vpop.f32.mrf.mxu0
  %v2507 = vpop.f32.mrf.mxu0
  %v2508 = vadd.f32 0.0, %v2507
  %v2509 = vpop.f32.mrf.mxu0
  %2510 = vmatprep.mubr.bf16.mxu0 0
  %2511 = vmatmul.mubr.bf16.gmra.mxu0 %v1178
  %v2512 = vpop.f32.mrf.mxu0
  %v2513 = vadd.f32 0.0, %v2512
  %v2514 = vpop.f32.mrf.mxu0
  %v2515 = vpop.f32.mrf.mxu0
  %v2516 = vadd.f32 0.0, %v2515
  %v2517 = vpop.f32.mrf.mxu0
  %2518 = vmatprep.mubr.bf16.mxu0 0
  %2519 = vmatmul.mubr.bf16.gmra.mxu0 %v1181
  %v2520 = vpop.f32.mrf.mxu0
  %v2521 = vadd.f32 0.0, %v2520
  %v2522 = vpop.f32.mrf.mxu0
  %v2523 = vpop.f32.mrf.mxu0
  %v2524 = vadd.f32 0.0, %v2523
  %v2525 = vpop.f32.mrf.mxu0
  %2526 = vmatprep.mubr.bf16.mxu0 0
  %2527 = vmatmul.mubr.bf16.gmra.mxu0 %v1184
  %v2528 = vpop.f32.mrf.mxu0
  %v2529 = vadd.f32 0.0, %v2528
  %v2530 = vpop.f32.mrf.mxu0
  %v2531 = vpop.f32.mrf.mxu0
  %v2532 = vadd.f32 0.0, %v2531
  %v2533 = vpop.f32.mrf.mxu0
  %2534 = vmatprep.mubr.bf16.mxu0 0
  %2535 = vmatmul.mubr.bf16.gmra.mxu0 %v1187
  %v2536 = vpop.f32.mrf.mxu0
  %v2537 = vadd.f32 0.0, %v2536
  %v2538 = vpop.f32.mrf.mxu0
  %v2539 = vpop.f32.mrf.mxu0
  %v2540 = vadd.f32 0.0, %v2539
  %v2541 = vpop.f32.mrf.mxu0
  %2542 = vmatprep.mubr.bf16.mxu0 0
  %2543 = vmatmul.mubr.bf16.gmra.mxu0 %v1190
  %v2544 = vpop.f32.mrf.mxu0
  %v2545 = vadd.f32 0.0, %v2544
  %v2546 = vpop.f32.mrf.mxu0
  %v2547 = vpop.f32.mrf.mxu0
  %v2548 = vadd.f32 0.0, %v2547
  %v2549 = vpop.f32.mrf.mxu0
  %2550 = vmatprep.mubr.bf16.mxu0 0
  %2551 = vmatmul.mubr.bf16.gmra.mxu0 %v1193
  %v2552 = vpop.f32.mrf.mxu0
  %v2553 = vadd.f32 0.0, %v2552
  %v2554 = vpop.f32.mrf.mxu0
  %v2555 = vpop.f32.mrf.mxu0
  %v2556 = vadd.f32 0.0, %v2555
  %v2557 = vpop.f32.mrf.mxu0
  %2558 = vmatprep.mubr.bf16.mxu0 0
  %2559 = vmatmul.mubr.bf16.gmra.mxu0 %v1196
  %v2560 = vpop.f32.mrf.mxu0
  %v2561 = vadd.f32 0.0, %v2560
  %v2562 = vpop.f32.mrf.mxu0
  %v2563 = vpop.f32.mrf.mxu0
  %v2564 = vadd.f32 0.0, %v2563
  %v2565 = vpop.f32.mrf.mxu0
  %2566 = vmatprep.mubr.bf16.mxu0 0
  %2567 = vmatmul.mubr.bf16.gmra.mxu0 %v1199
  %v2568 = vpop.f32.mrf.mxu0
  %v2569 = vadd.f32 0.0, %v2568
  %v2570 = vpop.f32.mrf.mxu0
  %v2571 = vpop.f32.mrf.mxu0
  %v2572 = vadd.f32 0.0, %v2571
  %v2573 = vpop.f32.mrf.mxu0
  %2574 = vmatprep.mubr.bf16.mxu0 0
  %2575 = vmatmul.mubr.bf16.gmra.mxu0 %v1202
  %v2576 = vpop.f32.mrf.mxu0
  %v2577 = vadd.f32 0.0, %v2576
  %v2578 = vpop.f32.mrf.mxu0
  %v2579 = vpop.f32.mrf.mxu0
  %v2580 = vadd.f32 0.0, %v2579
  %v2581 = vpop.f32.mrf.mxu0
  %2582 = vmatprep.mubr.bf16.mxu0 0
  %2583 = vmatmul.mubr.bf16.gmra.mxu0 %v1205
  %v2584 = vpop.f32.mrf.mxu0
  %v2585 = vadd.f32 0.0, %v2584
  %v2586 = vpop.f32.mrf.mxu0
  %v2587 = vpop.f32.mrf.mxu0
  %v2588 = vadd.f32 0.0, %v2587
  %v2589 = vpop.f32.mrf.mxu0
  %2590 = vmatprep.mubr.bf16.mxu0 0
  %2591 = vmatmul.mubr.bf16.gmra.mxu0 %v1208
  %v2592 = vpop.f32.mrf.mxu0
  %v2593 = vadd.f32 0.0, %v2592
  %v2594 = vpop.f32.mrf.mxu0
  %v2595 = vpop.f32.mrf.mxu0
  %v2596 = vadd.f32 0.0, %v2595
  %v2597 = vpop.f32.mrf.mxu0
  %2598 = vmatprep.mubr.bf16.mxu0 0
  %2599 = vmatmul.mubr.bf16.gmra.mxu0 %v1211
  %v2600 = vpop.f32.mrf.mxu0
  %v2601 = vadd.f32 0.0, %v2600
  %v2602 = vpop.f32.mrf.mxu0
  %v2603 = vpop.f32.mrf.mxu0
  %v2604 = vadd.f32 0.0, %v2603
  %v2605 = vpop.f32.mrf.mxu0
  %2606 = vmatprep.mubr.bf16.mxu0 0
  %2607 = vmatmul.mubr.bf16.gmra.mxu0 %v1214
  %v2608 = vpop.f32.mrf.mxu0
  %v2609 = vadd.f32 0.0, %v2608
  %v2610 = vpop.f32.mrf.mxu0
  %v2611 = vpop.f32.mrf.mxu0
  %v2612 = vadd.f32 0.0, %v2611
  %v2613 = vpop.f32.mrf.mxu0
  %2614 = vmatprep.mubr.bf16.mxu0 0
  %2615 = vmatmul.mubr.bf16.gmra.mxu0 %v1217
  %v2616 = vpop.f32.mrf.mxu0
  %v2617 = vadd.f32 0.0, %v2616
  %v2618 = vpop.f32.mrf.mxu0
  %v2619 = vpop.f32.mrf.mxu0
  %v2620 = vadd.f32 0.0, %v2619
  %v2621 = vpop.f32.mrf.mxu0
  %2622 = vmatprep.mubr.bf16.mxu0 0
  %2623 = vmatmul.mubr.bf16.gmra.mxu0 %v1220
  %v2624 = vpop.f32.mrf.mxu0
  %v2625 = vadd.f32 0.0, %v2624
  %v2626 = vpop.f32.mrf.mxu0
  %v2627 = vpop.f32.mrf.mxu0
  %v2628 = vadd.f32 0.0, %v2627
  %v2629 = vpop.f32.mrf.mxu0
  %2630 = vmatprep.mubr.bf16.mxu0 0
  %2631 = vmatmul.mubr.bf16.gmra.mxu0 %v1223
  %v2632 = vpop.f32.mrf.mxu0
  %v2633 = vadd.f32 0.0, %v2632
  %v2634 = vpop.f32.mrf.mxu0
  %v2635 = vpop.f32.mrf.mxu0
  %v2636 = vadd.f32 0.0, %v2635
  %v2637 = vpop.f32.mrf.mxu0
  %2638 = vmatprep.mubr.bf16.mxu0 0
  %2639 = vmatmul.mubr.bf16.gmra.mxu0 %v1226
  %v2640 = vpop.f32.mrf.mxu0
  %v2641 = vadd.f32 0.0, %v2640
  %v2642 = vpop.f32.mrf.mxu0
  %v2643 = vpop.f32.mrf.mxu0
  %v2644 = vadd.f32 0.0, %v2643
  %v2645 = vpop.f32.mrf.mxu0
  %2646 = vmatprep.mubr.bf16.mxu0 0
  %2647 = vmatmul.mubr.bf16.gmra.mxu0 %v1229
  %v2648 = vpop.f32.mrf.mxu0
  %v2649 = vadd.f32 0.0, %v2648
  %v2650 = vpop.f32.mrf.mxu0
  %v2651 = vpop.f32.mrf.mxu0
  %v2652 = vadd.f32 0.0, %v2651
  %v2653 = vpop.f32.mrf.mxu0
  %2654 = vmatprep.mubr.bf16.mxu0 0
  %2655 = vmatmul.mubr.bf16.gmra.mxu0 %v1232
  %v2656 = vpop.f32.mrf.mxu0
  %v2657 = vadd.f32 0.0, %v2656
  %v2658 = vpop.f32.mrf.mxu0
  %v2659 = vpop.f32.mrf.mxu0
  %v2660 = vadd.f32 0.0, %v2659
  %v2661 = vpop.f32.mrf.mxu0
  %2662 = vmatprep.mubr.bf16.mxu0 0
  %2663 = vmatmul.mubr.bf16.gmra.mxu0 %v1235
  %v2664 = vpop.f32.mrf.mxu0
  %v2665 = vadd.f32 0.0, %v2664
  %v2666 = vpop.f32.mrf.mxu0
  %v2667 = vpop.f32.mrf.mxu0
  %v2668 = vadd.f32 0.0, %v2667
  %v2669 = vpop.f32.mrf.mxu0
  %2670 = vmatprep.mubr.bf16.mxu0 0
  %2671 = vmatmul.mubr.bf16.gmra.mxu0 %v1238
  %v2672 = vpop.f32.mrf.mxu0
  %v2673 = vadd.f32 0.0, %v2672
  %v2674 = vpop.f32.mrf.mxu0
  %v2675 = vpop.f32.mrf.mxu0
  %v2676 = vadd.f32 0.0, %v2675
  %v2677 = vpop.f32.mrf.mxu0
  %2678 = vmatprep.mubr.bf16.mxu0 0
  %2679 = vmatmul.mubr.bf16.gmra.mxu0 %v1241
  %v2680 = vpop.f32.mrf.mxu0
  %v2681 = vadd.f32 0.0, %v2680
  %v2682 = vpop.f32.mrf.mxu0
  %v2683 = vpop.f32.mrf.mxu0
  %v2684 = vadd.f32 0.0, %v2683
  %v2685 = vpop.f32.mrf.mxu0
  %2686 = vmatprep.mubr.bf16.mxu0 0
  %2687 = vmatmul.mubr.bf16.gmra.mxu0 %v1244
  %v2688 = vpop.f32.mrf.mxu0
  %v2689 = vadd.f32 0.0, %v2688
  %v2690 = vpop.f32.mrf.mxu0
  %v2691 = vpop.f32.mrf.mxu0
  %v2692 = vadd.f32 0.0, %v2691
  %v2693 = vpop.f32.mrf.mxu0
  %2694 = vmatprep.mubr.bf16.mxu0 0
  %2695 = vmatmul.mubr.bf16.gmra.mxu0 %v1247
  %v2696 = vpop.f32.mrf.mxu0
  %v2697 = vadd.f32 0.0, %v2696
  %v2698 = vpop.f32.mrf.mxu0
  %v2699 = vpop.f32.mrf.mxu0
  %v2700 = vadd.f32 0.0, %v2699
  %v2701 = vpop.f32.mrf.mxu0
  %2702 = vmatprep.mubr.bf16.mxu0 0
  %2703 = vmatmul.mubr.bf16.gmra.mxu0 %v1250
  %v2704 = vpop.f32.mrf.mxu0
  %v2705 = vadd.f32 0.0, %v2704
  %v2706 = vpop.f32.mrf.mxu0
  %v2707 = vpop.f32.mrf.mxu0
  %v2708 = vadd.f32 0.0, %v2707
  %v2709 = vpop.f32.mrf.mxu0
  %2710 = vmatprep.mubr.bf16.mxu0 0
  %2711 = vmatmul.mubr.bf16.gmra.mxu0 %v1253
  %v2712 = vpop.f32.mrf.mxu0
  %v2713 = vadd.f32 0.0, %v2712
  %v2714 = vpop.f32.mrf.mxu0
  %v2715 = vpop.f32.mrf.mxu0
  %v2716 = vadd.f32 0.0, %v2715
  %v2717 = vpop.f32.mrf.mxu0
  %2718 = vmatprep.mubr.bf16.mxu0 0
  %2719 = vmatmul.mubr.bf16.gmra.mxu0 %v1256
  %v2720 = vpop.f32.mrf.mxu0
  %v2721 = vadd.f32 0.0, %v2720
  %v2722 = vpop.f32.mrf.mxu0
  %v2723 = vpop.f32.mrf.mxu0
  %v2724 = vadd.f32 0.0, %v2723
  %v2725 = vpop.f32.mrf.mxu0
  %2726 = vmatprep.mubr.bf16.mxu0 0
  %2727 = vmatmul.mubr.bf16.gmra.mxu0 %v1259
  %v2728 = vpop.f32.mrf.mxu0
  %v2729 = vadd.f32 0.0, %v2728
  %v2730 = vpop.f32.mrf.mxu0
  %v2731 = vpop.f32.mrf.mxu0
  %v2732 = vadd.f32 0.0, %v2731
  %v2733 = vpop.f32.mrf.mxu0
  %2734 = vmatprep.mubr.bf16.mxu0 0
  %2735 = vmatmul.mubr.bf16.gmra.mxu0 %v1262
  %v2736 = vpop.f32.mrf.mxu0
  %v2737 = vadd.f32 0.0, %v2736
  %v2738 = vpop.f32.mrf.mxu0
  %v2739 = vpop.f32.mrf.mxu0
  %v2740 = vadd.f32 0.0, %v2739
  %v2741 = vpop.f32.mrf.mxu0
  %2742 = vmatprep.mubr.bf16.mxu0 0
  %2743 = vmatmul.mubr.bf16.gmra.mxu0 %v1265
  %v2744 = vpop.f32.mrf.mxu0
  %v2745 = vadd.f32 0.0, %v2744
  %v2746 = vpop.f32.mrf.mxu0
  %v2747 = vpop.f32.mrf.mxu0
  %v2748 = vadd.f32 0.0, %v2747
  %v2749 = vpop.f32.mrf.mxu0
  %2750 = vmatprep.mubr.bf16.mxu0 0
  %2751 = vmatmul.mubr.bf16.gmra.mxu0 %v1268
  %v2752 = vpop.f32.mrf.mxu0
  %v2753 = vadd.f32 0.0, %v2752
  %v2754 = vpop.f32.mrf.mxu0
  %v2755 = vpop.f32.mrf.mxu0
  %v2756 = vadd.f32 0.0, %v2755
  %v2757 = vpop.f32.mrf.mxu0
  %2758 = vmatprep.mubr.bf16.mxu0 0
  %2759 = vmatmul.mubr.bf16.gmra.mxu0 %v1271
  %v2760 = vpop.f32.mrf.mxu0
  %v2761 = vadd.f32 0.0, %v2760
  %v2762 = vpop.f32.mrf.mxu0
  %v2763 = vpop.f32.mrf.mxu0
  %v2764 = vadd.f32 0.0, %v2763
  %v2765 = vpop.f32.mrf.mxu0
  %2766 = vmatprep.mubr.bf16.mxu0 0
  %2767 = vmatmul.mubr.bf16.gmra.mxu0 %v1274
  %v2768 = vpop.f32.mrf.mxu0
  %v2769 = vadd.f32 0.0, %v2768
  %v2770 = vpop.f32.mrf.mxu0
  %v2771 = vpop.f32.mrf.mxu0
  %v2772 = vadd.f32 0.0, %v2771
  %v2773 = vpop.f32.mrf.mxu0
  %2774 = vmatprep.mubr.bf16.mxu0 0
  %2775 = vmatmul.mubr.bf16.gmra.mxu0 %v1277
  %v2776 = vpop.f32.mrf.mxu0
  %v2777 = vadd.f32 0.0, %v2776
  %v2778 = vpop.f32.mrf.mxu0
  %v2779 = vpop.f32.mrf.mxu0
  %v2780 = vadd.f32 0.0, %v2779
  %v2781 = vpop.f32.mrf.mxu0
  %2782 = vmatprep.mubr.bf16.mxu0 0
  %2783 = vmatmul.mubr.bf16.gmra.mxu0 %v1280
  %v2784 = vpop.f32.mrf.mxu0
  %v2785 = vadd.f32 0.0, %v2784
  %v2786 = vpop.f32.mrf.mxu0
  %v2787 = vpop.f32.mrf.mxu0
  %v2788 = vadd.f32 0.0, %v2787
  %v2789 = vpop.f32.mrf.mxu0
  %2790 = vmatprep.mubr.bf16.mxu0 0
  %2791 = vmatmul.mubr.bf16.gmra.mxu0 %v1283
  %v2792 = vpop.f32.mrf.mxu0
  %v2793 = vadd.f32 0.0, %v2792
  %v2794 = vpop.f32.mrf.mxu0
  %v2795 = vpop.f32.mrf.mxu0
  %v2796 = vadd.f32 0.0, %v2795
  %v2797 = vpop.f32.mrf.mxu0
  %2798 = vmatprep.mubr.bf16.mxu0 0
  %2799 = vmatmul.mubr.bf16.gmra.mxu0 %v1286
  %v2800 = vpop.f32.mrf.mxu0
  %v2801 = vadd.f32 0.0, %v2800
  %v2802 = vpop.f32.mrf.mxu0
  %v2803 = vpop.f32.mrf.mxu0
  %v2804 = vadd.f32 0.0, %v2803
  %v2805 = vpop.f32.mrf.mxu0
  %2806 = vmatprep.mubr.bf16.mxu0 0
  %2807 = vmatmul.mubr.bf16.gmra.mxu0 %v1289
  %v2808 = vpop.f32.mrf.mxu0
  %v2809 = vadd.f32 0.0, %v2808
  %v2810 = vpop.f32.mrf.mxu0
  %v2811 = vpop.f32.mrf.mxu0
  %v2812 = vadd.f32 0.0, %v2811
  %v2813 = vpop.f32.mrf.mxu0
  %2814 = vmatprep.mubr.bf16.mxu0 0
  %2815 = vmatmul.mubr.bf16.gmra.mxu0 %v1292
  %v2816 = vpop.f32.mrf.mxu0
  %v2817 = vadd.f32 0.0, %v2816
  %v2818 = vpop.f32.mrf.mxu0
  %v2819 = vpop.f32.mrf.mxu0
  %v2820 = vadd.f32 0.0, %v2819
  %v2821 = vpop.f32.mrf.mxu0
  %2822 = vmatprep.mubr.bf16.mxu0 0
  %2823 = vmatmul.mubr.bf16.gmra.mxu0 %v1295
  %v2824 = vpop.f32.mrf.mxu0
  %v2825 = vadd.f32 0.0, %v2824
  %v2826 = vpop.f32.mrf.mxu0
  %v2827 = vpop.f32.mrf.mxu0
  %v2828 = vadd.f32 0.0, %v2827
  %v2829 = vpop.f32.mrf.mxu0
  %2830 = vmatprep.mubr.bf16.mxu0 0
  %2831 = vmatmul.mubr.bf16.gmra.mxu0 %v1298
  %v2832 = vpop.f32.mrf.mxu0
  %v2833 = vadd.f32 0.0, %v2832
  %v2834 = vpop.f32.mrf.mxu0
  %v2835 = vpop.f32.mrf.mxu0
  %v2836 = vadd.f32 0.0, %v2835
  %v2837 = vpop.f32.mrf.mxu0
  %2838 = vmatprep.mubr.bf16.mxu0 0
  %2839 = vmatmul.mubr.bf16.gmra.mxu0 %v1301
  %v2840 = vpop.f32.mrf.mxu0
  %v2841 = vadd.f32 0.0, %v2840
  %v2842 = vpop.f32.mrf.mxu0
  %v2843 = vpop.f32.mrf.mxu0
  %v2844 = vadd.f32 0.0, %v2843
  %v2845 = vpop.f32.mrf.mxu0
  %2846 = vmatprep.mubr.bf16.mxu0 0
  %2847 = vmatmul.mubr.bf16.gmra.mxu0 %v1304
  %v2848 = vpop.f32.mrf.mxu0
  %v2849 = vadd.f32 0.0, %v2848
  %v2850 = vpop.f32.mrf.mxu0
  %v2851 = vpop.f32.mrf.mxu0
  %v2852 = vadd.f32 0.0, %v2851
  %v2853 = vpop.f32.mrf.mxu0
  %2854 = vmatprep.mubr.bf16.mxu0 0
  %2855 = vmatmul.mubr.bf16.gmra.mxu0 %v1307
  %v2856 = vpop.f32.mrf.mxu0
  %v2857 = vadd.f32 0.0, %v2856
  %v2858 = vpop.f32.mrf.mxu0
  %v2859 = vpop.f32.mrf.mxu0
  %v2860 = vadd.f32 0.0, %v2859
  %v2861 = vpop.f32.mrf.mxu0
  %2862 = vmatprep.mubr.bf16.mxu0 0
  %2863 = vmatmul.mubr.bf16.gmra.mxu0 %v1310
  %v2864 = vpop.f32.mrf.mxu0
  %v2865 = vadd.f32 0.0, %v2864
  %v2866 = vpop.f32.mrf.mxu0
  %v2867 = vpop.f32.mrf.mxu0
  %v2868 = vadd.f32 0.0, %v2867
  %v2869 = vpop.f32.mrf.mxu0
  %2870 = vmatprep.mubr.bf16.mxu0 0
  %2871 = vmatmul.mubr.bf16.gmra.mxu0 %v1313
  %v2872 = vpop.f32.mrf.mxu0
  %v2873 = vadd.f32 0.0, %v2872
  %v2874 = vpop.f32.mrf.mxu0
  %v2875 = vpop.f32.mrf.mxu0
  %v2876 = vadd.f32 0.0, %v2875
  %v2877 = vpop.f32.mrf.mxu0
  %2878 = vmatprep.mubr.bf16.mxu0 0
  %2879 = vmatmul.mubr.bf16.gmra.mxu0 %v1316
  %v2880 = vpop.f32.mrf.mxu0
  %v2881 = vadd.f32 0.0, %v2880
  %v2882 = vpop.f32.mrf.mxu0
  %v2883 = vpop.f32.mrf.mxu0
  %v2884 = vadd.f32 0.0, %v2883
  %v2885 = vpop.f32.mrf.mxu0
  %2886 = vmatprep.mubr.bf16.mxu0 0
  %2887 = vmatmul.mubr.bf16.gmra.mxu0 %v1319
  %v2888 = vpop.f32.mrf.mxu0
  %v2889 = vadd.f32 0.0, %v2888
  %v2890 = vpop.f32.mrf.mxu0
  %v2891 = vpop.f32.mrf.mxu0
  %v2892 = vadd.f32 0.0, %v2891
  %v2893 = vpop.f32.mrf.mxu0
  %2894 = vmatprep.mubr.bf16.mxu0 0
  %2895 = vmatmul.mubr.bf16.gmra.mxu0 %v1322
  %v2896 = vpop.f32.mrf.mxu0
  %v2897 = vadd.f32 0.0, %v2896
  %v2898 = vpop.f32.mrf.mxu0
  %v2899 = vpop.f32.mrf.mxu0
  %v2900 = vadd.f32 0.0, %v2899
  %v2901 = vpop.f32.mrf.mxu0
  %2902 = vmatprep.mubr.bf16.mxu0 0
  %2903 = vmatmul.mubr.bf16.gmra.mxu0 %v1325
  %v2904 = vpop.f32.mrf.mxu0
  %v2905 = vadd.f32 0.0, %v2904
  %v2906 = vpop.f32.mrf.mxu0
  %v2907 = vpop.f32.mrf.mxu0
  %v2908 = vadd.f32 0.0, %v2907
  %v2909 = vpop.f32.mrf.mxu0
  %2910 = vmatprep.mubr.bf16.mxu0 0
  %2911 = vmatmul.mubr.bf16.gmra.mxu0 %v1328
  %v2912 = vpop.f32.mrf.mxu0
  %v2913 = vadd.f32 0.0, %v2912
  %v2914 = vpop.f32.mrf.mxu0
  %v2915 = vpop.f32.mrf.mxu0
  %v2916 = vadd.f32 0.0, %v2915
  %v2917 = vpop.f32.mrf.mxu0
  %2918 = vmatprep.mubr.bf16.mxu0 0
  %2919 = vmatmul.mubr.bf16.gmra.mxu0 %v1331
  %v2920 = vpop.f32.mrf.mxu0
  %v2921 = vadd.f32 0.0, %v2920
  %v2922 = vpop.f32.mrf.mxu0
  %v2923 = vpop.f32.mrf.mxu0
  %v2924 = vadd.f32 0.0, %v2923
  %v2925 = vpop.f32.mrf.mxu0
  %2926 = vmatprep.mubr.bf16.mxu0 0
  %2927 = vmatmul.mubr.bf16.gmra.mxu0 %v1334
  %v2928 = vpop.f32.mrf.mxu0
  %v2929 = vadd.f32 0.0, %v2928
  %v2930 = vpop.f32.mrf.mxu0
  %v2931 = vpop.f32.mrf.mxu0
  %v2932 = vadd.f32 0.0, %v2931
  %v2933 = vpop.f32.mrf.mxu0
  %2934 = vmatprep.mubr.bf16.mxu0 0
  %2935 = vmatmul.mubr.bf16.gmra.mxu0 %v1337
  %v2936 = vpop.f32.mrf.mxu0
  %v2937 = vadd.f32 0.0, %v2936
  %v2938 = vpop.f32.mrf.mxu0
  %v2939 = vpop.f32.mrf.mxu0
  %v2940 = vadd.f32 0.0, %v2939
  %v2941 = vpop.f32.mrf.mxu0
  %2942 = vmatprep.mubr.bf16.mxu0 0
  %2943 = vmatmul.mubr.bf16.gmra.mxu0 %v1340
  %v2944 = vpop.f32.mrf.mxu0
  %v2945 = vadd.f32 0.0, %v2944
  %v2946 = vpop.f32.mrf.mxu0
  %v2947 = vpop.f32.mrf.mxu0
  %v2948 = vadd.f32 0.0, %v2947
  %v2949 = vpop.f32.mrf.mxu0
  %2950 = vmatprep.mubr.bf16.mxu0 0
  %2951 = vmatmul.mubr.bf16.gmra.mxu0 %v1343
  %v2952 = vpop.f32.mrf.mxu0
  %v2953 = vadd.f32 0.0, %v2952
  %v2954 = vpop.f32.mrf.mxu0
  %v2955 = vpop.f32.mrf.mxu0
  %v2956 = vadd.f32 0.0, %v2955
  %v2957 = vpop.f32.mrf.mxu0
  %2958 = vmatprep.mubr.bf16.mxu0 0
  %2959 = vmatmul.mubr.bf16.gmra.mxu0 %v1346
  %v2960 = vpop.f32.mrf.mxu0
  %v2961 = vadd.f32 0.0, %v2960
  %v2962 = vpop.f32.mrf.mxu0
  %v2963 = vpop.f32.mrf.mxu0
  %v2964 = vadd.f32 0.0, %v2963
  %v2965 = vpop.f32.mrf.mxu0
  %2966 = vmatprep.mubr.bf16.mxu0 0
  %2967 = vmatmul.mubr.bf16.gmra.mxu0 %v1349
  %v2968 = vpop.f32.mrf.mxu0
  %v2969 = vadd.f32 0.0, %v2968
  %v2970 = vpop.f32.mrf.mxu0
  %v2971 = vpop.f32.mrf.mxu0
  %v2972 = vadd.f32 0.0, %v2971
  %v2973 = vpop.f32.mrf.mxu0
  %2974 = vmatprep.mubr.bf16.mxu0 0
  %2975 = vmatmul.mubr.bf16.gmra.mxu0 %v1352
  %v2976 = vpop.f32.mrf.mxu0
  %v2977 = vadd.f32 0.0, %v2976
  %v2978 = vpop.f32.mrf.mxu0
  %v2979 = vpop.f32.mrf.mxu0
  %v2980 = vadd.f32 0.0, %v2979
  %v2981 = vpop.f32.mrf.mxu0
  %2982 = vmatprep.mubr.bf16.mxu0 0
  %2983 = vmatmul.mubr.bf16.gmra.mxu0 %v1355
  %v2984 = vpop.f32.mrf.mxu0
  %v2985 = vadd.f32 0.0, %v2984
  %v2986 = vpop.f32.mrf.mxu0
  %v2987 = vpop.f32.mrf.mxu0
  %v2988 = vadd.f32 0.0, %v2987
  %v2989 = vpop.f32.mrf.mxu0
  %2990 = vmatprep.mubr.bf16.mxu0 0
  %2991 = vmatmul.mubr.bf16.gmra.mxu0 %v1358
  %v2992 = vpop.f32.mrf.mxu0
  %v2993 = vadd.f32 0.0, %v2992
  %v2994 = vpop.f32.mrf.mxu0
  %v2995 = vpop.f32.mrf.mxu0
  %v2996 = vadd.f32 0.0, %v2995
  %v2997 = vpop.f32.mrf.mxu0
  %2998 = vmatprep.mubr.bf16.mxu0 0
  %2999 = vmatmul.mubr.bf16.gmra.mxu0 %v1361
  %v3000 = vpop.f32.mrf.mxu0
  %v3001 = vadd.f32 0.0, %v3000
  %v3002 = vpop.f32.mrf.mxu0
  %v3003 = vpop.f32.mrf.mxu0
  %v3004 = vadd.f32 0.0, %v3003
  %v3005 = vpop.f32.mrf.mxu0
  %3006 = vmatprep.mubr.bf16.mxu0 0
  %3007 = vmatmul.mubr.bf16.gmra.mxu0 %v1364
  %v3008 = vpop.f32.mrf.mxu0
  %v3009 = vadd.f32 0.0, %v3008
  %v3010 = vpop.f32.mrf.mxu0
  %v3011 = vpop.f32.mrf.mxu0
  %v3012 = vadd.f32 0.0, %v3011
  %v3013 = vpop.f32.mrf.mxu0
  %3014 = vmatprep.mubr.bf16.mxu0 0
  %3015 = vmatmul.mubr.bf16.gmra.mxu0 %v1367
  %v3016 = vpop.f32.mrf.mxu0
  %v3017 = vadd.f32 0.0, %v3016
  %v3018 = vpop.f32.mrf.mxu0
  %v3019 = vpop.f32.mrf.mxu0
  %v3020 = vadd.f32 0.0, %v3019
  %v3021 = vpop.f32.mrf.mxu0
  %3022 = vmatprep.mubr.bf16.mxu0 0
  %3023 = vmatmul.mubr.bf16.gmra.mxu0 %v1370
  %v3024 = vpop.f32.mrf.mxu0
  %v3025 = vadd.f32 0.0, %v3024
  %v3026 = vpop.f32.mrf.mxu0
  %v3027 = vpop.f32.mrf.mxu0
  %v3028 = vadd.f32 0.0, %v3027
  %v3029 = vpop.f32.mrf.mxu0
  %3030 = vmatprep.mubr.bf16.mxu0 0
  %3031 = vmatmul.mubr.bf16.gmra.mxu0 %v1373
  %v3032 = vpop.f32.mrf.mxu0
  %v3033 = vadd.f32 0.0, %v3032
  %v3034 = vpop.f32.mrf.mxu0
  %v3035 = vpop.f32.mrf.mxu0
  %v3036 = vadd.f32 0.0, %v3035
  %v3037 = vpop.f32.mrf.mxu0
  %3038 = vmatprep.mubr.bf16.mxu0 0
  %3039 = vmatmul.mubr.bf16.gmra.mxu0 %v1376
  %v3040 = vpop.f32.mrf.mxu0
  %v3041 = vadd.f32 0.0, %v3040
  %v3042 = vpop.f32.mrf.mxu0
  %v3043 = vpop.f32.mrf.mxu0
  %v3044 = vadd.f32 0.0, %v3043
  %v3045 = vpop.f32.mrf.mxu0
  %3046 = vmatprep.mubr.bf16.mxu0 0
  %3047 = vmatmul.mubr.bf16.gmra.mxu0 %v1379
  %v3048 = vpop.f32.mrf.mxu0
  %v3049 = vadd.f32 0.0, %v3048
  %v3050 = vpop.f32.mrf.mxu0
  %v3051 = vpop.f32.mrf.mxu0
  %v3052 = vadd.f32 0.0, %v3051
  %v3053 = vpop.f32.mrf.mxu0
  %3054 = vmatprep.mubr.bf16.mxu0 0
  %3055 = vmatmul.mubr.bf16.gmra.mxu0 %v1382
  %v3056 = vpop.f32.mrf.mxu0
  %v3057 = vadd.f32 0.0, %v3056
  %v3058 = vpop.f32.mrf.mxu0
  %v3059 = vpop.f32.mrf.mxu0
  %v3060 = vadd.f32 0.0, %v3059
  %v3061 = vpop.f32.mrf.mxu0
  %3062 = vmatprep.mubr.bf16.mxu0 0
  %3063 = vmatmul.mubr.bf16.gmra.mxu0 %v1385
  %v3064 = vpop.f32.mrf.mxu0
  %v3065 = vadd.f32 0.0, %v3064
  %v3066 = vpop.f32.mrf.mxu0
  %v3067 = vpop.f32.mrf.mxu0
  %v3068 = vadd.f32 0.0, %v3067
  %v3069 = vpop.f32.mrf.mxu0
  %3070 = vmatprep.mubr.bf16.mxu0 0
  %3071 = vmatmul.mubr.bf16.gmra.mxu0 %v1388
  %v3072 = vpop.f32.mrf.mxu0
  %v3073 = vadd.f32 0.0, %v3072
  %v3074 = vpop.f32.mrf.mxu0
  %v3075 = vpop.f32.mrf.mxu0
  %v3076 = vadd.f32 0.0, %v3075
  %v3077 = vpop.f32.mrf.mxu0
  %3078 = vmatprep.mubr.bf16.mxu0 0
  %3079 = vmatmul.mubr.bf16.gmra.mxu0 %v1391
  %v3080 = vpop.f32.mrf.mxu0
  %v3081 = vadd.f32 0.0, %v3080
  %v3082 = vpop.f32.mrf.mxu0
  %v3083 = vpop.f32.mrf.mxu0
  %v3084 = vadd.f32 0.0, %v3083
  %v3085 = vpop.f32.mrf.mxu0
  %3086 = vmatprep.mubr.bf16.mxu0 0
  %3087 = vmatmul.mubr.bf16.gmra.mxu0 %v1394
  %v3088 = vpop.f32.mrf.mxu0
  %v3089 = vadd.f32 0.0, %v3088
  %v3090 = vpop.f32.mrf.mxu0
  %v3091 = vpop.f32.mrf.mxu0
  %v3092 = vadd.f32 0.0, %v3091
  %v3093 = vpop.f32.mrf.mxu0
  %3094 = vmatprep.mubr.bf16.mxu0 0
  %3095 = vmatmul.mubr.bf16.gmra.mxu0 %v1397
  %v3096 = vpop.f32.mrf.mxu0
  %v3097 = vadd.f32 0.0, %v3096
  %v3098 = vpop.f32.mrf.mxu0
  %v3099 = vpop.f32.mrf.mxu0
  %v3100 = vadd.f32 0.0, %v3099
  %v3101 = vpop.f32.mrf.mxu0
  %3102 = vmatprep.mubr.bf16.mxu0 0
  %3103 = vmatmul.mubr.bf16.gmra.mxu0 %v1400
  %v3104 = vpop.f32.mrf.mxu0
  %v3105 = vadd.f32 0.0, %v3104
  %v3106 = vpop.f32.mrf.mxu0
  %v3107 = vpop.f32.mrf.mxu0
  %v3108 = vadd.f32 0.0, %v3107
  %v3109 = vpop.f32.mrf.mxu0
  %3110 = vmatprep.mubr.bf16.mxu0 0
  %3111 = vmatmul.mubr.bf16.gmra.mxu0 %v1403
  %v3112 = vpop.f32.mrf.mxu0
  %v3113 = vadd.f32 0.0, %v3112
  %v3114 = vpop.f32.mrf.mxu0
  %v3115 = vpop.f32.mrf.mxu0
  %v3116 = vadd.f32 0.0, %v3115
  %v3117 = vpop.f32.mrf.mxu0
  %3118 = vmatprep.mubr.bf16.mxu0 0
  %3119 = vmatmul.mubr.bf16.gmra.mxu0 %v1406
  %v3120 = vpop.f32.mrf.mxu0
  %v3121 = vadd.f32 0.0, %v3120
  %v3122 = vpop.f32.mrf.mxu0
  %v3123 = vpop.f32.mrf.mxu0
  %v3124 = vadd.f32 0.0, %v3123
  %v3125 = vpop.f32.mrf.mxu0
  %3126 = vmatprep.mubr.bf16.mxu0 0
  %3127 = vmatmul.mubr.bf16.gmra.mxu0 %v1409
  %v3128 = vpop.f32.mrf.mxu0
  %v3129 = vadd.f32 0.0, %v3128
  %v3130 = vpop.f32.mrf.mxu0
  %v3131 = vpop.f32.mrf.mxu0
  %v3132 = vadd.f32 0.0, %v3131
  %v3133 = vpop.f32.mrf.mxu0
  %3134 = vmatprep.mubr.bf16.mxu0 0
  %3135 = vmatmul.mubr.bf16.gmra.mxu0 %v1412
  %v3136 = vpop.f32.mrf.mxu0
  %v3137 = vadd.f32 0.0, %v3136
  %v3138 = vpop.f32.mrf.mxu0
  %v3139 = vpop.f32.mrf.mxu0
  %v3140 = vadd.f32 0.0, %v3139
  %v3141 = vpop.f32.mrf.mxu0
  %3142 = vmatprep.mubr.bf16.mxu0 0
  %3143 = vmatmul.mubr.bf16.gmra.mxu0 %v1415
  %v3144 = vpop.f32.mrf.mxu0
  %v3145 = vadd.f32 0.0, %v3144
  %v3146 = vpop.f32.mrf.mxu0
  %v3147 = vpop.f32.mrf.mxu0
  %v3148 = vadd.f32 0.0, %v3147
  %v3149 = vpop.f32.mrf.mxu0
  %3150 = vmatprep.mubr.bf16.mxu0 0
  %3151 = vmatmul.mubr.bf16.gmra.mxu0 %v1418
  %v3152 = vpop.f32.mrf.mxu0
  %v3153 = vadd.f32 0.0, %v3152
  %v3154 = vpop.f32.mrf.mxu0
  %v3155 = vpop.f32.mrf.mxu0
  %v3156 = vadd.f32 0.0, %v3155
  %v3157 = vpop.f32.mrf.mxu0
  %3158 = vmatprep.mubr.bf16.mxu0 0
  %3159 = vmatmul.mubr.bf16.gmra.mxu0 %v1421
  %v3160 = vpop.f32.mrf.mxu0
  %v3161 = vadd.f32 0.0, %v3160
  %v3162 = vpop.f32.mrf.mxu0
  %v3163 = vpop.f32.mrf.mxu0
  %v3164 = vadd.f32 0.0, %v3163
  %v3165 = vpop.f32.mrf.mxu0
  %3166 = vmatprep.mubr.bf16.mxu0 0
  %3167 = vmatmul.mubr.bf16.gmra.mxu0 %v1424
  %v3168 = vpop.f32.mrf.mxu0
  %v3169 = vadd.f32 0.0, %v3168
  %v3170 = vpop.f32.mrf.mxu0
  %v3171 = vpop.f32.mrf.mxu0
  %v3172 = vadd.f32 0.0, %v3171
  %v3173 = vpop.f32.mrf.mxu0
  %3174 = vmatprep.mubr.bf16.mxu0 0
  %3175 = vmatmul.mubr.bf16.gmra.mxu0 %v1427
  %v3176 = vpop.f32.mrf.mxu0
  %v3177 = vadd.f32 0.0, %v3176
  %v3178 = vpop.f32.mrf.mxu0
  %v3179 = vpop.f32.mrf.mxu0
  %v3180 = vadd.f32 0.0, %v3179
  %v3181 = vpop.f32.mrf.mxu0
  %3182 = vmatprep.mubr.bf16.mxu0 0
  %3183 = vmatmul.mubr.bf16.gmra.mxu0 %v1430
  %v3184 = vpop.f32.mrf.mxu0
  %v3185 = vadd.f32 0.0, %v3184
  %v3186 = vpop.f32.mrf.mxu0
  %v3187 = vpop.f32.mrf.mxu0
  %v3188 = vadd.f32 0.0, %v3187
  %v3189 = vpop.f32.mrf.mxu0
  %3190 = vmatprep.mubr.bf16.mxu0 0
  %3191 = vmatmul.mubr.bf16.gmra.mxu0 %v1433
  %v3192 = vpop.f32.mrf.mxu0
  %v3193 = vadd.f32 0.0, %v3192
  %v3194 = vpop.f32.mrf.mxu0
  %v3195 = vpop.f32.mrf.mxu0
  %v3196 = vadd.f32 0.0, %v3195
  %v3197 = vpop.f32.mrf.mxu0
  %3198 = vmatprep.mubr.bf16.mxu0 0
  %3199 = vmatmul.mubr.bf16.gmra.mxu0 %v1436
  %v3200 = vpop.f32.mrf.mxu0
  %v3201 = vadd.f32 0.0, %v3200
  %v3202 = vpop.f32.mrf.mxu0
  %v3203 = vpop.f32.mrf.mxu0
  %v3204 = vadd.f32 0.0, %v3203
  %v3205 = vpop.f32.mrf.mxu0
  %3206 = vmatprep.mubr.bf16.mxu0 0
  %3207 = vmatmul.mubr.bf16.gmra.mxu0 %v1439
  %v3208 = vpop.f32.mrf.mxu0
  %v3209 = vadd.f32 0.0, %v3208
  %v3210 = vpop.f32.mrf.mxu0
  %v3211 = vpop.f32.mrf.mxu0
  %v3212 = vadd.f32 0.0, %v3211
  %v3213 = vpop.f32.mrf.mxu0
  %3214 = vmatprep.mubr.bf16.mxu0 0
  %3215 = vmatmul.mubr.bf16.gmra.mxu0 %v1442
  %v3216 = vpop.f32.mrf.mxu0
  %v3217 = vadd.f32 0.0, %v3216
  %v3218 = vpop.f32.mrf.mxu0
  %v3219 = vpop.f32.mrf.mxu0
  %v3220 = vadd.f32 0.0, %v3219
  %v3221 = vpop.f32.mrf.mxu0
  %3222 = vmatprep.mubr.bf16.mxu0 0
  %3223 = vmatmul.mubr.bf16.gmra.mxu0 %v1445
  %v3224 = vpop.f32.mrf.mxu0
  %v3225 = vadd.f32 0.0, %v3224
  %v3226 = vpop.f32.mrf.mxu0
  %v3227 = vpop.f32.mrf.mxu0
  %v3228 = vadd.f32 0.0, %v3227
  %v3229 = vpop.f32.mrf.mxu0
  %3230 = vmatprep.mubr.bf16.mxu0 0
  %3231 = vmatmul.mubr.bf16.gmra.mxu0 %v1448
  %v3232 = vpop.f32.mrf.mxu0
  %v3233 = vadd.f32 0.0, %v3232
  %v3234 = vpop.f32.mrf.mxu0
  %v3235 = vpop.f32.mrf.mxu0
  %v3236 = vadd.f32 0.0, %v3235
  %v3237 = vpop.f32.mrf.mxu0
  %3238 = vmatprep.mubr.bf16.mxu0 0
  %3239 = vmatmul.mubr.bf16.gmra.mxu0 %v1451
  %v3240 = vpop.f32.mrf.mxu0
  %v3241 = vadd.f32 0.0, %v3240
  %v3242 = vpop.f32.mrf.mxu0
  %v3243 = vpop.f32.mrf.mxu0
  %v3244 = vadd.f32 0.0, %v3243
  %v3245 = vpop.f32.mrf.mxu0
  %3246 = vmatprep.mubr.bf16.mxu0 0
  %3247 = vmatmul.mubr.bf16.gmra.mxu0 %v1454
  %v3248 = vpop.f32.mrf.mxu0
  %v3249 = vadd.f32 0.0, %v3248
  %v3250 = vpop.f32.mrf.mxu0
  %v3251 = vpop.f32.mrf.mxu0
  %v3252 = vadd.f32 0.0, %v3251
  %v3253 = vpop.f32.mrf.mxu0
  %3254 = vmatprep.mubr.bf16.mxu0 0
  %3255 = vmatmul.mubr.bf16.gmra.mxu0 %v1457
  %v3256 = vpop.f32.mrf.mxu0
  %v3257 = vadd.f32 0.0, %v3256
  %v3258 = vpop.f32.mrf.mxu0
  %v3259 = vpop.f32.mrf.mxu0
  %v3260 = vadd.f32 0.0, %v3259
  %v3261 = vpop.f32.mrf.mxu0
  %3262 = vmatprep.mubr.bf16.mxu0 0
  %3263 = vmatmul.mubr.bf16.gmra.mxu0 %v1460
  %v3264 = vpop.f32.mrf.mxu0
  %v3265 = vadd.f32 0.0, %v3264
  %v3266 = vpop.f32.mrf.mxu0
  %v3267 = vpop.f32.mrf.mxu0
  %v3268 = vadd.f32 0.0, %v3267
  %v3269 = vpop.f32.mrf.mxu0
  %3270 = vmatprep.mubr.bf16.mxu0 0
  %3271 = vmatmul.mubr.bf16.gmra.mxu0 %v1463
  %v3272 = vpop.f32.mrf.mxu0
  %v3273 = vadd.f32 0.0, %v3272
  %v3274 = vpop.f32.mrf.mxu0
  %v3275 = vpop.f32.mrf.mxu0
  %v3276 = vadd.f32 0.0, %v3275
  %v3277 = vpop.f32.mrf.mxu0
  %3278 = vmatprep.mubr.bf16.mxu0 0
  %3279 = vmatmul.mubr.bf16.gmra.mxu0 %v1466
  %v3280 = vpop.f32.mrf.mxu0
  %v3281 = vadd.f32 0.0, %v3280
  %v3282 = vpop.f32.mrf.mxu0
  %v3283 = vpop.f32.mrf.mxu0
  %v3284 = vadd.f32 0.0, %v3283
  %v3285 = vpop.f32.mrf.mxu0
  %3286 = vmatprep.mubr.bf16.mxu0 0
  %3287 = vmatmul.mubr.bf16.gmra.mxu0 %v1469
  %v3288 = vpop.f32.mrf.mxu0
  %v3289 = vadd.f32 0.0, %v3288
  %v3290 = vpop.f32.mrf.mxu0
  %v3291 = vpop.f32.mrf.mxu0
  %v3292 = vadd.f32 0.0, %v3291
  %v3293 = vpop.f32.mrf.mxu0
  %3294 = vmatprep.mubr.bf16.mxu0 0
  %3295 = vmatmul.mubr.bf16.gmra.mxu0 %v1472
  %v3296 = vpop.f32.mrf.mxu0
  %v3297 = vadd.f32 0.0, %v3296
  %v3298 = vpop.f32.mrf.mxu0
  %v3299 = vpop.f32.mrf.mxu0
  %v3300 = vadd.f32 0.0, %v3299
  %v3301 = vpop.f32.mrf.mxu0
  %3302 = vmatprep.mubr.bf16.mxu0 0
  %3303 = vmatmul.mubr.bf16.gmra.mxu0 %v1475
  %v3304 = vpop.f32.mrf.mxu0
  %v3305 = vadd.f32 0.0, %v3304
  %v3306 = vpop.f32.mrf.mxu0
  %v3307 = vpop.f32.mrf.mxu0
  %v3308 = vadd.f32 0.0, %v3307
  %v3309 = vpop.f32.mrf.mxu0
  %3310 = vmatprep.mubr.bf16.mxu0 0
  %3311 = vmatmul.mubr.bf16.gmra.mxu0 %v1478
  %v3312 = vpop.f32.mrf.mxu0
  %v3313 = vadd.f32 0.0, %v3312
  %v3314 = vpop.f32.mrf.mxu0
  %v3315 = vpop.f32.mrf.mxu0
  %v3316 = vadd.f32 0.0, %v3315
  %v3317 = vpop.f32.mrf.mxu0
  %3318 = vmatprep.mubr.bf16.mxu0 0
  %3319 = vmatmul.mubr.bf16.gmra.mxu0 %v1481
  %v3320 = vpop.f32.mrf.mxu0
  %v3321 = vadd.f32 0.0, %v3320
  %v3322 = vpop.f32.mrf.mxu0
  %v3323 = vpop.f32.mrf.mxu0
  %v3324 = vadd.f32 0.0, %v3323
  %v3325 = vpop.f32.mrf.mxu0
  %3326 = vmatprep.mubr.bf16.mxu0 0
  %3327 = vmatmul.mubr.bf16.gmra.mxu0 %v1484
  %v3328 = vpop.f32.mrf.mxu0
  %v3329 = vadd.f32 0.0, %v3328
  %v3330 = vpop.f32.mrf.mxu0
  %v3331 = vpop.f32.mrf.mxu0
  %v3332 = vadd.f32 0.0, %v3331
  %v3333 = vpop.f32.mrf.mxu0
  %3334 = vmatprep.mubr.bf16.mxu0 0
  %3335 = vmatmul.mubr.bf16.gmra.mxu0 %v1487
  %v3336 = vpop.f32.mrf.mxu0
  %v3337 = vadd.f32 0.0, %v3336
  %v3338 = vpop.f32.mrf.mxu0
  %v3339 = vpop.f32.mrf.mxu0
  %v3340 = vadd.f32 0.0, %v3339
  %v3341 = vpop.f32.mrf.mxu0
  %3342 = vmatprep.mubr.bf16.mxu0 0
  %3343 = vmatmul.mubr.bf16.gmra.mxu0 %v1490
  %v3344 = vpop.f32.mrf.mxu0
  %v3345 = vadd.f32 0.0, %v3344
  %v3346 = vpop.f32.mrf.mxu0
  %v3347 = vpop.f32.mrf.mxu0
  %v3348 = vadd.f32 0.0, %v3347
  %v3349 = vpop.f32.mrf.mxu0
  %3350 = vmatprep.mubr.bf16.mxu0 0
  %3351 = vmatmul.mubr.bf16.gmra.mxu0 %v1493
  %v3352 = vpop.f32.mrf.mxu0
  %v3353 = vadd.f32 0.0, %v3352
  %v3354 = vpop.f32.mrf.mxu0
  %v3355 = vpop.f32.mrf.mxu0
  %v3356 = vadd.f32 0.0, %v3355
  %v3357 = vpop.f32.mrf.mxu0
  %3358 = vmatprep.mubr.bf16.mxu0 0
  %3359 = vmatmul.mubr.bf16.gmra.mxu0 %v1496
  %v3360 = vpop.f32.mrf.mxu0
  %v3361 = vadd.f32 0.0, %v3360
  %v3362 = vpop.f32.mrf.mxu0
  %v3363 = vpop.f32.mrf.mxu0
  %v3364 = vadd.f32 0.0, %v3363
  %v3365 = vpop.f32.mrf.mxu0
  %3366 = vmatprep.mubr.bf16.mxu0 0
  %3367 = vmatmul.mubr.bf16.gmra.mxu0 %v1499
  %v3368 = vpop.f32.mrf.mxu0
  %v3369 = vadd.f32 0.0, %v3368
  %v3370 = vpop.f32.mrf.mxu0
  %v3371 = vpop.f32.mrf.mxu0
  %v3372 = vadd.f32 0.0, %v3371
  %v3373 = vpop.f32.mrf.mxu0
  %3374 = vmatprep.mubr.bf16.mxu0 0
  %3375 = vmatmul.mubr.bf16.gmra.mxu0 %v1502
  %v3376 = vpop.f32.mrf.mxu0
  %v3377 = vadd.f32 0.0, %v3376
  %v3378 = vpop.f32.mrf.mxu0
  %v3379 = vpop.f32.mrf.mxu0
  %v3380 = vadd.f32 0.0, %v3379
  %v3381 = vpop.f32.mrf.mxu0
  %3382 = vmatprep.mubr.bf16.mxu0 0
  %3383 = vmatmul.mubr.bf16.gmra.mxu0 %v1505
  %v3384 = vpop.f32.mrf.mxu0
  %v3385 = vadd.f32 0.0, %v3384
  %v3386 = vpop.f32.mrf.mxu0
  %v3387 = vpop.f32.mrf.mxu0
  %v3388 = vadd.f32 0.0, %v3387
  %v3389 = vpop.f32.mrf.mxu0
  %3390 = vmatprep.mubr.bf16.mxu0 0
  %3391 = vmatmul.mubr.bf16.gmra.mxu0 %v1508
  %v3392 = vpop.f32.mrf.mxu0
  %v3393 = vadd.f32 0.0, %v3392
  %v3394 = vpop.f32.mrf.mxu0
  %v3395 = vpop.f32.mrf.mxu0
  %v3396 = vadd.f32 0.0, %v3395
  %v3397 = vpop.f32.mrf.mxu0
  %3398 = vmatprep.mubr.bf16.mxu0 0
  %3399 = vmatmul.mubr.bf16.gmra.mxu0 %v1511
  %v3400 = vpop.f32.mrf.mxu0
  %v3401 = vadd.f32 0.0, %v3400
  %v3402 = vpop.f32.mrf.mxu0
  %v3403 = vpop.f32.mrf.mxu0
  %v3404 = vadd.f32 0.0, %v3403
  %v3405 = vpop.f32.mrf.mxu0
  %3406 = vmatprep.mubr.bf16.mxu0 0
  %3407 = vmatmul.mubr.bf16.gmra.mxu0 %v1514
  %v3408 = vpop.f32.mrf.mxu0
  %v3409 = vadd.f32 0.0, %v3408
  %v3410 = vpop.f32.mrf.mxu0
  %v3411 = vpop.f32.mrf.mxu0
  %v3412 = vadd.f32 0.0, %v3411
  %v3413 = vpop.f32.mrf.mxu0
  %3414 = vmatprep.mubr.bf16.mxu0 0
  %3415 = vmatmul.mubr.bf16.gmra.mxu0 %v1517
  %v3416 = vpop.f32.mrf.mxu0
  %v3417 = vadd.f32 0.0, %v3416
  %v3418 = vpop.f32.mrf.mxu0
  %v3419 = vpop.f32.mrf.mxu0
  %v3420 = vadd.f32 0.0, %v3419
  %v3421 = vpop.f32.mrf.mxu0
  %3422 = vmatprep.mubr.bf16.mxu0 0
  %3423 = vmatmul.mubr.bf16.gmra.mxu0 %v1520
  %v3424 = vpop.f32.mrf.mxu0
  %v3425 = vadd.f32 0.0, %v3424
  %v3426 = vpop.f32.mrf.mxu0
  %v3427 = vpop.f32.mrf.mxu0
  %v3428 = vadd.f32 0.0, %v3427
  %v3429 = vpop.f32.mrf.mxu0
  %3430 = vmatprep.mubr.bf16.mxu0 0
  %3431 = vmatmul.mubr.bf16.gmra.mxu0 %v1523
  %v3432 = vpop.f32.mrf.mxu0
  %v3433 = vadd.f32 0.0, %v3432
  %v3434 = vpop.f32.mrf.mxu0
  %v3435 = vpop.f32.mrf.mxu0
  %v3436 = vadd.f32 0.0, %v3435
  %v3437 = vpop.f32.mrf.mxu0
  %3438 = vmatprep.mubr.bf16.mxu0 0
  %3439 = vmatmul.mubr.bf16.gmra.mxu0 %v1526
  %v3440 = vpop.f32.mrf.mxu0
  %v3441 = vadd.f32 0.0, %v3440
  %v3442 = vpop.f32.mrf.mxu0
  %v3443 = vpop.f32.mrf.mxu0
  %v3444 = vadd.f32 0.0, %v3443
  %v3445 = vpop.f32.mrf.mxu0
  %3446 = vmatprep.mubr.bf16.mxu0 0
  %3447 = vmatmul.mubr.bf16.gmra.mxu0 %v1529
  %v3448 = vpop.f32.mrf.mxu0
  %v3449 = vadd.f32 0.0, %v3448
  %v3450 = vpop.f32.mrf.mxu0
  %v3451 = vpop.f32.mrf.mxu0
  %v3452 = vadd.f32 0.0, %v3451
  %v3453 = vpop.f32.mrf.mxu0
  %3454 = vmatprep.mubr.bf16.mxu0 0
  %3455 = vmatmul.mubr.bf16.gmra.mxu0 %v1532
  %v3456 = vpop.f32.mrf.mxu0
  %v3457 = vadd.f32 0.0, %v3456
  %v3458 = vpop.f32.mrf.mxu0
  %v3459 = vpop.f32.mrf.mxu0
  %v3460 = vadd.f32 0.0, %v3459
  %v3461 = vpop.f32.mrf.mxu0
  %3462 = vmatprep.mubr.bf16.mxu0 0
  %3463 = vmatmul.mubr.bf16.gmra.mxu0 %v1535
  %v3464 = vpop.f32.mrf.mxu0
  %v3465 = vadd.f32 0.0, %v3464
  %v3466 = vpop.f32.mrf.mxu0
  %v3467 = vpop.f32.mrf.mxu0
  %v3468 = vadd.f32 0.0, %v3467
  %v3469 = vpop.f32.mrf.mxu0
  %3470 = vmatprep.mubr.bf16.mxu0 0
  %3471 = vmatmul.mubr.bf16.gmra.mxu0 %v1538
  %v3472 = vpop.f32.mrf.mxu0
  %v3473 = vadd.f32 0.0, %v3472
  %v3474 = vpop.f32.mrf.mxu0
  %v3475 = vpop.f32.mrf.mxu0
  %v3476 = vadd.f32 0.0, %v3475
  %v3477 = vpop.f32.mrf.mxu0
  %3478 = vmatprep.mubr.bf16.mxu0 0
  %3479 = vmatmul.mubr.bf16.gmra.mxu0 %v1541
  %v3480 = vpop.f32.mrf.mxu0
  %v3481 = vadd.f32 0.0, %v3480
  %v3482 = vpop.f32.mrf.mxu0
  %v3483 = vpop.f32.mrf.mxu0
  %v3484 = vadd.f32 0.0, %v3483
  %v3485 = vpop.f32.mrf.mxu0
  %3486 = vmatprep.mubr.bf16.mxu0 0
  %3487 = vmatmul.mubr.bf16.gmra.mxu0 %v1544
  %v3488 = vpop.f32.mrf.mxu0
  %v3489 = vadd.f32 0.0, %v3488
  %v3490 = vpop.f32.mrf.mxu0
  %v3491 = vpop.f32.mrf.mxu0
  %v3492 = vadd.f32 0.0, %v3491
  %v3493 = vpop.f32.mrf.mxu0
  %3494 = vmatprep.mubr.bf16.mxu0 0
  %3495 = vmatmul.mubr.bf16.gmra.mxu0 %v1547
  %v3496 = vpop.f32.mrf.mxu0
  %v3497 = vadd.f32 0.0, %v3496
  %v3498 = vpop.f32.mrf.mxu0
  %v3499 = vpop.f32.mrf.mxu0
  %v3500 = vadd.f32 0.0, %v3499
  %v3501 = vpop.f32.mrf.mxu0
  %3502 = vmatprep.mubr.bf16.mxu0 0
  %3503 = vmatmul.mubr.bf16.gmra.mxu0 %v1550
  %v3504 = vpop.f32.mrf.mxu0
  %v3505 = vadd.f32 0.0, %v3504
  %v3506 = vpop.f32.mrf.mxu0
  %v3507 = vpop.f32.mrf.mxu0
  %v3508 = vadd.f32 0.0, %v3507
  %v3509 = vpop.f32.mrf.mxu0
  %3510 = vmatprep.mubr.bf16.mxu0 0
  %3511 = vmatmul.mubr.bf16.gmra.mxu0 %v1553
  %v3512 = vpop.f32.mrf.mxu0
  %v3513 = vadd.f32 0.0, %v3512
  %v3514 = vpop.f32.mrf.mxu0
  %v3515 = vpop.f32.mrf.mxu0
  %v3516 = vadd.f32 0.0, %v3515
  %v3517 = vpop.f32.mrf.mxu0
  %3518 = vmatprep.mubr.bf16.mxu0 0
  %3519 = vmatmul.mubr.bf16.gmra.mxu0 %v1556
  %v3520 = vpop.f32.mrf.mxu0
  %v3521 = vadd.f32 0.0, %v3520
  %v3522 = vpop.f32.mrf.mxu0
  %v3523 = vpop.f32.mrf.mxu0
  %v3524 = vadd.f32 0.0, %v3523
  %v3525 = vpop.f32.mrf.mxu0
  %3526 = vmatprep.mubr.bf16.mxu0 0
  %3527 = vmatmul.mubr.bf16.gmra.mxu0 %v1559
  %v3528 = vpop.f32.mrf.mxu0
  %v3529 = vadd.f32 0.0, %v3528
  %v3530 = vpop.f32.mrf.mxu0
  %v3531 = vpop.f32.mrf.mxu0
  %v3532 = vadd.f32 0.0, %v3531
  %v3533 = vpop.f32.mrf.mxu0
  %3534 = vmatprep.mubr.bf16.mxu0 0
  %3535 = vmatmul.mubr.bf16.gmra.mxu0 %v1562
  %v3536 = vpop.f32.mrf.mxu0
  %v3537 = vadd.f32 0.0, %v3536
  %v3538 = vpop.f32.mrf.mxu0
  %v3539 = vpop.f32.mrf.mxu0
  %v3540 = vadd.f32 0.0, %v3539
  %v3541 = vpop.f32.mrf.mxu0
  %3542 = vmatprep.mubr.bf16.mxu0 0
  %3543 = vmatmul.mubr.bf16.gmra.mxu0 %v1565
  %v3544 = vpop.f32.mrf.mxu0
  %v3545 = vadd.f32 0.0, %v3544
  %v3546 = vpop.f32.mrf.mxu0
  %v3547 = vpop.f32.mrf.mxu0
  %v3548 = vadd.f32 0.0, %v3547
  %v3549 = vpop.f32.mrf.mxu0
  %3550 = vmatprep.mubr.bf16.mxu0 0
  %3551 = vmatmul.mubr.bf16.gmra.mxu0 %v1568
  %v3552 = vpop.f32.mrf.mxu0
  %v3553 = vadd.f32 0.0, %v3552
  %v3554 = vpop.f32.mrf.mxu0
  %v3555 = vpop.f32.mrf.mxu0
  %v3556 = vadd.f32 0.0, %v3555
  %v3557 = vpop.f32.mrf.mxu0
  %3558 = vmatprep.mubr.bf16.mxu0 0
  %3559 = vmatmul.mubr.bf16.gmra.mxu0 %v1571
  %v3560 = vpop.f32.mrf.mxu0
  %v3561 = vadd.f32 0.0, %v3560
  %v3562 = vpop.f32.mrf.mxu0
  %v3563 = vpop.f32.mrf.mxu0
  %v3564 = vadd.f32 0.0, %v3563
  %v3565 = vpop.f32.mrf.mxu0
  %3566 = vmatprep.mubr.bf16.mxu0 0
  %3567 = vmatmul.mubr.bf16.gmra.mxu0 %v1574
  %v3568 = vpop.f32.mrf.mxu0
  %v3569 = vadd.f32 0.0, %v3568
  %v3570 = vpop.f32.mrf.mxu0
  %v3571 = vpop.f32.mrf.mxu0
  %v3572 = vadd.f32 0.0, %v3571
  %v3573 = vpop.f32.mrf.mxu0
  %3574 = vmatprep.mubr.bf16.mxu0 0
  %3575 = vmatmul.mubr.bf16.gmra.mxu0 %v1577
  %v3576 = vpop.f32.mrf.mxu0
  %v3577 = vadd.f32 0.0, %v3576
  %v3578 = vpop.f32.mrf.mxu0
  %v3579 = vpop.f32.mrf.mxu0
  %v3580 = vadd.f32 0.0, %v3579
  %v3581 = vpop.f32.mrf.mxu0
  %3582 = vmatprep.mubr.bf16.mxu0 0
  %3583 = vmatmul.mubr.bf16.gmra.mxu0 %v1580
  %v3584 = vpop.f32.mrf.mxu0
  %v3585 = vadd.f32 0.0, %v3584
  %v3586 = vpop.f32.mrf.mxu0
  %v3587 = vpop.f32.mrf.mxu0
  %v3588 = vadd.f32 0.0, %v3587
  %v3589 = vpop.f32.mrf.mxu0
  %3590 = vmatprep.mubr.bf16.mxu0 0
  %3591 = vmatmul.mubr.bf16.gmra.mxu0 %v1583
  %v3592 = vpop.f32.mrf.mxu0
  %v3593 = vadd.f32 0.0, %v3592
  %v3594 = vpop.f32.mrf.mxu0
  %v3595 = vpop.f32.mrf.mxu0
  %v3596 = vadd.f32 0.0, %v3595
  %v3597 = vpop.f32.mrf.mxu0
  %3598 = vmatprep.mubr.bf16.mxu0 0
  %3599 = vmatmul.mubr.bf16.gmra.mxu0 %v1586
  %v3600 = vpop.f32.mrf.mxu0
  %v3601 = vadd.f32 0.0, %v3600
  %v3602 = vpop.f32.mrf.mxu0
  %v3603 = vpop.f32.mrf.mxu0
  %v3604 = vadd.f32 0.0, %v3603
  %v3605 = vpop.f32.mrf.mxu0
  %3606 = vmatprep.mubr.bf16.mxu0 0
  %3607 = vmatmul.mubr.bf16.gmra.mxu0 %v1589
  %v3608 = vpop.f32.mrf.mxu0
  %v3609 = vadd.f32 0.0, %v3608
  %v3610 = vpop.f32.mrf.mxu0
  %v3611 = vpop.f32.mrf.mxu0
  %v3612 = vadd.f32 0.0, %v3611
  %v3613 = vpop.f32.mrf.mxu0
  %3614 = vmatprep.mubr.bf16.mxu0 0
  %3615 = vmatmul.mubr.bf16.gmra.mxu0 %v1592
  %v3616 = vpop.f32.mrf.mxu0
  %v3617 = vadd.f32 0.0, %v3616
  %v3618 = vpop.f32.mrf.mxu0
  %v3619 = vpop.f32.mrf.mxu0
  %v3620 = vadd.f32 0.0, %v3619
  %v3621 = vpop.f32.mrf.mxu0
  %3622 = vmatprep.mubr.bf16.mxu0 0
  %3623 = vmatmul.mubr.bf16.gmra.mxu0 %v1595
  %v3624 = vpop.f32.mrf.mxu0
  %v3625 = vadd.f32 0.0, %v3624
  %v3626 = vpop.f32.mrf.mxu0
  %v3627 = vpop.f32.mrf.mxu0
  %v3628 = vadd.f32 0.0, %v3627
  %v3629 = vpop.f32.mrf.mxu0
  %3630 = vmatprep.mubr.bf16.mxu0 0
  %3631 = vmatmul.mubr.bf16.gmra.mxu0 %v1598
  %v3632 = vpop.f32.mrf.mxu0
  %v3633 = vadd.f32 0.0, %v3632
  %v3634 = vpop.f32.mrf.mxu0
  %v3635 = vpop.f32.mrf.mxu0
  %v3636 = vadd.f32 0.0, %v3635
  %v3637 = vpop.f32.mrf.mxu0
  %3638 = vmatprep.mubr.bf16.mxu0 0
  %3639 = vmatmul.mubr.bf16.gmra.mxu0 %v1601
  %v3640 = vpop.f32.mrf.mxu0
  %v3641 = vadd.f32 0.0, %v3640
  %v3642 = vpop.f32.mrf.mxu0
  %v3643 = vpop.f32.mrf.mxu0
  %v3644 = vadd.f32 0.0, %v3643
  %v3645 = vpop.f32.mrf.mxu0
  %3646 = vmatprep.mubr.bf16.mxu0 0
  %3647 = vmatmul.mubr.bf16.gmra.mxu0 %v1604
  %v3648 = vpop.f32.mrf.mxu0
  %v3649 = vadd.f32 0.0, %v3648
  %v3650 = vpop.f32.mrf.mxu0
  %v3651 = vpop.f32.mrf.mxu0
  %v3652 = vadd.f32 0.0, %v3651
  %v3653 = vpop.f32.mrf.mxu0
  %3654 = vmatprep.mubr.bf16.mxu0 0
  %3655 = vmatmul.mubr.bf16.gmra.mxu0 %v1607
  %v3656 = vpop.f32.mrf.mxu0
  %v3657 = vadd.f32 0.0, %v3656
  %v3658 = vpop.f32.mrf.mxu0
  %v3659 = vpop.f32.mrf.mxu0
  %v3660 = vadd.f32 0.0, %v3659
  %v3661 = vpop.f32.mrf.mxu0
  %3662 = vmatprep.mubr.bf16.mxu0 0
  %3663 = vmatmul.mubr.bf16.gmra.mxu0 %v1610
  %v3664 = vpop.f32.mrf.mxu0
  %v3665 = vadd.f32 0.0, %v3664
  %v3666 = vpop.f32.mrf.mxu0
  %v3667 = vpop.f32.mrf.mxu0
  %v3668 = vadd.f32 0.0, %v3667
  %v3669 = vpop.f32.mrf.mxu0
  %3670 = vmatprep.mubr.bf16.mxu0 0
  %3671 = vmatmul.mubr.bf16.gmra.mxu0 %v1613
  %v3672 = vpop.f32.mrf.mxu0
  %v3673 = vadd.f32 0.0, %v3672
  %v3674 = vpop.f32.mrf.mxu0
  %v3675 = vpop.f32.mrf.mxu0
  %v3676 = vadd.f32 0.0, %v3675
  %v3677 = vpop.f32.mrf.mxu0
  %3678 = vmatprep.mubr.bf16.mxu0 0
  %3679 = vmatmul.mubr.bf16.gmra.mxu0 %v1616
  %v3680 = vpop.f32.mrf.mxu0
  %v3681 = vadd.f32 0.0, %v3680
  %v3682 = vpop.f32.mrf.mxu0
  %v3683 = vpop.f32.mrf.mxu0
  %v3684 = vadd.f32 0.0, %v3683
  %v3685 = vpop.f32.mrf.mxu0
  %3686 = vmatprep.mubr.bf16.mxu0 0
  %3687 = vmatmul.mubr.bf16.gmra.mxu0 %v1619
  %v3688 = vpop.f32.mrf.mxu0
  %v3689 = vadd.f32 0.0, %v3688
  %v3690 = vpop.f32.mrf.mxu0
  %v3691 = vpop.f32.mrf.mxu0
  %v3692 = vadd.f32 0.0, %v3691
  %v3693 = vpop.f32.mrf.mxu0
  %3694 = vmatprep.mubr.bf16.mxu0 0
  %3695 = vmatmul.mubr.bf16.gmra.mxu0 %v1622
  %v3696 = vpop.f32.mrf.mxu0
  %v3697 = vadd.f32 0.0, %v3696
  %v3698 = vpop.f32.mrf.mxu0
  %v3699 = vpop.f32.mrf.mxu0
  %v3700 = vadd.f32 0.0, %v3699
  %v3701 = vpop.f32.mrf.mxu0
  %3702 = vmatprep.mubr.bf16.mxu0 0
  %3703 = vmatmul.mubr.bf16.gmra.mxu0 %v1625
  %v3704 = vpop.f32.mrf.mxu0
  %v3705 = vadd.f32 0.0, %v3704
  %v3706 = vpop.f32.mrf.mxu0
  %v3707 = vpop.f32.mrf.mxu0
  %v3708 = vadd.f32 0.0, %v3707
  %v3709 = vpop.f32.mrf.mxu0
  %3710 = vmatprep.mubr.bf16.mxu0 0
  %3711 = vmatmul.mubr.bf16.gmra.mxu0 %v1628
  %v3712 = vpop.f32.mrf.mxu0
  %v3713 = vadd.f32 0.0, %v3712
  %v3714 = vpop.f32.mrf.mxu0
  %v3715 = vpop.f32.mrf.mxu0
  %v3716 = vadd.f32 0.0, %v3715
  %v3717 = vpop.f32.mrf.mxu0
  %3718 = vmatprep.mubr.bf16.mxu0 0
  %3719 = vmatmul.mubr.bf16.gmra.mxu0 %v1631
  %v3720 = vpop.f32.mrf.mxu0
  %v3721 = vadd.f32 0.0, %v3720
  %v3722 = vpop.f32.mrf.mxu0
  %v3723 = vpop.f32.mrf.mxu0
  %v3724 = vadd.f32 0.0, %v3723
  %v3725 = vpop.f32.mrf.mxu0
  %3726 = vmatprep.mubr.bf16.mxu0 0
  %3727 = vmatmul.mubr.bf16.gmra.mxu0 %v1634
  %v3728 = vpop.f32.mrf.mxu0
  %v3729 = vadd.f32 0.0, %v3728
  %v3730 = vpop.f32.mrf.mxu0
  %v3731 = vpop.f32.mrf.mxu0
  %v3732 = vadd.f32 0.0, %v3731
  %v3733 = vpop.f32.mrf.mxu0
  %3734 = vmatprep.mubr.bf16.mxu0 0
  %3735 = vmatmul.mubr.bf16.gmra.mxu0 %v1637
  %v3736 = vpop.f32.mrf.mxu0
  %v3737 = vadd.f32 0.0, %v3736
  %v3738 = vpop.f32.mrf.mxu0
  %v3739 = vpop.f32.mrf.mxu0
  %v3740 = vadd.f32 0.0, %v3739
  %v3741 = vpop.f32.mrf.mxu0
  %3742 = vmatprep.mubr.bf16.mxu0 0
  %3743 = vmatmul.mubr.bf16.gmra.mxu0 %v1640
  %v3744 = vpop.f32.mrf.mxu0
  %v3745 = vadd.f32 0.0, %v3744
  %v3746 = vpop.f32.mrf.mxu0
  %v3747 = vpop.f32.mrf.mxu0
  %v3748 = vadd.f32 0.0, %v3747
  %v3749 = vpop.f32.mrf.mxu0
  %3750 = vmatprep.mubr.bf16.mxu0 0
  %3751 = vmatmul.mubr.bf16.gmra.mxu0 %v1643
  %v3752 = vpop.f32.mrf.mxu0
  %v3753 = vadd.f32 0.0, %v3752
  %v3754 = vpop.f32.mrf.mxu0
  %v3755 = vpop.f32.mrf.mxu0
  %v3756 = vadd.f32 0.0, %v3755
  %v3757 = vpop.f32.mrf.mxu0
  %3758 = vmatprep.mubr.bf16.mxu0 0
  %3759 = vmatmul.mubr.bf16.gmra.mxu0 %v1646
  %v3760 = vpop.f32.mrf.mxu0
  %v3761 = vadd.f32 0.0, %v3760
  %v3762 = vpop.f32.mrf.mxu0
  %v3763 = vpop.f32.mrf.mxu0
  %v3764 = vadd.f32 0.0, %v3763
  %v3765 = vpop.f32.mrf.mxu0
  %3766 = vmatprep.mubr.bf16.mxu0 0
  %3767 = vmatmul.mubr.bf16.gmra.mxu0 %v1649
  %v3768 = vpop.f32.mrf.mxu0
  %v3769 = vadd.f32 0.0, %v3768
  %v3770 = vpop.f32.mrf.mxu0
  %v3771 = vpop.f32.mrf.mxu0
  %v3772 = vadd.f32 0.0, %v3771
  %v3773 = vpop.f32.mrf.mxu0
  %3774 = vmatprep.mubr.bf16.mxu0 0
  %3775 = vmatmul.mubr.bf16.gmra.mxu0 %v1652
  %v3776 = vpop.f32.mrf.mxu0
  %v3777 = vadd.f32 0.0, %v3776
  %v3778 = vpop.f32.mrf.mxu0
  %v3779 = vpop.f32.mrf.mxu0
  %v3780 = vadd.f32 0.0, %v3779
  %v3781 = vpop.f32.mrf.mxu0
  %3782 = vmatprep.mubr.bf16.mxu0 0
  %3783 = vmatmul.mubr.bf16.gmra.mxu0 %v1655
  %v3784 = vpop.f32.mrf.mxu0
  %v3785 = vadd.f32 0.0, %v3784
  %v3786 = vpop.f32.mrf.mxu0
  %v3787 = vpop.f32.mrf.mxu0
  %v3788 = vadd.f32 0.0, %v3787
  %v3789 = vpop.f32.mrf.mxu0
  %3790 = vmatprep.mubr.bf16.mxu0 0
  %3791 = vmatmul.mubr.bf16.gmra.mxu0 %v1658
  %v3792 = vpop.f32.mrf.mxu0
  %v3793 = vadd.f32 0.0, %v3792
  %v3794 = vpop.f32.mrf.mxu0
  %v3795 = vpop.f32.mrf.mxu0
  %v3796 = vadd.f32 0.0, %v3795
  %v3797 = vpop.f32.mrf.mxu0
  %3798 = vmatprep.mubr.bf16.mxu0 0
  %3799 = vmatmul.mubr.bf16.gmra.mxu0 %v1661
  %v3800 = vpop.f32.mrf.mxu0
  %v3801 = vadd.f32 0.0, %v3800
  %v3802 = vpop.f32.mrf.mxu0
  %v3803 = vpop.f32.mrf.mxu0
  %v3804 = vadd.f32 0.0, %v3803
  %v3805 = vpop.f32.mrf.mxu0
  %3806 = vmatprep.mubr.bf16.mxu0 0
  %3807 = vmatmul.mubr.bf16.gmra.mxu0 %v1664
  %v3808 = vpop.f32.mrf.mxu0
  %v3809 = vadd.f32 0.0, %v3808
  %v3810 = vpop.f32.mrf.mxu0
  %v3811 = vpop.f32.mrf.mxu0
  %v3812 = vadd.f32 0.0, %v3811
  %v3813 = vpop.f32.mrf.mxu0
  %3814 = vmatprep.mubr.bf16.mxu0 0
  %3815 = vmatmul.mubr.bf16.gmra.mxu0 %v1667
  %v3816 = vpop.f32.mrf.mxu0
  %v3817 = vadd.f32 0.0, %v3816
  %v3818 = vpop.f32.mrf.mxu0
  %v3819 = vpop.f32.mrf.mxu0
  %v3820 = vadd.f32 0.0, %v3819
  %v3821 = vpop.f32.mrf.mxu0
  %3822 = vmatprep.mubr.bf16.mxu0 0
  %3823 = vmatmul.mubr.bf16.gmra.mxu0 %v1670
  %v3824 = vpop.f32.mrf.mxu0
  %v3825 = vadd.f32 0.0, %v3824
  %v3826 = vpop.f32.mrf.mxu0
  %v3827 = vpop.f32.mrf.mxu0
  %v3828 = vadd.f32 0.0, %v3827
  %v3829 = vpop.f32.mrf.mxu0
  %3830 = vmatprep.mubr.bf16.mxu0 0
  %3831 = vmatmul.mubr.bf16.gmra.mxu0 %v1673
  %v3832 = vpop.f32.mrf.mxu0
  %v3833 = vadd.f32 0.0, %v3832
  %v3834 = vpop.f32.mrf.mxu0
  %v3835 = vpop.f32.mrf.mxu0
  %v3836 = vadd.f32 0.0, %v3835
  %v3837 = vpop.f32.mrf.mxu0
  %3838 = vmatprep.mubr.bf16.mxu0 0
  %3839 = vmatmul.mubr.bf16.gmra.mxu0 %v1676
  %v3840 = vpop.f32.mrf.mxu0
  %v3841 = vadd.f32 0.0, %v3840
  %v3842 = vpop.f32.mrf.mxu0
  %v3843 = vpop.f32.mrf.mxu0
  %v3844 = vadd.f32 0.0, %v3843
  %v3845 = vpop.f32.mrf.mxu0
  %3846 = vmatprep.mubr.bf16.mxu0 0
  %3847 = vmatmul.mubr.bf16.gmra.mxu0 %v1679
  %v3848 = vpop.f32.mrf.mxu0
  %v3849 = vadd.f32 0.0, %v3848
  %v3850 = vpop.f32.mrf.mxu0
  %v3851 = vpop.f32.mrf.mxu0
  %v3852 = vadd.f32 0.0, %v3851
  %v3853 = vpop.f32.mrf.mxu0
  %3854 = vmatprep.mubr.bf16.mxu0 0
  %3855 = vmatmul.mubr.bf16.gmra.mxu0 %v1682
  %v3856 = vpop.f32.mrf.mxu0
  %v3857 = vadd.f32 0.0, %v3856
  %v3858 = vpop.f32.mrf.mxu0
  %v3859 = vpop.f32.mrf.mxu0
  %v3860 = vadd.f32 0.0, %v3859
  %v3861 = vpop.f32.mrf.mxu0
  %3862 = vmatprep.mubr.bf16.mxu0 0
  %3863 = vmatmul.mubr.bf16.gmra.mxu0 %v1685
  %v3864 = vpop.f32.mrf.mxu0
  %v3865 = vadd.f32 0.0, %v3864
  %v3866 = vpop.f32.mrf.mxu0
  %v3867 = vpop.f32.mrf.mxu0
  %v3868 = vadd.f32 0.0, %v3867
  %v3869 = vpop.f32.mrf.mxu0
  %3870 = vmatprep.mubr.bf16.mxu0 0
  %3871 = vmatmul.mubr.bf16.gmra.mxu0 %v1688
  %v3872 = vpop.f32.mrf.mxu0
  %v3873 = vadd.f32 0.0, %v3872
  %v3874 = vpop.f32.mrf.mxu0
  %v3875 = vpop.f32.mrf.mxu0
  %v3876 = vadd.f32 0.0, %v3875
  %v3877 = vpop.f32.mrf.mxu0
  %3878 = vmatprep.mubr.bf16.mxu0 0
  %3879 = vmatmul.mubr.bf16.gmra.mxu0 %v1691
  %v3880 = vpop.f32.mrf.mxu0
  %v3881 = vadd.f32 0.0, %v3880
  %v3882 = vpop.f32.mrf.mxu0
  %v3883 = vpop.f32.mrf.mxu0
  %v3884 = vadd.f32 0.0, %v3883
  %v3885 = vpop.f32.mrf.mxu0
  %3886 = vmatprep.mubr.bf16.mxu0 0
  %3887 = vmatmul.mubr.bf16.gmra.mxu0 %v1694
  %v3888 = vpop.f32.mrf.mxu0
  %v3889 = vadd.f32 0.0, %v3888
  %v3890 = vpop.f32.mrf.mxu0
  %v3891 = vpop.f32.mrf.mxu0
  %v3892 = vadd.f32 0.0, %v3891
  %v3893 = vpop.f32.mrf.mxu0
  %3894 = vmatprep.mubr.bf16.mxu0 0
  %3895 = vmatmul.mubr.bf16.gmra.mxu0 %v1697
  %v3896 = vpop.f32.mrf.mxu0
  %v3897 = vadd.f32 0.0, %v3896
  %v3898 = vpop.f32.mrf.mxu0
  %v3899 = vpop.f32.mrf.mxu0
  %v3900 = vadd.f32 0.0, %v3899
  %v3901 = vpop.f32.mrf.mxu0
  %3902 = vmatprep.mubr.bf16.mxu0 0
  %3903 = vmatmul.mubr.bf16.gmra.mxu0 %v1700
  %v3904 = vpop.f32.mrf.mxu0
  %v3905 = vadd.f32 0.0, %v3904
  %v3906 = vpop.f32.mrf.mxu0
  %v3907 = vpop.f32.mrf.mxu0
  %v3908 = vadd.f32 0.0, %v3907
  %v3909 = vpop.f32.mrf.mxu0
  %3910 = vmatprep.mubr.bf16.mxu0 0
  %3911 = vmatmul.mubr.bf16.gmra.mxu0 %v1703
  %v3912 = vpop.f32.mrf.mxu0
  %v3913 = vadd.f32 0.0, %v3912
  %v3914 = vpop.f32.mrf.mxu0
  %v3915 = vpop.f32.mrf.mxu0
  %v3916 = vadd.f32 0.0, %v3915
  %v3917 = vpop.f32.mrf.mxu0
  %3918 = vmatprep.mubr.bf16.mxu0 0
  %3919 = vmatmul.mubr.bf16.gmra.mxu0 %v1706
  %v3920 = vpop.f32.mrf.mxu0
  %v3921 = vadd.f32 0.0, %v3920
  %v3922 = vpop.f32.mrf.mxu0
  %v3923 = vpop.f32.mrf.mxu0
  %v3924 = vadd.f32 0.0, %v3923
  %v3925 = vpop.f32.mrf.mxu0
  %3926 = vmatprep.mubr.bf16.mxu0 0
  %3927 = vmatmul.mubr.bf16.gmra.mxu0 %v1709
  %v3928 = vpop.f32.mrf.mxu0
  %v3929 = vadd.f32 0.0, %v3928
  %v3930 = vpop.f32.mrf.mxu0
  %v3931 = vpop.f32.mrf.mxu0
  %v3932 = vadd.f32 0.0, %v3931
  %v3933 = vpop.f32.mrf.mxu0
  %3934 = vmatprep.mubr.bf16.mxu0 0
  %3935 = vmatmul.mubr.bf16.gmra.mxu0 %v1712
  %v3936 = vpop.f32.mrf.mxu0
  %v3937 = vadd.f32 0.0, %v3936
  %v3938 = vpop.f32.mrf.mxu0
  %v3939 = vpop.f32.mrf.mxu0
  %v3940 = vadd.f32 0.0, %v3939
  %v3941 = vpop.f32.mrf.mxu0
  %3942 = vmatprep.mubr.bf16.mxu0 0
  %3943 = vmatmul.mubr.bf16.gmra.mxu0 %v1715
  %v3944 = vpop.f32.mrf.mxu0
  %v3945 = vadd.f32 0.0, %v3944
  %v3946 = vpop.f32.mrf.mxu0
  %v3947 = vpop.f32.mrf.mxu0
  %v3948 = vadd.f32 0.0, %v3947
  %v3949 = vpop.f32.mrf.mxu0
  %3950 = vmatprep.mubr.bf16.mxu0 0
  %3951 = vmatmul.mubr.bf16.gmra.mxu0 %v1718
  %v3952 = vpop.f32.mrf.mxu0
  %v3953 = vadd.f32 0.0, %v3952
  %v3954 = vpop.f32.mrf.mxu0
  %v3955 = vpop.f32.mrf.mxu0
  %v3956 = vadd.f32 0.0, %v3955
  %v3957 = vpop.f32.mrf.mxu0
  %3958 = vmatprep.mubr.bf16.mxu0 0
  %3959 = vmatmul.mubr.bf16.gmra.mxu0 %v1721
  %v3960 = vpop.f32.mrf.mxu0
  %v3961 = vadd.f32 0.0, %v3960
  %v3962 = vpop.f32.mrf.mxu0
  %v3963 = vpop.f32.mrf.mxu0
  %v3964 = vadd.f32 0.0, %v3963
  %v3965 = vpop.f32.mrf.mxu0
  %3966 = vmatprep.mubr.bf16.mxu0 0
  %3967 = vmatmul.mubr.bf16.gmra.mxu0 %v1724
  %v3968 = vpop.f32.mrf.mxu0
  %v3969 = vadd.f32 0.0, %v3968
  %v3970 = vpop.f32.mrf.mxu0
  %v3971 = vpop.f32.mrf.mxu0
  %v3972 = vadd.f32 0.0, %v3971
  %v3973 = vpop.f32.mrf.mxu0
  %3974 = vmatprep.mubr.bf16.mxu0 0
  %3975 = vmatmul.mubr.bf16.gmra.mxu0 %v1727
  %v3976 = vpop.f32.mrf.mxu0
  %v3977 = vadd.f32 0.0, %v3976
  %v3978 = vpop.f32.mrf.mxu0
  %v3979 = vpop.f32.mrf.mxu0
  %v3980 = vadd.f32 0.0, %v3979
  %v3981 = vpop.f32.mrf.mxu0
  %3982 = vmatprep.mubr.bf16.mxu0 0
  %3983 = vmatmul.mubr.bf16.gmra.mxu0 %v1730
  %v3984 = vpop.f32.mrf.mxu0
  %v3985 = vadd.f32 0.0, %v3984
  %v3986 = vpop.f32.mrf.mxu0
  %v3987 = vpop.f32.mrf.mxu0
  %v3988 = vadd.f32 0.0, %v3987
  %v3989 = vpop.f32.mrf.mxu0
  %3990 = vmatprep.mubr.bf16.mxu0 0
  %3991 = vmatmul.mubr.bf16.gmra.mxu0 %v1733
  %v3992 = vpop.f32.mrf.mxu0
  %v3993 = vadd.f32 0.0, %v3992
  %v3994 = vpop.f32.mrf.mxu0
  %v3995 = vpop.f32.mrf.mxu0
  %v3996 = vadd.f32 0.0, %v3995
  %v3997 = vpop.f32.mrf.mxu0
  %3998 = vmatprep.mubr.bf16.mxu0 0
  %3999 = vmatmul.mubr.bf16.gmra.mxu0 %v1736
  %v4000 = vpop.f32.mrf.mxu0
  %v4001 = vadd.f32 0.0, %v4000
  %v4002 = vpop.f32.mrf.mxu0
  %v4003 = vpop.f32.mrf.mxu0
  %v4004 = vadd.f32 0.0, %v4003
  %v4005 = vpop.f32.mrf.mxu0
  %4006 = vmatprep.mubr.bf16.mxu0 0
  %4007 = vmatmul.mubr.bf16.gmra.mxu0 %v1739
  %v4008 = vpop.f32.mrf.mxu0
  %v4009 = vadd.f32 0.0, %v4008
  %v4010 = vpop.f32.mrf.mxu0
  %v4011 = vpop.f32.mrf.mxu0
  %v4012 = vadd.f32 0.0, %v4011
  %v4013 = vpop.f32.mrf.mxu0
  %4014 = vmatprep.mubr.bf16.mxu0 0
  %4015 = vmatmul.mubr.bf16.gmra.mxu0 %v1742
  %v4016 = vpop.f32.mrf.mxu0
  %v4017 = vadd.f32 0.0, %v4016
  %v4018 = vpop.f32.mrf.mxu0
  %v4019 = vpop.f32.mrf.mxu0
  %v4020 = vadd.f32 0.0, %v4019
  %v4021 = vpop.f32.mrf.mxu0
  %4022 = vmatprep.mubr.bf16.mxu0 0
  %4023 = vmatmul.mubr.bf16.gmra.mxu0 %v1745
  %v4024 = vpop.f32.mrf.mxu0
  %v4025 = vadd.f32 0.0, %v4024
  %v4026 = vpop.f32.mrf.mxu0
  %v4027 = vpop.f32.mrf.mxu0
  %v4028 = vadd.f32 0.0, %v4027
  %v4029 = vpop.f32.mrf.mxu0
  %4030 = vmatprep.mubr.bf16.mxu0 0
  %4031 = vmatmul.mubr.bf16.gmra.mxu0 %v1748
  %v4032 = vpop.f32.mrf.mxu0
  %v4033 = vadd.f32 0.0, %v4032
  %v4034 = vpop.f32.mrf.mxu0
  %v4035 = vpop.f32.mrf.mxu0
  %v4036 = vadd.f32 0.0, %v4035
  %v4037 = vpop.f32.mrf.mxu0
  %4038 = vmatprep.mubr.bf16.mxu0 0
  %4039 = vmatmul.mubr.bf16.gmra.mxu0 %v1751
  %v4040 = vpop.f32.mrf.mxu0
  %v4041 = vadd.f32 0.0, %v4040
  %v4042 = vpop.f32.mrf.mxu0
  %v4043 = vpop.f32.mrf.mxu0
  %v4044 = vadd.f32 0.0, %v4043
  %v4045 = vpop.f32.mrf.mxu0
  %4046 = vmatprep.mubr.bf16.mxu0 0
  %4047 = vmatmul.mubr.bf16.gmra.mxu0 %v1754
  %v4048 = vpop.f32.mrf.mxu0
  %v4049 = vadd.f32 0.0, %v4048
  %v4050 = vpop.f32.mrf.mxu0
  %v4051 = vpop.f32.mrf.mxu0
  %v4052 = vadd.f32 0.0, %v4051
  %v4053 = vpop.f32.mrf.mxu0
  %4054 = vmatprep.mubr.bf16.mxu0 0
  %4055 = vmatmul.mubr.bf16.gmra.mxu0 %v1757
  %v4056 = vpop.f32.mrf.mxu0
  %v4057 = vadd.f32 0.0, %v4056
  %v4058 = vpop.f32.mrf.mxu0
  %v4059 = vpop.f32.mrf.mxu0
  %v4060 = vadd.f32 0.0, %v4059
  %v4061 = vpop.f32.mrf.mxu0
  %4062 = vmatprep.mubr.bf16.mxu0 0
  %4063 = vmatmul.mubr.bf16.gmra.mxu0 %v1760
  %v4064 = vpop.f32.mrf.mxu0
  %v4065 = vadd.f32 0.0, %v4064
  %v4066 = vpop.f32.mrf.mxu0
  %v4067 = vpop.f32.mrf.mxu0
  %v4068 = vadd.f32 0.0, %v4067
  %v4069 = vpop.f32.mrf.mxu0
  %4070 = vmatprep.mubr.bf16.mxu0 0
  %4071 = vmatmul.mubr.bf16.gmra.mxu0 %v1763
  %v4072 = vpop.f32.mrf.mxu0
  %v4073 = vadd.f32 0.0, %v4072
  %v4074 = vpop.f32.mrf.mxu0
  %v4075 = vpop.f32.mrf.mxu0
  %v4076 = vadd.f32 0.0, %v4075
  %v4077 = vpop.f32.mrf.mxu0
  %4078 = vmatprep.mubr.bf16.mxu0 0
  %4079 = vmatmul.mubr.bf16.gmra.mxu0 %v1766
  %v4080 = vpop.f32.mrf.mxu0
  %v4081 = vadd.f32 0.0, %v4080
  %v4082 = vpop.f32.mrf.mxu0
  %v4083 = vpop.f32.mrf.mxu0
  %v4084 = vadd.f32 0.0, %v4083
  %v4085 = vpop.f32.mrf.mxu0
  %4086 = vmatprep.mubr.bf16.mxu0 0
  %4087 = vmatmul.mubr.bf16.gmra.mxu0 %v1769
  %v4088 = vpop.f32.mrf.mxu0
  %v4089 = vadd.f32 0.0, %v4088
  %v4090 = vpop.f32.mrf.mxu0
  %v4091 = vpop.f32.mrf.mxu0
  %v4092 = vadd.f32 0.0, %v4091
  %v4093 = vpop.f32.mrf.mxu0
  %4094 = vmatprep.mubr.bf16.mxu0 0
  %4095 = vmatmul.mubr.bf16.gmra.mxu0 %v1772
  %v4096 = vpop.f32.mrf.mxu0
  %v4097 = vadd.f32 0.0, %v4096
  %v4098 = vpop.f32.mrf.mxu0
  %v4099 = vpop.f32.mrf.mxu0
  %v4100 = vadd.f32 0.0, %v4099
  %v4101 = vpop.f32.mrf.mxu0
  %4102 = vmatprep.mubr.bf16.mxu0 0
  %4103 = vmatmul.mubr.bf16.gmra.mxu0 %v1775
  %v4104 = vpop.f32.mrf.mxu0
  %v4105 = vadd.f32 0.0, %v4104
  %v4106 = vpop.f32.mrf.mxu0
  %v4107 = vpop.f32.mrf.mxu0
  %v4108 = vadd.f32 0.0, %v4107
  %v4109 = vpop.f32.mrf.mxu0
  %4110 = vmatprep.mubr.bf16.mxu0 0
  %4111 = vmatmul.mubr.bf16.gmra.mxu0 %v1778
  %v4112 = vpop.f32.mrf.mxu0
  %v4113 = vadd.f32 0.0, %v4112
  %v4114 = vpop.f32.mrf.mxu0
  %v4115 = vpop.f32.mrf.mxu0
  %v4116 = vadd.f32 0.0, %v4115
  %v4117 = vpop.f32.mrf.mxu0
  %4118 = vmatprep.mubr.bf16.mxu0 0
  %4119 = vmatmul.mubr.bf16.gmra.mxu0 %v1781
  %v4120 = vpop.f32.mrf.mxu0
  %v4121 = vadd.f32 0.0, %v4120
  %v4122 = vpop.f32.mrf.mxu0
  %v4123 = vpop.f32.mrf.mxu0
  %v4124 = vadd.f32 0.0, %v4123
  %v4125 = vpop.f32.mrf.mxu0
  %4126 = vdwg.mxu0
  %v4127 = vld [vmem:[%s2] sm:$0x1]
  %v4128 = vmax.f32 %v1825, %v1969
  %v4129 = vmax.f32 %v1828, %v1972
  %v4130 = vmax.f32 %v1833, %v1977
  %v4131 = vmax.f32 %v1836, %v1980
  %v4132 = vmax.f32 %v1841, %v1985
  %v4133 = vmax.f32 %v1844, %v1988
  %v4134 = vmax.f32 %v1849, %v1993
  %v4135 = vmax.f32 %v1852, %v1996
  %v4136 = vmax.f32 %v1857, %v2001
  %v4137 = vmax.f32 %v1860, %v2004
  %v4138 = vmax.f32 %v1865, %v2009
  %v4139 = vmax.f32 %v1868, %v2012
  %v4140 = vmax.f32 %v1873, %v2017
  %v4141 = vmax.f32 %v1876, %v2020
  %v4142 = vmax.f32 %v1881, %v2025
  %v4143 = vmax.f32 %v1884, %v2028
  %v4144 = vmax.f32 %v1889, %v2033
  %v4145 = vmax.f32 %v1892, %v2036
  %v4146 = vmax.f32 %v1897, %v2041
  %v4147 = vmax.f32 %v1900, %v2044
  %v4148 = vmax.f32 %v1905, %v2049
  %v4149 = vmax.f32 %v1908, %v2052
  %v4150 = vmax.f32 %v1913, %v2057
  %v4151 = vmax.f32 %v1916, %v2060
  %v4152 = vmax.f32 %v1921, %v2065
  %v4153 = vmax.f32 %v1924, %v2068
  %v4154 = vmax.f32 %v1929, %v2073
  %v4155 = vmax.f32 %v1932, %v2076
  %v4156 = vmax.f32 %v1937, %v2081
  %v4157 = vmax.f32 %v1940, %v2084
  %v4158 = vmax.f32 %v1945, %v2089
  %v4159 = vmax.f32 %v1948, %v2092
  %v4160 = vmax.f32 %v1953, %v2097
  %v4161 = vmax.f32 %v1956, %v2100
  %v4162 = vmax.f32 %v1961, %v2105
  %v4163 = vmax.f32 %v1964, %v2108
  %v4164 = vmax.f32 %v2401, %v2545
  %v4165 = vmax.f32 %v2404, %v2548
  %v4166 = vmax.f32 %v2409, %v2553
  %v4167 = vmax.f32 %v2412, %v2556
  %v4168 = vmax.f32 %v2417, %v2561
  %v4169 = vmax.f32 %v2420, %v2564
  %v4170 = vmax.f32 %v2425, %v2569
  %v4171 = vmax.f32 %v2428, %v2572
  %v4172 = vmax.f32 %v2433, %v2577
  %v4173 = vmax.f32 %v2436, %v2580
  %v4174 = vmax.f32 %v2441, %v2585
  %v4175 = vmax.f32 %v2444, %v2588
  %v4176 = vmax.f32 %v2449, %v2593
  %v4177 = vmax.f32 %v2452, %v2596
  %v4178 = vmax.f32 %v2457, %v2601
  %v4179 = vmax.f32 %v2460, %v2604
  %v4180 = vmax.f32 %v2465, %v2609
  %v4181 = vmax.f32 %v2468, %v2612
  %v4182 = vmax.f32 %v2473, %v2617
  %v4183 = vmax.f32 %v2476, %v2620
  %v4184 = vmax.f32 %v2481, %v2625
  %v4185 = vmax.f32 %v2484, %v2628
  %v4186 = vmax.f32 %v2489, %v2633
  %v4187 = vmax.f32 %v2492, %v2636
  %v4188 = vmax.f32 %v2497, %v2641
  %v4189 = vmax.f32 %v2500, %v2644
  %v4190 = vmax.f32 %v2505, %v2649
  %v4191 = vmax.f32 %v2508, %v2652
  %v4192 = vmax.f32 %v2513, %v2657
  %v4193 = vmax.f32 %v2516, %v2660
  %v4194 = vmax.f32 %v2521, %v2665
  %v4195 = vmax.f32 %v2524, %v2668
  %v4196 = vmax.f32 %v2529, %v2673
  %v4197 = vmax.f32 %v2532, %v2676
  %v4198 = vmax.f32 %v2537, %v2681
  %v4199 = vmax.f32 %v2540, %v2684
  %v4200 = vmax.f32 %v4128, %v4164
  %v4201 = vmax.f32 %v4129, %v4165
  %v4202 = vmax.f32 %v4130, %v4166
  %v4203 = vmax.f32 %v4131, %v4167
  %v4204 = vmax.f32 %v4132, %v4168
  %v4205 = vmax.f32 %v4133, %v4169
  %v4206 = vmax.f32 %v4134, %v4170
  %v4207 = vmax.f32 %v4135, %v4171
  %v4208 = vmax.f32 %v4136, %v4172
  %v4209 = vmax.f32 %v4137, %v4173
  %v4210 = vmax.f32 %v4138, %v4174
  %v4211 = vmax.f32 %v4139, %v4175
  %v4212 = vmax.f32 %v4140, %v4176
  %v4213 = vmax.f32 %v4141, %v4177
  %v4214 = vmax.f32 %v4142, %v4178
  %v4215 = vmax.f32 %v4143, %v4179
  %v4216 = vmax.f32 %v4144, %v4180
  %v4217 = vmax.f32 %v4145, %v4181
  %v4218 = vmax.f32 %v4146, %v4182
  %v4219 = vmax.f32 %v4147, %v4183
  %v4220 = vmax.f32 %v4148, %v4184
  %v4221 = vmax.f32 %v4149, %v4185
  %v4222 = vmax.f32 %v4150, %v4186
  %v4223 = vmax.f32 %v4151, %v4187
  %v4224 = vmax.f32 %v4152, %v4188
  %v4225 = vmax.f32 %v4153, %v4189
  %v4226 = vmax.f32 %v4154, %v4190
  %v4227 = vmax.f32 %v4155, %v4191
  %v4228 = vmax.f32 %v4156, %v4192
  %v4229 = vmax.f32 %v4157, %v4193
  %v4230 = vmax.f32 %v4158, %v4194
  %v4231 = vmax.f32 %v4159, %v4195
  %v4232 = vmax.f32 %v4160, %v4196
  %v4233 = vmax.f32 %v4161, %v4197
  %v4234 = vmax.f32 %v4162, %v4198
  %v4235 = vmax.f32 %v4163, %v4199
  %v4237 = vlaneseq
  %v4238 = vshrl.u32 %v4237, 7
  %v4239 = vsub.s32 0, %v4238
  %v4240 = vrot.slane %v4127, %v4239
  %v4242 = vadd.f32 %v4200, %v4240
  %v4243 = vadd.f32 %v4201, %v4240
  %v4244 = vadd.f32 %v4202, %v4240
  %v4245 = vadd.f32 %v4203, %v4240
  %v4246 = vadd.f32 %v4204, %v4240
  %v4247 = vadd.f32 %v4205, %v4240
  %v4248 = vadd.f32 %v4206, %v4240
  %v4249 = vadd.f32 %v4207, %v4240
  %v4250 = vadd.f32 %v4208, %v4240
  %v4251 = vadd.f32 %v4209, %v4240
  %v4252 = vadd.f32 %v4210, %v4240
  %v4253 = vadd.f32 %v4211, %v4240
  %v4254 = vadd.f32 %v4212, %v4240
  %v4255 = vadd.f32 %v4213, %v4240
  %v4256 = vadd.f32 %v4214, %v4240
  %v4257 = vadd.f32 %v4215, %v4240
  %v4258 = vadd.f32 %v4216, %v4240
  %v4259 = vadd.f32 %v4217, %v4240
  %v4260 = vadd.f32 %v4218, %v4240
  %v4261 = vadd.f32 %v4219, %v4240
  %v4262 = vadd.f32 %v4220, %v4240
  %v4263 = vadd.f32 %v4221, %v4240
  %v4264 = vadd.f32 %v4222, %v4240
  %v4265 = vadd.f32 %v4223, %v4240
  %v4266 = vadd.f32 %v4224, %v4240
  %v4267 = vadd.f32 %v4225, %v4240
  %v4268 = vadd.f32 %v4226, %v4240
  %v4269 = vadd.f32 %v4227, %v4240
  %v4270 = vadd.f32 %v4228, %v4240
  %v4271 = vadd.f32 %v4229, %v4240
  %v4272 = vadd.f32 %v4230, %v4240
  %v4273 = vadd.f32 %v4231, %v4240
  %v4274 = vadd.f32 %v4232, %v4240
  %v4275 = vadd.f32 %v4233, %v4240
  %v4276 = vadd.f32 %v4234, %v4240
  %v4277 = vadd.f32 %v4235, %v4240
  %v4278 = vmax.f32 %v4242, 0.0
  %v4279 = vmax.f32 %v4243, 0.0
  %v4280 = vmax.f32 %v4244, 0.0
  %v4281 = vmax.f32 %v4245, 0.0
  %v4282 = vmax.f32 %v4246, 0.0
  %v4283 = vmax.f32 %v4247, 0.0
  %v4284 = vmax.f32 %v4248, 0.0
  %v4285 = vmax.f32 %v4249, 0.0
  %v4286 = vmax.f32 %v4250, 0.0
  %v4287 = vmax.f32 %v4251, 0.0
  %v4288 = vmax.f32 %v4252, 0.0
  %v4289 = vmax.f32 %v4253, 0.0
  %v4290 = vmax.f32 %v4254, 0.0
  %v4291 = vmax.f32 %v4255, 0.0
  %v4292 = vmax.f32 %v4256, 0.0
  %v4293 = vmax.f32 %v4257, 0.0
  %v4294 = vmax.f32 %v4258, 0.0
  %v4295 = vmax.f32 %v4259, 0.0
  %v4296 = vmax.f32 %v4260, 0.0
  %v4297 = vmax.f32 %v4261, 0.0
  %v4298 = vmax.f32 %v4262, 0.0
  %v4299 = vmax.f32 %v4263, 0.0
  %v4300 = vmax.f32 %v4264, 0.0
  %v4301 = vmax.f32 %v4265, 0.0
  %v4302 = vmax.f32 %v4266, 0.0
  %v4303 = vmax.f32 %v4267, 0.0
  %v4304 = vmax.f32 %v4268, 0.0
  %v4305 = vmax.f32 %v4269, 0.0
  %v4306 = vmax.f32 %v4270, 0.0
  %v4307 = vmax.f32 %v4271, 0.0
  %v4308 = vmax.f32 %v4272, 0.0
  %v4309 = vmax.f32 %v4273, 0.0
  %v4310 = vmax.f32 %v4274, 0.0
  %v4311 = vmax.f32 %v4275, 0.0
  %v4312 = vmax.f32 %v4276, 0.0
  %v4313 = vmax.f32 %v4277, 0.0
  %v4314 = vmax.f32 %v2113, %v2257
  %v4315 = vmax.f32 %v2116, %v2260
  %v4316 = vmax.f32 %v2121, %v2265
  %v4317 = vmax.f32 %v2124, %v2268
  %v4318 = vmax.f32 %v2129, %v2273
  %v4319 = vmax.f32 %v2132, %v2276
  %v4320 = vmax.f32 %v2137, %v2281
  %v4321 = vmax.f32 %v2140, %v2284
  %v4322 = vmax.f32 %v2145, %v2289
  %v4323 = vmax.f32 %v2148, %v2292
  %v4324 = vmax.f32 %v2153, %v2297
  %v4325 = vmax.f32 %v2156, %v2300
  %v4326 = vmax.f32 %v2161, %v2305
  %v4327 = vmax.f32 %v2164, %v2308
  %v4328 = vmax.f32 %v2169, %v2313
  %v4329 = vmax.f32 %v2172, %v2316
  %v4330 = vmax.f32 %v2177, %v2321
  %v4331 = vmax.f32 %v2180, %v2324
  %v4332 = vmax.f32 %v2185, %v2329
  %v4333 = vmax.f32 %v2188, %v2332
  %v4334 = vmax.f32 %v2193, %v2337
  %v4335 = vmax.f32 %v2196, %v2340
  %v4336 = vmax.f32 %v2201, %v2345
  %v4337 = vmax.f32 %v2204, %v2348
  %v4338 = vmax.f32 %v2209, %v2353
  %v4339 = vmax.f32 %v2212, %v2356
  %v4340 = vmax.f32 %v2217, %v2361
  %v4341 = vmax.f32 %v2220, %v2364
  %v4342 = vmax.f32 %v2225, %v2369
  %v4343 = vmax.f32 %v2228, %v2372
  %v4344 = vmax.f32 %v2233, %v2377
  %v4345 = vmax.f32 %v2236, %v2380
  %v4346 = vmax.f32 %v2241, %v2385
  %v4347 = vmax.f32 %v2244, %v2388
  %v4348 = vmax.f32 %v2249, %v2393
  %v4349 = vmax.f32 %v2252, %v2396
  %v4350 = vmax.f32 %v2689, %v2833
  %v4351 = vmax.f32 %v2692, %v2836
  %v4352 = vmax.f32 %v2697, %v2841
  %v4353 = vmax.f32 %v2700, %v2844
  %v4354 = vmax.f32 %v2705, %v2849
  %v4355 = vmax.f32 %v2708, %v2852
  %v4356 = vmax.f32 %v2713, %v2857
  %v4357 = vmax.f32 %v2716, %v2860
  %v4358 = vmax.f32 %v2721, %v2865
  %v4359 = vmax.f32 %v2724, %v2868
  %v4360 = vmax.f32 %v2729, %v2873
  %v4361 = vmax.f32 %v2732, %v2876
  %v4362 = vmax.f32 %v2737, %v2881
  %v4363 = vmax.f32 %v2740, %v2884
  %v4364 = vmax.f32 %v2745, %v2889
  %v4365 = vmax.f32 %v2748, %v2892
  %v4366 = vmax.f32 %v2753, %v2897
  %v4367 = vmax.f32 %v2756, %v2900
  %v4368 = vmax.f32 %v2761, %v2905
  %v4369 = vmax.f32 %v2764, %v2908
  %v4370 = vmax.f32 %v2769, %v2913
  %v4371 = vmax.f32 %v2772, %v2916
  %v4372 = vmax.f32 %v2777, %v2921
  %v4373 = vmax.f32 %v2780, %v2924
  %v4374 = vmax.f32 %v2785, %v2929
  %v4375 = vmax.f32 %v2788, %v2932
  %v4376 = vmax.f32 %v2793, %v2937
  %v4377 = vmax.f32 %v2796, %v2940
  %v4378 = vmax.f32 %v2801, %v2945
  %v4379 = vmax.f32 %v2804, %v2948
  %v4380 = vmax.f32 %v2809, %v2953
  %v4381 = vmax.f32 %v2812, %v2956
  %v4382 = vmax.f32 %v2817, %v2961
  %v4383 = vmax.f32 %v2820, %v2964
  %v4384 = vmax.f32 %v2825, %v2969
  %v4385 = vmax.f32 %v2828, %v2972
  %v4386 = vmax.f32 %v4314, %v4350
  %v4387 = vmax.f32 %v4315, %v4351
  %v4388 = vmax.f32 %v4316, %v4352
  %v4389 = vmax.f32 %v4317, %v4353
  %v4390 = vmax.f32 %v4318, %v4354
  %v4391 = vmax.f32 %v4319, %v4355
  %v4392 = vmax.f32 %v4320, %v4356
  %v4393 = vmax.f32 %v4321, %v4357
  %v4394 = vmax.f32 %v4322, %v4358
  %v4395 = vmax.f32 %v4323, %v4359
  %v4396 = vmax.f32 %v4324, %v4360
  %v4397 = vmax.f32 %v4325, %v4361
  %v4398 = vmax.f32 %v4326, %v4362
  %v4399 = vmax.f32 %v4327, %v4363
  %v4400 = vmax.f32 %v4328, %v4364
  %v4401 = vmax.f32 %v4329, %v4365
  %v4402 = vmax.f32 %v4330, %v4366
  %v4403 = vmax.f32 %v4331, %v4367
  %v4404 = vmax.f32 %v4332, %v4368
  %v4405 = vmax.f32 %v4333, %v4369
  %v4406 = vmax.f32 %v4334, %v4370
  %v4407 = vmax.f32 %v4335, %v4371
  %v4408 = vmax.f32 %v4336, %v4372
  %v4409 = vmax.f32 %v4337, %v4373
  %v4410 = vmax.f32 %v4338, %v4374
  %v4411 = vmax.f32 %v4339, %v4375
  %v4412 = vmax.f32 %v4340, %v4376
  %v4413 = vmax.f32 %v4341, %v4377
  %v4414 = vmax.f32 %v4342, %v4378
  %v4415 = vmax.f32 %v4343, %v4379
  %v4416 = vmax.f32 %v4344, %v4380
  %v4417 = vmax.f32 %v4345, %v4381
  %v4418 = vmax.f32 %v4346, %v4382
  %v4419 = vmax.f32 %v4347, %v4383
  %v4420 = vmax.f32 %v4348, %v4384
  %v4421 = vmax.f32 %v4349, %v4385
  %v4422 = vadd.f32 %v4386, %v4240
  %v4423 = vadd.f32 %v4387, %v4240
  %v4424 = vadd.f32 %v4388, %v4240
  %v4425 = vadd.f32 %v4389, %v4240
  %v4426 = vadd.f32 %v4390, %v4240
  %v4427 = vadd.f32 %v4391, %v4240
  %v4428 = vadd.f32 %v4392, %v4240
  %v4429 = vadd.f32 %v4393, %v4240
  %v4430 = vadd.f32 %v4394, %v4240
  %v4431 = vadd.f32 %v4395, %v4240
  %v4432 = vadd.f32 %v4396, %v4240
  %v4433 = vadd.f32 %v4397, %v4240
  %v4434 = vadd.f32 %v4398, %v4240
  %v4435 = vadd.f32 %v4399, %v4240
  %v4436 = vadd.f32 %v4400, %v4240
  %v4437 = vadd.f32 %v4401, %v4240
  %v4438 = vadd.f32 %v4402, %v4240
  %v4439 = vadd.f32 %v4403, %v4240
  %v4440 = vadd.f32 %v4404, %v4240
  %v4441 = vadd.f32 %v4405, %v4240
  %v4442 = vadd.f32 %v4406, %v4240
  %v4443 = vadd.f32 %v4407, %v4240
  %v4444 = vadd.f32 %v4408, %v4240
  %v4445 = vadd.f32 %v4409, %v4240
  %v4446 = vadd.f32 %v4410, %v4240
  %v4447 = vadd.f32 %v4411, %v4240
  %v4448 = vadd.f32 %v4412, %v4240
  %v4449 = vadd.f32 %v4413, %v4240
  %v4450 = vadd.f32 %v4414, %v4240
  %v4451 = vadd.f32 %v4415, %v4240
  %v4452 = vadd.f32 %v4416, %v4240
  %v4453 = vadd.f32 %v4417, %v4240
  %v4454 = vadd.f32 %v4418, %v4240
  %v4455 = vadd.f32 %v4419, %v4240
  %v4456 = vadd.f32 %v4420, %v4240
  %v4457 = vadd.f32 %v4421, %v4240
  %v4458 = vmax.f32 %v4422, 0.0
  %v4459 = vmax.f32 %v4423, 0.0
  %v4460 = vmax.f32 %v4424, 0.0
  %v4461 = vmax.f32 %v4425, 0.0
  %v4462 = vmax.f32 %v4426, 0.0
  %v4463 = vmax.f32 %v4427, 0.0
  %v4464 = vmax.f32 %v4428, 0.0
  %v4465 = vmax.f32 %v4429, 0.0
  %v4466 = vmax.f32 %v4430, 0.0
  %v4467 = vmax.f32 %v4431, 0.0
  %v4468 = vmax.f32 %v4432, 0.0
  %v4469 = vmax.f32 %v4433, 0.0
  %v4470 = vmax.f32 %v4434, 0.0
  %v4471 = vmax.f32 %v4435, 0.0
  %v4472 = vmax.f32 %v4436, 0.0
  %v4473 = vmax.f32 %v4437, 0.0
  %v4474 = vmax.f32 %v4438, 0.0
  %v4475 = vmax.f32 %v4439, 0.0
  %v4476 = vmax.f32 %v4440, 0.0
  %v4477 = vmax.f32 %v4441, 0.0
  %v4478 = vmax.f32 %v4442, 0.0
  %v4479 = vmax.f32 %v4443, 0.0
  %v4480 = vmax.f32 %v4444, 0.0
  %v4481 = vmax.f32 %v4445, 0.0
  %v4482 = vmax.f32 %v4446, 0.0
  %v4483 = vmax.f32 %v4447, 0.0
  %v4484 = vmax.f32 %v4448, 0.0
  %v4485 = vmax.f32 %v4449, 0.0
  %v4486 = vmax.f32 %v4450, 0.0
  %v4487 = vmax.f32 %v4451, 0.0
  %v4488 = vmax.f32 %v4452, 0.0
  %v4489 = vmax.f32 %v4453, 0.0
  %v4490 = vmax.f32 %v4454, 0.0
  %v4491 = vmax.f32 %v4455, 0.0
  %v4492 = vmax.f32 %v4456, 0.0
  %v4493 = vmax.f32 %v4457, 0.0
  %v4494 = vmax.f32 %v2977, %v3121
  %v4495 = vmax.f32 %v2980, %v3124
  %v4496 = vmax.f32 %v2985, %v3129
  %v4497 = vmax.f32 %v2988, %v3132
  %v4498 = vmax.f32 %v2993, %v3137
  %v4499 = vmax.f32 %v2996, %v3140
  %v4500 = vmax.f32 %v3001, %v3145
  %v4501 = vmax.f32 %v3004, %v3148
  %v4502 = vmax.f32 %v3009, %v3153
  %v4503 = vmax.f32 %v3012, %v3156
  %v4504 = vmax.f32 %v3017, %v3161
  %v4505 = vmax.f32 %v3020, %v3164
  %v4506 = vmax.f32 %v3025, %v3169
  %v4507 = vmax.f32 %v3028, %v3172
  %v4508 = vmax.f32 %v3033, %v3177
  %v4509 = vmax.f32 %v3036, %v3180
  %v4510 = vmax.f32 %v3041, %v3185
  %v4511 = vmax.f32 %v3044, %v3188
  %v4512 = vmax.f32 %v3049, %v3193
  %v4513 = vmax.f32 %v3052, %v3196
  %v4514 = vmax.f32 %v3057, %v3201
  %v4515 = vmax.f32 %v3060, %v3204
  %v4516 = vmax.f32 %v3065, %v3209
  %v4517 = vmax.f32 %v3068, %v3212
  %v4518 = vmax.f32 %v3073, %v3217
  %v4519 = vmax.f32 %v3076, %v3220
  %v4520 = vmax.f32 %v3081, %v3225
  %v4521 = vmax.f32 %v3084, %v3228
  %v4522 = vmax.f32 %v3089, %v3233
  %v4523 = vmax.f32 %v3092, %v3236
  %v4524 = vmax.f32 %v3097, %v3241
  %v4525 = vmax.f32 %v3100, %v3244
  %v4526 = vmax.f32 %v3105, %v3249
  %v4527 = vmax.f32 %v3108, %v3252
  %v4528 = vmax.f32 %v3113, %v3257
  %v4529 = vmax.f32 %v3116, %v3260
  %v4530 = vmax.f32 %v3553, %v3697
  %v4531 = vmax.f32 %v3556, %v3700
  %v4532 = vmax.f32 %v3561, %v3705
  %v4533 = vmax.f32 %v3564, %v3708
  %v4534 = vmax.f32 %v3569, %v3713
  %v4535 = vmax.f32 %v3572, %v3716
  %v4536 = vmax.f32 %v3577, %v3721
  %v4537 = vmax.f32 %v3580, %v3724
  %v4538 = vmax.f32 %v3585, %v3729
  %v4539 = vmax.f32 %v3588, %v3732
  %v4540 = vmax.f32 %v3593, %v3737
  %v4541 = vmax.f32 %v3596, %v3740
  %v4542 = vmax.f32 %v3601, %v3745
  %v4543 = vmax.f32 %v3604, %v3748
  %v4544 = vmax.f32 %v3609, %v3753
  %v4545 = vmax.f32 %v3612, %v3756
  %v4546 = vmax.f32 %v3617, %v3761
  %v4547 = vmax.f32 %v3620, %v3764
  %v4548 = vmax.f32 %v3625, %v3769
  %v4549 = vmax.f32 %v3628, %v3772
  %v4550 = vmax.f32 %v3633, %v3777
  %v4551 = vmax.f32 %v3636, %v3780
  %v4552 = vmax.f32 %v3641, %v3785
  %v4553 = vmax.f32 %v3644, %v3788
  %v4554 = vmax.f32 %v3649, %v3793
  %v4555 = vmax.f32 %v3652, %v3796
  %v4556 = vmax.f32 %v3657, %v3801
  %v4557 = vmax.f32 %v3660, %v3804
  %v4558 = vmax.f32 %v3665, %v3809
  %v4559 = vmax.f32 %v3668, %v3812
  %v4560 = vmax.f32 %v3673, %v3817
  %v4561 = vmax.f32 %v3676, %v3820
  %v4562 = vmax.f32 %v3681, %v3825
  %v4563 = vmax.f32 %v3684, %v3828
  %v4564 = vmax.f32 %v3689, %v3833
  %v4565 = vmax.f32 %v3692, %v3836
  %v4566 = vmax.f32 %v4494, %v4530
  %v4567 = vmax.f32 %v4495, %v4531
  %v4568 = vmax.f32 %v4496, %v4532
  %v4569 = vmax.f32 %v4497, %v4533
  %v4570 = vmax.f32 %v4498, %v4534
  %v4571 = vmax.f32 %v4499, %v4535
  %v4572 = vmax.f32 %v4500, %v4536
  %v4573 = vmax.f32 %v4501, %v4537
  %v4574 = vmax.f32 %v4502, %v4538
  %v4575 = vmax.f32 %v4503, %v4539
  %v4576 = vmax.f32 %v4504, %v4540
  %v4577 = vmax.f32 %v4505, %v4541
  %v4578 = vmax.f32 %v4506, %v4542
  %v4579 = vmax.f32 %v4507, %v4543
  %v4580 = vmax.f32 %v4508, %v4544
  %v4581 = vmax.f32 %v4509, %v4545
  %v4582 = vmax.f32 %v4510, %v4546
  %v4583 = vmax.f32 %v4511, %v4547
  %v4584 = vmax.f32 %v4512, %v4548
  %v4585 = vmax.f32 %v4513, %v4549
  %v4586 = vmax.f32 %v4514, %v4550
  %v4587 = vmax.f32 %v4515, %v4551
  %v4588 = vmax.f32 %v4516, %v4552
  %v4589 = vmax.f32 %v4517, %v4553
  %v4590 = vmax.f32 %v4518, %v4554
  %v4591 = vmax.f32 %v4519, %v4555
  %v4592 = vmax.f32 %v4520, %v4556
  %v4593 = vmax.f32 %v4521, %v4557
  %v4594 = vmax.f32 %v4522, %v4558
  %v4595 = vmax.f32 %v4523, %v4559
  %v4596 = vmax.f32 %v4524, %v4560
  %v4597 = vmax.f32 %v4525, %v4561
  %v4598 = vmax.f32 %v4526, %v4562
  %v4599 = vmax.f32 %v4527, %v4563
  %v4600 = vmax.f32 %v4528, %v4564
  %v4601 = vmax.f32 %v4529, %v4565
  %v4602 = vadd.f32 %v4566, %v4240
  %v4603 = vadd.f32 %v4567, %v4240
  %v4604 = vadd.f32 %v4568, %v4240
  %v4605 = vadd.f32 %v4569, %v4240
  %v4606 = vadd.f32 %v4570, %v4240
  %v4607 = vadd.f32 %v4571, %v4240
  %v4608 = vadd.f32 %v4572, %v4240
  %v4609 = vadd.f32 %v4573, %v4240
  %v4610 = vadd.f32 %v4574, %v4240
  %v4611 = vadd.f32 %v4575, %v4240
  %v4612 = vadd.f32 %v4576, %v4240
  %v4613 = vadd.f32 %v4577, %v4240
  %v4614 = vadd.f32 %v4578, %v4240
  %v4615 = vadd.f32 %v4579, %v4240
  %v4616 = vadd.f32 %v4580, %v4240
  %v4617 = vadd.f32 %v4581, %v4240
  %v4618 = vadd.f32 %v4582, %v4240
  %v4619 = vadd.f32 %v4583, %v4240
  %v4620 = vadd.f32 %v4584, %v4240
  %v4621 = vadd.f32 %v4585, %v4240
  %v4622 = vadd.f32 %v4586, %v4240
  %v4623 = vadd.f32 %v4587, %v4240
  %v4624 = vadd.f32 %v4588, %v4240
  %v4625 = vadd.f32 %v4589, %v4240
  %v4626 = vadd.f32 %v4590, %v4240
  %v4627 = vadd.f32 %v4591, %v4240
  %v4628 = vadd.f32 %v4592, %v4240
  %v4629 = vadd.f32 %v4593, %v4240
  %v4630 = vadd.f32 %v4594, %v4240
  %v4631 = vadd.f32 %v4595, %v4240
  %v4632 = vadd.f32 %v4596, %v4240
  %v4633 = vadd.f32 %v4597, %v4240
  %v4634 = vadd.f32 %v4598, %v4240
  %v4635 = vadd.f32 %v4599, %v4240
  %v4636 = vadd.f32 %v4600, %v4240
  %v4637 = vadd.f32 %v4601, %v4240
  %v4638 = vmax.f32 %v4602, 0.0
  %v4639 = vmax.f32 %v4603, 0.0
  %v4640 = vmax.f32 %v4604, 0.0
  %v4641 = vmax.f32 %v4605, 0.0
  %v4642 = vmax.f32 %v4606, 0.0
  %v4643 = vmax.f32 %v4607, 0.0
  %v4644 = vmax.f32 %v4608, 0.0
  %v4645 = vmax.f32 %v4609, 0.0
  %v4646 = vmax.f32 %v4610, 0.0
  %v4647 = vmax.f32 %v4611, 0.0
  %v4648 = vmax.f32 %v4612, 0.0
  %v4649 = vmax.f32 %v4613, 0.0
  %v4650 = vmax.f32 %v4614, 0.0
  %v4651 = vmax.f32 %v4615, 0.0
  %v4652 = vmax.f32 %v4616, 0.0
  %v4653 = vmax.f32 %v4617, 0.0
  %v4654 = vmax.f32 %v4618, 0.0
  %v4655 = vmax.f32 %v4619, 0.0
  %v4656 = vmax.f32 %v4620, 0.0
  %v4657 = vmax.f32 %v4621, 0.0
  %v4658 = vmax.f32 %v4622, 0.0
  %v4659 = vmax.f32 %v4623, 0.0
  %v4660 = vmax.f32 %v4624, 0.0
  %v4661 = vmax.f32 %v4625, 0.0
  %v4662 = vmax.f32 %v4626, 0.0
  %v4663 = vmax.f32 %v4627, 0.0
  %v4664 = vmax.f32 %v4628, 0.0
  %v4665 = vmax.f32 %v4629, 0.0
  %v4666 = vmax.f32 %v4630, 0.0
  %v4667 = vmax.f32 %v4631, 0.0
  %v4668 = vmax.f32 %v4632, 0.0
  %v4669 = vmax.f32 %v4633, 0.0
  %v4670 = vmax.f32 %v4634, 0.0
  %v4671 = vmax.f32 %v4635, 0.0
  %v4672 = vmax.f32 %v4636, 0.0
  %v4673 = vmax.f32 %v4637, 0.0
  %v4674 = vmax.f32 %v3265, %v3409
  %v4675 = vmax.f32 %v3268, %v3412
  %v4676 = vmax.f32 %v3273, %v3417
  %v4677 = vmax.f32 %v3276, %v3420
  %v4678 = vmax.f32 %v3281, %v3425
  %v4679 = vmax.f32 %v3284, %v3428
  %v4680 = vmax.f32 %v3289, %v3433
  %v4681 = vmax.f32 %v3292, %v3436
  %v4682 = vmax.f32 %v3297, %v3441
  %v4683 = vmax.f32 %v3300, %v3444
  %v4684 = vmax.f32 %v3305, %v3449
  %v4685 = vmax.f32 %v3308, %v3452
  %v4686 = vmax.f32 %v3313, %v3457
  %v4687 = vmax.f32 %v3316, %v3460
  %v4688 = vmax.f32 %v3321, %v3465
  %v4689 = vmax.f32 %v3324, %v3468
  %v4690 = vmax.f32 %v3329, %v3473
  %v4691 = vmax.f32 %v3332, %v3476
  %v4692 = vmax.f32 %v3337, %v3481
  %v4693 = vmax.f32 %v3340, %v3484
  %v4694 = vmax.f32 %v3345, %v3489
  %v4695 = vmax.f32 %v3348, %v3492
  %v4696 = vmax.f32 %v3353, %v3497
  %v4697 = vmax.f32 %v3356, %v3500
  %v4698 = vmax.f32 %v3361, %v3505
  %v4699 = vmax.f32 %v3364, %v3508
  %v4700 = vmax.f32 %v3369, %v3513
  %v4701 = vmax.f32 %v3372, %v3516
  %v4702 = vmax.f32 %v3377, %v3521
  %v4703 = vmax.f32 %v3380, %v3524
  %v4704 = vmax.f32 %v3385, %v3529
  %v4705 = vmax.f32 %v3388, %v3532
  %v4706 = vmax.f32 %v3393, %v3537
  %v4707 = vmax.f32 %v3396, %v3540
  %v4708 = vmax.f32 %v3401, %v3545
  %v4709 = vmax.f32 %v3404, %v3548
  %v4710 = vmax.f32 %v3841, %v3985
  %v4711 = vmax.f32 %v3844, %v3988
  %v4712 = vmax.f32 %v3849, %v3993
  %v4713 = vmax.f32 %v3852, %v3996
  %v4714 = vmax.f32 %v3857, %v4001
  %v4715 = vmax.f32 %v3860, %v4004
  %v4716 = vmax.f32 %v3865, %v4009
  %v4717 = vmax.f32 %v3868, %v4012
  %v4718 = vmax.f32 %v3873, %v4017
  %v4719 = vmax.f32 %v3876, %v4020
  %v4720 = vmax.f32 %v3881, %v4025
  %v4721 = vmax.f32 %v3884, %v4028
  %v4722 = vmax.f32 %v3889, %v4033
  %v4723 = vmax.f32 %v3892, %v4036
  %v4724 = vmax.f32 %v3897, %v4041
  %v4725 = vmax.f32 %v3900, %v4044
  %v4726 = vmax.f32 %v3905, %v4049
  %v4727 = vmax.f32 %v3908, %v4052
  %v4728 = vmax.f32 %v3913, %v4057
  %v4729 = vmax.f32 %v3916, %v4060
  %v4730 = vmax.f32 %v3921, %v4065
  %v4731 = vmax.f32 %v3924, %v4068
  %v4732 = vmax.f32 %v3929, %v4073
  %v4733 = vmax.f32 %v3932, %v4076
  %v4734 = vmax.f32 %v3937, %v4081
  %v4735 = vmax.f32 %v3940, %v4084
  %v4736 = vmax.f32 %v3945, %v4089
  %v4737 = vmax.f32 %v3948, %v4092
  %v4738 = vmax.f32 %v3953, %v4097
  %v4739 = vmax.f32 %v3956, %v4100
  %v4740 = vmax.f32 %v3961, %v4105
  %v4741 = vmax.f32 %v3964, %v4108
  %v4742 = vmax.f32 %v3969, %v4113
  %v4743 = vmax.f32 %v3972, %v4116
  %v4744 = vmax.f32 %v3977, %v4121
  %v4745 = vmax.f32 %v3980, %v4124
  %v4746 = vmax.f32 %v4674, %v4710
  %v4747 = vmax.f32 %v4675, %v4711
  %v4748 = vmax.f32 %v4676, %v4712
  %v4749 = vmax.f32 %v4677, %v4713
  %v4750 = vmax.f32 %v4678, %v4714
  %v4751 = vmax.f32 %v4679, %v4715
  %v4752 = vmax.f32 %v4680, %v4716
  %v4753 = vmax.f32 %v4681, %v4717
  %v4754 = vmax.f32 %v4682, %v4718
  %v4755 = vmax.f32 %v4683, %v4719
  %v4756 = vmax.f32 %v4684, %v4720
  %v4757 = vmax.f32 %v4685, %v4721
  %v4758 = vmax.f32 %v4686, %v4722
  %v4759 = vmax.f32 %v4687, %v4723
  %v4760 = vmax.f32 %v4688, %v4724
  %v4761 = vmax.f32 %v4689, %v4725
  %v4762 = vmax.f32 %v4690, %v4726
  %v4763 = vmax.f32 %v4691, %v4727
  %v4764 = vmax.f32 %v4692, %v4728
  %v4765 = vmax.f32 %v4693, %v4729
  %v4766 = vmax.f32 %v4694, %v4730
  %v4767 = vmax.f32 %v4695, %v4731
  %v4768 = vmax.f32 %v4696, %v4732
  %v4769 = vmax.f32 %v4697, %v4733
  %v4770 = vmax.f32 %v4698, %v4734
  %v4771 = vmax.f32 %v4699, %v4735
  %v4772 = vmax.f32 %v4700, %v4736
  %v4773 = vmax.f32 %v4701, %v4737
  %v4774 = vmax.f32 %v4702, %v4738
  %v4775 = vmax.f32 %v4703, %v4739
  %v4776 = vmax.f32 %v4704, %v4740
  %v4777 = vmax.f32 %v4705, %v4741
  %v4778 = vmax.f32 %v4706, %v4742
  %v4779 = vmax.f32 %v4707, %v4743
  %v4780 = vmax.f32 %v4708, %v4744
  %v4781 = vmax.f32 %v4709, %v4745
  %v4782 = vadd.f32 %v4746, %v4240
  %v4783 = vadd.f32 %v4747, %v4240
  %v4784 = vadd.f32 %v4748, %v4240
  %v4785 = vadd.f32 %v4749, %v4240
  %v4786 = vadd.f32 %v4750, %v4240
  %v4787 = vadd.f32 %v4751, %v4240
  %v4788 = vadd.f32 %v4752, %v4240
  %v4789 = vadd.f32 %v4753, %v4240
  %v4790 = vadd.f32 %v4754, %v4240
  %v4791 = vadd.f32 %v4755, %v4240
  %v4792 = vadd.f32 %v4756, %v4240
  %v4793 = vadd.f32 %v4757, %v4240
  %v4794 = vadd.f32 %v4758, %v4240
  %v4795 = vadd.f32 %v4759, %v4240
  %v4796 = vadd.f32 %v4760, %v4240
  %v4797 = vadd.f32 %v4761, %v4240
  %v4798 = vadd.f32 %v4762, %v4240
  %v4799 = vadd.f32 %v4763, %v4240
  %v4800 = vadd.f32 %v4764, %v4240
  %v4801 = vadd.f32 %v4765, %v4240
  %v4802 = vadd.f32 %v4766, %v4240
  %v4803 = vadd.f32 %v4767, %v4240
  %v4804 = vadd.f32 %v4768, %v4240
  %v4805 = vadd.f32 %v4769, %v4240
  %v4806 = vadd.f32 %v4770, %v4240
  %v4807 = vadd.f32 %v4771, %v4240
  %v4808 = vadd.f32 %v4772, %v4240
  %v4809 = vadd.f32 %v4773, %v4240
  %v4810 = vadd.f32 %v4774, %v4240
  %v4811 = vadd.f32 %v4775, %v4240
  %v4812 = vadd.f32 %v4776, %v4240
  %v4813 = vadd.f32 %v4777, %v4240
  %v4814 = vadd.f32 %v4778, %v4240
  %v4815 = vadd.f32 %v4779, %v4240
  %v4816 = vadd.f32 %v4780, %v4240
  %v4817 = vadd.f32 %v4781, %v4240
  %v4818 = vmax.f32 %v4782, 0.0
  %v4819 = vmax.f32 %v4783, 0.0
  %v4820 = vmax.f32 %v4784, 0.0
  %v4821 = vmax.f32 %v4785, 0.0
  %v4822 = vmax.f32 %v4786, 0.0
  %v4823 = vmax.f32 %v4787, 0.0
  %v4824 = vmax.f32 %v4788, 0.0
  %v4825 = vmax.f32 %v4789, 0.0
  %v4826 = vmax.f32 %v4790, 0.0
  %v4827 = vmax.f32 %v4791, 0.0
  %v4828 = vmax.f32 %v4792, 0.0
  %v4829 = vmax.f32 %v4793, 0.0
  %v4830 = vmax.f32 %v4794, 0.0
  %v4831 = vmax.f32 %v4795, 0.0
  %v4832 = vmax.f32 %v4796, 0.0
  %v4833 = vmax.f32 %v4797, 0.0
  %v4834 = vmax.f32 %v4798, 0.0
  %v4835 = vmax.f32 %v4799, 0.0
  %v4836 = vmax.f32 %v4800, 0.0
  %v4837 = vmax.f32 %v4801, 0.0
  %v4838 = vmax.f32 %v4802, 0.0
  %v4839 = vmax.f32 %v4803, 0.0
  %v4840 = vmax.f32 %v4804, 0.0
  %v4841 = vmax.f32 %v4805, 0.0
  %v4842 = vmax.f32 %v4806, 0.0
  %v4843 = vmax.f32 %v4807, 0.0
  %v4844 = vmax.f32 %v4808, 0.0
  %v4845 = vmax.f32 %v4809, 0.0
  %v4846 = vmax.f32 %v4810, 0.0
  %v4847 = vmax.f32 %v4811, 0.0
  %v4848 = vmax.f32 %v4812, 0.0
  %v4849 = vmax.f32 %v4813, 0.0
  %v4850 = vmax.f32 %v4814, 0.0
  %v4851 = vmax.f32 %v4815, 0.0
  %v4852 = vmax.f32 %v4816, 0.0
  %v4853 = vmax.f32 %v4817, 0.0
  %v4854 = vpack.c.bf16 %v4279, %v4278
  %v4855 = vpack.c.bf16 %v4459, %v4458
  %v4856 = vpack.c.bf16 %v4280, %v4279
  %v4857 = vpack.c.bf16 %v4460, %v4459
  %v4858 = vpack.c.bf16 %v4281, %v4280
  %v4859 = vpack.c.bf16 %v4639, %v4638
  %v4860 = vpack.c.bf16 %v4819, %v4818
  %v4861 = vpack.c.bf16 %v4640, %v4639
  %v4862 = vpack.c.bf16 %v4820, %v4819
  %v4863 = vpack.c.bf16 %v4641, %v4640
  %v4864 = vpack.c.bf16 %v4285, %v4284
  %v4865 = vpack.c.bf16 %v4465, %v4464
  %v4866 = vpack.c.bf16 %v4286, %v4285
  %v4867 = vpack.c.bf16 %v4466, %v4465
  %v4868 = vpack.c.bf16 %v4287, %v4286
  %v4869 = vpack.c.bf16 %v4645, %v4644
  %v4870 = vpack.c.bf16 %v4825, %v4824
  %v4871 = vpack.c.bf16 %v4646, %v4645
  %v4872 = vpack.c.bf16 %v4826, %v4825
  %v4873 = vpack.c.bf16 %v4647, %v4646
  %v4874 = vpack.c.bf16 %v4291, %v4290
  %v4875 = vpack.c.bf16 %v4471, %v4470
  %v4876 = vpack.c.bf16 %v4292, %v4291
  %v4877 = vpack.c.bf16 %v4472, %v4471
  %v4878 = vpack.c.bf16 %v4293, %v4292
  %v4879 = vpack.c.bf16 %v4461, %v4460
  %v4880 = vpack.c.bf16 %v4282, %v4281
  %v4881 = vpack.c.bf16 %v4462, %v4461
  %v4882 = vpack.c.bf16 %v4283, %v4282
  %v4883 = vpack.c.bf16 %v4821, %v4820
  %v4884 = vpack.c.bf16 %v4642, %v4641
  %v4885 = vpack.c.bf16 %v4822, %v4821
  %v4886 = vpack.c.bf16 %v4643, %v4642
  %v4887 = vpack.c.bf16 %v4467, %v4466
  %v4888 = vpack.c.bf16 %v4288, %v4287
  %v4889 = vpack.c.bf16 %v4468, %v4467
  %v4890 = vpack.c.bf16 %v4289, %v4288
  %v4891 = vpack.c.bf16 %v4827, %v4826
  %v4892 = vpack.c.bf16 %v4648, %v4647
  %v4893 = vpack.c.bf16 %v4828, %v4827
  %v4894 = vpack.c.bf16 %v4649, %v4648
  %v4895 = vpack.c.bf16 %v4473, %v4472
  %v4896 = vpack.c.bf16 %v4294, %v4293
  %v4897 = vpack.c.bf16 %v4474, %v4473
  %v4898 = vpack.c.bf16 %v4295, %v4294
  %v4899 = vpack.c.bf16 %v4651, %v4650
  %v4900 = vpack.c.bf16 %v4831, %v4830
  %v4901 = vpack.c.bf16 %v4652, %v4651
  %v4902 = vpack.c.bf16 %v4832, %v4831
  %v4903 = vpack.c.bf16 %v4653, %v4652
  %v4904 = vpack.c.bf16 %v4297, %v4296
  %v4905 = vpack.c.bf16 %v4477, %v4476
  %v4906 = vpack.c.bf16 %v4298, %v4297
  %v4907 = vpack.c.bf16 %v4478, %v4477
  %v4908 = vpack.c.bf16 %v4299, %v4298
  %v4909 = vpack.c.bf16 %v4833, %v4832
  %v4910 = vpack.c.bf16 %v4654, %v4653
  %v4911 = vpack.c.bf16 %v4834, %v4833
  %v4912 = vpack.c.bf16 %v4655, %v4654
  %v4913 = vpack.c.bf16 %v4479, %v4478
  %v4914 = vpack.c.bf16 %v4300, %v4299
  %v4915 = vpack.c.bf16 %v4480, %v4479
  %v4916 = vpack.c.bf16 %v4301, %v4300
  %v4917 = vpack.c.bf16 %v4657, %v4656
  %v4918 = vpack.c.bf16 %v4837, %v4836
  %v4919 = vpack.c.bf16 %v4658, %v4657
  %v4920 = vpack.c.bf16 %v4838, %v4837
  %v4921 = vpack.c.bf16 %v4659, %v4658
  %v4922 = vpack.c.bf16 %v4303, %v4302
  %v4923 = vpack.c.bf16 %v4483, %v4482
  %v4924 = vpack.c.bf16 %v4304, %v4303
  %v4925 = vpack.c.bf16 %v4484, %v4483
  %v4926 = vpack.c.bf16 %v4305, %v4304
  %v4927 = vpack.c.bf16 %v4839, %v4838
  %v4928 = vpack.c.bf16 %v4660, %v4659
  %v4929 = vpack.c.bf16 %v4840, %v4839
  %v4930 = vpack.c.bf16 %v4661, %v4660
  %v4931 = vpack.c.bf16 %v4485, %v4484
  %v4932 = vpack.c.bf16 %v4306, %v4305
  %v4933 = vpack.c.bf16 %v4486, %v4485
  %v4934 = vpack.c.bf16 %v4307, %v4306
  %v4935 = vpack.c.bf16 %v4663, %v4662
  %v4936 = vpack.c.bf16 %v4843, %v4842
  %v4937 = vpack.c.bf16 %v4664, %v4663
  %v4938 = vpack.c.bf16 %v4844, %v4843
  %v4939 = vpack.c.bf16 %v4665, %v4664
  %v4940 = vpack.c.bf16 %v4309, %v4308
  %v4941 = vpack.c.bf16 %v4489, %v4488
  %v4942 = vpack.c.bf16 %v4310, %v4309
  %v4943 = vpack.c.bf16 %v4490, %v4489
  %v4944 = vpack.c.bf16 %v4311, %v4310
  %v4945 = vpack.c.bf16 %v4845, %v4844
  %v4946 = vpack.c.bf16 %v4666, %v4665
  %v4947 = vpack.c.bf16 %v4846, %v4845
  %v4948 = vpack.c.bf16 %v4667, %v4666
  %v4949 = vpack.c.bf16 %v4491, %v4490
  %v4950 = vpack.c.bf16 %v4312, %v4311
  %v4951 = vpack.c.bf16 %v4492, %v4491
  %v4952 = vpack.c.bf16 %v4313, %v4312
  %v4953 = vpack.c.bf16 %v4463, %v4462
  %v4954 = vpack.c.bf16 %v4823, %v4822
  %v4955 = vpack.c.bf16 %v4469, %v4468
  %v4956 = vpack.c.bf16 %v4829, %v4828
  %v4957 = vpack.c.bf16 %v4475, %v4474
  %v4958 = vpack.c.bf16 %v4835, %v4834
  %v4959 = vpack.c.bf16 %v4481, %v4480
  %v4960 = vpack.c.bf16 %v4841, %v4840
  %v4961 = vpack.c.bf16 %v4487, %v4486
  %v4962 = vpack.c.bf16 %v4847, %v4846
  %v4963 = vpack.c.bf16 %v4493, %v4492
  %v4964 = vpack.c.bf16 %v4669, %v4668
  %v4965 = vpack.c.bf16 %v4849, %v4848
  %v4966 = vpack.c.bf16 %v4670, %v4669
  %v4967 = vpack.c.bf16 %v4850, %v4849
  %v4968 = vpack.c.bf16 %v4671, %v4670
  %v4969 = vpack.c.bf16 %v4851, %v4850
  %v4970 = vpack.c.bf16 %v4672, %v4671
  %v4971 = vpack.c.bf16 %v4852, %v4851
  %v4972 = vpack.c.bf16 %v4673, %v4672
  %v4973 = vpack.c.bf16 %v4853, %v4852
  %v4974 = vld [vmem:[%s3] sm:$0xf]
  %v4975 = vld [vmem:[%s3 + $0x4] sm:$0xf]
  %v4976 = vld [vmem:[%s3 + $0x8] sm:$0xf]
  %v4977 = vld [vmem:[%s3 + $0xc] sm:$0xf]
  %v4978 = vld [vmem:[%s3 + $0x10] sm:$0xf]
  %v4979 = vld [vmem:[%s3 + $0x14] sm:$0xf]
  %v4980 = vld [vmem:[%s3 + $0x18] sm:$0xf]
  %v4981 = vld [vmem:[%s3 + $0x1c] sm:$0xf]
  %v4982 = vld [vmem:[%s3 + $0x20] sm:$0xf]
  %v4983 = vld [vmem:[%s3 + $0x24] sm:$0xf]
  %v4984 = vld [vmem:[%s3 + $0x28] sm:$0xf]
  %v4985 = vld [vmem:[%s3 + $0x2c] sm:$0xf]
  %v4986 = vld [vmem:[%s3 + $0x30] sm:$0xf]
  %v4987 = vld [vmem:[%s3 + $0x34] sm:$0xf]
  %v4988 = vld [vmem:[%s3 + $0x38] sm:$0xf]
  %v4989 = vld [vmem:[%s3 + $0x3c] sm:$0xf]
  %v4990 = vld [vmem:[%s3 + $0x40] sm:$0xf]
  %v4991 = vld [vmem:[%s3 + $0x44] sm:$0xf]
  %v4992 = vld [vmem:[%s3 + $0x48] sm:$0xf]
  %v4993 = vld [vmem:[%s3 + $0x4c] sm:$0xf]
  %v4994 = vld [vmem:[%s3 + $0x50] sm:$0xf]
  %v4995 = vld [vmem:[%s3 + $0x54] sm:$0xf]
  %v4996 = vld [vmem:[%s3 + $0x58] sm:$0xf]
  %v4997 = vld [vmem:[%s3 + $0x5c] sm:$0xf]
  %v4998 = vld [vmem:[%s3 + $0x60] sm:$0xf]
  %v4999 = vld [vmem:[%s3 + $0x64] sm:$0xf]
  %v5000 = vld [vmem:[%s3 + $0x68] sm:$0xf]
  %v5001 = vld [vmem:[%s3 + $0x6c] sm:$0xf]
  %v5002 = vld [vmem:[%s3 + $0x70] sm:$0xf]
  %v5003 = vld [vmem:[%s3 + $0x74] sm:$0xf]
  %v5004 = vld [vmem:[%s3 + $0x78] sm:$0xf]
  %v5005 = vld [vmem:[%s3 + $0x7c] sm:$0xf]
  %v5006 = vld [vmem:[%s3 + $0x80] sm:$0xf]
  %v5007 = vld [vmem:[%s3 + $0x84] sm:$0xf]
  %v5008 = vld [vmem:[%s3 + $0x88] sm:$0xf]
  %v5009 = vld [vmem:[%s3 + $0x8c] sm:$0xf]
  %v5010 = vld [vmem:[%s3 + $0x90] sm:$0xf]
  %v5011 = vld [vmem:[%s3 + $0x94] sm:$0xf]
  %v5012 = vld [vmem:[%s3 + $0x98] sm:$0xf]
  %v5013 = vld [vmem:[%s3 + $0x9c] sm:$0xf]
  %v5014 = vld [vmem:[%s3 + $0xa0] sm:$0xf]
  %v5015 = vld [vmem:[%s3 + $0xa4] sm:$0xf]
  %v5016 = vld [vmem:[%s3 + $0xa8] sm:$0xf]
  %v5017 = vld [vmem:[%s3 + $0xac] sm:$0xf]
  %v5018 = vld [vmem:[%s3 + $0xb0] sm:$0xf]
  %v5019 = vld [vmem:[%s3 + $0xb4] sm:$0xf]
  %v5020 = vld [vmem:[%s3 + $0xb8] sm:$0xf]
  %v5021 = vld [vmem:[%s3 + $0xbc] sm:$0xf]
  %v5022 = vld [vmem:[%s3 + $0xc0] sm:$0xf]
  %v5023 = vld [vmem:[%s3 + $0xc4] sm:$0xf]
  %v5024 = vld [vmem:[%s3 + $0xc8] sm:$0xf]
  %v5025 = vld [vmem:[%s3 + $0xcc] sm:$0xf]
  %v5026 = vld [vmem:[%s3 + $0xd0] sm:$0xf]
  %v5027 = vld [vmem:[%s3 + $0xd4] sm:$0xf]
  %v5028 = vld [vmem:[%s3 + $0xd8] sm:$0xf]
  %v5029 = vld [vmem:[%s3 + $0xdc] sm:$0xf]
  %v5030 = vld [vmem:[%s3 + $0xe0] sm:$0xf]
  %v5031 = vld [vmem:[%s3 + $0xe4] sm:$0xf]
  %v5032 = vld [vmem:[%s3 + $0xe8] sm:$0xf]
  %v5033 = vld [vmem:[%s3 + $0xec] sm:$0xf]
  %v5034 = vld [vmem:[%s3 + $0xf0] sm:$0xf]
  %v5035 = vld [vmem:[%s3 + $0xf4] sm:$0xf]
  %v5036 = vld [vmem:[%s3 + $0xf8] sm:$0xf]
  %v5037 = vld [vmem:[%s3 + $0xfc] sm:$0xf]
  %v5038 = vld [vmem:[%s3 + $0x100] sm:$0xf]
  %v5039 = vld [vmem:[%s3 + $0x104] sm:$0xf]
  %v5040 = vld [vmem:[%s3 + $0x108] sm:$0xf]
  %v5041 = vld [vmem:[%s3 + $0x10c] sm:$0xf]
  %v5042 = vld [vmem:[%s3 + $0x110] sm:$0xf]
  %v5043 = vld [vmem:[%s3 + $0x114] sm:$0xf]
  %v5044 = vld [vmem:[%s3 + $0x118] sm:$0xf]
  %v5045 = vld [vmem:[%s3 + $0x11c] sm:$0xf]
  %v5046 = vld [vmem:[%s3 + $0x120] sm:$0xf]
  %v5047 = vld [vmem:[%s3 + $0x124] sm:$0xf]
  %v5048 = vld [vmem:[%s3 + $0x128] sm:$0xf]
  %v5049 = vld [vmem:[%s3 + $0x12c] sm:$0xf]
  %v5050 = vld [vmem:[%s3 + $0x130] sm:$0xf]
  %v5051 = vld [vmem:[%s3 + $0x134] sm:$0xf]
  %v5052 = vld [vmem:[%s3 + $0x138] sm:$0xf]
  %v5053 = vld [vmem:[%s3 + $0x13c] sm:$0xf]
  %v5054 = vld [vmem:[%s3 + $0x140] sm:$0xf]
  %v5055 = vld [vmem:[%s3 + $0x144] sm:$0xf]
  %v5056 = vld [vmem:[%s3 + $0x148] sm:$0xf]
  %v5057 = vld [vmem:[%s3 + $0x14c] sm:$0xf]
  %v5058 = vld [vmem:[%s3 + $0x150] sm:$0xf]
  %v5059 = vld [vmem:[%s3 + $0x154] sm:$0xf]
  %v5060 = vld [vmem:[%s3 + $0x158] sm:$0xf]
  %v5061 = vld [vmem:[%s3 + $0x15c] sm:$0xf]
  %v5062 = vld [vmem:[%s3 + $0x160] sm:$0xf]
  %v5063 = vld [vmem:[%s3 + $0x164] sm:$0xf]
  %v5064 = vld [vmem:[%s3 + $0x168] sm:$0xf]
  %v5065 = vld [vmem:[%s3 + $0x16c] sm:$0xf]
  %v5066 = vld [vmem:[%s3 + $0x170] sm:$0xf]
  %v5067 = vld [vmem:[%s3 + $0x174] sm:$0xf]
  %v5068 = vld [vmem:[%s3 + $0x178] sm:$0xf]
  %v5069 = vld [vmem:[%s3 + $0x17c] sm:$0xf]
  %v5070 = vld [vmem:[%s3 + $0x180] sm:$0xf]
  %v5071 = vld [vmem:[%s3 + $0x184] sm:$0xf]
  %v5072 = vld [vmem:[%s3 + $0x188] sm:$0xf]
  %v5073 = vld [vmem:[%s3 + $0x18c] sm:$0xf]
  %v5074 = vld [vmem:[%s3 + $0x190] sm:$0xf]
  %v5075 = vld [vmem:[%s3 + $0x194] sm:$0xf]
  %v5076 = vld [vmem:[%s3 + $0x198] sm:$0xf]
  %v5077 = vld [vmem:[%s3 + $0x19c] sm:$0xf]
  %v5078 = vld [vmem:[%s3 + $0x1a0] sm:$0xf]
  %v5079 = vld [vmem:[%s3 + $0x1a4] sm:$0xf]
  %v5080 = vld [vmem:[%s3 + $0x1a8] sm:$0xf]
  %v5081 = vld [vmem:[%s3 + $0x1ac] sm:$0xf]
  %v5082 = vld [vmem:[%s3 + $0x1b0] sm:$0xf]
  %v5083 = vld [vmem:[%s3 + $0x1b4] sm:$0xf]
  %v5084 = vld [vmem:[%s3 + $0x1b8] sm:$0xf]
  %v5085 = vld [vmem:[%s3 + $0x1bc] sm:$0xf]
  %v5086 = vld [vmem:[%s3 + $0x1c0] sm:$0xf]
  %v5087 = vld [vmem:[%s3 + $0x1c4] sm:$0xf]
  %v5088 = vld [vmem:[%s3 + $0x1c8] sm:$0xf]
  %v5089 = vld [vmem:[%s3 + $0x1cc] sm:$0xf]
  %v5090 = vld [vmem:[%s3 + $0x1d0] sm:$0xf]
  %v5091 = vld [vmem:[%s3 + $0x1d4] sm:$0xf]
  %v5092 = vld [vmem:[%s3 + $0x1d8] sm:$0xf]
  %v5093 = vld [vmem:[%s3 + $0x1dc] sm:$0xf]
  %v5094 = vld [vmem:[%s3 + $0x1e0] sm:$0xf]
  %v5095 = vld [vmem:[%s3 + $0x1e4] sm:$0xf]
  %v5096 = vld [vmem:[%s3 + $0x1e8] sm:$0xf]
  %v5097 = vld [vmem:[%s3 + $0x1ec] sm:$0xf]
  %v5098 = vld [vmem:[%s3 + $0x1f0] sm:$0xf]
  %v5099 = vld [vmem:[%s3 + $0x1f4] sm:$0xf]
  %v5100 = vld [vmem:[%s3 + $0x1f8] sm:$0xf]
  %v5101 = vld [vmem:[%s3 + $0x1fc] sm:$0xf]
  %v5102 = vld [vmem:[%s3 + $0x200] sm:$0xf]
  %v5103 = vld [vmem:[%s3 + $0x204] sm:$0xf]
  %v5104 = vld [vmem:[%s3 + $0x208] sm:$0xf]
  %v5105 = vld [vmem:[%s3 + $0x20c] sm:$0xf]
  %v5106 = vld [vmem:[%s3 + $0x210] sm:$0xf]
  %v5107 = vld [vmem:[%s3 + $0x214] sm:$0xf]
  %v5108 = vld [vmem:[%s3 + $0x218] sm:$0xf]
  %v5109 = vld [vmem:[%s3 + $0x21c] sm:$0xf]
  %v5110 = vld [vmem:[%s3 + $0x220] sm:$0xf]
  %v5111 = vld [vmem:[%s3 + $0x224] sm:$0xf]
  %v5112 = vld [vmem:[%s3 + $0x228] sm:$0xf]
  %v5113 = vld [vmem:[%s3 + $0x22c] sm:$0xf]
  %v5114 = vld [vmem:[%s3 + $0x230] sm:$0xf]
  %v5115 = vld [vmem:[%s3 + $0x234] sm:$0xf]
  %v5116 = vld [vmem:[%s3 + $0x238] sm:$0xf]
  %v5117 = vld [vmem:[%s3 + $0x23c] sm:$0xf]
  %v5118 = vld [vmem:[%s3 + $0x240] sm:$0xf]
  %v5119 = vld [vmem:[%s3 + $0x244] sm:$0xf]
  %v5120 = vld [vmem:[%s3 + $0x248] sm:$0xf]
  %v5121 = vld [vmem:[%s3 + $0x24c] sm:$0xf]
  %v5122 = vld [vmem:[%s3 + $0x250] sm:$0xf]
  %v5123 = vld [vmem:[%s3 + $0x254] sm:$0xf]
  %v5124 = vld [vmem:[%s3 + $0x258] sm:$0xf]
  %v5125 = vld [vmem:[%s3 + $0x25c] sm:$0xf]
  %v5126 = vld [vmem:[%s3 + $0x260] sm:$0xf]
  %v5127 = vld [vmem:[%s3 + $0x264] sm:$0xf]
  %v5128 = vld [vmem:[%s3 + $0x268] sm:$0xf]
  %v5129 = vld [vmem:[%s3 + $0x26c] sm:$0xf]
  %v5130 = vld [vmem:[%s3 + $0x270] sm:$0xf]
  %v5131 = vld [vmem:[%s3 + $0x274] sm:$0xf]
  %v5132 = vld [vmem:[%s3 + $0x278] sm:$0xf]
  %v5133 = vld [vmem:[%s3 + $0x27c] sm:$0xf]
  %v5134 = vld [vmem:[%s3 + $0x280] sm:$0xf]
  %v5135 = vld [vmem:[%s3 + $0x284] sm:$0xf]
  %v5136 = vld [vmem:[%s3 + $0x288] sm:$0xf]
  %v5137 = vld [vmem:[%s3 + $0x28c] sm:$0xf]
  %v5138 = vld [vmem:[%s3 + $0x290] sm:$0xf]
  %v5139 = vld [vmem:[%s3 + $0x294] sm:$0xf]
  %v5140 = vld [vmem:[%s3 + $0x298] sm:$0xf]
  %v5141 = vld [vmem:[%s3 + $0x29c] sm:$0xf]
  %v5142 = vld [vmem:[%s3 + $0x2a0] sm:$0xf]
  %v5143 = vld [vmem:[%s3 + $0x2a4] sm:$0xf]
  %v5144 = vld [vmem:[%s3 + $0x2a8] sm:$0xf]
  %v5145 = vld [vmem:[%s3 + $0x2ac] sm:$0xf]
  %v5146 = vld [vmem:[%s3 + $0x2b0] sm:$0xf]
  %v5147 = vld [vmem:[%s3 + $0x2b4] sm:$0xf]
  %v5148 = vld [vmem:[%s3 + $0x2b8] sm:$0xf]
  %v5149 = vld [vmem:[%s3 + $0x2bc] sm:$0xf]
  %v5150 = vld [vmem:[%s3 + $0x2c0] sm:$0xf]
  %v5151 = vld [vmem:[%s3 + $0x2c4] sm:$0xf]
  %v5152 = vld [vmem:[%s3 + $0x2c8] sm:$0xf]
  %v5153 = vld [vmem:[%s3 + $0x2cc] sm:$0xf]
  %v5154 = vld [vmem:[%s3 + $0x2d0] sm:$0xf]
  %v5155 = vld [vmem:[%s3 + $0x2d4] sm:$0xf]
  %v5156 = vld [vmem:[%s3 + $0x2d8] sm:$0xf]
  %v5157 = vld [vmem:[%s3 + $0x2dc] sm:$0xf]
  %v5158 = vld [vmem:[%s3 + $0x2e0] sm:$0xf]
  %v5159 = vld [vmem:[%s3 + $0x2e4] sm:$0xf]
  %v5160 = vld [vmem:[%s3 + $0x2e8] sm:$0xf]
  %v5161 = vld [vmem:[%s3 + $0x2ec] sm:$0xf]
  %v5162 = vld [vmem:[%s3 + $0x2f0] sm:$0xf]
  %v5163 = vld [vmem:[%s3 + $0x2f4] sm:$0xf]
  %v5164 = vld [vmem:[%s3 + $0x2f8] sm:$0xf]
  %v5165 = vld [vmem:[%s3 + $0x2fc] sm:$0xf]
  %v5166 = vld [vmem:[%s3 + $0x300] sm:$0xf]
  %v5167 = vld [vmem:[%s3 + $0x304] sm:$0xf]
  %v5168 = vld [vmem:[%s3 + $0x308] sm:$0xf]
  %v5169 = vld [vmem:[%s3 + $0x30c] sm:$0xf]
  %v5170 = vld [vmem:[%s3 + $0x310] sm:$0xf]
  %v5171 = vld [vmem:[%s3 + $0x314] sm:$0xf]
  %v5172 = vld [vmem:[%s3 + $0x318] sm:$0xf]
  %v5173 = vld [vmem:[%s3 + $0x31c] sm:$0xf]
  %v5174 = vld [vmem:[%s3 + $0x320] sm:$0xf]
  %v5175 = vld [vmem:[%s3 + $0x324] sm:$0xf]
  %v5176 = vld [vmem:[%s3 + $0x328] sm:$0xf]
  %v5177 = vld [vmem:[%s3 + $0x32c] sm:$0xf]
  %v5178 = vld [vmem:[%s3 + $0x330] sm:$0xf]
  %v5179 = vld [vmem:[%s3 + $0x334] sm:$0xf]
  %v5180 = vld [vmem:[%s3 + $0x338] sm:$0xf]
  %v5181 = vld [vmem:[%s3 + $0x33c] sm:$0xf]
  %v5182 = vld [vmem:[%s3 + $0x340] sm:$0xf]
  %v5183 = vld [vmem:[%s3 + $0x344] sm:$0xf]
  %v5184 = vld [vmem:[%s3 + $0x348] sm:$0xf]
  %v5185 = vld [vmem:[%s3 + $0x34c] sm:$0xf]
  %v5186 = vld [vmem:[%s3 + $0x350] sm:$0xf]
  %v5187 = vld [vmem:[%s3 + $0x354] sm:$0xf]
  %v5188 = vld [vmem:[%s3 + $0x358] sm:$0xf]
  %v5189 = vld [vmem:[%s3 + $0x35c] sm:$0xf]
  %v5190 = vld [vmem:[%s3 + $0x360] sm:$0xf]
  %v5191 = vld [vmem:[%s3 + $0x364] sm:$0xf]
  %v5192 = vld [vmem:[%s3 + $0x368] sm:$0xf]
  %v5193 = vld [vmem:[%s3 + $0x36c] sm:$0xf]
  %v5194 = vld [vmem:[%s3 + $0x370] sm:$0xf]
  %v5195 = vld [vmem:[%s3 + $0x374] sm:$0xf]
  %v5196 = vld [vmem:[%s3 + $0x378] sm:$0xf]
  %v5197 = vld [vmem:[%s3 + $0x37c] sm:$0xf]
  %v5198 = vld [vmem:[%s3 + $0x380] sm:$0xf]
  %v5199 = vld [vmem:[%s3 + $0x384] sm:$0xf]
  %v5200 = vld [vmem:[%s3 + $0x388] sm:$0xf]
  %v5201 = vld [vmem:[%s3 + $0x38c] sm:$0xf]
  %v5202 = vld [vmem:[%s3 + $0x390] sm:$0xf]
  %v5203 = vld [vmem:[%s3 + $0x394] sm:$0xf]
  %v5204 = vld [vmem:[%s3 + $0x398] sm:$0xf]
  %v5205 = vld [vmem:[%s3 + $0x39c] sm:$0xf]
  %v5206 = vld [vmem:[%s3 + $0x3a0] sm:$0xf]
  %v5207 = vld [vmem:[%s3 + $0x3a4] sm:$0xf]
  %v5208 = vld [vmem:[%s3 + $0x3a8] sm:$0xf]
  %v5209 = vld [vmem:[%s3 + $0x3ac] sm:$0xf]
  %v5210 = vld [vmem:[%s3 + $0x3b0] sm:$0xf]
  %v5211 = vld [vmem:[%s3 + $0x3b4] sm:$0xf]
  %v5212 = vld [vmem:[%s3 + $0x3b8] sm:$0xf]
  %v5213 = vld [vmem:[%s3 + $0x3bc] sm:$0xf]
  %v5214 = vld [vmem:[%s3 + $0x3c0] sm:$0xf]
  %v5215 = vld [vmem:[%s3 + $0x3c4] sm:$0xf]
  %v5216 = vld [vmem:[%s3 + $0x3c8] sm:$0xf]
  %v5217 = vld [vmem:[%s3 + $0x3cc] sm:$0xf]
  %v5218 = vld [vmem:[%s3 + $0x3d0] sm:$0xf]
  %v5219 = vld [vmem:[%s3 + $0x3d4] sm:$0xf]
  %v5220 = vld [vmem:[%s3 + $0x3d8] sm:$0xf]
  %v5221 = vld [vmem:[%s3 + $0x3dc] sm:$0xf]
  %v5222 = vld [vmem:[%s3 + $0x3e0] sm:$0xf]
  %v5223 = vld [vmem:[%s3 + $0x3e4] sm:$0xf]
  %v5224 = vld [vmem:[%s3 + $0x3e8] sm:$0xf]
  %v5225 = vld [vmem:[%s3 + $0x3ec] sm:$0xf]
  %v5226 = vld [vmem:[%s3 + $0x3f0] sm:$0xf]
  %v5227 = vld [vmem:[%s3 + $0x3f4] sm:$0xf]
  %v5228 = vld [vmem:[%s3 + $0x3f8] sm:$0xf]
  %v5229 = vld [vmem:[%s3 + $0x3fc] sm:$0xf]
  %v5230 = vld [vmem:[%s3 + $0x400] sm:$0xf]
  %v5231 = vld [vmem:[%s3 + $0x404] sm:$0xf]
  %v5232 = vld [vmem:[%s3 + $0x408] sm:$0xf]
  %v5233 = vld [vmem:[%s3 + $0x40c] sm:$0xf]
  %v5234 = vld [vmem:[%s3 + $0x410] sm:$0xf]
  %v5235 = vld [vmem:[%s3 + $0x414] sm:$0xf]
  %v5236 = vld [vmem:[%s3 + $0x418] sm:$0xf]
  %v5237 = vld [vmem:[%s3 + $0x41c] sm:$0xf]
  %v5238 = vld [vmem:[%s3 + $0x420] sm:$0xf]
  %v5239 = vld [vmem:[%s3 + $0x424] sm:$0xf]
  %v5240 = vld [vmem:[%s3 + $0x428] sm:$0xf]
  %v5241 = vld [vmem:[%s3 + $0x42c] sm:$0xf]
  %v5242 = vld [vmem:[%s3 + $0x430] sm:$0xf]
  %v5243 = vld [vmem:[%s3 + $0x434] sm:$0xf]
  %v5244 = vld [vmem:[%s3 + $0x438] sm:$0xf]
  %v5245 = vld [vmem:[%s3 + $0x43c] sm:$0xf]
  %v5246 = vld [vmem:[%s3 + $0x440] sm:$0xf]
  %v5247 = vld [vmem:[%s3 + $0x444] sm:$0xf]
  %v5248 = vld [vmem:[%s3 + $0x448] sm:$0xf]
  %v5249 = vld [vmem:[%s3 + $0x44c] sm:$0xf]
  %v5250 = vld [vmem:[%s3 + $0x450] sm:$0xf]
  %v5251 = vld [vmem:[%s3 + $0x454] sm:$0xf]
  %v5252 = vld [vmem:[%s3 + $0x458] sm:$0xf]
  %v5253 = vld [vmem:[%s3 + $0x45c] sm:$0xf]
  %v5254 = vld [vmem:[%s3 + $0x460] sm:$0xf]
  %v5255 = vld [vmem:[%s3 + $0x464] sm:$0xf]
  %v5256 = vld [vmem:[%s3 + $0x468] sm:$0xf]
  %v5257 = vld [vmem:[%s3 + $0x46c] sm:$0xf]
  %v5258 = vld [vmem:[%s3 + $0x470] sm:$0xf]
  %v5259 = vld [vmem:[%s3 + $0x474] sm:$0xf]
  %v5260 = vld [vmem:[%s3 + $0x478] sm:$0xf]
  %v5261 = vld [vmem:[%s3 + $0x47c] sm:$0xf]
  %v5262 = vld [vmem:[%s3 + $0x480] sm:$0xf]
  %v5263 = vld [vmem:[%s3 + $0x484] sm:$0xf]
  %v5264 = vld [vmem:[%s3 + $0x488] sm:$0xf]
  %v5265 = vld [vmem:[%s3 + $0x48c] sm:$0xf]
  %v5266 = vld [vmem:[%s3 + $0x490] sm:$0xf]
  %v5267 = vld [vmem:[%s3 + $0x494] sm:$0xf]
  %v5268 = vld [vmem:[%s3 + $0x498] sm:$0xf]
  %v5269 = vld [vmem:[%s3 + $0x49c] sm:$0xf]
  %v5270 = vld [vmem:[%s3 + $0x4a0] sm:$0xf]
  %v5271 = vld [vmem:[%s3 + $0x4a4] sm:$0xf]
  %v5272 = vld [vmem:[%s3 + $0x4a8] sm:$0xf]
  %v5273 = vld [vmem:[%s3 + $0x4ac] sm:$0xf]
  %v5274 = vld [vmem:[%s3 + $0x4b0] sm:$0xf]
  %v5275 = vld [vmem:[%s3 + $0x4b4] sm:$0xf]
  %v5276 = vld [vmem:[%s3 + $0x4b8] sm:$0xf]
  %v5277 = vld [vmem:[%s3 + $0x4bc] sm:$0xf]
  %v5278 = vld [vmem:[%s3 + $0x4c0] sm:$0xf]
  %v5279 = vld [vmem:[%s3 + $0x4c4] sm:$0xf]
  %v5280 = vld [vmem:[%s3 + $0x4c8] sm:$0xf]
  %v5281 = vld [vmem:[%s3 + $0x4cc] sm:$0xf]
  %v5282 = vld [vmem:[%s3 + $0x4d0] sm:$0xf]
  %v5283 = vld [vmem:[%s3 + $0x4d4] sm:$0xf]
  %v5284 = vld [vmem:[%s3 + $0x4d8] sm:$0xf]
  %v5285 = vld [vmem:[%s3 + $0x4dc] sm:$0xf]
  %v5286 = vld [vmem:[%s3 + $0x4e0] sm:$0xf]
  %v5287 = vld [vmem:[%s3 + $0x4e4] sm:$0xf]
  %v5288 = vld [vmem:[%s3 + $0x4e8] sm:$0xf]
  %v5289 = vld [vmem:[%s3 + $0x4ec] sm:$0xf]
  %v5290 = vld [vmem:[%s3 + $0x4f0] sm:$0xf]
  %v5291 = vld [vmem:[%s3 + $0x4f4] sm:$0xf]
  %v5292 = vld [vmem:[%s3 + $0x4f8] sm:$0xf]
  %v5293 = vld [vmem:[%s3 + $0x4fc] sm:$0xf]
  %v5294 = vld [vmem:[%s3 + $0x500] sm:$0xf]
  %v5295 = vld [vmem:[%s3 + $0x504] sm:$0xf]
  %v5296 = vld [vmem:[%s3 + $0x508] sm:$0xf]
  %v5297 = vld [vmem:[%s3 + $0x50c] sm:$0xf]
  %v5298 = vld [vmem:[%s3 + $0x510] sm:$0xf]
  %v5299 = vld [vmem:[%s3 + $0x514] sm:$0xf]
  %v5300 = vld [vmem:[%s3 + $0x518] sm:$0xf]
  %v5301 = vld [vmem:[%s3 + $0x51c] sm:$0xf]
  %v5302 = vld [vmem:[%s3 + $0x520] sm:$0xf]
  %v5303 = vld [vmem:[%s3 + $0x524] sm:$0xf]
  %v5304 = vld [vmem:[%s3 + $0x528] sm:$0xf]
  %v5305 = vld [vmem:[%s3 + $0x52c] sm:$0xf]
  %v5306 = vld [vmem:[%s3 + $0x530] sm:$0xf]
  %v5307 = vld [vmem:[%s3 + $0x534] sm:$0xf]
  %v5308 = vld [vmem:[%s3 + $0x538] sm:$0xf]
  %v5309 = vld [vmem:[%s3 + $0x53c] sm:$0xf]
  %v5310 = vld [vmem:[%s3 + $0x540] sm:$0xf]
  %v5311 = vld [vmem:[%s3 + $0x544] sm:$0xf]
  %v5312 = vld [vmem:[%s3 + $0x548] sm:$0xf]
  %v5313 = vld [vmem:[%s3 + $0x54c] sm:$0xf]
  %v5314 = vld [vmem:[%s3 + $0x550] sm:$0xf]
  %v5315 = vld [vmem:[%s3 + $0x554] sm:$0xf]
  %v5316 = vld [vmem:[%s3 + $0x558] sm:$0xf]
  %v5317 = vld [vmem:[%s3 + $0x55c] sm:$0xf]
  %v5318 = vld [vmem:[%s3 + $0x560] sm:$0xf]
  %v5319 = vld [vmem:[%s3 + $0x564] sm:$0xf]
  %v5320 = vld [vmem:[%s3 + $0x568] sm:$0xf]
  %v5321 = vld [vmem:[%s3 + $0x56c] sm:$0xf]
  %v5322 = vld [vmem:[%s3 + $0x570] sm:$0xf]
  %v5323 = vld [vmem:[%s3 + $0x574] sm:$0xf]
  %v5324 = vld [vmem:[%s3 + $0x578] sm:$0xf]
  %v5325 = vld [vmem:[%s3 + $0x57c] sm:$0xf]
  %v5326 = vld [vmem:[%s3 + $0x580] sm:$0xf]
  %v5327 = vld [vmem:[%s3 + $0x584] sm:$0xf]
  %v5328 = vld [vmem:[%s3 + $0x588] sm:$0xf]
  %v5329 = vld [vmem:[%s3 + $0x58c] sm:$0xf]
  %v5330 = vld [vmem:[%s3 + $0x590] sm:$0xf]
  %v5331 = vld [vmem:[%s3 + $0x594] sm:$0xf]
  %v5332 = vld [vmem:[%s3 + $0x598] sm:$0xf]
  %v5333 = vld [vmem:[%s3 + $0x59c] sm:$0xf]
  %v5334 = vld [vmem:[%s3 + $0x5a0] sm:$0xf]
  %v5335 = vld [vmem:[%s3 + $0x5a4] sm:$0xf]
  %v5336 = vld [vmem:[%s3 + $0x5a8] sm:$0xf]
  %v5337 = vld [vmem:[%s3 + $0x5ac] sm:$0xf]
  %v5338 = vld [vmem:[%s3 + $0x5b0] sm:$0xf]
  %v5339 = vld [vmem:[%s3 + $0x5b4] sm:$0xf]
  %v5340 = vld [vmem:[%s3 + $0x5b8] sm:$0xf]
  %v5341 = vld [vmem:[%s3 + $0x5bc] sm:$0xf]
  %v5342 = vld [vmem:[%s3 + $0x5c0] sm:$0xf]
  %v5343 = vld [vmem:[%s3 + $0x5c4] sm:$0xf]
  %v5344 = vld [vmem:[%s3 + $0x5c8] sm:$0xf]
  %v5345 = vld [vmem:[%s3 + $0x5cc] sm:$0xf]
  %v5346 = vld [vmem:[%s3 + $0x5d0] sm:$0xf]
  %v5347 = vld [vmem:[%s3 + $0x5d4] sm:$0xf]
  %v5348 = vld [vmem:[%s3 + $0x5d8] sm:$0xf]
  %v5349 = vld [vmem:[%s3 + $0x5dc] sm:$0xf]
  %v5350 = vld [vmem:[%s3 + $0x5e0] sm:$0xf]
  %v5351 = vld [vmem:[%s3 + $0x5e4] sm:$0xf]
  %v5352 = vld [vmem:[%s3 + $0x5e8] sm:$0xf]
  %v5353 = vld [vmem:[%s3 + $0x5ec] sm:$0xf]
  %v5354 = vld [vmem:[%s3 + $0x5f0] sm:$0xf]
  %v5355 = vld [vmem:[%s3 + $0x5f4] sm:$0xf]
  %v5356 = vld [vmem:[%s3 + $0x5f8] sm:$0xf]
  %v5357 = vld [vmem:[%s3 + $0x5fc] sm:$0xf]
  %v5358 = vld [vmem:[%s3 + $0x600] sm:$0xf]
  %v5359 = vld [vmem:[%s3 + $0x604] sm:$0xf]
  %v5360 = vld [vmem:[%s3 + $0x608] sm:$0xf]
  %v5361 = vld [vmem:[%s3 + $0x60c] sm:$0xf]
  %v5362 = vld [vmem:[%s3 + $0x610] sm:$0xf]
  %v5363 = vld [vmem:[%s3 + $0x614] sm:$0xf]
  %v5364 = vld [vmem:[%s3 + $0x618] sm:$0xf]
  %v5365 = vld [vmem:[%s3 + $0x61c] sm:$0xf]
  %v5366 = vld [vmem:[%s3 + $0x620] sm:$0xf]
  %v5367 = vld [vmem:[%s3 + $0x624] sm:$0xf]
  %v5368 = vld [vmem:[%s3 + $0x628] sm:$0xf]
  %v5369 = vld [vmem:[%s3 + $0x62c] sm:$0xf]
  %v5370 = vld [vmem:[%s3 + $0x630] sm:$0xf]
  %v5371 = vld [vmem:[%s3 + $0x634] sm:$0xf]
  %v5372 = vld [vmem:[%s3 + $0x638] sm:$0xf]
  %v5373 = vld [vmem:[%s3 + $0x63c] sm:$0xf]
  %v5774 = vunpack.c.l.b16 %v4974
  %v5775 = vunpack.c.l.b16 %v4975
  %v5776 = vunpack.c.l.b16 %v4976
  %v5777 = vunpack.c.l.b16 %v4977
  %v5778 = vunpack.c.l.b16 %v4978
  %v5779 = vunpack.c.l.b16 %v4979
  %v5780 = vunpack.c.l.b16 %v4980
  %v5781 = vunpack.c.l.b16 %v4981
  %v5782 = vunpack.c.l.b16 %v4982
  %v5783 = vunpack.c.l.b16 %v4983
  %v5784 = vunpack.c.l.b16 %v4984
  %v5785 = vunpack.c.l.b16 %v4985
  %v5786 = vunpack.c.l.b16 %v4986
  %v5787 = vunpack.c.l.b16 %v4987
  %v5788 = vunpack.c.l.b16 %v4988
  %v5789 = vunpack.c.l.b16 %v4989
  %v5790 = vunpack.c.l.b16 %v4990
  %v5791 = vunpack.c.l.b16 %v4991
  %v5792 = vunpack.c.l.b16 %v4992
  %v5793 = vunpack.c.l.b16 %v4993
  %v5794 = vunpack.c.l.b16 %v4994
  %v5795 = vunpack.c.l.b16 %v4995
  %v5796 = vunpack.c.l.b16 %v4996
  %v5797 = vunpack.c.l.b16 %v4997
  %v5798 = vunpack.c.l.b16 %v4998
  %v5799 = vunpack.c.l.b16 %v4999
  %v5800 = vunpack.c.l.b16 %v5000
  %v5801 = vunpack.c.l.b16 %v5001
  %v5802 = vunpack.c.l.b16 %v5002
  %v5803 = vunpack.c.l.b16 %v5003
  %v5804 = vunpack.c.l.b16 %v5004
  %v5805 = vunpack.c.l.b16 %v5005
  %v5806 = vunpack.c.l.b16 %v5006
  %v5807 = vunpack.c.l.b16 %v5007
  %v5808 = vunpack.c.l.b16 %v5008
  %v5809 = vunpack.c.l.b16 %v5009
  %v5810 = vunpack.c.l.b16 %v5010
  %v5811 = vunpack.c.l.b16 %v5011
  %v5812 = vunpack.c.l.b16 %v5012
  %v5813 = vunpack.c.l.b16 %v5013
  %v5814 = vunpack.c.l.b16 %v5014
  %v5815 = vunpack.c.l.b16 %v5015
  %v5816 = vunpack.c.l.b16 %v5016
  %v5817 = vunpack.c.l.b16 %v5017
  %v5818 = vunpack.c.l.b16 %v5018
  %v5819 = vunpack.c.l.b16 %v5019
  %v5820 = vunpack.c.l.b16 %v5020
  %v5821 = vunpack.c.l.b16 %v5021
  %v5822 = vunpack.c.l.b16 %v5022
  %v5823 = vunpack.c.l.b16 %v5023
  %v5824 = vunpack.c.l.b16 %v5024
  %v5825 = vunpack.c.l.b16 %v5025
  %v5826 = vunpack.c.l.b16 %v5026
  %v5827 = vunpack.c.l.b16 %v5027
  %v5828 = vunpack.c.l.b16 %v5028
  %v5829 = vunpack.c.l.b16 %v5029
  %v5830 = vunpack.c.l.b16 %v5030
  %v5831 = vunpack.c.l.b16 %v5031
  %v5832 = vunpack.c.l.b16 %v5032
  %v5833 = vunpack.c.l.b16 %v5033
  %v5834 = vunpack.c.l.b16 %v5034
  %v5835 = vunpack.c.l.b16 %v5035
  %v5836 = vunpack.c.l.b16 %v5036
  %v5837 = vunpack.c.l.b16 %v5037
  %v5838 = vunpack.c.l.b16 %v5038
  %v5839 = vunpack.c.l.b16 %v5039
  %v5840 = vunpack.c.l.b16 %v5040
  %v5841 = vunpack.c.l.b16 %v5041
  %v5842 = vunpack.c.l.b16 %v5042
  %v5843 = vunpack.c.l.b16 %v5043
  %v5844 = vunpack.c.l.b16 %v5044
  %v5845 = vunpack.c.l.b16 %v5045
  %v5846 = vunpack.c.l.b16 %v5046
  %v5847 = vunpack.c.l.b16 %v5047
  %v5848 = vunpack.c.l.b16 %v5048
  %v5849 = vunpack.c.l.b16 %v5049
  %v5850 = vunpack.c.l.b16 %v5050
  %v5851 = vunpack.c.l.b16 %v5051
  %v5852 = vunpack.c.l.b16 %v5052
  %v5853 = vunpack.c.l.b16 %v5053
  %v5854 = vunpack.c.l.b16 %v5054
  %v5855 = vunpack.c.l.b16 %v5055
  %v5856 = vunpack.c.l.b16 %v5056
  %v5857 = vunpack.c.l.b16 %v5057
  %v5858 = vunpack.c.l.b16 %v5058
  %v5859 = vunpack.c.l.b16 %v5059
  %v5860 = vunpack.c.l.b16 %v5060
  %v5861 = vunpack.c.l.b16 %v5061
  %v5862 = vunpack.c.l.b16 %v5062
  %v5863 = vunpack.c.l.b16 %v5063
  %v5864 = vunpack.c.l.b16 %v5064
  %v5865 = vunpack.c.l.b16 %v5065
  %v5866 = vunpack.c.l.b16 %v5066
  %v5867 = vunpack.c.l.b16 %v5067
  %v5868 = vunpack.c.l.b16 %v5068
  %v5869 = vunpack.c.l.b16 %v5069
  %v5870 = vunpack.c.l.b16 %v5070
  %v5871 = vunpack.c.l.b16 %v5071
  %v5872 = vunpack.c.l.b16 %v5072
  %v5873 = vunpack.c.l.b16 %v5073
  %v5874 = vunpack.c.l.b16 %v5074
  %v5875 = vunpack.c.l.b16 %v5075
  %v5876 = vunpack.c.l.b16 %v5076
  %v5877 = vunpack.c.l.b16 %v5077
  %v5878 = vunpack.c.l.b16 %v5078
  %v5879 = vunpack.c.l.b16 %v5079
  %v5880 = vunpack.c.l.b16 %v5080
  %v5881 = vunpack.c.l.b16 %v5081
  %v5882 = vunpack.c.l.b16 %v5082
  %v5883 = vunpack.c.l.b16 %v5083
  %v5884 = vunpack.c.l.b16 %v5084
  %v5885 = vunpack.c.l.b16 %v5085
  %v5886 = vunpack.c.l.b16 %v5086
  %v5887 = vunpack.c.l.b16 %v5087
  %v5888 = vunpack.c.l.b16 %v5088
  %v5889 = vunpack.c.l.b16 %v5089
  %v5890 = vunpack.c.l.b16 %v5090
  %v5891 = vunpack.c.l.b16 %v5091
  %v5892 = vunpack.c.l.b16 %v5092
  %v5893 = vunpack.c.l.b16 %v5093
  %v5894 = vunpack.c.l.b16 %v5094
  %v5895 = vunpack.c.l.b16 %v5095
  %v5896 = vunpack.c.l.b16 %v5096
  %v5897 = vunpack.c.l.b16 %v5097
  %v5898 = vunpack.c.l.b16 %v5098
  %v5899 = vunpack.c.l.b16 %v5099
  %v5900 = vunpack.c.l.b16 %v5100
  %v5901 = vunpack.c.l.b16 %v5101
  %v5902 = vunpack.c.l.b16 %v5102
  %v5903 = vunpack.c.l.b16 %v5103
  %v5904 = vunpack.c.l.b16 %v5104
  %v5905 = vunpack.c.l.b16 %v5105
  %v5906 = vunpack.c.l.b16 %v5106
  %v5907 = vunpack.c.l.b16 %v5107
  %v5908 = vunpack.c.l.b16 %v5108
  %v5909 = vunpack.c.l.b16 %v5109
  %v5910 = vunpack.c.l.b16 %v5110
  %v5911 = vunpack.c.l.b16 %v5111
  %v5912 = vunpack.c.l.b16 %v5112
  %v5913 = vunpack.c.l.b16 %v5113
  %v5914 = vunpack.c.l.b16 %v5114
  %v5915 = vunpack.c.l.b16 %v5115
  %v5916 = vunpack.c.l.b16 %v5116
  %v5917 = vunpack.c.l.b16 %v5117
  %v5918 = vunpack.c.l.b16 %v5118
  %v5919 = vunpack.c.l.b16 %v5119
  %v5920 = vunpack.c.l.b16 %v5120
  %v5921 = vunpack.c.l.b16 %v5121
  %v5922 = vunpack.c.l.b16 %v5122
  %v5923 = vunpack.c.l.b16 %v5123
  %v5924 = vunpack.c.l.b16 %v5124
  %v5925 = vunpack.c.l.b16 %v5125
  %v5926 = vunpack.c.l.b16 %v5126
  %v5927 = vunpack.c.l.b16 %v5127
  %v5928 = vunpack.c.l.b16 %v5128
  %v5929 = vunpack.c.l.b16 %v5129
  %v5930 = vunpack.c.l.b16 %v5130
  %v5931 = vunpack.c.l.b16 %v5131
  %v5932 = vunpack.c.l.b16 %v5132
  %v5933 = vunpack.c.l.b16 %v5133
  %v5934 = vunpack.c.l.b16 %v5134
  %v5935 = vunpack.c.l.b16 %v5135
  %v5936 = vunpack.c.l.b16 %v5136
  %v5937 = vunpack.c.l.b16 %v5137
  %v5938 = vunpack.c.l.b16 %v5138
  %v5939 = vunpack.c.l.b16 %v5139
  %v5940 = vunpack.c.l.b16 %v5140
  %v5941 = vunpack.c.l.b16 %v5141
  %v5942 = vunpack.c.l.b16 %v5142
  %v5943 = vunpack.c.l.b16 %v5143
  %v5944 = vunpack.c.l.b16 %v5144
  %v5945 = vunpack.c.l.b16 %v5145
  %v5946 = vunpack.c.l.b16 %v5146
  %v5947 = vunpack.c.l.b16 %v5147
  %v5948 = vunpack.c.l.b16 %v5148
  %v5949 = vunpack.c.l.b16 %v5149
  %v5950 = vunpack.c.l.b16 %v5150
  %v5951 = vunpack.c.l.b16 %v5151
  %v5952 = vunpack.c.l.b16 %v5152
  %v5953 = vunpack.c.l.b16 %v5153
  %v5954 = vunpack.c.l.b16 %v5154
  %v5955 = vunpack.c.l.b16 %v5155
  %v5956 = vunpack.c.l.b16 %v5156
  %v5957 = vunpack.c.l.b16 %v5157
  %v5958 = vunpack.c.l.b16 %v5158
  %v5959 = vunpack.c.l.b16 %v5159
  %v5960 = vunpack.c.l.b16 %v5160
  %v5961 = vunpack.c.l.b16 %v5161
  %v5962 = vunpack.c.l.b16 %v5162
  %v5963 = vunpack.c.l.b16 %v5163
  %v5964 = vunpack.c.l.b16 %v5164
  %v5965 = vunpack.c.l.b16 %v5165
  %v5966 = vunpack.c.l.b16 %v5166
  %v5967 = vunpack.c.l.b16 %v5167
  %v5968 = vunpack.c.l.b16 %v5168
  %v5969 = vunpack.c.l.b16 %v5169
  %v5970 = vunpack.c.l.b16 %v5170
  %v5971 = vunpack.c.l.b16 %v5171
  %v5972 = vunpack.c.l.b16 %v5172
  %v5973 = vunpack.c.l.b16 %v5173
  %v5974 = vunpack.c.l.b16 %v5174
  %v5975 = vunpack.c.l.b16 %v5175
  %v5976 = vunpack.c.l.b16 %v5176
  %v5977 = vunpack.c.l.b16 %v5177
  %v5978 = vunpack.c.l.b16 %v5178
  %v5979 = vunpack.c.l.b16 %v5179
  %v5980 = vunpack.c.l.b16 %v5180
  %v5981 = vunpack.c.l.b16 %v5181
  %v5982 = vunpack.c.l.b16 %v5182
  %v5983 = vunpack.c.l.b16 %v5183
  %v5984 = vunpack.c.l.b16 %v5184
  %v5985 = vunpack.c.l.b16 %v5185
  %v5986 = vunpack.c.l.b16 %v5186
  %v5987 = vunpack.c.l.b16 %v5187
  %v5988 = vunpack.c.l.b16 %v5188
  %v5989 = vunpack.c.l.b16 %v5189
  %v5990 = vunpack.c.l.b16 %v5190
  %v5991 = vunpack.c.l.b16 %v5191
  %v5992 = vunpack.c.l.b16 %v5192
  %v5993 = vunpack.c.l.b16 %v5193
  %v5994 = vunpack.c.l.b16 %v5194
  %v5995 = vunpack.c.l.b16 %v5195
  %v5996 = vunpack.c.l.b16 %v5196
  %v5997 = vunpack.c.l.b16 %v5197
  %v5998 = vunpack.c.l.b16 %v5198
  %v5999 = vunpack.c.l.b16 %v5199
  %v6000 = vunpack.c.l.b16 %v5200
  %v6001 = vunpack.c.l.b16 %v5201
  %v6002 = vunpack.c.l.b16 %v5202
  %v6003 = vunpack.c.l.b16 %v5203
  %v6004 = vunpack.c.l.b16 %v5204
  %v6005 = vunpack.c.l.b16 %v5205
  %v6006 = vunpack.c.l.b16 %v5206
  %v6007 = vunpack.c.l.b16 %v5207
  %v6008 = vunpack.c.l.b16 %v5208
  %v6009 = vunpack.c.l.b16 %v5209
  %v6010 = vunpack.c.l.b16 %v5210
  %v6011 = vunpack.c.l.b16 %v5211
  %v6012 = vunpack.c.l.b16 %v5212
  %v6013 = vunpack.c.l.b16 %v5213
  %v6014 = vunpack.c.l.b16 %v5214
  %v6015 = vunpack.c.l.b16 %v5215
  %v6016 = vunpack.c.l.b16 %v5216
  %v6017 = vunpack.c.l.b16 %v5217
  %v6018 = vunpack.c.l.b16 %v5218
  %v6019 = vunpack.c.l.b16 %v5219
  %v6020 = vunpack.c.l.b16 %v5220
  %v6021 = vunpack.c.l.b16 %v5221
  %v6022 = vunpack.c.l.b16 %v5222
  %v6023 = vunpack.c.l.b16 %v5223
  %v6024 = vunpack.c.l.b16 %v5224
  %v6025 = vunpack.c.l.b16 %v5225
  %v6026 = vunpack.c.l.b16 %v5226
  %v6027 = vunpack.c.l.b16 %v5227
  %v6028 = vunpack.c.l.b16 %v5228
  %v6029 = vunpack.c.l.b16 %v5229
  %v6030 = vunpack.c.l.b16 %v5230
  %v6031 = vunpack.c.l.b16 %v5231
  %v6032 = vunpack.c.l.b16 %v5232
  %v6033 = vunpack.c.l.b16 %v5233
  %v6034 = vunpack.c.l.b16 %v5234
  %v6035 = vunpack.c.l.b16 %v5235
  %v6036 = vunpack.c.l.b16 %v5236
  %v6037 = vunpack.c.l.b16 %v5237
  %v6038 = vunpack.c.l.b16 %v5238
  %v6039 = vunpack.c.l.b16 %v5239
  %v6040 = vunpack.c.l.b16 %v5240
  %v6041 = vunpack.c.l.b16 %v5241
  %v6042 = vunpack.c.l.b16 %v5242
  %v6043 = vunpack.c.l.b16 %v5243
  %v6044 = vunpack.c.l.b16 %v5244
  %v6045 = vunpack.c.l.b16 %v5245
  %v6046 = vunpack.c.l.b16 %v5246
  %v6047 = vunpack.c.l.b16 %v5247
  %v6048 = vunpack.c.l.b16 %v5248
  %v6049 = vunpack.c.l.b16 %v5249
  %v6050 = vunpack.c.l.b16 %v5250
  %v6051 = vunpack.c.l.b16 %v5251
  %v6052 = vunpack.c.l.b16 %v5252
  %v6053 = vunpack.c.l.b16 %v5253
  %v6054 = vunpack.c.l.b16 %v5254
  %v6055 = vunpack.c.l.b16 %v5255
  %v6056 = vunpack.c.l.b16 %v5256
  %v6057 = vunpack.c.l.b16 %v5257
  %v6058 = vunpack.c.l.b16 %v5258
  %v6059 = vunpack.c.l.b16 %v5259
  %v6060 = vunpack.c.l.b16 %v5260
  %v6061 = vunpack.c.l.b16 %v5261
  %v6062 = vunpack.c.l.b16 %v5262
  %v6063 = vunpack.c.l.b16 %v5263
  %v6064 = vunpack.c.l.b16 %v5264
  %v6065 = vunpack.c.l.b16 %v5265
  %v6066 = vunpack.c.l.b16 %v5266
  %v6067 = vunpack.c.l.b16 %v5267
  %v6068 = vunpack.c.l.b16 %v5268
  %v6069 = vunpack.c.l.b16 %v5269
  %v6070 = vunpack.c.l.b16 %v5270
  %v6071 = vunpack.c.l.b16 %v5271
  %v6072 = vunpack.c.l.b16 %v5272
  %v6073 = vunpack.c.l.b16 %v5273
  %v6074 = vunpack.c.l.b16 %v5274
  %v6075 = vunpack.c.l.b16 %v5275
  %v6076 = vunpack.c.l.b16 %v5276
  %v6077 = vunpack.c.l.b16 %v5277
  %v6078 = vunpack.c.l.b16 %v5278
  %v6079 = vunpack.c.l.b16 %v5279
  %v6080 = vunpack.c.l.b16 %v5280
  %v6081 = vunpack.c.l.b16 %v5281
  %v6082 = vunpack.c.l.b16 %v5282
  %v6083 = vunpack.c.l.b16 %v5283
  %v6084 = vunpack.c.l.b16 %v5284
  %v6085 = vunpack.c.l.b16 %v5285
  %v6086 = vunpack.c.l.b16 %v5286
  %v6087 = vunpack.c.l.b16 %v5287
  %v6088 = vunpack.c.l.b16 %v5288
  %v6089 = vunpack.c.l.b16 %v5289
  %v6090 = vunpack.c.l.b16 %v5290
  %v6091 = vunpack.c.l.b16 %v5291
  %v6092 = vunpack.c.l.b16 %v5292
  %v6093 = vunpack.c.l.b16 %v5293
  %v6094 = vunpack.c.l.b16 %v5294
  %v6095 = vunpack.c.l.b16 %v5295
  %v6096 = vunpack.c.l.b16 %v5296
  %v6097 = vunpack.c.l.b16 %v5297
  %v6098 = vunpack.c.l.b16 %v5298
  %v6099 = vunpack.c.l.b16 %v5299
  %v6100 = vunpack.c.l.b16 %v5300
  %v6101 = vunpack.c.l.b16 %v5301
  %v6102 = vunpack.c.l.b16 %v5302
  %v6103 = vunpack.c.l.b16 %v5303
  %v6104 = vunpack.c.l.b16 %v5304
  %v6105 = vunpack.c.l.b16 %v5305
  %v6106 = vunpack.c.l.b16 %v5306
  %v6107 = vunpack.c.l.b16 %v5307
  %v6108 = vunpack.c.l.b16 %v5308
  %v6109 = vunpack.c.l.b16 %v5309
  %v6110 = vunpack.c.l.b16 %v5310
  %v6111 = vunpack.c.l.b16 %v5311
  %v6112 = vunpack.c.l.b16 %v5312
  %v6113 = vunpack.c.l.b16 %v5313
  %v6114 = vunpack.c.l.b16 %v5314
  %v6115 = vunpack.c.l.b16 %v5315
  %v6116 = vunpack.c.l.b16 %v5316
  %v6117 = vunpack.c.l.b16 %v5317
  %v6118 = vunpack.c.l.b16 %v5318
  %v6119 = vunpack.c.l.b16 %v5319
  %v6120 = vunpack.c.l.b16 %v5320
  %v6121 = vunpack.c.l.b16 %v5321
  %v6122 = vunpack.c.l.b16 %v5322
  %v6123 = vunpack.c.l.b16 %v5323
  %v6124 = vunpack.c.l.b16 %v5324
  %v6125 = vunpack.c.l.b16 %v5325
  %v6126 = vunpack.c.l.b16 %v5326
  %v6127 = vunpack.c.l.b16 %v5327
  %v6128 = vunpack.c.l.b16 %v5328
  %v6129 = vunpack.c.l.b16 %v5329
  %v6130 = vunpack.c.l.b16 %v5330
  %v6131 = vunpack.c.l.b16 %v5331
  %v6132 = vunpack.c.l.b16 %v5332
  %v6133 = vunpack.c.l.b16 %v5333
  %v6134 = vunpack.c.l.b16 %v5334
  %v6135 = vunpack.c.l.b16 %v5335
  %v6136 = vunpack.c.l.b16 %v5336
  %v6137 = vunpack.c.l.b16 %v5337
  %v6138 = vunpack.c.l.b16 %v5338
  %v6139 = vunpack.c.l.b16 %v5339
  %v6140 = vunpack.c.l.b16 %v5340
  %v6141 = vunpack.c.l.b16 %v5341
  %v6142 = vunpack.c.l.b16 %v5342
  %v6143 = vunpack.c.l.b16 %v5343
  %v6144 = vunpack.c.l.b16 %v5344
  %v6145 = vunpack.c.l.b16 %v5345
  %v6146 = vunpack.c.l.b16 %v5346
  %v6147 = vunpack.c.l.b16 %v5347
  %v6148 = vunpack.c.l.b16 %v5348
  %v6149 = vunpack.c.l.b16 %v5349
  %v6150 = vunpack.c.l.b16 %v5350
  %v6151 = vunpack.c.l.b16 %v5351
  %v6152 = vunpack.c.l.b16 %v5352
  %v6153 = vunpack.c.l.b16 %v5353
  %v6154 = vunpack.c.l.b16 %v5354
  %v6155 = vunpack.c.l.b16 %v5355
  %v6156 = vunpack.c.l.b16 %v5356
  %v6157 = vunpack.c.l.b16 %v5357
  %v6158 = vunpack.c.l.b16 %v5358
  %v6159 = vunpack.c.l.b16 %v5359
  %v6160 = vunpack.c.l.b16 %v5360
  %v6161 = vunpack.c.l.b16 %v5361
  %v6162 = vunpack.c.l.b16 %v5362
  %v6163 = vunpack.c.l.b16 %v5363
  %v6164 = vunpack.c.l.b16 %v5364
  %v6165 = vunpack.c.l.b16 %v5365
  %v6166 = vunpack.c.l.b16 %v5366
  %v6167 = vunpack.c.l.b16 %v5367
  %v6168 = vunpack.c.l.b16 %v5368
  %v6169 = vunpack.c.l.b16 %v5369
  %v6170 = vunpack.c.l.b16 %v5370
  %v6171 = vunpack.c.l.b16 %v5371
  %v6172 = vunpack.c.l.b16 %v5372
  %v6173 = vunpack.c.l.b16 %v5373
  %v6174 = vpack.c.b16 %v5775, %v5774
  %v6175 = vpack.c.b16 %v5777, %v5776
  %v6176 = vpack.c.b16 %v5779, %v5778
  %v6177 = vpack.c.b16 %v5781, %v5780
  %v6178 = vpack.c.b16 %v5783, %v5782
  %v6179 = vpack.c.b16 %v5785, %v5784
  %v6180 = vpack.c.b16 %v5787, %v5786
  %v6181 = vpack.c.b16 %v5789, %v5788
  %v6182 = vpack.c.b16 %v5791, %v5790
  %v6183 = vpack.c.b16 %v5793, %v5792
  %v6184 = vpack.c.b16 %v5795, %v5794
  %v6185 = vpack.c.b16 %v5797, %v5796
  %v6186 = vpack.c.b16 %v5799, %v5798
  %v6187 = vpack.c.b16 %v5801, %v5800
  %v6188 = vpack.c.b16 %v5803, %v5802
  %v6189 = vpack.c.b16 %v5805, %v5804
  %v6190 = vpack.c.b16 %v5807, %v5806
  %v6191 = vpack.c.b16 %v5809, %v5808
  %v6192 = vpack.c.b16 %v5811, %v5810
  %v6193 = vpack.c.b16 %v5813, %v5812
  %v6194 = vpack.c.b16 %v5815, %v5814
  %v6195 = vpack.c.b16 %v5817, %v5816
  %v6196 = vpack.c.b16 %v5819, %v5818
  %v6197 = vpack.c.b16 %v5821, %v5820
  %v6198 = vpack.c.b16 %v5823, %v5822
  %v6199 = vpack.c.b16 %v5825, %v5824
  %v6200 = vpack.c.b16 %v5827, %v5826
  %v6201 = vpack.c.b16 %v5829, %v5828
  %v6202 = vpack.c.b16 %v5831, %v5830
  %v6203 = vpack.c.b16 %v5833, %v5832
  %v6204 = vpack.c.b16 %v5835, %v5834
  %v6205 = vpack.c.b16 %v5837, %v5836
  %v6206 = vpack.c.b16 %v5839, %v5838
  %v6207 = vpack.c.b16 %v5841, %v5840
  %v6208 = vpack.c.b16 %v5843, %v5842
  %v6209 = vpack.c.b16 %v5845, %v5844
  %v6210 = vpack.c.b16 %v5847, %v5846
  %v6211 = vpack.c.b16 %v5849, %v5848
  %v6212 = vpack.c.b16 %v5851, %v5850
  %v6213 = vpack.c.b16 %v5853, %v5852
  %v6214 = vpack.c.b16 %v5855, %v5854
  %v6215 = vpack.c.b16 %v5857, %v5856
  %v6216 = vpack.c.b16 %v5859, %v5858
  %v6217 = vpack.c.b16 %v5861, %v5860
  %v6218 = vpack.c.b16 %v5863, %v5862
  %v6219 = vpack.c.b16 %v5865, %v5864
  %v6220 = vpack.c.b16 %v5867, %v5866
  %v6221 = vpack.c.b16 %v5869, %v5868
  %v6222 = vpack.c.b16 %v5871, %v5870
  %v6223 = vpack.c.b16 %v5873, %v5872
  %v6224 = vpack.c.b16 %v5875, %v5874
  %v6225 = vpack.c.b16 %v5877, %v5876
  %v6226 = vpack.c.b16 %v5879, %v5878
  %v6227 = vpack.c.b16 %v5881, %v5880
  %v6228 = vpack.c.b16 %v5883, %v5882
  %v6229 = vpack.c.b16 %v5885, %v5884
  %v6230 = vpack.c.b16 %v5887, %v5886
  %v6231 = vpack.c.b16 %v5889, %v5888
  %v6232 = vpack.c.b16 %v5891, %v5890
  %v6233 = vpack.c.b16 %v5893, %v5892
  %v6234 = vpack.c.b16 %v5895, %v5894
  %v6235 = vpack.c.b16 %v5897, %v5896
  %v6236 = vpack.c.b16 %v5899, %v5898
  %v6237 = vpack.c.b16 %v5901, %v5900
  %v6238 = vpack.c.b16 %v5903, %v5902
  %v6239 = vpack.c.b16 %v5905, %v5904
  %v6240 = vpack.c.b16 %v5907, %v5906
  %v6241 = vpack.c.b16 %v5909, %v5908
  %v6242 = vpack.c.b16 %v5911, %v5910
  %v6243 = vpack.c.b16 %v5913, %v5912
  %v6244 = vpack.c.b16 %v5915, %v5914
  %v6245 = vpack.c.b16 %v5917, %v5916
  %v6246 = vpack.c.b16 %v5919, %v5918
  %v6247 = vpack.c.b16 %v5921, %v5920
  %v6248 = vpack.c.b16 %v5923, %v5922
  %v6249 = vpack.c.b16 %v5925, %v5924
  %v6250 = vpack.c.b16 %v5927, %v5926
  %v6251 = vpack.c.b16 %v5929, %v5928
  %v6252 = vpack.c.b16 %v5931, %v5930
  %v6253 = vpack.c.b16 %v5933, %v5932
  %v6254 = vpack.c.b16 %v5935, %v5934
  %v6255 = vpack.c.b16 %v5937, %v5936
  %v6256 = vpack.c.b16 %v5939, %v5938
  %v6257 = vpack.c.b16 %v5941, %v5940
  %v6258 = vpack.c.b16 %v5943, %v5942
  %v6259 = vpack.c.b16 %v5945, %v5944
  %v6260 = vpack.c.b16 %v5947, %v5946
  %v6261 = vpack.c.b16 %v5949, %v5948
  %v6262 = vpack.c.b16 %v5951, %v5950
  %v6263 = vpack.c.b16 %v5953, %v5952
  %v6264 = vpack.c.b16 %v5955, %v5954
  %v6265 = vpack.c.b16 %v5957, %v5956
  %v6266 = vpack.c.b16 %v5959, %v5958
  %v6267 = vpack.c.b16 %v5961, %v5960
  %v6268 = vpack.c.b16 %v5963, %v5962
  %v6269 = vpack.c.b16 %v5965, %v5964
  %v6270 = vpack.c.b16 %v5967, %v5966
  %v6271 = vpack.c.b16 %v5969, %v5968
  %v6272 = vpack.c.b16 %v5971, %v5970
  %v6273 = vpack.c.b16 %v5973, %v5972
  %v6274 = vpack.c.b16 %v5975, %v5974
  %v6275 = vpack.c.b16 %v5977, %v5976
  %v6276 = vpack.c.b16 %v5979, %v5978
  %v6277 = vpack.c.b16 %v5981, %v5980
  %v6278 = vpack.c.b16 %v5983, %v5982
  %v6279 = vpack.c.b16 %v5985, %v5984
  %v6280 = vpack.c.b16 %v5987, %v5986
  %v6281 = vpack.c.b16 %v5989, %v5988
  %v6282 = vpack.c.b16 %v5991, %v5990
  %v6283 = vpack.c.b16 %v5993, %v5992
  %v6284 = vpack.c.b16 %v5995, %v5994
  %v6285 = vpack.c.b16 %v5997, %v5996
  %v6286 = vpack.c.b16 %v5999, %v5998
  %v6287 = vpack.c.b16 %v6001, %v6000
  %v6288 = vpack.c.b16 %v6003, %v6002
  %v6289 = vpack.c.b16 %v6005, %v6004
  %v6290 = vpack.c.b16 %v6007, %v6006
  %v6291 = vpack.c.b16 %v6009, %v6008
  %v6292 = vpack.c.b16 %v6011, %v6010
  %v6293 = vpack.c.b16 %v6013, %v6012
  %v6294 = vpack.c.b16 %v6015, %v6014
  %v6295 = vpack.c.b16 %v6017, %v6016
  %v6296 = vpack.c.b16 %v6019, %v6018
  %v6297 = vpack.c.b16 %v6021, %v6020
  %v6298 = vpack.c.b16 %v6023, %v6022
  %v6299 = vpack.c.b16 %v6025, %v6024
  %v6300 = vpack.c.b16 %v6027, %v6026
  %v6301 = vpack.c.b16 %v6029, %v6028
  %v6302 = vpack.c.b16 %v6031, %v6030
  %v6303 = vpack.c.b16 %v6033, %v6032
  %v6304 = vpack.c.b16 %v6035, %v6034
  %v6305 = vpack.c.b16 %v6037, %v6036
  %v6306 = vpack.c.b16 %v6039, %v6038
  %v6307 = vpack.c.b16 %v6041, %v6040
  %v6308 = vpack.c.b16 %v6043, %v6042
  %v6309 = vpack.c.b16 %v6045, %v6044
  %v6310 = vpack.c.b16 %v6047, %v6046
  %v6311 = vpack.c.b16 %v6049, %v6048
  %v6312 = vpack.c.b16 %v6051, %v6050
  %v6313 = vpack.c.b16 %v6053, %v6052
  %v6314 = vpack.c.b16 %v6055, %v6054
  %v6315 = vpack.c.b16 %v6057, %v6056
  %v6316 = vpack.c.b16 %v6059, %v6058
  %v6317 = vpack.c.b16 %v6061, %v6060
  %v6318 = vpack.c.b16 %v6063, %v6062
  %v6319 = vpack.c.b16 %v6065, %v6064
  %v6320 = vpack.c.b16 %v6067, %v6066
  %v6321 = vpack.c.b16 %v6069, %v6068
  %v6322 = vpack.c.b16 %v6071, %v6070
  %v6323 = vpack.c.b16 %v6073, %v6072
  %v6324 = vpack.c.b16 %v6075, %v6074
  %v6325 = vpack.c.b16 %v6077, %v6076
  %v6326 = vpack.c.b16 %v6079, %v6078
  %v6327 = vpack.c.b16 %v6081, %v6080
  %v6328 = vpack.c.b16 %v6083, %v6082
  %v6329 = vpack.c.b16 %v6085, %v6084
  %v6330 = vpack.c.b16 %v6087, %v6086
  %v6331 = vpack.c.b16 %v6089, %v6088
  %v6332 = vpack.c.b16 %v6091, %v6090
  %v6333 = vpack.c.b16 %v6093, %v6092
  %v6334 = vpack.c.b16 %v6095, %v6094
  %v6335 = vpack.c.b16 %v6097, %v6096
  %v6336 = vpack.c.b16 %v6099, %v6098
  %v6337 = vpack.c.b16 %v6101, %v6100
  %v6338 = vpack.c.b16 %v6103, %v6102
  %v6339 = vpack.c.b16 %v6105, %v6104
  %v6340 = vpack.c.b16 %v6107, %v6106
  %v6341 = vpack.c.b16 %v6109, %v6108
  %v6342 = vpack.c.b16 %v6111, %v6110
  %v6343 = vpack.c.b16 %v6113, %v6112
  %v6344 = vpack.c.b16 %v6115, %v6114
  %v6345 = vpack.c.b16 %v6117, %v6116
  %v6346 = vpack.c.b16 %v6119, %v6118
  %v6347 = vpack.c.b16 %v6121, %v6120
  %v6348 = vpack.c.b16 %v6123, %v6122
  %v6349 = vpack.c.b16 %v6125, %v6124
  %v6350 = vpack.c.b16 %v6127, %v6126
  %v6351 = vpack.c.b16 %v6129, %v6128
  %v6352 = vpack.c.b16 %v6131, %v6130
  %v6353 = vpack.c.b16 %v6133, %v6132
  %v6354 = vpack.c.b16 %v6135, %v6134
  %v6355 = vpack.c.b16 %v6137, %v6136
  %v6356 = vpack.c.b16 %v6139, %v6138
  %v6357 = vpack.c.b16 %v6141, %v6140
  %v6358 = vpack.c.b16 %v6143, %v6142
  %v6359 = vpack.c.b16 %v6145, %v6144
  %v6360 = vpack.c.b16 %v6147, %v6146
  %v6361 = vpack.c.b16 %v6149, %v6148
  %v6362 = vpack.c.b16 %v6151, %v6150
  %v6363 = vpack.c.b16 %v6153, %v6152
  %v6364 = vpack.c.b16 %v6155, %v6154
  %v6365 = vpack.c.b16 %v6157, %v6156
  %v6366 = vpack.c.b16 %v6159, %v6158
  %v6367 = vpack.c.b16 %v6161, %v6160
  %v6368 = vpack.c.b16 %v6163, %v6162
  %v6369 = vpack.c.b16 %v6165, %v6164
  %v6370 = vpack.c.b16 %v6167, %v6166
  %v6371 = vpack.c.b16 %v6169, %v6168
  %v6372 = vpack.c.b16 %v6171, %v6170
  %v6373 = vpack.c.b16 %v6173, %v6172
  %6574 = vmatprep.subr.bf16.mxu0 0
  %6575 = vmatpush1.bf16.msra.mxu0 %v6181
  %6576 = vmatprep.subr.bf16.mxu0 0
  %6577 = vmatpush1.bf16.msra.mxu0 %v6180
  %6578 = vmatprep.subr.bf16.mxu0 0
  %6579 = vmatpush1.bf16.msra.mxu0 %v6179
  %6580 = vmatprep.subr.bf16.mxu0 0
  %6581 = vmatpush1.bf16.msra.mxu0 %v6178
  %6582 = vmatprep.subr.bf16.mxu0 0
  %6583 = vmatpush1.bf16.msra.mxu0 %v6177
  %6584 = vmatprep.subr.bf16.mxu0 0
  %6585 = vmatpush1.bf16.msra.mxu0 %v6176
  %6586 = vmatprep.subr.bf16.mxu0 0
  %6587 = vmatpush1.bf16.msra.mxu0 %v6175
  %6588 = vmatprep.subr.bf16.mxu0 0
  %6589 = vmatpush1.bf16.msra.mxu0 %v6174
  %6590 = vmatprep.subr.bf16.mxu0 0
  %6591 = vmatpush2.bf16.msra.mxu0 %v6189
  %6592 = vmatprep.subr.bf16.mxu0 0
  %6593 = vmatpush2.bf16.msra.mxu0 %v6188
  %6594 = vmatprep.subr.bf16.mxu0 0
  %6595 = vmatpush2.bf16.msra.mxu0 %v6187
  %6596 = vmatprep.subr.bf16.mxu0 0
  %6597 = vmatpush2.bf16.msra.mxu0 %v6186
  %6598 = vmatprep.subr.bf16.mxu0 0
  %6599 = vmatpush2.bf16.msra.mxu0 %v6185
  %6600 = vmatprep.subr.bf16.mxu0 0
  %6601 = vmatpush2.bf16.msra.mxu0 %v6184
  %6602 = vmatprep.subr.bf16.mxu0 0
  %6603 = vmatpush2.bf16.msra.mxu0 %v6183
  %6604 = vmatprep.subr.bf16.mxu0 0
  %6605 = vmatpush2.bf16.msra.mxu0 %v6182
  %6606 = vmatprep.mubr.bf16.mxu0 %v4855
  %6607 = vmatmul.mubr.bf16.gmra.mxu0 %v4854
  %v6608 = vpop.f32.mrf.mxu0
  %v6609 = vadd.f32 0.0, %v6608
  %v6610 = vpop.f32.mrf.mxu0
  %v6611 = vpop.f32.mrf.mxu0
  %v6612 = vadd.f32 0.0, %v6611
  %v6613 = vpop.f32.mrf.mxu0
  %6614 = vmatprep.mubr.bf16.mxu0 %v4879
  %6615 = vmatmul.mubr.bf16.gmra.mxu0 %v4858
  %v6616 = vpop.f32.mrf.mxu0
  %v6617 = vadd.f32 0.0, %v6616
  %v6618 = vpop.f32.mrf.mxu0
  %v6619 = vpop.f32.mrf.mxu0
  %v6620 = vadd.f32 0.0, %v6619
  %v6621 = vpop.f32.mrf.mxu0
  %6622 = vmatprep.mubr.bf16.mxu0 %v4865
  %6623 = vmatmul.mubr.bf16.gmra.mxu0 %v4864
  %v6624 = vpop.f32.mrf.mxu0
  %v6625 = vadd.f32 0.0, %v6624
  %v6626 = vpop.f32.mrf.mxu0
  %v6627 = vpop.f32.mrf.mxu0
  %v6628 = vadd.f32 0.0, %v6627
  %v6629 = vpop.f32.mrf.mxu0
  %6630 = vmatprep.mubr.bf16.mxu0 %v4887
  %6631 = vmatmul.mubr.bf16.gmra.mxu0 %v4868
  %v6632 = vpop.f32.mrf.mxu0
  %v6633 = vadd.f32 0.0, %v6632
  %v6634 = vpop.f32.mrf.mxu0
  %v6635 = vpop.f32.mrf.mxu0
  %v6636 = vadd.f32 0.0, %v6635
  %v6637 = vpop.f32.mrf.mxu0
  %6638 = vmatprep.mubr.bf16.mxu0 %v4875
  %6639 = vmatmul.mubr.bf16.gmra.mxu0 %v4874
  %v6640 = vpop.f32.mrf.mxu0
  %v6641 = vadd.f32 0.0, %v6640
  %v6642 = vpop.f32.mrf.mxu0
  %v6643 = vpop.f32.mrf.mxu0
  %v6644 = vadd.f32 0.0, %v6643
  %v6645 = vpop.f32.mrf.mxu0
  %6646 = vmatprep.mubr.bf16.mxu0 %v4895
  %6647 = vmatmul.mubr.bf16.gmra.mxu0 %v4878
  %v6648 = vpop.f32.mrf.mxu0
  %v6649 = vadd.f32 0.0, %v6648
  %v6650 = vpop.f32.mrf.mxu0
  %v6651 = vpop.f32.mrf.mxu0
  %v6652 = vadd.f32 0.0, %v6651
  %v6653 = vpop.f32.mrf.mxu0
  %6654 = vmatprep.mubr.bf16.mxu0 %v4905
  %6655 = vmatmul.mubr.bf16.gmra.mxu0 %v4904
  %v6656 = vpop.f32.mrf.mxu0
  %v6657 = vadd.f32 0.0, %v6656
  %v6658 = vpop.f32.mrf.mxu0
  %v6659 = vpop.f32.mrf.mxu0
  %v6660 = vadd.f32 0.0, %v6659
  %v6661 = vpop.f32.mrf.mxu0
  %6662 = vmatprep.mubr.bf16.mxu0 %v4913
  %6663 = vmatmul.mubr.bf16.gmra.mxu0 %v4908
  %v6664 = vpop.f32.mrf.mxu0
  %v6665 = vadd.f32 0.0, %v6664
  %v6666 = vpop.f32.mrf.mxu0
  %v6667 = vpop.f32.mrf.mxu0
  %v6668 = vadd.f32 0.0, %v6667
  %v6669 = vpop.f32.mrf.mxu0
  %6670 = vmatprep.mubr.bf16.mxu0 %v4856
  %6671 = vmatmul.mubr.bf16.gmra.mxu0 %v4855
  %v6672 = vpop.f32.mrf.mxu0
  %v6673 = vadd.f32 0.0, %v6672
  %v6674 = vpop.f32.mrf.mxu0
  %v6675 = vpop.f32.mrf.mxu0
  %v6676 = vadd.f32 0.0, %v6675
  %v6677 = vpop.f32.mrf.mxu0
  %6678 = vmatprep.mubr.bf16.mxu0 %v4880
  %6679 = vmatmul.mubr.bf16.gmra.mxu0 %v4879
  %v6680 = vpop.f32.mrf.mxu0
  %v6681 = vadd.f32 0.0, %v6680
  %v6682 = vpop.f32.mrf.mxu0
  %v6683 = vpop.f32.mrf.mxu0
  %v6684 = vadd.f32 0.0, %v6683
  %v6685 = vpop.f32.mrf.mxu0
  %6686 = vmatprep.mubr.bf16.mxu0 %v4866
  %6687 = vmatmul.mubr.bf16.gmra.mxu0 %v4865
  %v6688 = vpop.f32.mrf.mxu0
  %v6689 = vadd.f32 0.0, %v6688
  %v6690 = vpop.f32.mrf.mxu0
  %v6691 = vpop.f32.mrf.mxu0
  %v6692 = vadd.f32 0.0, %v6691
  %v6693 = vpop.f32.mrf.mxu0
  %6694 = vmatprep.mubr.bf16.mxu0 %v4888
  %6695 = vmatmul.mubr.bf16.gmra.mxu0 %v4887
  %v6696 = vpop.f32.mrf.mxu0
  %v6697 = vadd.f32 0.0, %v6696
  %v6698 = vpop.f32.mrf.mxu0
  %v6699 = vpop.f32.mrf.mxu0
  %v6700 = vadd.f32 0.0, %v6699
  %v6701 = vpop.f32.mrf.mxu0
  %6702 = vmatprep.mubr.bf16.mxu0 %v4876
  %6703 = vmatmul.mubr.bf16.gmra.mxu0 %v4875
  %v6704 = vpop.f32.mrf.mxu0
  %v6705 = vadd.f32 0.0, %v6704
  %v6706 = vpop.f32.mrf.mxu0
  %v6707 = vpop.f32.mrf.mxu0
  %v6708 = vadd.f32 0.0, %v6707
  %v6709 = vpop.f32.mrf.mxu0
  %6710 = vmatprep.mubr.bf16.mxu0 %v4896
  %6711 = vmatmul.mubr.bf16.gmra.mxu0 %v4895
  %v6712 = vpop.f32.mrf.mxu0
  %v6713 = vadd.f32 0.0, %v6712
  %v6714 = vpop.f32.mrf.mxu0
  %v6715 = vpop.f32.mrf.mxu0
  %v6716 = vadd.f32 0.0, %v6715
  %v6717 = vpop.f32.mrf.mxu0
  %6718 = vmatprep.mubr.bf16.mxu0 %v4906
  %6719 = vmatmul.mubr.bf16.gmra.mxu0 %v4905
  %v6720 = vpop.f32.mrf.mxu0
  %v6721 = vadd.f32 0.0, %v6720
  %v6722 = vpop.f32.mrf.mxu0
  %v6723 = vpop.f32.mrf.mxu0
  %v6724 = vadd.f32 0.0, %v6723
  %v6725 = vpop.f32.mrf.mxu0
  %6726 = vmatprep.mubr.bf16.mxu0 %v4914
  %6727 = vmatmul.mubr.bf16.gmra.mxu0 %v4913
  %v6728 = vpop.f32.mrf.mxu0
  %v6729 = vadd.f32 0.0, %v6728
  %v6730 = vpop.f32.mrf.mxu0
  %v6731 = vpop.f32.mrf.mxu0
  %v6732 = vadd.f32 0.0, %v6731
  %v6733 = vpop.f32.mrf.mxu0
  %6734 = vmatprep.mubr.bf16.mxu0 %v4860
  %6735 = vmatmul.mubr.bf16.gmra.mxu0 %v4859
  %v6736 = vpop.f32.mrf.mxu0
  %v6737 = vadd.f32 0.0, %v6736
  %v6738 = vpop.f32.mrf.mxu0
  %v6739 = vpop.f32.mrf.mxu0
  %v6740 = vadd.f32 0.0, %v6739
  %v6741 = vpop.f32.mrf.mxu0
  %6742 = vmatprep.mubr.bf16.mxu0 %v4883
  %6743 = vmatmul.mubr.bf16.gmra.mxu0 %v4863
  %v6744 = vpop.f32.mrf.mxu0
  %v6745 = vadd.f32 0.0, %v6744
  %v6746 = vpop.f32.mrf.mxu0
  %v6747 = vpop.f32.mrf.mxu0
  %v6748 = vadd.f32 0.0, %v6747
  %v6749 = vpop.f32.mrf.mxu0
  %6750 = vmatprep.mubr.bf16.mxu0 %v4870
  %6751 = vmatmul.mubr.bf16.gmra.mxu0 %v4869
  %v6752 = vpop.f32.mrf.mxu0
  %v6753 = vadd.f32 0.0, %v6752
  %v6754 = vpop.f32.mrf.mxu0
  %v6755 = vpop.f32.mrf.mxu0
  %v6756 = vadd.f32 0.0, %v6755
  %v6757 = vpop.f32.mrf.mxu0
  %6758 = vmatprep.mubr.bf16.mxu0 %v4891
  %6759 = vmatmul.mubr.bf16.gmra.mxu0 %v4873
  %v6760 = vpop.f32.mrf.mxu0
  %v6761 = vadd.f32 0.0, %v6760
  %v6762 = vpop.f32.mrf.mxu0
  %v6763 = vpop.f32.mrf.mxu0
  %v6764 = vadd.f32 0.0, %v6763
  %v6765 = vpop.f32.mrf.mxu0
  %6766 = vmatprep.mubr.bf16.mxu0 %v4900
  %6767 = vmatmul.mubr.bf16.gmra.mxu0 %v4899
  %v6768 = vpop.f32.mrf.mxu0
  %v6769 = vadd.f32 0.0, %v6768
  %v6770 = vpop.f32.mrf.mxu0
  %v6771 = vpop.f32.mrf.mxu0
  %v6772 = vadd.f32 0.0, %v6771
  %v6773 = vpop.f32.mrf.mxu0
  %6774 = vmatprep.mubr.bf16.mxu0 %v4909
  %6775 = vmatmul.mubr.bf16.gmra.mxu0 %v4903
  %v6776 = vpop.f32.mrf.mxu0
  %v6777 = vadd.f32 0.0, %v6776
  %v6778 = vpop.f32.mrf.mxu0
  %v6779 = vpop.f32.mrf.mxu0
  %v6780 = vadd.f32 0.0, %v6779
  %v6781 = vpop.f32.mrf.mxu0
  %6782 = vmatprep.mubr.bf16.mxu0 %v4918
  %6783 = vmatmul.mubr.bf16.gmra.mxu0 %v4917
  %v6784 = vpop.f32.mrf.mxu0
  %v6785 = vadd.f32 0.0, %v6784
  %v6786 = vpop.f32.mrf.mxu0
  %v6787 = vpop.f32.mrf.mxu0
  %v6788 = vadd.f32 0.0, %v6787
  %v6789 = vpop.f32.mrf.mxu0
  %6790 = vmatprep.mubr.bf16.mxu0 %v4927
  %6791 = vmatmul.mubr.bf16.gmra.mxu0 %v4921
  %v6792 = vpop.f32.mrf.mxu0
  %v6793 = vadd.f32 0.0, %v6792
  %v6794 = vpop.f32.mrf.mxu0
  %v6795 = vpop.f32.mrf.mxu0
  %v6796 = vadd.f32 0.0, %v6795
  %v6797 = vpop.f32.mrf.mxu0
  %6798 = vmatprep.mubr.bf16.mxu0 %v4861
  %6799 = vmatmul.mubr.bf16.gmra.mxu0 %v4860
  %v6800 = vpop.f32.mrf.mxu0
  %v6801 = vadd.f32 0.0, %v6800
  %v6802 = vpop.f32.mrf.mxu0
  %v6803 = vpop.f32.mrf.mxu0
  %v6804 = vadd.f32 0.0, %v6803
  %v6805 = vpop.f32.mrf.mxu0
  %6806 = vmatprep.mubr.bf16.mxu0 %v4884
  %6807 = vmatmul.mubr.bf16.gmra.mxu0 %v4883
  %v6808 = vpop.f32.mrf.mxu0
  %v6809 = vadd.f32 0.0, %v6808
  %v6810 = vpop.f32.mrf.mxu0
  %v6811 = vpop.f32.mrf.mxu0
  %v6812 = vadd.f32 0.0, %v6811
  %v6813 = vpop.f32.mrf.mxu0
  %6814 = vmatprep.mubr.bf16.mxu0 %v4871
  %6815 = vmatmul.mubr.bf16.gmra.mxu0 %v4870
  %v6816 = vpop.f32.mrf.mxu0
  %v6817 = vadd.f32 0.0, %v6816
  %v6818 = vpop.f32.mrf.mxu0
  %v6819 = vpop.f32.mrf.mxu0
  %v6820 = vadd.f32 0.0, %v6819
  %v6821 = vpop.f32.mrf.mxu0
  %6822 = vmatprep.mubr.bf16.mxu0 %v4892
  %6823 = vmatmul.mubr.bf16.gmra.mxu0 %v4891
  %v6824 = vpop.f32.mrf.mxu0
  %v6825 = vadd.f32 0.0, %v6824
  %v6826 = vpop.f32.mrf.mxu0
  %v6827 = vpop.f32.mrf.mxu0
  %v6828 = vadd.f32 0.0, %v6827
  %v6829 = vpop.f32.mrf.mxu0
  %6830 = vmatprep.mubr.bf16.mxu0 %v4901
  %6831 = vmatmul.mubr.bf16.gmra.mxu0 %v4900
  %v6832 = vpop.f32.mrf.mxu0
  %v6833 = vadd.f32 0.0, %v6832
  %v6834 = vpop.f32.mrf.mxu0
  %v6835 = vpop.f32.mrf.mxu0
  %v6836 = vadd.f32 0.0, %v6835
  %v6837 = vpop.f32.mrf.mxu0
  %6838 = vmatprep.mubr.bf16.mxu0 %v4910
  %6839 = vmatmul.mubr.bf16.gmra.mxu0 %v4909
  %v6840 = vpop.f32.mrf.mxu0
  %v6841 = vadd.f32 0.0, %v6840
  %v6842 = vpop.f32.mrf.mxu0
  %v6843 = vpop.f32.mrf.mxu0
  %v6844 = vadd.f32 0.0, %v6843
  %v6845 = vpop.f32.mrf.mxu0
  %6846 = vmatprep.mubr.bf16.mxu0 %v4919
  %6847 = vmatmul.mubr.bf16.gmra.mxu0 %v4918
  %v6848 = vpop.f32.mrf.mxu0
  %v6849 = vadd.f32 0.0, %v6848
  %v6850 = vpop.f32.mrf.mxu0
  %v6851 = vpop.f32.mrf.mxu0
  %v6852 = vadd.f32 0.0, %v6851
  %v6853 = vpop.f32.mrf.mxu0
  %6854 = vmatprep.mubr.bf16.mxu0 %v4928
  %6855 = vmatmul.mubr.bf16.gmra.mxu0 %v4927
  %v6856 = vpop.f32.mrf.mxu0
  %v6857 = vadd.f32 0.0, %v6856
  %v6858 = vpop.f32.mrf.mxu0
  %v6859 = vpop.f32.mrf.mxu0
  %v6860 = vadd.f32 0.0, %v6859
  %v6861 = vpop.f32.mrf.mxu0
  %6862 = vdwg.mxu0
  %6863 = vmatprep.subr.bf16.mxu0 0
  %6864 = vmatpush1.bf16.msra.mxu0 %v6197
  %6865 = vmatprep.subr.bf16.mxu0 0
  %6866 = vmatpush1.bf16.msra.mxu0 %v6196
  %6867 = vmatprep.subr.bf16.mxu0 0
  %6868 = vmatpush1.bf16.msra.mxu0 %v6195
  %6869 = vmatprep.subr.bf16.mxu0 0
  %6870 = vmatpush1.bf16.msra.mxu0 %v6194
  %6871 = vmatprep.subr.bf16.mxu0 0
  %6872 = vmatpush1.bf16.msra.mxu0 %v6193
  %6873 = vmatprep.subr.bf16.mxu0 0
  %6874 = vmatpush1.bf16.msra.mxu0 %v6192
  %6875 = vmatprep.subr.bf16.mxu0 0
  %6876 = vmatpush1.bf16.msra.mxu0 %v6191
  %6877 = vmatprep.subr.bf16.mxu0 0
  %6878 = vmatpush1.bf16.msra.mxu0 %v6190
  %6879 = vmatprep.subr.bf16.mxu0 0
  %6880 = vmatpush2.bf16.msra.mxu0 %v6205
  %6881 = vmatprep.subr.bf16.mxu0 0
  %6882 = vmatpush2.bf16.msra.mxu0 %v6204
  %6883 = vmatprep.subr.bf16.mxu0 0
  %6884 = vmatpush2.bf16.msra.mxu0 %v6203
  %6885 = vmatprep.subr.bf16.mxu0 0
  %6886 = vmatpush2.bf16.msra.mxu0 %v6202
  %6887 = vmatprep.subr.bf16.mxu0 0
  %6888 = vmatpush2.bf16.msra.mxu0 %v6201
  %6889 = vmatprep.subr.bf16.mxu0 0
  %6890 = vmatpush2.bf16.msra.mxu0 %v6200
  %6891 = vmatprep.subr.bf16.mxu0 0
  %6892 = vmatpush2.bf16.msra.mxu0 %v6199
  %6893 = vmatprep.subr.bf16.mxu0 0
  %6894 = vmatpush2.bf16.msra.mxu0 %v6198
  %6895 = vmatprep.mubr.bf16.mxu0 %v4857
  %6896 = vmatmul.mubr.bf16.gmra.mxu0 %v4856
  %v6897 = vpop.f32.mrf.mxu0
  %v6898 = vadd.f32 %v6609, %v6897
  %v6899 = vpop.f32.mrf.mxu0
  %v6900 = vpop.f32.mrf.mxu0
  %v6901 = vadd.f32 %v6612, %v6900
  %v6902 = vpop.f32.mrf.mxu0
  %6903 = vmatprep.mubr.bf16.mxu0 %v4881
  %6904 = vmatmul.mubr.bf16.gmra.mxu0 %v4880
  %v6905 = vpop.f32.mrf.mxu0
  %v6906 = vadd.f32 %v6617, %v6905
  %v6907 = vpop.f32.mrf.mxu0
  %v6908 = vpop.f32.mrf.mxu0
  %v6909 = vadd.f32 %v6620, %v6908
  %v6910 = vpop.f32.mrf.mxu0
  %6911 = vmatprep.mubr.bf16.mxu0 %v4867
  %6912 = vmatmul.mubr.bf16.gmra.mxu0 %v4866
  %v6913 = vpop.f32.mrf.mxu0
  %v6914 = vadd.f32 %v6625, %v6913
  %v6915 = vpop.f32.mrf.mxu0
  %v6916 = vpop.f32.mrf.mxu0
  %v6917 = vadd.f32 %v6628, %v6916
  %v6918 = vpop.f32.mrf.mxu0
  %6919 = vmatprep.mubr.bf16.mxu0 %v4889
  %6920 = vmatmul.mubr.bf16.gmra.mxu0 %v4888
  %v6921 = vpop.f32.mrf.mxu0
  %v6922 = vadd.f32 %v6633, %v6921
  %v6923 = vpop.f32.mrf.mxu0
  %v6924 = vpop.f32.mrf.mxu0
  %v6925 = vadd.f32 %v6636, %v6924
  %v6926 = vpop.f32.mrf.mxu0
  %6927 = vmatprep.mubr.bf16.mxu0 %v4877
  %6928 = vmatmul.mubr.bf16.gmra.mxu0 %v4876
  %v6929 = vpop.f32.mrf.mxu0
  %v6930 = vadd.f32 %v6641, %v6929
  %v6931 = vpop.f32.mrf.mxu0
  %v6932 = vpop.f32.mrf.mxu0
  %v6933 = vadd.f32 %v6644, %v6932
  %v6934 = vpop.f32.mrf.mxu0
  %6935 = vmatprep.mubr.bf16.mxu0 %v4897
  %6936 = vmatmul.mubr.bf16.gmra.mxu0 %v4896
  %v6937 = vpop.f32.mrf.mxu0
  %v6938 = vadd.f32 %v6649, %v6937
  %v6939 = vpop.f32.mrf.mxu0
  %v6940 = vpop.f32.mrf.mxu0
  %v6941 = vadd.f32 %v6652, %v6940
  %v6942 = vpop.f32.mrf.mxu0
  %6943 = vmatprep.mubr.bf16.mxu0 %v4907
  %6944 = vmatmul.mubr.bf16.gmra.mxu0 %v4906
  %v6945 = vpop.f32.mrf.mxu0
  %v6946 = vadd.f32 %v6657, %v6945
  %v6947 = vpop.f32.mrf.mxu0
  %v6948 = vpop.f32.mrf.mxu0
  %v6949 = vadd.f32 %v6660, %v6948
  %v6950 = vpop.f32.mrf.mxu0
  %6951 = vmatprep.mubr.bf16.mxu0 %v4915
  %6952 = vmatmul.mubr.bf16.gmra.mxu0 %v4914
  %v6953 = vpop.f32.mrf.mxu0
  %v6954 = vadd.f32 %v6665, %v6953
  %v6955 = vpop.f32.mrf.mxu0
  %v6956 = vpop.f32.mrf.mxu0
  %v6957 = vadd.f32 %v6668, %v6956
  %v6958 = vpop.f32.mrf.mxu0
  %6959 = vmatprep.mubr.bf16.mxu0 %v4858
  %6960 = vmatmul.mubr.bf16.gmra.mxu0 %v4857
  %v6961 = vpop.f32.mrf.mxu0
  %v6962 = vadd.f32 %v6673, %v6961
  %v6963 = vpop.f32.mrf.mxu0
  %v6964 = vpop.f32.mrf.mxu0
  %v6965 = vadd.f32 %v6676, %v6964
  %v6966 = vpop.f32.mrf.mxu0
  %6967 = vmatprep.mubr.bf16.mxu0 %v4882
  %6968 = vmatmul.mubr.bf16.gmra.mxu0 %v4881
  %v6969 = vpop.f32.mrf.mxu0
  %v6970 = vadd.f32 %v6681, %v6969
  %v6971 = vpop.f32.mrf.mxu0
  %v6972 = vpop.f32.mrf.mxu0
  %v6973 = vadd.f32 %v6684, %v6972
  %v6974 = vpop.f32.mrf.mxu0
  %6975 = vmatprep.mubr.bf16.mxu0 %v4868
  %6976 = vmatmul.mubr.bf16.gmra.mxu0 %v4867
  %v6977 = vpop.f32.mrf.mxu0
  %v6978 = vadd.f32 %v6689, %v6977
  %v6979 = vpop.f32.mrf.mxu0
  %v6980 = vpop.f32.mrf.mxu0
  %v6981 = vadd.f32 %v6692, %v6980
  %v6982 = vpop.f32.mrf.mxu0
  %6983 = vmatprep.mubr.bf16.mxu0 %v4890
  %6984 = vmatmul.mubr.bf16.gmra.mxu0 %v4889
  %v6985 = vpop.f32.mrf.mxu0
  %v6986 = vadd.f32 %v6697, %v6985
  %v6987 = vpop.f32.mrf.mxu0
  %v6988 = vpop.f32.mrf.mxu0
  %v6989 = vadd.f32 %v6700, %v6988
  %v6990 = vpop.f32.mrf.mxu0
  %6991 = vmatprep.mubr.bf16.mxu0 %v4878
  %6992 = vmatmul.mubr.bf16.gmra.mxu0 %v4877
  %v6993 = vpop.f32.mrf.mxu0
  %v6994 = vadd.f32 %v6705, %v6993
  %v6995 = vpop.f32.mrf.mxu0
  %v6996 = vpop.f32.mrf.mxu0
  %v6997 = vadd.f32 %v6708, %v6996
  %v6998 = vpop.f32.mrf.mxu0
  %6999 = vmatprep.mubr.bf16.mxu0 %v4898
  %7000 = vmatmul.mubr.bf16.gmra.mxu0 %v4897
  %v7001 = vpop.f32.mrf.mxu0
  %v7002 = vadd.f32 %v6713, %v7001
  %v7003 = vpop.f32.mrf.mxu0
  %v7004 = vpop.f32.mrf.mxu0
  %v7005 = vadd.f32 %v6716, %v7004
  %v7006 = vpop.f32.mrf.mxu0
  %7007 = vmatprep.mubr.bf16.mxu0 %v4908
  %7008 = vmatmul.mubr.bf16.gmra.mxu0 %v4907
  %v7009 = vpop.f32.mrf.mxu0
  %v7010 = vadd.f32 %v6721, %v7009
  %v7011 = vpop.f32.mrf.mxu0
  %v7012 = vpop.f32.mrf.mxu0
  %v7013 = vadd.f32 %v6724, %v7012
  %v7014 = vpop.f32.mrf.mxu0
  %7015 = vmatprep.mubr.bf16.mxu0 %v4916
  %7016 = vmatmul.mubr.bf16.gmra.mxu0 %v4915
  %v7017 = vpop.f32.mrf.mxu0
  %v7018 = vadd.f32 %v6729, %v7017
  %v7019 = vpop.f32.mrf.mxu0
  %v7020 = vpop.f32.mrf.mxu0
  %v7021 = vadd.f32 %v6732, %v7020
  %v7022 = vpop.f32.mrf.mxu0
  %7023 = vmatprep.mubr.bf16.mxu0 %v4862
  %7024 = vmatmul.mubr.bf16.gmra.mxu0 %v4861
  %v7025 = vpop.f32.mrf.mxu0
  %v7026 = vadd.f32 %v6737, %v7025
  %v7027 = vpop.f32.mrf.mxu0
  %v7028 = vpop.f32.mrf.mxu0
  %v7029 = vadd.f32 %v6740, %v7028
  %v7030 = vpop.f32.mrf.mxu0
  %7031 = vmatprep.mubr.bf16.mxu0 %v4885
  %7032 = vmatmul.mubr.bf16.gmra.mxu0 %v4884
  %v7033 = vpop.f32.mrf.mxu0
  %v7034 = vadd.f32 %v6745, %v7033
  %v7035 = vpop.f32.mrf.mxu0
  %v7036 = vpop.f32.mrf.mxu0
  %v7037 = vadd.f32 %v6748, %v7036
  %v7038 = vpop.f32.mrf.mxu0
  %7039 = vmatprep.mubr.bf16.mxu0 %v4872
  %7040 = vmatmul.mubr.bf16.gmra.mxu0 %v4871
  %v7041 = vpop.f32.mrf.mxu0
  %v7042 = vadd.f32 %v6753, %v7041
  %v7043 = vpop.f32.mrf.mxu0
  %v7044 = vpop.f32.mrf.mxu0
  %v7045 = vadd.f32 %v6756, %v7044
  %v7046 = vpop.f32.mrf.mxu0
  %7047 = vmatprep.mubr.bf16.mxu0 %v4893
  %7048 = vmatmul.mubr.bf16.gmra.mxu0 %v4892
  %v7049 = vpop.f32.mrf.mxu0
  %v7050 = vadd.f32 %v6761, %v7049
  %v7051 = vpop.f32.mrf.mxu0
  %v7052 = vpop.f32.mrf.mxu0
  %v7053 = vadd.f32 %v6764, %v7052
  %v7054 = vpop.f32.mrf.mxu0
  %7055 = vmatprep.mubr.bf16.mxu0 %v4902
  %7056 = vmatmul.mubr.bf16.gmra.mxu0 %v4901
  %v7057 = vpop.f32.mrf.mxu0
  %v7058 = vadd.f32 %v6769, %v7057
  %v7059 = vpop.f32.mrf.mxu0
  %v7060 = vpop.f32.mrf.mxu0
  %v7061 = vadd.f32 %v6772, %v7060
  %v7062 = vpop.f32.mrf.mxu0
  %7063 = vmatprep.mubr.bf16.mxu0 %v4911
  %7064 = vmatmul.mubr.bf16.gmra.mxu0 %v4910
  %v7065 = vpop.f32.mrf.mxu0
  %v7066 = vadd.f32 %v6777, %v7065
  %v7067 = vpop.f32.mrf.mxu0
  %v7068 = vpop.f32.mrf.mxu0
  %v7069 = vadd.f32 %v6780, %v7068
  %v7070 = vpop.f32.mrf.mxu0
  %7071 = vmatprep.mubr.bf16.mxu0 %v4920
  %7072 = vmatmul.mubr.bf16.gmra.mxu0 %v4919
  %v7073 = vpop.f32.mrf.mxu0
  %v7074 = vadd.f32 %v6785, %v7073
  %v7075 = vpop.f32.mrf.mxu0
  %v7076 = vpop.f32.mrf.mxu0
  %v7077 = vadd.f32 %v6788, %v7076
  %v7078 = vpop.f32.mrf.mxu0
  %7079 = vmatprep.mubr.bf16.mxu0 %v4929
  %7080 = vmatmul.mubr.bf16.gmra.mxu0 %v4928
  %v7081 = vpop.f32.mrf.mxu0
  %v7082 = vadd.f32 %v6793, %v7081
  %v7083 = vpop.f32.mrf.mxu0
  %v7084 = vpop.f32.mrf.mxu0
  %v7085 = vadd.f32 %v6796, %v7084
  %v7086 = vpop.f32.mrf.mxu0
  %7087 = vmatprep.mubr.bf16.mxu0 %v4863
  %7088 = vmatmul.mubr.bf16.gmra.mxu0 %v4862
  %v7089 = vpop.f32.mrf.mxu0
  %v7090 = vadd.f32 %v6801, %v7089
  %v7091 = vpop.f32.mrf.mxu0
  %v7092 = vpop.f32.mrf.mxu0
  %v7093 = vadd.f32 %v6804, %v7092
  %v7094 = vpop.f32.mrf.mxu0
  %7095 = vmatprep.mubr.bf16.mxu0 %v4886
  %7096 = vmatmul.mubr.bf16.gmra.mxu0 %v4885
  %v7097 = vpop.f32.mrf.mxu0
  %v7098 = vadd.f32 %v6809, %v7097
  %v7099 = vpop.f32.mrf.mxu0
  %v7100 = vpop.f32.mrf.mxu0
  %v7101 = vadd.f32 %v6812, %v7100
  %v7102 = vpop.f32.mrf.mxu0
  %7103 = vmatprep.mubr.bf16.mxu0 %v4873
  %7104 = vmatmul.mubr.bf16.gmra.mxu0 %v4872
  %v7105 = vpop.f32.mrf.mxu0
  %v7106 = vadd.f32 %v6817, %v7105
  %v7107 = vpop.f32.mrf.mxu0
  %v7108 = vpop.f32.mrf.mxu0
  %v7109 = vadd.f32 %v6820, %v7108
  %v7110 = vpop.f32.mrf.mxu0
  %7111 = vmatprep.mubr.bf16.mxu0 %v4894
  %7112 = vmatmul.mubr.bf16.gmra.mxu0 %v4893
  %v7113 = vpop.f32.mrf.mxu0
  %v7114 = vadd.f32 %v6825, %v7113
  %v7115 = vpop.f32.mrf.mxu0
  %v7116 = vpop.f32.mrf.mxu0
  %v7117 = vadd.f32 %v6828, %v7116
  %v7118 = vpop.f32.mrf.mxu0
  %7119 = vmatprep.mubr.bf16.mxu0 %v4903
  %7120 = vmatmul.mubr.bf16.gmra.mxu0 %v4902
  %v7121 = vpop.f32.mrf.mxu0
  %v7122 = vadd.f32 %v6833, %v7121
  %v7123 = vpop.f32.mrf.mxu0
  %v7124 = vpop.f32.mrf.mxu0
  %v7125 = vadd.f32 %v6836, %v7124
  %v7126 = vpop.f32.mrf.mxu0
  %7127 = vmatprep.mubr.bf16.mxu0 %v4912
  %7128 = vmatmul.mubr.bf16.gmra.mxu0 %v4911
  %v7129 = vpop.f32.mrf.mxu0
  %v7130 = vadd.f32 %v6841, %v7129
  %v7131 = vpop.f32.mrf.mxu0
  %v7132 = vpop.f32.mrf.mxu0
  %v7133 = vadd.f32 %v6844, %v7132
  %v7134 = vpop.f32.mrf.mxu0
  %7135 = vmatprep.mubr.bf16.mxu0 %v4921
  %7136 = vmatmul.mubr.bf16.gmra.mxu0 %v4920
  %v7137 = vpop.f32.mrf.mxu0
  %v7138 = vadd.f32 %v6849, %v7137
  %v7139 = vpop.f32.mrf.mxu0
  %v7140 = vpop.f32.mrf.mxu0
  %v7141 = vadd.f32 %v6852, %v7140
  %v7142 = vpop.f32.mrf.mxu0
  %7143 = vmatprep.mubr.bf16.mxu0 %v4930
  %7144 = vmatmul.mubr.bf16.gmra.mxu0 %v4929
  %v7145 = vpop.f32.mrf.mxu0
  %v7146 = vadd.f32 %v6857, %v7145
  %v7147 = vpop.f32.mrf.mxu0
  %v7148 = vpop.f32.mrf.mxu0
  %v7149 = vadd.f32 %v6860, %v7148
  %v7150 = vpop.f32.mrf.mxu0
  %7151 = vdwg.mxu0
  %7152 = vmatprep.subr.bf16.mxu0 0
  %7153 = vmatpush1.bf16.msra.mxu0 %v6213
  %7154 = vmatprep.subr.bf16.mxu0 0
  %7155 = vmatpush1.bf16.msra.mxu0 %v6212
  %7156 = vmatprep.subr.bf16.mxu0 0
  %7157 = vmatpush1.bf16.msra.mxu0 %v6211
  %7158 = vmatprep.subr.bf16.mxu0 0
  %7159 = vmatpush1.bf16.msra.mxu0 %v6210
  %7160 = vmatprep.subr.bf16.mxu0 0
  %7161 = vmatpush1.bf16.msra.mxu0 %v6209
  %7162 = vmatprep.subr.bf16.mxu0 0
  %7163 = vmatpush1.bf16.msra.mxu0 %v6208
  %7164 = vmatprep.subr.bf16.mxu0 0
  %7165 = vmatpush1.bf16.msra.mxu0 %v6207
  %7166 = vmatprep.subr.bf16.mxu0 0
  %7167 = vmatpush1.bf16.msra.mxu0 %v6206
  %7168 = vmatprep.subr.bf16.mxu0 0
  %7169 = vmatpush2.bf16.msra.mxu0 %v6221
  %7170 = vmatprep.subr.bf16.mxu0 0
  %7171 = vmatpush2.bf16.msra.mxu0 %v6220
  %7172 = vmatprep.subr.bf16.mxu0 0
  %7173 = vmatpush2.bf16.msra.mxu0 %v6219
  %7174 = vmatprep.subr.bf16.mxu0 0
  %7175 = vmatpush2.bf16.msra.mxu0 %v6218
  %7176 = vmatprep.subr.bf16.mxu0 0
  %7177 = vmatpush2.bf16.msra.mxu0 %v6217
  %7178 = vmatprep.subr.bf16.mxu0 0
  %7179 = vmatpush2.bf16.msra.mxu0 %v6216
  %7180 = vmatprep.subr.bf16.mxu0 0
  %7181 = vmatpush2.bf16.msra.mxu0 %v6215
  %7182 = vmatprep.subr.bf16.mxu0 0
  %7183 = vmatpush2.bf16.msra.mxu0 %v6214
  %7184 = vmatprep.mubr.bf16.mxu0 %v4859
  %7185 = vmatmul.mubr.bf16.gmra.mxu0 %v4858
  %v7186 = vpop.f32.mrf.mxu0
  %v7187 = vadd.f32 %v6898, %v7186
  %v7188 = vpop.f32.mrf.mxu0
  %v7189 = vpop.f32.mrf.mxu0
  %v7190 = vadd.f32 %v6901, %v7189
  %v7191 = vpop.f32.mrf.mxu0
  %7192 = vmatprep.mubr.bf16.mxu0 %v4863
  %7193 = vmatmul.mubr.bf16.gmra.mxu0 %v4882
  %v7194 = vpop.f32.mrf.mxu0
  %v7195 = vadd.f32 %v6906, %v7194
  %v7196 = vpop.f32.mrf.mxu0
  %v7197 = vpop.f32.mrf.mxu0
  %v7198 = vadd.f32 %v6909, %v7197
  %v7199 = vpop.f32.mrf.mxu0
  %7200 = vmatprep.mubr.bf16.mxu0 %v4869
  %7201 = vmatmul.mubr.bf16.gmra.mxu0 %v4868
  %v7202 = vpop.f32.mrf.mxu0
  %v7203 = vadd.f32 %v6914, %v7202
  %v7204 = vpop.f32.mrf.mxu0
  %v7205 = vpop.f32.mrf.mxu0
  %v7206 = vadd.f32 %v6917, %v7205
  %v7207 = vpop.f32.mrf.mxu0
  %7208 = vmatprep.mubr.bf16.mxu0 %v4873
  %7209 = vmatmul.mubr.bf16.gmra.mxu0 %v4890
  %v7210 = vpop.f32.mrf.mxu0
  %v7211 = vadd.f32 %v6922, %v7210
  %v7212 = vpop.f32.mrf.mxu0
  %v7213 = vpop.f32.mrf.mxu0
  %v7214 = vadd.f32 %v6925, %v7213
  %v7215 = vpop.f32.mrf.mxu0
  %7216 = vmatprep.mubr.bf16.mxu0 %v4899
  %7217 = vmatmul.mubr.bf16.gmra.mxu0 %v4878
  %v7218 = vpop.f32.mrf.mxu0
  %v7219 = vadd.f32 %v6930, %v7218
  %v7220 = vpop.f32.mrf.mxu0
  %v7221 = vpop.f32.mrf.mxu0
  %v7222 = vadd.f32 %v6933, %v7221
  %v7223 = vpop.f32.mrf.mxu0
  %7224 = vmatprep.mubr.bf16.mxu0 %v4903
  %7225 = vmatmul.mubr.bf16.gmra.mxu0 %v4898
  %v7226 = vpop.f32.mrf.mxu0
  %v7227 = vadd.f32 %v6938, %v7226
  %v7228 = vpop.f32.mrf.mxu0
  %v7229 = vpop.f32.mrf.mxu0
  %v7230 = vadd.f32 %v6941, %v7229
  %v7231 = vpop.f32.mrf.mxu0
  %7232 = vmatprep.mubr.bf16.mxu0 %v4917
  %7233 = vmatmul.mubr.bf16.gmra.mxu0 %v4908
  %v7234 = vpop.f32.mrf.mxu0
  %v7235 = vadd.f32 %v6946, %v7234
  %v7236 = vpop.f32.mrf.mxu0
  %v7237 = vpop.f32.mrf.mxu0
  %v7238 = vadd.f32 %v6949, %v7237
  %v7239 = vpop.f32.mrf.mxu0
  %7240 = vmatprep.mubr.bf16.mxu0 %v4921
  %7241 = vmatmul.mubr.bf16.gmra.mxu0 %v4916
  %v7242 = vpop.f32.mrf.mxu0
  %v7243 = vadd.f32 %v6954, %v7242
  %v7244 = vpop.f32.mrf.mxu0
  %v7245 = vpop.f32.mrf.mxu0
  %v7246 = vadd.f32 %v6957, %v7245
  %v7247 = vpop.f32.mrf.mxu0
  %7248 = vmatprep.mubr.bf16.mxu0 %v4860
  %7249 = vmatmul.mubr.bf16.gmra.mxu0 %v4879
  %v7250 = vpop.f32.mrf.mxu0
  %v7251 = vadd.f32 %v6962, %v7250
  %v7252 = vpop.f32.mrf.mxu0
  %v7253 = vpop.f32.mrf.mxu0
  %v7254 = vadd.f32 %v6965, %v7253
  %v7255 = vpop.f32.mrf.mxu0
  %7256 = vmatprep.mubr.bf16.mxu0 %v4883
  %7257 = vmatmul.mubr.bf16.gmra.mxu0 %v4953
  %v7258 = vpop.f32.mrf.mxu0
  %v7259 = vadd.f32 %v6970, %v7258
  %v7260 = vpop.f32.mrf.mxu0
  %v7261 = vpop.f32.mrf.mxu0
  %v7262 = vadd.f32 %v6973, %v7261
  %v7263 = vpop.f32.mrf.mxu0
  %7264 = vmatprep.mubr.bf16.mxu0 %v4870
  %7265 = vmatmul.mubr.bf16.gmra.mxu0 %v4887
  %v7266 = vpop.f32.mrf.mxu0
  %v7267 = vadd.f32 %v6978, %v7266
  %v7268 = vpop.f32.mrf.mxu0
  %v7269 = vpop.f32.mrf.mxu0
  %v7270 = vadd.f32 %v6981, %v7269
  %v7271 = vpop.f32.mrf.mxu0
  %7272 = vmatprep.mubr.bf16.mxu0 %v4891
  %7273 = vmatmul.mubr.bf16.gmra.mxu0 %v4955
  %v7274 = vpop.f32.mrf.mxu0
  %v7275 = vadd.f32 %v6986, %v7274
  %v7276 = vpop.f32.mrf.mxu0
  %v7277 = vpop.f32.mrf.mxu0
  %v7278 = vadd.f32 %v6989, %v7277
  %v7279 = vpop.f32.mrf.mxu0
  %7280 = vmatprep.mubr.bf16.mxu0 %v4900
  %7281 = vmatmul.mubr.bf16.gmra.mxu0 %v4895
  %v7282 = vpop.f32.mrf.mxu0
  %v7283 = vadd.f32 %v6994, %v7282
  %v7284 = vpop.f32.mrf.mxu0
  %v7285 = vpop.f32.mrf.mxu0
  %v7286 = vadd.f32 %v6997, %v7285
  %v7287 = vpop.f32.mrf.mxu0
  %7288 = vmatprep.mubr.bf16.mxu0 %v4909
  %7289 = vmatmul.mubr.bf16.gmra.mxu0 %v4957
  %v7290 = vpop.f32.mrf.mxu0
  %v7291 = vadd.f32 %v7002, %v7290
  %v7292 = vpop.f32.mrf.mxu0
  %v7293 = vpop.f32.mrf.mxu0
  %v7294 = vadd.f32 %v7005, %v7293
  %v7295 = vpop.f32.mrf.mxu0
  %7296 = vmatprep.mubr.bf16.mxu0 %v4918
  %7297 = vmatmul.mubr.bf16.gmra.mxu0 %v4913
  %v7298 = vpop.f32.mrf.mxu0
  %v7299 = vadd.f32 %v7010, %v7298
  %v7300 = vpop.f32.mrf.mxu0
  %v7301 = vpop.f32.mrf.mxu0
  %v7302 = vadd.f32 %v7013, %v7301
  %v7303 = vpop.f32.mrf.mxu0
  %7304 = vmatprep.mubr.bf16.mxu0 %v4927
  %7305 = vmatmul.mubr.bf16.gmra.mxu0 %v4959
  %v7306 = vpop.f32.mrf.mxu0
  %v7307 = vadd.f32 %v7018, %v7306
  %v7308 = vpop.f32.mrf.mxu0
  %v7309 = vpop.f32.mrf.mxu0
  %v7310 = vadd.f32 %v7021, %v7309
  %v7311 = vpop.f32.mrf.mxu0
  %7312 = vmatprep.mubr.bf16.mxu0 %v4864
  %7313 = vmatmul.mubr.bf16.gmra.mxu0 %v4863
  %v7314 = vpop.f32.mrf.mxu0
  %v7315 = vadd.f32 %v7026, %v7314
  %v7316 = vpop.f32.mrf.mxu0
  %v7317 = vpop.f32.mrf.mxu0
  %v7318 = vadd.f32 %v7029, %v7317
  %v7319 = vpop.f32.mrf.mxu0
  %7320 = vmatprep.mubr.bf16.mxu0 %v4868
  %7321 = vmatmul.mubr.bf16.gmra.mxu0 %v4886
  %v7322 = vpop.f32.mrf.mxu0
  %v7323 = vadd.f32 %v7034, %v7322
  %v7324 = vpop.f32.mrf.mxu0
  %v7325 = vpop.f32.mrf.mxu0
  %v7326 = vadd.f32 %v7037, %v7325
  %v7327 = vpop.f32.mrf.mxu0
  %7328 = vmatprep.mubr.bf16.mxu0 %v4874
  %7329 = vmatmul.mubr.bf16.gmra.mxu0 %v4873
  %v7330 = vpop.f32.mrf.mxu0
  %v7331 = vadd.f32 %v7042, %v7330
  %v7332 = vpop.f32.mrf.mxu0
  %v7333 = vpop.f32.mrf.mxu0
  %v7334 = vadd.f32 %v7045, %v7333
  %v7335 = vpop.f32.mrf.mxu0
  %7336 = vmatprep.mubr.bf16.mxu0 %v4878
  %7337 = vmatmul.mubr.bf16.gmra.mxu0 %v4894
  %v7338 = vpop.f32.mrf.mxu0
  %v7339 = vadd.f32 %v7050, %v7338
  %v7340 = vpop.f32.mrf.mxu0
  %v7341 = vpop.f32.mrf.mxu0
  %v7342 = vadd.f32 %v7053, %v7341
  %v7343 = vpop.f32.mrf.mxu0
  %7344 = vmatprep.mubr.bf16.mxu0 %v4904
  %7345 = vmatmul.mubr.bf16.gmra.mxu0 %v4903
  %v7346 = vpop.f32.mrf.mxu0
  %v7347 = vadd.f32 %v7058, %v7346
  %v7348 = vpop.f32.mrf.mxu0
  %v7349 = vpop.f32.mrf.mxu0
  %v7350 = vadd.f32 %v7061, %v7349
  %v7351 = vpop.f32.mrf.mxu0
  %7352 = vmatprep.mubr.bf16.mxu0 %v4908
  %7353 = vmatmul.mubr.bf16.gmra.mxu0 %v4912
  %v7354 = vpop.f32.mrf.mxu0
  %v7355 = vadd.f32 %v7066, %v7354
  %v7356 = vpop.f32.mrf.mxu0
  %v7357 = vpop.f32.mrf.mxu0
  %v7358 = vadd.f32 %v7069, %v7357
  %v7359 = vpop.f32.mrf.mxu0
  %7360 = vmatprep.mubr.bf16.mxu0 %v4922
  %7361 = vmatmul.mubr.bf16.gmra.mxu0 %v4921
  %v7362 = vpop.f32.mrf.mxu0
  %v7363 = vadd.f32 %v7074, %v7362
  %v7364 = vpop.f32.mrf.mxu0
  %v7365 = vpop.f32.mrf.mxu0
  %v7366 = vadd.f32 %v7077, %v7365
  %v7367 = vpop.f32.mrf.mxu0
  %7368 = vmatprep.mubr.bf16.mxu0 %v4926
  %7369 = vmatmul.mubr.bf16.gmra.mxu0 %v4930
  %v7370 = vpop.f32.mrf.mxu0
  %v7371 = vadd.f32 %v7082, %v7370
  %v7372 = vpop.f32.mrf.mxu0
  %v7373 = vpop.f32.mrf.mxu0
  %v7374 = vadd.f32 %v7085, %v7373
  %v7375 = vpop.f32.mrf.mxu0
  %7376 = vmatprep.mubr.bf16.mxu0 %v4865
  %7377 = vmatmul.mubr.bf16.gmra.mxu0 %v4883
  %v7378 = vpop.f32.mrf.mxu0
  %v7379 = vadd.f32 %v7090, %v7378
  %v7380 = vpop.f32.mrf.mxu0
  %v7381 = vpop.f32.mrf.mxu0
  %v7382 = vadd.f32 %v7093, %v7381
  %v7383 = vpop.f32.mrf.mxu0
  %7384 = vmatprep.mubr.bf16.mxu0 %v4887
  %7385 = vmatmul.mubr.bf16.gmra.mxu0 %v4954
  %v7386 = vpop.f32.mrf.mxu0
  %v7387 = vadd.f32 %v7098, %v7386
  %v7388 = vpop.f32.mrf.mxu0
  %v7389 = vpop.f32.mrf.mxu0
  %v7390 = vadd.f32 %v7101, %v7389
  %v7391 = vpop.f32.mrf.mxu0
  %7392 = vmatprep.mubr.bf16.mxu0 %v4875
  %7393 = vmatmul.mubr.bf16.gmra.mxu0 %v4891
  %v7394 = vpop.f32.mrf.mxu0
  %v7395 = vadd.f32 %v7106, %v7394
  %v7396 = vpop.f32.mrf.mxu0
  %v7397 = vpop.f32.mrf.mxu0
  %v7398 = vadd.f32 %v7109, %v7397
  %v7399 = vpop.f32.mrf.mxu0
  %7400 = vmatprep.mubr.bf16.mxu0 %v4895
  %7401 = vmatmul.mubr.bf16.gmra.mxu0 %v4956
  %v7402 = vpop.f32.mrf.mxu0
  %v7403 = vadd.f32 %v7114, %v7402
  %v7404 = vpop.f32.mrf.mxu0
  %v7405 = vpop.f32.mrf.mxu0
  %v7406 = vadd.f32 %v7117, %v7405
  %v7407 = vpop.f32.mrf.mxu0
  %7408 = vmatprep.mubr.bf16.mxu0 %v4905
  %7409 = vmatmul.mubr.bf16.gmra.mxu0 %v4909
  %v7410 = vpop.f32.mrf.mxu0
  %v7411 = vadd.f32 %v7122, %v7410
  %v7412 = vpop.f32.mrf.mxu0
  %v7413 = vpop.f32.mrf.mxu0
  %v7414 = vadd.f32 %v7125, %v7413
  %v7415 = vpop.f32.mrf.mxu0
  %7416 = vmatprep.mubr.bf16.mxu0 %v4913
  %7417 = vmatmul.mubr.bf16.gmra.mxu0 %v4958
  %v7418 = vpop.f32.mrf.mxu0
  %v7419 = vadd.f32 %v7130, %v7418
  %v7420 = vpop.f32.mrf.mxu0
  %v7421 = vpop.f32.mrf.mxu0
  %v7422 = vadd.f32 %v7133, %v7421
  %v7423 = vpop.f32.mrf.mxu0
  %7424 = vmatprep.mubr.bf16.mxu0 %v4923
  %7425 = vmatmul.mubr.bf16.gmra.mxu0 %v4927
  %v7426 = vpop.f32.mrf.mxu0
  %v7427 = vadd.f32 %v7138, %v7426
  %v7428 = vpop.f32.mrf.mxu0
  %v7429 = vpop.f32.mrf.mxu0
  %v7430 = vadd.f32 %v7141, %v7429
  %v7431 = vpop.f32.mrf.mxu0
  %7432 = vmatprep.mubr.bf16.mxu0 %v4931
  %7433 = vmatmul.mubr.bf16.gmra.mxu0 %v4960
  %v7434 = vpop.f32.mrf.mxu0
  %v7435 = vadd.f32 %v7146, %v7434
  %v7436 = vpop.f32.mrf.mxu0
  %v7437 = vpop.f32.mrf.mxu0
  %v7438 = vadd.f32 %v7149, %v7437
  %v7439 = vpop.f32.mrf.mxu0
  %7440 = vdwg.mxu0
  %7441 = vmatprep.subr.bf16.mxu0 0
  %7442 = vmatpush1.bf16.msra.mxu0 %v6229
  %7443 = vmatprep.subr.bf16.mxu0 0
  %7444 = vmatpush1.bf16.msra.mxu0 %v6228
  %7445 = vmatprep.subr.bf16.mxu0 0
  %7446 = vmatpush1.bf16.msra.mxu0 %v6227
  %7447 = vmatprep.subr.bf16.mxu0 0
  %7448 = vmatpush1.bf16.msra.mxu0 %v6226
  %7449 = vmatprep.subr.bf16.mxu0 0
  %7450 = vmatpush1.bf16.msra.mxu0 %v6225
  %7451 = vmatprep.subr.bf16.mxu0 0
  %7452 = vmatpush1.bf16.msra.mxu0 %v6224
  %7453 = vmatprep.subr.bf16.mxu0 0
  %7454 = vmatpush1.bf16.msra.mxu0 %v6223
  %7455 = vmatprep.subr.bf16.mxu0 0
  %7456 = vmatpush1.bf16.msra.mxu0 %v6222
  %7457 = vmatprep.subr.bf16.mxu0 0
  %7458 = vmatpush2.bf16.msra.mxu0 %v6237
  %7459 = vmatprep.subr.bf16.mxu0 0
  %7460 = vmatpush2.bf16.msra.mxu0 %v6236
  %7461 = vmatprep.subr.bf16.mxu0 0
  %7462 = vmatpush2.bf16.msra.mxu0 %v6235
  %7463 = vmatprep.subr.bf16.mxu0 0
  %7464 = vmatpush2.bf16.msra.mxu0 %v6234
  %7465 = vmatprep.subr.bf16.mxu0 0
  %7466 = vmatpush2.bf16.msra.mxu0 %v6233
  %7467 = vmatprep.subr.bf16.mxu0 0
  %7468 = vmatpush2.bf16.msra.mxu0 %v6232
  %7469 = vmatprep.subr.bf16.mxu0 0
  %7470 = vmatpush2.bf16.msra.mxu0 %v6231
  %7471 = vmatprep.subr.bf16.mxu0 0
  %7472 = vmatpush2.bf16.msra.mxu0 %v6230
  %7473 = vmatprep.mubr.bf16.mxu0 %v4861
  %7474 = vmatmul.mubr.bf16.gmra.mxu0 %v4860
  %v7475 = vpop.f32.mrf.mxu0
  %v7476 = vadd.f32 %v7187, %v7475
  %v7477 = vpop.f32.mrf.mxu0
  %v7478 = vpop.f32.mrf.mxu0
  %v7479 = vadd.f32 %v7190, %v7478
  %v7480 = vpop.f32.mrf.mxu0
  %7481 = vmatprep.mubr.bf16.mxu0 %v4884
  %7482 = vmatmul.mubr.bf16.gmra.mxu0 %v4883
  %v7483 = vpop.f32.mrf.mxu0
  %v7484 = vadd.f32 %v7195, %v7483
  %v7485 = vpop.f32.mrf.mxu0
  %v7486 = vpop.f32.mrf.mxu0
  %v7487 = vadd.f32 %v7198, %v7486
  %v7488 = vpop.f32.mrf.mxu0
  %7489 = vmatprep.mubr.bf16.mxu0 %v4871
  %7490 = vmatmul.mubr.bf16.gmra.mxu0 %v4870
  %v7491 = vpop.f32.mrf.mxu0
  %v7492 = vadd.f32 %v7203, %v7491
  %v7493 = vpop.f32.mrf.mxu0
  %v7494 = vpop.f32.mrf.mxu0
  %v7495 = vadd.f32 %v7206, %v7494
  %v7496 = vpop.f32.mrf.mxu0
  %7497 = vmatprep.mubr.bf16.mxu0 %v4892
  %7498 = vmatmul.mubr.bf16.gmra.mxu0 %v4891
  %v7499 = vpop.f32.mrf.mxu0
  %v7500 = vadd.f32 %v7211, %v7499
  %v7501 = vpop.f32.mrf.mxu0
  %v7502 = vpop.f32.mrf.mxu0
  %v7503 = vadd.f32 %v7214, %v7502
  %v7504 = vpop.f32.mrf.mxu0
  %7505 = vmatprep.mubr.bf16.mxu0 %v4901
  %7506 = vmatmul.mubr.bf16.gmra.mxu0 %v4900
  %v7507 = vpop.f32.mrf.mxu0
  %v7508 = vadd.f32 %v7219, %v7507
  %v7509 = vpop.f32.mrf.mxu0
  %v7510 = vpop.f32.mrf.mxu0
  %v7511 = vadd.f32 %v7222, %v7510
  %v7512 = vpop.f32.mrf.mxu0
  %7513 = vmatprep.mubr.bf16.mxu0 %v4910
  %7514 = vmatmul.mubr.bf16.gmra.mxu0 %v4909
  %v7515 = vpop.f32.mrf.mxu0
  %v7516 = vadd.f32 %v7227, %v7515
  %v7517 = vpop.f32.mrf.mxu0
  %v7518 = vpop.f32.mrf.mxu0
  %v7519 = vadd.f32 %v7230, %v7518
  %v7520 = vpop.f32.mrf.mxu0
  %7521 = vmatprep.mubr.bf16.mxu0 %v4919
  %7522 = vmatmul.mubr.bf16.gmra.mxu0 %v4918
  %v7523 = vpop.f32.mrf.mxu0
  %v7524 = vadd.f32 %v7235, %v7523
  %v7525 = vpop.f32.mrf.mxu0
  %v7526 = vpop.f32.mrf.mxu0
  %v7527 = vadd.f32 %v7238, %v7526
  %v7528 = vpop.f32.mrf.mxu0
  %7529 = vmatprep.mubr.bf16.mxu0 %v4928
  %7530 = vmatmul.mubr.bf16.gmra.mxu0 %v4927
  %v7531 = vpop.f32.mrf.mxu0
  %v7532 = vadd.f32 %v7243, %v7531
  %v7533 = vpop.f32.mrf.mxu0
  %v7534 = vpop.f32.mrf.mxu0
  %v7535 = vadd.f32 %v7246, %v7534
  %v7536 = vpop.f32.mrf.mxu0
  %7537 = vmatprep.mubr.bf16.mxu0 %v4862
  %7538 = vmatmul.mubr.bf16.gmra.mxu0 %v4861
  %v7539 = vpop.f32.mrf.mxu0
  %v7540 = vadd.f32 %v7251, %v7539
  %v7541 = vpop.f32.mrf.mxu0
  %v7542 = vpop.f32.mrf.mxu0
  %v7543 = vadd.f32 %v7254, %v7542
  %v7544 = vpop.f32.mrf.mxu0
  %7545 = vmatprep.mubr.bf16.mxu0 %v4885
  %7546 = vmatmul.mubr.bf16.gmra.mxu0 %v4884
  %v7547 = vpop.f32.mrf.mxu0
  %v7548 = vadd.f32 %v7259, %v7547
  %v7549 = vpop.f32.mrf.mxu0
  %v7550 = vpop.f32.mrf.mxu0
  %v7551 = vadd.f32 %v7262, %v7550
  %v7552 = vpop.f32.mrf.mxu0
  %7553 = vmatprep.mubr.bf16.mxu0 %v4872
  %7554 = vmatmul.mubr.bf16.gmra.mxu0 %v4871
  %v7555 = vpop.f32.mrf.mxu0
  %v7556 = vadd.f32 %v7267, %v7555
  %v7557 = vpop.f32.mrf.mxu0
  %v7558 = vpop.f32.mrf.mxu0
  %v7559 = vadd.f32 %v7270, %v7558
  %v7560 = vpop.f32.mrf.mxu0
  %7561 = vmatprep.mubr.bf16.mxu0 %v4893
  %7562 = vmatmul.mubr.bf16.gmra.mxu0 %v4892
  %v7563 = vpop.f32.mrf.mxu0
  %v7564 = vadd.f32 %v7275, %v7563
  %v7565 = vpop.f32.mrf.mxu0
  %v7566 = vpop.f32.mrf.mxu0
  %v7567 = vadd.f32 %v7278, %v7566
  %v7568 = vpop.f32.mrf.mxu0
  %7569 = vmatprep.mubr.bf16.mxu0 %v4902
  %7570 = vmatmul.mubr.bf16.gmra.mxu0 %v4901
  %v7571 = vpop.f32.mrf.mxu0
  %v7572 = vadd.f32 %v7283, %v7571
  %v7573 = vpop.f32.mrf.mxu0
  %v7574 = vpop.f32.mrf.mxu0
  %v7575 = vadd.f32 %v7286, %v7574
  %v7576 = vpop.f32.mrf.mxu0
  %7577 = vmatprep.mubr.bf16.mxu0 %v4911
  %7578 = vmatmul.mubr.bf16.gmra.mxu0 %v4910
  %v7579 = vpop.f32.mrf.mxu0
  %v7580 = vadd.f32 %v7291, %v7579
  %v7581 = vpop.f32.mrf.mxu0
  %v7582 = vpop.f32.mrf.mxu0
  %v7583 = vadd.f32 %v7294, %v7582
  %v7584 = vpop.f32.mrf.mxu0
  %7585 = vmatprep.mubr.bf16.mxu0 %v4920
  %7586 = vmatmul.mubr.bf16.gmra.mxu0 %v4919
  %v7587 = vpop.f32.mrf.mxu0
  %v7588 = vadd.f32 %v7299, %v7587
  %v7589 = vpop.f32.mrf.mxu0
  %v7590 = vpop.f32.mrf.mxu0
  %v7591 = vadd.f32 %v7302, %v7590
  %v7592 = vpop.f32.mrf.mxu0
  %7593 = vmatprep.mubr.bf16.mxu0 %v4929
  %7594 = vmatmul.mubr.bf16.gmra.mxu0 %v4928
  %v7595 = vpop.f32.mrf.mxu0
  %v7596 = vadd.f32 %v7307, %v7595
  %v7597 = vpop.f32.mrf.mxu0
  %v7598 = vpop.f32.mrf.mxu0
  %v7599 = vadd.f32 %v7310, %v7598
  %v7600 = vpop.f32.mrf.mxu0
  %7601 = vmatprep.mubr.bf16.mxu0 %v4866
  %7602 = vmatmul.mubr.bf16.gmra.mxu0 %v4865
  %v7603 = vpop.f32.mrf.mxu0
  %v7604 = vadd.f32 %v7315, %v7603
  %v7605 = vpop.f32.mrf.mxu0
  %v7606 = vpop.f32.mrf.mxu0
  %v7607 = vadd.f32 %v7318, %v7606
  %v7608 = vpop.f32.mrf.mxu0
  %7609 = vmatprep.mubr.bf16.mxu0 %v4888
  %7610 = vmatmul.mubr.bf16.gmra.mxu0 %v4887
  %v7611 = vpop.f32.mrf.mxu0
  %v7612 = vadd.f32 %v7323, %v7611
  %v7613 = vpop.f32.mrf.mxu0
  %v7614 = vpop.f32.mrf.mxu0
  %v7615 = vadd.f32 %v7326, %v7614
  %v7616 = vpop.f32.mrf.mxu0
  %7617 = vmatprep.mubr.bf16.mxu0 %v4876
  %7618 = vmatmul.mubr.bf16.gmra.mxu0 %v4875
  %v7619 = vpop.f32.mrf.mxu0
  %v7620 = vadd.f32 %v7331, %v7619
  %v7621 = vpop.f32.mrf.mxu0
  %v7622 = vpop.f32.mrf.mxu0
  %v7623 = vadd.f32 %v7334, %v7622
  %v7624 = vpop.f32.mrf.mxu0
  %7625 = vmatprep.mubr.bf16.mxu0 %v4896
  %7626 = vmatmul.mubr.bf16.gmra.mxu0 %v4895
  %v7627 = vpop.f32.mrf.mxu0
  %v7628 = vadd.f32 %v7339, %v7627
  %v7629 = vpop.f32.mrf.mxu0
  %v7630 = vpop.f32.mrf.mxu0
  %v7631 = vadd.f32 %v7342, %v7630
  %v7632 = vpop.f32.mrf.mxu0
  %7633 = vmatprep.mubr.bf16.mxu0 %v4906
  %7634 = vmatmul.mubr.bf16.gmra.mxu0 %v4905
  %v7635 = vpop.f32.mrf.mxu0
  %v7636 = vadd.f32 %v7347, %v7635
  %v7637 = vpop.f32.mrf.mxu0
  %v7638 = vpop.f32.mrf.mxu0
  %v7639 = vadd.f32 %v7350, %v7638
  %v7640 = vpop.f32.mrf.mxu0
  %7641 = vmatprep.mubr.bf16.mxu0 %v4914
  %7642 = vmatmul.mubr.bf16.gmra.mxu0 %v4913
  %v7643 = vpop.f32.mrf.mxu0
  %v7644 = vadd.f32 %v7355, %v7643
  %v7645 = vpop.f32.mrf.mxu0
  %v7646 = vpop.f32.mrf.mxu0
  %v7647 = vadd.f32 %v7358, %v7646
  %v7648 = vpop.f32.mrf.mxu0
  %7649 = vmatprep.mubr.bf16.mxu0 %v4924
  %7650 = vmatmul.mubr.bf16.gmra.mxu0 %v4923
  %v7651 = vpop.f32.mrf.mxu0
  %v7652 = vadd.f32 %v7363, %v7651
  %v7653 = vpop.f32.mrf.mxu0
  %v7654 = vpop.f32.mrf.mxu0
  %v7655 = vadd.f32 %v7366, %v7654
  %v7656 = vpop.f32.mrf.mxu0
  %7657 = vmatprep.mubr.bf16.mxu0 %v4932
  %7658 = vmatmul.mubr.bf16.gmra.mxu0 %v4931
  %v7659 = vpop.f32.mrf.mxu0
  %v7660 = vadd.f32 %v7371, %v7659
  %v7661 = vpop.f32.mrf.mxu0
  %v7662 = vpop.f32.mrf.mxu0
  %v7663 = vadd.f32 %v7374, %v7662
  %v7664 = vpop.f32.mrf.mxu0
  %7665 = vmatprep.mubr.bf16.mxu0 %v4867
  %7666 = vmatmul.mubr.bf16.gmra.mxu0 %v4866
  %v7667 = vpop.f32.mrf.mxu0
  %v7668 = vadd.f32 %v7379, %v7667
  %v7669 = vpop.f32.mrf.mxu0
  %v7670 = vpop.f32.mrf.mxu0
  %v7671 = vadd.f32 %v7382, %v7670
  %v7672 = vpop.f32.mrf.mxu0
  %7673 = vmatprep.mubr.bf16.mxu0 %v4889
  %7674 = vmatmul.mubr.bf16.gmra.mxu0 %v4888
  %v7675 = vpop.f32.mrf.mxu0
  %v7676 = vadd.f32 %v7387, %v7675
  %v7677 = vpop.f32.mrf.mxu0
  %v7678 = vpop.f32.mrf.mxu0
  %v7679 = vadd.f32 %v7390, %v7678
  %v7680 = vpop.f32.mrf.mxu0
  %7681 = vmatprep.mubr.bf16.mxu0 %v4877
  %7682 = vmatmul.mubr.bf16.gmra.mxu0 %v4876
  %v7683 = vpop.f32.mrf.mxu0
  %v7684 = vadd.f32 %v7395, %v7683
  %v7685 = vpop.f32.mrf.mxu0
  %v7686 = vpop.f32.mrf.mxu0
  %v7687 = vadd.f32 %v7398, %v7686
  %v7688 = vpop.f32.mrf.mxu0
  %7689 = vmatprep.mubr.bf16.mxu0 %v4897
  %7690 = vmatmul.mubr.bf16.gmra.mxu0 %v4896
  %v7691 = vpop.f32.mrf.mxu0
  %v7692 = vadd.f32 %v7403, %v7691
  %v7693 = vpop.f32.mrf.mxu0
  %v7694 = vpop.f32.mrf.mxu0
  %v7695 = vadd.f32 %v7406, %v7694
  %v7696 = vpop.f32.mrf.mxu0
  %7697 = vmatprep.mubr.bf16.mxu0 %v4907
  %7698 = vmatmul.mubr.bf16.gmra.mxu0 %v4906
  %v7699 = vpop.f32.mrf.mxu0
  %v7700 = vadd.f32 %v7411, %v7699
  %v7701 = vpop.f32.mrf.mxu0
  %v7702 = vpop.f32.mrf.mxu0
  %v7703 = vadd.f32 %v7414, %v7702
  %v7704 = vpop.f32.mrf.mxu0
  %7705 = vmatprep.mubr.bf16.mxu0 %v4915
  %7706 = vmatmul.mubr.bf16.gmra.mxu0 %v4914
  %v7707 = vpop.f32.mrf.mxu0
  %v7708 = vadd.f32 %v7419, %v7707
  %v7709 = vpop.f32.mrf.mxu0
  %v7710 = vpop.f32.mrf.mxu0
  %v7711 = vadd.f32 %v7422, %v7710
  %v7712 = vpop.f32.mrf.mxu0
  %7713 = vmatprep.mubr.bf16.mxu0 %v4925
  %7714 = vmatmul.mubr.bf16.gmra.mxu0 %v4924
  %v7715 = vpop.f32.mrf.mxu0
  %v7716 = vadd.f32 %v7427, %v7715
  %v7717 = vpop.f32.mrf.mxu0
  %v7718 = vpop.f32.mrf.mxu0
  %v7719 = vadd.f32 %v7430, %v7718
  %v7720 = vpop.f32.mrf.mxu0
  %7721 = vmatprep.mubr.bf16.mxu0 %v4933
  %7722 = vmatmul.mubr.bf16.gmra.mxu0 %v4932
  %v7723 = vpop.f32.mrf.mxu0
  %v7724 = vadd.f32 %v7435, %v7723
  %v7725 = vpop.f32.mrf.mxu0
  %v7726 = vpop.f32.mrf.mxu0
  %v7727 = vadd.f32 %v7438, %v7726
  %v7728 = vpop.f32.mrf.mxu0
  %7729 = vdwg.mxu0
  %7730 = vmatprep.subr.bf16.mxu0 0
  %7731 = vmatpush1.bf16.msra.mxu0 %v6245
  %7732 = vmatprep.subr.bf16.mxu0 0
  %7733 = vmatpush1.bf16.msra.mxu0 %v6244
  %7734 = vmatprep.subr.bf16.mxu0 0
  %7735 = vmatpush1.bf16.msra.mxu0 %v6243
  %7736 = vmatprep.subr.bf16.mxu0 0
  %7737 = vmatpush1.bf16.msra.mxu0 %v6242
  %7738 = vmatprep.subr.bf16.mxu0 0
  %7739 = vmatpush1.bf16.msra.mxu0 %v6241
  %7740 = vmatprep.subr.bf16.mxu0 0
  %7741 = vmatpush1.bf16.msra.mxu0 %v6240
  %7742 = vmatprep.subr.bf16.mxu0 0
  %7743 = vmatpush1.bf16.msra.mxu0 %v6239
  %7744 = vmatprep.subr.bf16.mxu0 0
  %7745 = vmatpush1.bf16.msra.mxu0 %v6238
  %7746 = vmatprep.subr.bf16.mxu0 0
  %7747 = vmatpush2.bf16.msra.mxu0 %v6253
  %7748 = vmatprep.subr.bf16.mxu0 0
  %7749 = vmatpush2.bf16.msra.mxu0 %v6252
  %7750 = vmatprep.subr.bf16.mxu0 0
  %7751 = vmatpush2.bf16.msra.mxu0 %v6251
  %7752 = vmatprep.subr.bf16.mxu0 0
  %7753 = vmatpush2.bf16.msra.mxu0 %v6250
  %7754 = vmatprep.subr.bf16.mxu0 0
  %7755 = vmatpush2.bf16.msra.mxu0 %v6249
  %7756 = vmatprep.subr.bf16.mxu0 0
  %7757 = vmatpush2.bf16.msra.mxu0 %v6248
  %7758 = vmatprep.subr.bf16.mxu0 0
  %7759 = vmatpush2.bf16.msra.mxu0 %v6247
  %7760 = vmatprep.subr.bf16.mxu0 0
  %7761 = vmatpush2.bf16.msra.mxu0 %v6246
  %7762 = vmatprep.mubr.bf16.mxu0 %v4863
  %7763 = vmatmul.mubr.bf16.gmra.mxu0 %v4862
  %v7764 = vpop.f32.mrf.mxu0
  %v7765 = vadd.f32 %v7476, %v7764
  %v7766 = vpop.f32.mrf.mxu0
  %v7767 = vpop.f32.mrf.mxu0
  %v7768 = vadd.f32 %v7479, %v7767
  %v7769 = vpop.f32.mrf.mxu0
  %7770 = vmatprep.mubr.bf16.mxu0 %v4886
  %7771 = vmatmul.mubr.bf16.gmra.mxu0 %v4885
  %v7772 = vpop.f32.mrf.mxu0
  %v7773 = vadd.f32 %v7484, %v7772
  %v7774 = vpop.f32.mrf.mxu0
  %v7775 = vpop.f32.mrf.mxu0
  %v7776 = vadd.f32 %v7487, %v7775
  %v7777 = vpop.f32.mrf.mxu0
  %7778 = vmatprep.mubr.bf16.mxu0 %v4873
  %7779 = vmatmul.mubr.bf16.gmra.mxu0 %v4872
  %v7780 = vpop.f32.mrf.mxu0
  %v7781 = vadd.f32 %v7492, %v7780
  %v7782 = vpop.f32.mrf.mxu0
  %v7783 = vpop.f32.mrf.mxu0
  %v7784 = vadd.f32 %v7495, %v7783
  %v7785 = vpop.f32.mrf.mxu0
  %7786 = vmatprep.mubr.bf16.mxu0 %v4894
  %7787 = vmatmul.mubr.bf16.gmra.mxu0 %v4893
  %v7788 = vpop.f32.mrf.mxu0
  %v7789 = vadd.f32 %v7500, %v7788
  %v7790 = vpop.f32.mrf.mxu0
  %v7791 = vpop.f32.mrf.mxu0
  %v7792 = vadd.f32 %v7503, %v7791
  %v7793 = vpop.f32.mrf.mxu0
  %7794 = vmatprep.mubr.bf16.mxu0 %v4903
  %7795 = vmatmul.mubr.bf16.gmra.mxu0 %v4902
  %v7796 = vpop.f32.mrf.mxu0
  %v7797 = vadd.f32 %v7508, %v7796
  %v7798 = vpop.f32.mrf.mxu0
  %v7799 = vpop.f32.mrf.mxu0
  %v7800 = vadd.f32 %v7511, %v7799
  %v7801 = vpop.f32.mrf.mxu0
  %7802 = vmatprep.mubr.bf16.mxu0 %v4912
  %7803 = vmatmul.mubr.bf16.gmra.mxu0 %v4911
  %v7804 = vpop.f32.mrf.mxu0
  %v7805 = vadd.f32 %v7516, %v7804
  %v7806 = vpop.f32.mrf.mxu0
  %v7807 = vpop.f32.mrf.mxu0
  %v7808 = vadd.f32 %v7519, %v7807
  %v7809 = vpop.f32.mrf.mxu0
  %7810 = vmatprep.mubr.bf16.mxu0 %v4921
  %7811 = vmatmul.mubr.bf16.gmra.mxu0 %v4920
  %v7812 = vpop.f32.mrf.mxu0
  %v7813 = vadd.f32 %v7524, %v7812
  %v7814 = vpop.f32.mrf.mxu0
  %v7815 = vpop.f32.mrf.mxu0
  %v7816 = vadd.f32 %v7527, %v7815
  %v7817 = vpop.f32.mrf.mxu0
  %7818 = vmatprep.mubr.bf16.mxu0 %v4930
  %7819 = vmatmul.mubr.bf16.gmra.mxu0 %v4929
  %v7820 = vpop.f32.mrf.mxu0
  %v7821 = vadd.f32 %v7532, %v7820
  %v7822 = vpop.f32.mrf.mxu0
  %v7823 = vpop.f32.mrf.mxu0
  %v7824 = vadd.f32 %v7535, %v7823
  %v7825 = vpop.f32.mrf.mxu0
  %7826 = vmatprep.mubr.bf16.mxu0 %v4883
  %7827 = vmatmul.mubr.bf16.gmra.mxu0 %v4863
  %v7828 = vpop.f32.mrf.mxu0
  %v7829 = vadd.f32 %v7540, %v7828
  %v7830 = vpop.f32.mrf.mxu0
  %v7831 = vpop.f32.mrf.mxu0
  %v7832 = vadd.f32 %v7543, %v7831
  %v7833 = vpop.f32.mrf.mxu0
  %7834 = vmatprep.mubr.bf16.mxu0 %v4954
  %7835 = vmatmul.mubr.bf16.gmra.mxu0 %v4886
  %v7836 = vpop.f32.mrf.mxu0
  %v7837 = vadd.f32 %v7548, %v7836
  %v7838 = vpop.f32.mrf.mxu0
  %v7839 = vpop.f32.mrf.mxu0
  %v7840 = vadd.f32 %v7551, %v7839
  %v7841 = vpop.f32.mrf.mxu0
  %7842 = vmatprep.mubr.bf16.mxu0 %v4891
  %7843 = vmatmul.mubr.bf16.gmra.mxu0 %v4873
  %v7844 = vpop.f32.mrf.mxu0
  %v7845 = vadd.f32 %v7556, %v7844
  %v7846 = vpop.f32.mrf.mxu0
  %v7847 = vpop.f32.mrf.mxu0
  %v7848 = vadd.f32 %v7559, %v7847
  %v7849 = vpop.f32.mrf.mxu0
  %7850 = vmatprep.mubr.bf16.mxu0 %v4956
  %7851 = vmatmul.mubr.bf16.gmra.mxu0 %v4894
  %v7852 = vpop.f32.mrf.mxu0
  %v7853 = vadd.f32 %v7564, %v7852
  %v7854 = vpop.f32.mrf.mxu0
  %v7855 = vpop.f32.mrf.mxu0
  %v7856 = vadd.f32 %v7567, %v7855
  %v7857 = vpop.f32.mrf.mxu0
  %7858 = vmatprep.mubr.bf16.mxu0 %v4909
  %7859 = vmatmul.mubr.bf16.gmra.mxu0 %v4903
  %v7860 = vpop.f32.mrf.mxu0
  %v7861 = vadd.f32 %v7572, %v7860
  %v7862 = vpop.f32.mrf.mxu0
  %v7863 = vpop.f32.mrf.mxu0
  %v7864 = vadd.f32 %v7575, %v7863
  %v7865 = vpop.f32.mrf.mxu0
  %7866 = vmatprep.mubr.bf16.mxu0 %v4958
  %7867 = vmatmul.mubr.bf16.gmra.mxu0 %v4912
  %v7868 = vpop.f32.mrf.mxu0
  %v7869 = vadd.f32 %v7580, %v7868
  %v7870 = vpop.f32.mrf.mxu0
  %v7871 = vpop.f32.mrf.mxu0
  %v7872 = vadd.f32 %v7583, %v7871
  %v7873 = vpop.f32.mrf.mxu0
  %7874 = vmatprep.mubr.bf16.mxu0 %v4927
  %7875 = vmatmul.mubr.bf16.gmra.mxu0 %v4921
  %v7876 = vpop.f32.mrf.mxu0
  %v7877 = vadd.f32 %v7588, %v7876
  %v7878 = vpop.f32.mrf.mxu0
  %v7879 = vpop.f32.mrf.mxu0
  %v7880 = vadd.f32 %v7591, %v7879
  %v7881 = vpop.f32.mrf.mxu0
  %7882 = vmatprep.mubr.bf16.mxu0 %v4960
  %7883 = vmatmul.mubr.bf16.gmra.mxu0 %v4930
  %v7884 = vpop.f32.mrf.mxu0
  %v7885 = vadd.f32 %v7596, %v7884
  %v7886 = vpop.f32.mrf.mxu0
  %v7887 = vpop.f32.mrf.mxu0
  %v7888 = vadd.f32 %v7599, %v7887
  %v7889 = vpop.f32.mrf.mxu0
  %7890 = vmatprep.mubr.bf16.mxu0 %v4868
  %7891 = vmatmul.mubr.bf16.gmra.mxu0 %v4867
  %v7892 = vpop.f32.mrf.mxu0
  %v7893 = vadd.f32 %v7604, %v7892
  %v7894 = vpop.f32.mrf.mxu0
  %v7895 = vpop.f32.mrf.mxu0
  %v7896 = vadd.f32 %v7607, %v7895
  %v7897 = vpop.f32.mrf.mxu0
  %7898 = vmatprep.mubr.bf16.mxu0 %v4890
  %7899 = vmatmul.mubr.bf16.gmra.mxu0 %v4889
  %v7900 = vpop.f32.mrf.mxu0
  %v7901 = vadd.f32 %v7612, %v7900
  %v7902 = vpop.f32.mrf.mxu0
  %v7903 = vpop.f32.mrf.mxu0
  %v7904 = vadd.f32 %v7615, %v7903
  %v7905 = vpop.f32.mrf.mxu0
  %7906 = vmatprep.mubr.bf16.mxu0 %v4878
  %7907 = vmatmul.mubr.bf16.gmra.mxu0 %v4877
  %v7908 = vpop.f32.mrf.mxu0
  %v7909 = vadd.f32 %v7620, %v7908
  %v7910 = vpop.f32.mrf.mxu0
  %v7911 = vpop.f32.mrf.mxu0
  %v7912 = vadd.f32 %v7623, %v7911
  %v7913 = vpop.f32.mrf.mxu0
  %7914 = vmatprep.mubr.bf16.mxu0 %v4898
  %7915 = vmatmul.mubr.bf16.gmra.mxu0 %v4897
  %v7916 = vpop.f32.mrf.mxu0
  %v7917 = vadd.f32 %v7628, %v7916
  %v7918 = vpop.f32.mrf.mxu0
  %v7919 = vpop.f32.mrf.mxu0
  %v7920 = vadd.f32 %v7631, %v7919
  %v7921 = vpop.f32.mrf.mxu0
  %7922 = vmatprep.mubr.bf16.mxu0 %v4908
  %7923 = vmatmul.mubr.bf16.gmra.mxu0 %v4907
  %v7924 = vpop.f32.mrf.mxu0
  %v7925 = vadd.f32 %v7636, %v7924
  %v7926 = vpop.f32.mrf.mxu0
  %v7927 = vpop.f32.mrf.mxu0
  %v7928 = vadd.f32 %v7639, %v7927
  %v7929 = vpop.f32.mrf.mxu0
  %7930 = vmatprep.mubr.bf16.mxu0 %v4916
  %7931 = vmatmul.mubr.bf16.gmra.mxu0 %v4915
  %v7932 = vpop.f32.mrf.mxu0
  %v7933 = vadd.f32 %v7644, %v7932
  %v7934 = vpop.f32.mrf.mxu0
  %v7935 = vpop.f32.mrf.mxu0
  %v7936 = vadd.f32 %v7647, %v7935
  %v7937 = vpop.f32.mrf.mxu0
  %7938 = vmatprep.mubr.bf16.mxu0 %v4926
  %7939 = vmatmul.mubr.bf16.gmra.mxu0 %v4925
  %v7940 = vpop.f32.mrf.mxu0
  %v7941 = vadd.f32 %v7652, %v7940
  %v7942 = vpop.f32.mrf.mxu0
  %v7943 = vpop.f32.mrf.mxu0
  %v7944 = vadd.f32 %v7655, %v7943
  %v7945 = vpop.f32.mrf.mxu0
  %7946 = vmatprep.mubr.bf16.mxu0 %v4934
  %7947 = vmatmul.mubr.bf16.gmra.mxu0 %v4933
  %v7948 = vpop.f32.mrf.mxu0
  %v7949 = vadd.f32 %v7660, %v7948
  %v7950 = vpop.f32.mrf.mxu0
  %v7951 = vpop.f32.mrf.mxu0
  %v7952 = vadd.f32 %v7663, %v7951
  %v7953 = vpop.f32.mrf.mxu0
  %7954 = vmatprep.mubr.bf16.mxu0 %v4887
  %7955 = vmatmul.mubr.bf16.gmra.mxu0 %v4868
  %v7956 = vpop.f32.mrf.mxu0
  %v7957 = vadd.f32 %v7668, %v7956
  %v7958 = vpop.f32.mrf.mxu0
  %v7959 = vpop.f32.mrf.mxu0
  %v7960 = vadd.f32 %v7671, %v7959
  %v7961 = vpop.f32.mrf.mxu0
  %7962 = vmatprep.mubr.bf16.mxu0 %v4955
  %7963 = vmatmul.mubr.bf16.gmra.mxu0 %v4890
  %v7964 = vpop.f32.mrf.mxu0
  %v7965 = vadd.f32 %v7676, %v7964
  %v7966 = vpop.f32.mrf.mxu0
  %v7967 = vpop.f32.mrf.mxu0
  %v7968 = vadd.f32 %v7679, %v7967
  %v7969 = vpop.f32.mrf.mxu0
  %7970 = vmatprep.mubr.bf16.mxu0 %v4895
  %7971 = vmatmul.mubr.bf16.gmra.mxu0 %v4878
  %v7972 = vpop.f32.mrf.mxu0
  %v7973 = vadd.f32 %v7684, %v7972
  %v7974 = vpop.f32.mrf.mxu0
  %v7975 = vpop.f32.mrf.mxu0
  %v7976 = vadd.f32 %v7687, %v7975
  %v7977 = vpop.f32.mrf.mxu0
  %7978 = vmatprep.mubr.bf16.mxu0 %v4957
  %7979 = vmatmul.mubr.bf16.gmra.mxu0 %v4898
  %v7980 = vpop.f32.mrf.mxu0
  %v7981 = vadd.f32 %v7692, %v7980
  %v7982 = vpop.f32.mrf.mxu0
  %v7983 = vpop.f32.mrf.mxu0
  %v7984 = vadd.f32 %v7695, %v7983
  %v7985 = vpop.f32.mrf.mxu0
  %7986 = vmatprep.mubr.bf16.mxu0 %v4913
  %7987 = vmatmul.mubr.bf16.gmra.mxu0 %v4908
  %v7988 = vpop.f32.mrf.mxu0
  %v7989 = vadd.f32 %v7700, %v7988
  %v7990 = vpop.f32.mrf.mxu0
  %v7991 = vpop.f32.mrf.mxu0
  %v7992 = vadd.f32 %v7703, %v7991
  %v7993 = vpop.f32.mrf.mxu0
  %7994 = vmatprep.mubr.bf16.mxu0 %v4959
  %7995 = vmatmul.mubr.bf16.gmra.mxu0 %v4916
  %v7996 = vpop.f32.mrf.mxu0
  %v7997 = vadd.f32 %v7708, %v7996
  %v7998 = vpop.f32.mrf.mxu0
  %v7999 = vpop.f32.mrf.mxu0
  %v8000 = vadd.f32 %v7711, %v7999
  %v8001 = vpop.f32.mrf.mxu0
  %8002 = vmatprep.mubr.bf16.mxu0 %v4931
  %8003 = vmatmul.mubr.bf16.gmra.mxu0 %v4926
  %v8004 = vpop.f32.mrf.mxu0
  %v8005 = vadd.f32 %v7716, %v8004
  %v8006 = vpop.f32.mrf.mxu0
  %v8007 = vpop.f32.mrf.mxu0
  %v8008 = vadd.f32 %v7719, %v8007
  %v8009 = vpop.f32.mrf.mxu0
  %8010 = vmatprep.mubr.bf16.mxu0 %v4961
  %8011 = vmatmul.mubr.bf16.gmra.mxu0 %v4934
  %v8012 = vpop.f32.mrf.mxu0
  %v8013 = vadd.f32 %v7724, %v8012
  %v8014 = vpop.f32.mrf.mxu0
  %v8015 = vpop.f32.mrf.mxu0
  %v8016 = vadd.f32 %v7727, %v8015
  %v8017 = vpop.f32.mrf.mxu0
  %8018 = vdwg.mxu0
  %8019 = vmatprep.subr.bf16.mxu0 0
  %8020 = vmatpush1.bf16.msra.mxu0 %v6261
  %8021 = vmatprep.subr.bf16.mxu0 0
  %8022 = vmatpush1.bf16.msra.mxu0 %v6260
  %8023 = vmatprep.subr.bf16.mxu0 0
  %8024 = vmatpush1.bf16.msra.mxu0 %v6259
  %8025 = vmatprep.subr.bf16.mxu0 0
  %8026 = vmatpush1.bf16.msra.mxu0 %v6258
  %8027 = vmatprep.subr.bf16.mxu0 0
  %8028 = vmatpush1.bf16.msra.mxu0 %v6257
  %8029 = vmatprep.subr.bf16.mxu0 0
  %8030 = vmatpush1.bf16.msra.mxu0 %v6256
  %8031 = vmatprep.subr.bf16.mxu0 0
  %8032 = vmatpush1.bf16.msra.mxu0 %v6255
  %8033 = vmatprep.subr.bf16.mxu0 0
  %8034 = vmatpush1.bf16.msra.mxu0 %v6254
  %8035 = vmatprep.subr.bf16.mxu0 0
  %8036 = vmatpush2.bf16.msra.mxu0 %v6269
  %8037 = vmatprep.subr.bf16.mxu0 0
  %8038 = vmatpush2.bf16.msra.mxu0 %v6268
  %8039 = vmatprep.subr.bf16.mxu0 0
  %8040 = vmatpush2.bf16.msra.mxu0 %v6267
  %8041 = vmatprep.subr.bf16.mxu0 0
  %8042 = vmatpush2.bf16.msra.mxu0 %v6266
  %8043 = vmatprep.subr.bf16.mxu0 0
  %8044 = vmatpush2.bf16.msra.mxu0 %v6265
  %8045 = vmatprep.subr.bf16.mxu0 0
  %8046 = vmatpush2.bf16.msra.mxu0 %v6264
  %8047 = vmatprep.subr.bf16.mxu0 0
  %8048 = vmatpush2.bf16.msra.mxu0 %v6263
  %8049 = vmatprep.subr.bf16.mxu0 0
  %8050 = vmatpush2.bf16.msra.mxu0 %v6262
  %8051 = vmatprep.mubr.bf16.mxu0 %v4865
  %8052 = vmatmul.mubr.bf16.gmra.mxu0 %v4864
  %v8053 = vpop.f32.mrf.mxu0
  %v8054 = vadd.f32 %v7765, %v8053
  %v8055 = vpop.f32.mrf.mxu0
  %v8056 = vpop.f32.mrf.mxu0
  %v8057 = vadd.f32 %v7768, %v8056
  %v8058 = vpop.f32.mrf.mxu0
  %8059 = vmatprep.mubr.bf16.mxu0 %v4887
  %8060 = vmatmul.mubr.bf16.gmra.mxu0 %v4868
  %v8061 = vpop.f32.mrf.mxu0
  %v8062 = vadd.f32 %v7773, %v8061
  %v8063 = vpop.f32.mrf.mxu0
  %v8064 = vpop.f32.mrf.mxu0
  %v8065 = vadd.f32 %v7776, %v8064
  %v8066 = vpop.f32.mrf.mxu0
  %8067 = vmatprep.mubr.bf16.mxu0 %v4875
  %8068 = vmatmul.mubr.bf16.gmra.mxu0 %v4874
  %v8069 = vpop.f32.mrf.mxu0
  %v8070 = vadd.f32 %v7781, %v8069
  %v8071 = vpop.f32.mrf.mxu0
  %v8072 = vpop.f32.mrf.mxu0
  %v8073 = vadd.f32 %v7784, %v8072
  %v8074 = vpop.f32.mrf.mxu0
  %8075 = vmatprep.mubr.bf16.mxu0 %v4895
  %8076 = vmatmul.mubr.bf16.gmra.mxu0 %v4878
  %v8077 = vpop.f32.mrf.mxu0
  %v8078 = vadd.f32 %v7789, %v8077
  %v8079 = vpop.f32.mrf.mxu0
  %v8080 = vpop.f32.mrf.mxu0
  %v8081 = vadd.f32 %v7792, %v8080
  %v8082 = vpop.f32.mrf.mxu0
  %8083 = vmatprep.mubr.bf16.mxu0 %v4905
  %8084 = vmatmul.mubr.bf16.gmra.mxu0 %v4904
  %v8085 = vpop.f32.mrf.mxu0
  %v8086 = vadd.f32 %v7797, %v8085
  %v8087 = vpop.f32.mrf.mxu0
  %v8088 = vpop.f32.mrf.mxu0
  %v8089 = vadd.f32 %v7800, %v8088
  %v8090 = vpop.f32.mrf.mxu0
  %8091 = vmatprep.mubr.bf16.mxu0 %v4913
  %8092 = vmatmul.mubr.bf16.gmra.mxu0 %v4908
  %v8093 = vpop.f32.mrf.mxu0
  %v8094 = vadd.f32 %v7805, %v8093
  %v8095 = vpop.f32.mrf.mxu0
  %v8096 = vpop.f32.mrf.mxu0
  %v8097 = vadd.f32 %v7808, %v8096
  %v8098 = vpop.f32.mrf.mxu0
  %8099 = vmatprep.mubr.bf16.mxu0 %v4923
  %8100 = vmatmul.mubr.bf16.gmra.mxu0 %v4922
  %v8101 = vpop.f32.mrf.mxu0
  %v8102 = vadd.f32 %v7813, %v8101
  %v8103 = vpop.f32.mrf.mxu0
  %v8104 = vpop.f32.mrf.mxu0
  %v8105 = vadd.f32 %v7816, %v8104
  %v8106 = vpop.f32.mrf.mxu0
  %8107 = vmatprep.mubr.bf16.mxu0 %v4931
  %8108 = vmatmul.mubr.bf16.gmra.mxu0 %v4926
  %v8109 = vpop.f32.mrf.mxu0
  %v8110 = vadd.f32 %v7821, %v8109
  %v8111 = vpop.f32.mrf.mxu0
  %v8112 = vpop.f32.mrf.mxu0
  %v8113 = vadd.f32 %v7824, %v8112
  %v8114 = vpop.f32.mrf.mxu0
  %8115 = vmatprep.mubr.bf16.mxu0 %v4866
  %8116 = vmatmul.mubr.bf16.gmra.mxu0 %v4865
  %v8117 = vpop.f32.mrf.mxu0
  %v8118 = vadd.f32 %v7829, %v8117
  %v8119 = vpop.f32.mrf.mxu0
  %v8120 = vpop.f32.mrf.mxu0
  %v8121 = vadd.f32 %v7832, %v8120
  %v8122 = vpop.f32.mrf.mxu0
  %8123 = vmatprep.mubr.bf16.mxu0 %v4888
  %8124 = vmatmul.mubr.bf16.gmra.mxu0 %v4887
  %v8125 = vpop.f32.mrf.mxu0
  %v8126 = vadd.f32 %v7837, %v8125
  %v8127 = vpop.f32.mrf.mxu0
  %v8128 = vpop.f32.mrf.mxu0
  %v8129 = vadd.f32 %v7840, %v8128
  %v8130 = vpop.f32.mrf.mxu0
  %8131 = vmatprep.mubr.bf16.mxu0 %v4876
  %8132 = vmatmul.mubr.bf16.gmra.mxu0 %v4875
  %v8133 = vpop.f32.mrf.mxu0
  %v8134 = vadd.f32 %v7845, %v8133
  %v8135 = vpop.f32.mrf.mxu0
  %v8136 = vpop.f32.mrf.mxu0
  %v8137 = vadd.f32 %v7848, %v8136
  %v8138 = vpop.f32.mrf.mxu0
  %8139 = vmatprep.mubr.bf16.mxu0 %v4896
  %8140 = vmatmul.mubr.bf16.gmra.mxu0 %v4895
  %v8141 = vpop.f32.mrf.mxu0
  %v8142 = vadd.f32 %v7853, %v8141
  %v8143 = vpop.f32.mrf.mxu0
  %v8144 = vpop.f32.mrf.mxu0
  %v8145 = vadd.f32 %v7856, %v8144
  %v8146 = vpop.f32.mrf.mxu0
  %8147 = vmatprep.mubr.bf16.mxu0 %v4906
  %8148 = vmatmul.mubr.bf16.gmra.mxu0 %v4905
  %v8149 = vpop.f32.mrf.mxu0
  %v8150 = vadd.f32 %v7861, %v8149
  %v8151 = vpop.f32.mrf.mxu0
  %v8152 = vpop.f32.mrf.mxu0
  %v8153 = vadd.f32 %v7864, %v8152
  %v8154 = vpop.f32.mrf.mxu0
  %8155 = vmatprep.mubr.bf16.mxu0 %v4914
  %8156 = vmatmul.mubr.bf16.gmra.mxu0 %v4913
  %v8157 = vpop.f32.mrf.mxu0
  %v8158 = vadd.f32 %v7869, %v8157
  %v8159 = vpop.f32.mrf.mxu0
  %v8160 = vpop.f32.mrf.mxu0
  %v8161 = vadd.f32 %v7872, %v8160
  %v8162 = vpop.f32.mrf.mxu0
  %8163 = vmatprep.mubr.bf16.mxu0 %v4924
  %8164 = vmatmul.mubr.bf16.gmra.mxu0 %v4923
  %v8165 = vpop.f32.mrf.mxu0
  %v8166 = vadd.f32 %v7877, %v8165
  %v8167 = vpop.f32.mrf.mxu0
  %v8168 = vpop.f32.mrf.mxu0
  %v8169 = vadd.f32 %v7880, %v8168
  %v8170 = vpop.f32.mrf.mxu0
  %8171 = vmatprep.mubr.bf16.mxu0 %v4932
  %8172 = vmatmul.mubr.bf16.gmra.mxu0 %v4931
  %v8173 = vpop.f32.mrf.mxu0
  %v8174 = vadd.f32 %v7885, %v8173
  %v8175 = vpop.f32.mrf.mxu0
  %v8176 = vpop.f32.mrf.mxu0
  %v8177 = vadd.f32 %v7888, %v8176
  %v8178 = vpop.f32.mrf.mxu0
  %8179 = vmatprep.mubr.bf16.mxu0 %v4870
  %8180 = vmatmul.mubr.bf16.gmra.mxu0 %v4869
  %v8181 = vpop.f32.mrf.mxu0
  %v8182 = vadd.f32 %v7893, %v8181
  %v8183 = vpop.f32.mrf.mxu0
  %v8184 = vpop.f32.mrf.mxu0
  %v8185 = vadd.f32 %v7896, %v8184
  %v8186 = vpop.f32.mrf.mxu0
  %8187 = vmatprep.mubr.bf16.mxu0 %v4891
  %8188 = vmatmul.mubr.bf16.gmra.mxu0 %v4873
  %v8189 = vpop.f32.mrf.mxu0
  %v8190 = vadd.f32 %v7901, %v8189
  %v8191 = vpop.f32.mrf.mxu0
  %v8192 = vpop.f32.mrf.mxu0
  %v8193 = vadd.f32 %v7904, %v8192
  %v8194 = vpop.f32.mrf.mxu0
  %8195 = vmatprep.mubr.bf16.mxu0 %v4900
  %8196 = vmatmul.mubr.bf16.gmra.mxu0 %v4899
  %v8197 = vpop.f32.mrf.mxu0
  %v8198 = vadd.f32 %v7909, %v8197
  %v8199 = vpop.f32.mrf.mxu0
  %v8200 = vpop.f32.mrf.mxu0
  %v8201 = vadd.f32 %v7912, %v8200
  %v8202 = vpop.f32.mrf.mxu0
  %8203 = vmatprep.mubr.bf16.mxu0 %v4909
  %8204 = vmatmul.mubr.bf16.gmra.mxu0 %v4903
  %v8205 = vpop.f32.mrf.mxu0
  %v8206 = vadd.f32 %v7917, %v8205
  %v8207 = vpop.f32.mrf.mxu0
  %v8208 = vpop.f32.mrf.mxu0
  %v8209 = vadd.f32 %v7920, %v8208
  %v8210 = vpop.f32.mrf.mxu0
  %8211 = vmatprep.mubr.bf16.mxu0 %v4918
  %8212 = vmatmul.mubr.bf16.gmra.mxu0 %v4917
  %v8213 = vpop.f32.mrf.mxu0
  %v8214 = vadd.f32 %v7925, %v8213
  %v8215 = vpop.f32.mrf.mxu0
  %v8216 = vpop.f32.mrf.mxu0
  %v8217 = vadd.f32 %v7928, %v8216
  %v8218 = vpop.f32.mrf.mxu0
  %8219 = vmatprep.mubr.bf16.mxu0 %v4927
  %8220 = vmatmul.mubr.bf16.gmra.mxu0 %v4921
  %v8221 = vpop.f32.mrf.mxu0
  %v8222 = vadd.f32 %v7933, %v8221
  %v8223 = vpop.f32.mrf.mxu0
  %v8224 = vpop.f32.mrf.mxu0
  %v8225 = vadd.f32 %v7936, %v8224
  %v8226 = vpop.f32.mrf.mxu0
  %8227 = vmatprep.mubr.bf16.mxu0 %v4936
  %8228 = vmatmul.mubr.bf16.gmra.mxu0 %v4935
  %v8229 = vpop.f32.mrf.mxu0
  %v8230 = vadd.f32 %v7941, %v8229
  %v8231 = vpop.f32.mrf.mxu0
  %v8232 = vpop.f32.mrf.mxu0
  %v8233 = vadd.f32 %v7944, %v8232
  %v8234 = vpop.f32.mrf.mxu0
  %8235 = vmatprep.mubr.bf16.mxu0 %v4945
  %8236 = vmatmul.mubr.bf16.gmra.mxu0 %v4939
  %v8237 = vpop.f32.mrf.mxu0
  %v8238 = vadd.f32 %v7949, %v8237
  %v8239 = vpop.f32.mrf.mxu0
  %v8240 = vpop.f32.mrf.mxu0
  %v8241 = vadd.f32 %v7952, %v8240
  %v8242 = vpop.f32.mrf.mxu0
  %8243 = vmatprep.mubr.bf16.mxu0 %v4871
  %8244 = vmatmul.mubr.bf16.gmra.mxu0 %v4870
  %v8245 = vpop.f32.mrf.mxu0
  %v8246 = vadd.f32 %v7957, %v8245
  %v8247 = vpop.f32.mrf.mxu0
  %v8248 = vpop.f32.mrf.mxu0
  %v8249 = vadd.f32 %v7960, %v8248
  %v8250 = vpop.f32.mrf.mxu0
  %8251 = vmatprep.mubr.bf16.mxu0 %v4892
  %8252 = vmatmul.mubr.bf16.gmra.mxu0 %v4891
  %v8253 = vpop.f32.mrf.mxu0
  %v8254 = vadd.f32 %v7965, %v8253
  %v8255 = vpop.f32.mrf.mxu0
  %v8256 = vpop.f32.mrf.mxu0
  %v8257 = vadd.f32 %v7968, %v8256
  %v8258 = vpop.f32.mrf.mxu0
  %8259 = vmatprep.mubr.bf16.mxu0 %v4901
  %8260 = vmatmul.mubr.bf16.gmra.mxu0 %v4900
  %v8261 = vpop.f32.mrf.mxu0
  %v8262 = vadd.f32 %v7973, %v8261
  %v8263 = vpop.f32.mrf.mxu0
  %v8264 = vpop.f32.mrf.mxu0
  %v8265 = vadd.f32 %v7976, %v8264
  %v8266 = vpop.f32.mrf.mxu0
  %8267 = vmatprep.mubr.bf16.mxu0 %v4910
  %8268 = vmatmul.mubr.bf16.gmra.mxu0 %v4909
  %v8269 = vpop.f32.mrf.mxu0
  %v8270 = vadd.f32 %v7981, %v8269
  %v8271 = vpop.f32.mrf.mxu0
  %v8272 = vpop.f32.mrf.mxu0
  %v8273 = vadd.f32 %v7984, %v8272
  %v8274 = vpop.f32.mrf.mxu0
  %8275 = vmatprep.mubr.bf16.mxu0 %v4919
  %8276 = vmatmul.mubr.bf16.gmra.mxu0 %v4918
  %v8277 = vpop.f32.mrf.mxu0
  %v8278 = vadd.f32 %v7989, %v8277
  %v8279 = vpop.f32.mrf.mxu0
  %v8280 = vpop.f32.mrf.mxu0
  %v8281 = vadd.f32 %v7992, %v8280
  %v8282 = vpop.f32.mrf.mxu0
  %8283 = vmatprep.mubr.bf16.mxu0 %v4928
  %8284 = vmatmul.mubr.bf16.gmra.mxu0 %v4927
  %v8285 = vpop.f32.mrf.mxu0
  %v8286 = vadd.f32 %v7997, %v8285
  %v8287 = vpop.f32.mrf.mxu0
  %v8288 = vpop.f32.mrf.mxu0
  %v8289 = vadd.f32 %v8000, %v8288
  %v8290 = vpop.f32.mrf.mxu0
  %8291 = vmatprep.mubr.bf16.mxu0 %v4937
  %8292 = vmatmul.mubr.bf16.gmra.mxu0 %v4936
  %v8293 = vpop.f32.mrf.mxu0
  %v8294 = vadd.f32 %v8005, %v8293
  %v8295 = vpop.f32.mrf.mxu0
  %v8296 = vpop.f32.mrf.mxu0
  %v8297 = vadd.f32 %v8008, %v8296
  %v8298 = vpop.f32.mrf.mxu0
  %8299 = vmatprep.mubr.bf16.mxu0 %v4946
  %8300 = vmatmul.mubr.bf16.gmra.mxu0 %v4945
  %v8301 = vpop.f32.mrf.mxu0
  %v8302 = vadd.f32 %v8013, %v8301
  %v8303 = vpop.f32.mrf.mxu0
  %v8304 = vpop.f32.mrf.mxu0
  %v8305 = vadd.f32 %v8016, %v8304
  %v8306 = vpop.f32.mrf.mxu0
  %8307 = vdwg.mxu0
  %8308 = vmatprep.subr.bf16.mxu0 0
  %8309 = vmatpush1.bf16.msra.mxu0 %v6277
  %8310 = vmatprep.subr.bf16.mxu0 0
  %8311 = vmatpush1.bf16.msra.mxu0 %v6276
  %8312 = vmatprep.subr.bf16.mxu0 0
  %8313 = vmatpush1.bf16.msra.mxu0 %v6275
  %8314 = vmatprep.subr.bf16.mxu0 0
  %8315 = vmatpush1.bf16.msra.mxu0 %v6274
  %8316 = vmatprep.subr.bf16.mxu0 0
  %8317 = vmatpush1.bf16.msra.mxu0 %v6273
  %8318 = vmatprep.subr.bf16.mxu0 0
  %8319 = vmatpush1.bf16.msra.mxu0 %v6272
  %8320 = vmatprep.subr.bf16.mxu0 0
  %8321 = vmatpush1.bf16.msra.mxu0 %v6271
  %8322 = vmatprep.subr.bf16.mxu0 0
  %8323 = vmatpush1.bf16.msra.mxu0 %v6270
  %8324 = vmatprep.subr.bf16.mxu0 0
  %8325 = vmatpush2.bf16.msra.mxu0 %v6285
  %8326 = vmatprep.subr.bf16.mxu0 0
  %8327 = vmatpush2.bf16.msra.mxu0 %v6284
  %8328 = vmatprep.subr.bf16.mxu0 0
  %8329 = vmatpush2.bf16.msra.mxu0 %v6283
  %8330 = vmatprep.subr.bf16.mxu0 0
  %8331 = vmatpush2.bf16.msra.mxu0 %v6282
  %8332 = vmatprep.subr.bf16.mxu0 0
  %8333 = vmatpush2.bf16.msra.mxu0 %v6281
  %8334 = vmatprep.subr.bf16.mxu0 0
  %8335 = vmatpush2.bf16.msra.mxu0 %v6280
  %8336 = vmatprep.subr.bf16.mxu0 0
  %8337 = vmatpush2.bf16.msra.mxu0 %v6279
  %8338 = vmatprep.subr.bf16.mxu0 0
  %8339 = vmatpush2.bf16.msra.mxu0 %v6278
  %8340 = vmatprep.mubr.bf16.mxu0 %v4867
  %8341 = vmatmul.mubr.bf16.gmra.mxu0 %v4866
  %v8342 = vpop.f32.mrf.mxu0
  %v8343 = vadd.f32 %v8054, %v8342
  %v8344 = vpop.f32.mrf.mxu0
  %v8345 = vpop.f32.mrf.mxu0
  %v8346 = vadd.f32 %v8057, %v8345
  %v8347 = vpop.f32.mrf.mxu0
  %8348 = vmatprep.mubr.bf16.mxu0 %v4889
  %8349 = vmatmul.mubr.bf16.gmra.mxu0 %v4888
  %v8350 = vpop.f32.mrf.mxu0
  %v8351 = vadd.f32 %v8062, %v8350
  %v8352 = vpop.f32.mrf.mxu0
  %v8353 = vpop.f32.mrf.mxu0
  %v8354 = vadd.f32 %v8065, %v8353
  %v8355 = vpop.f32.mrf.mxu0
  %8356 = vmatprep.mubr.bf16.mxu0 %v4877
  %8357 = vmatmul.mubr.bf16.gmra.mxu0 %v4876
  %v8358 = vpop.f32.mrf.mxu0
  %v8359 = vadd.f32 %v8070, %v8358
  %v8360 = vpop.f32.mrf.mxu0
  %v8361 = vpop.f32.mrf.mxu0
  %v8362 = vadd.f32 %v8073, %v8361
  %v8363 = vpop.f32.mrf.mxu0
  %8364 = vmatprep.mubr.bf16.mxu0 %v4897
  %8365 = vmatmul.mubr.bf16.gmra.mxu0 %v4896
  %v8366 = vpop.f32.mrf.mxu0
  %v8367 = vadd.f32 %v8078, %v8366
  %v8368 = vpop.f32.mrf.mxu0
  %v8369 = vpop.f32.mrf.mxu0
  %v8370 = vadd.f32 %v8081, %v8369
  %v8371 = vpop.f32.mrf.mxu0
  %8372 = vmatprep.mubr.bf16.mxu0 %v4907
  %8373 = vmatmul.mubr.bf16.gmra.mxu0 %v4906
  %v8374 = vpop.f32.mrf.mxu0
  %v8375 = vadd.f32 %v8086, %v8374
  %v8376 = vpop.f32.mrf.mxu0
  %v8377 = vpop.f32.mrf.mxu0
  %v8378 = vadd.f32 %v8089, %v8377
  %v8379 = vpop.f32.mrf.mxu0
  %8380 = vmatprep.mubr.bf16.mxu0 %v4915
  %8381 = vmatmul.mubr.bf16.gmra.mxu0 %v4914
  %v8382 = vpop.f32.mrf.mxu0
  %v8383 = vadd.f32 %v8094, %v8382
  %v8384 = vpop.f32.mrf.mxu0
  %v8385 = vpop.f32.mrf.mxu0
  %v8386 = vadd.f32 %v8097, %v8385
  %v8387 = vpop.f32.mrf.mxu0
  %8388 = vmatprep.mubr.bf16.mxu0 %v4925
  %8389 = vmatmul.mubr.bf16.gmra.mxu0 %v4924
  %v8390 = vpop.f32.mrf.mxu0
  %v8391 = vadd.f32 %v8102, %v8390
  %v8392 = vpop.f32.mrf.mxu0
  %v8393 = vpop.f32.mrf.mxu0
  %v8394 = vadd.f32 %v8105, %v8393
  %v8395 = vpop.f32.mrf.mxu0
  %8396 = vmatprep.mubr.bf16.mxu0 %v4933
  %8397 = vmatmul.mubr.bf16.gmra.mxu0 %v4932
  %v8398 = vpop.f32.mrf.mxu0
  %v8399 = vadd.f32 %v8110, %v8398
  %v8400 = vpop.f32.mrf.mxu0
  %v8401 = vpop.f32.mrf.mxu0
  %v8402 = vadd.f32 %v8113, %v8401
  %v8403 = vpop.f32.mrf.mxu0
  %8404 = vmatprep.mubr.bf16.mxu0 %v4868
  %8405 = vmatmul.mubr.bf16.gmra.mxu0 %v4867
  %v8406 = vpop.f32.mrf.mxu0
  %v8407 = vadd.f32 %v8118, %v8406
  %v8408 = vpop.f32.mrf.mxu0
  %v8409 = vpop.f32.mrf.mxu0
  %v8410 = vadd.f32 %v8121, %v8409
  %v8411 = vpop.f32.mrf.mxu0
  %8412 = vmatprep.mubr.bf16.mxu0 %v4890
  %8413 = vmatmul.mubr.bf16.gmra.mxu0 %v4889
  %v8414 = vpop.f32.mrf.mxu0
  %v8415 = vadd.f32 %v8126, %v8414
  %v8416 = vpop.f32.mrf.mxu0
  %v8417 = vpop.f32.mrf.mxu0
  %v8418 = vadd.f32 %v8129, %v8417
  %v8419 = vpop.f32.mrf.mxu0
  %8420 = vmatprep.mubr.bf16.mxu0 %v4878
  %8421 = vmatmul.mubr.bf16.gmra.mxu0 %v4877
  %v8422 = vpop.f32.mrf.mxu0
  %v8423 = vadd.f32 %v8134, %v8422
  %v8424 = vpop.f32.mrf.mxu0
  %v8425 = vpop.f32.mrf.mxu0
  %v8426 = vadd.f32 %v8137, %v8425
  %v8427 = vpop.f32.mrf.mxu0
  %8428 = vmatprep.mubr.bf16.mxu0 %v4898
  %8429 = vmatmul.mubr.bf16.gmra.mxu0 %v4897
  %v8430 = vpop.f32.mrf.mxu0
  %v8431 = vadd.f32 %v8142, %v8430
  %v8432 = vpop.f32.mrf.mxu0
  %v8433 = vpop.f32.mrf.mxu0
  %v8434 = vadd.f32 %v8145, %v8433
  %v8435 = vpop.f32.mrf.mxu0
  %8436 = vmatprep.mubr.bf16.mxu0 %v4908
  %8437 = vmatmul.mubr.bf16.gmra.mxu0 %v4907
  %v8438 = vpop.f32.mrf.mxu0
  %v8439 = vadd.f32 %v8150, %v8438
  %v8440 = vpop.f32.mrf.mxu0
  %v8441 = vpop.f32.mrf.mxu0
  %v8442 = vadd.f32 %v8153, %v8441
  %v8443 = vpop.f32.mrf.mxu0
  %8444 = vmatprep.mubr.bf16.mxu0 %v4916
  %8445 = vmatmul.mubr.bf16.gmra.mxu0 %v4915
  %v8446 = vpop.f32.mrf.mxu0
  %v8447 = vadd.f32 %v8158, %v8446
  %v8448 = vpop.f32.mrf.mxu0
  %v8449 = vpop.f32.mrf.mxu0
  %v8450 = vadd.f32 %v8161, %v8449
  %v8451 = vpop.f32.mrf.mxu0
  %8452 = vmatprep.mubr.bf16.mxu0 %v4926
  %8453 = vmatmul.mubr.bf16.gmra.mxu0 %v4925
  %v8454 = vpop.f32.mrf.mxu0
  %v8455 = vadd.f32 %v8166, %v8454
  %v8456 = vpop.f32.mrf.mxu0
  %v8457 = vpop.f32.mrf.mxu0
  %v8458 = vadd.f32 %v8169, %v8457
  %v8459 = vpop.f32.mrf.mxu0
  %8460 = vmatprep.mubr.bf16.mxu0 %v4934
  %8461 = vmatmul.mubr.bf16.gmra.mxu0 %v4933
  %v8462 = vpop.f32.mrf.mxu0
  %v8463 = vadd.f32 %v8174, %v8462
  %v8464 = vpop.f32.mrf.mxu0
  %v8465 = vpop.f32.mrf.mxu0
  %v8466 = vadd.f32 %v8177, %v8465
  %v8467 = vpop.f32.mrf.mxu0
  %8468 = vmatprep.mubr.bf16.mxu0 %v4872
  %8469 = vmatmul.mubr.bf16.gmra.mxu0 %v4871
  %v8470 = vpop.f32.mrf.mxu0
  %v8471 = vadd.f32 %v8182, %v8470
  %v8472 = vpop.f32.mrf.mxu0
  %v8473 = vpop.f32.mrf.mxu0
  %v8474 = vadd.f32 %v8185, %v8473
  %v8475 = vpop.f32.mrf.mxu0
  %8476 = vmatprep.mubr.bf16.mxu0 %v4893
  %8477 = vmatmul.mubr.bf16.gmra.mxu0 %v4892
  %v8478 = vpop.f32.mrf.mxu0
  %v8479 = vadd.f32 %v8190, %v8478
  %v8480 = vpop.f32.mrf.mxu0
  %v8481 = vpop.f32.mrf.mxu0
  %v8482 = vadd.f32 %v8193, %v8481
  %v8483 = vpop.f32.mrf.mxu0
  %8484 = vmatprep.mubr.bf16.mxu0 %v4902
  %8485 = vmatmul.mubr.bf16.gmra.mxu0 %v4901
  %v8486 = vpop.f32.mrf.mxu0
  %v8487 = vadd.f32 %v8198, %v8486
  %v8488 = vpop.f32.mrf.mxu0
  %v8489 = vpop.f32.mrf.mxu0
  %v8490 = vadd.f32 %v8201, %v8489
  %v8491 = vpop.f32.mrf.mxu0
  %8492 = vmatprep.mubr.bf16.mxu0 %v4911
  %8493 = vmatmul.mubr.bf16.gmra.mxu0 %v4910
  %v8494 = vpop.f32.mrf.mxu0
  %v8495 = vadd.f32 %v8206, %v8494
  %v8496 = vpop.f32.mrf.mxu0
  %v8497 = vpop.f32.mrf.mxu0
  %v8498 = vadd.f32 %v8209, %v8497
  %v8499 = vpop.f32.mrf.mxu0
  %8500 = vmatprep.mubr.bf16.mxu0 %v4920
  %8501 = vmatmul.mubr.bf16.gmra.mxu0 %v4919
  %v8502 = vpop.f32.mrf.mxu0
  %v8503 = vadd.f32 %v8214, %v8502
  %v8504 = vpop.f32.mrf.mxu0
  %v8505 = vpop.f32.mrf.mxu0
  %v8506 = vadd.f32 %v8217, %v8505
  %v8507 = vpop.f32.mrf.mxu0
  %8508 = vmatprep.mubr.bf16.mxu0 %v4929
  %8509 = vmatmul.mubr.bf16.gmra.mxu0 %v4928
  %v8510 = vpop.f32.mrf.mxu0
  %v8511 = vadd.f32 %v8222, %v8510
  %v8512 = vpop.f32.mrf.mxu0
  %v8513 = vpop.f32.mrf.mxu0
  %v8514 = vadd.f32 %v8225, %v8513
  %v8515 = vpop.f32.mrf.mxu0
  %8516 = vmatprep.mubr.bf16.mxu0 %v4938
  %8517 = vmatmul.mubr.bf16.gmra.mxu0 %v4937
  %v8518 = vpop.f32.mrf.mxu0
  %v8519 = vadd.f32 %v8230, %v8518
  %v8520 = vpop.f32.mrf.mxu0
  %v8521 = vpop.f32.mrf.mxu0
  %v8522 = vadd.f32 %v8233, %v8521
  %v8523 = vpop.f32.mrf.mxu0
  %8524 = vmatprep.mubr.bf16.mxu0 %v4947
  %8525 = vmatmul.mubr.bf16.gmra.mxu0 %v4946
  %v8526 = vpop.f32.mrf.mxu0
  %v8527 = vadd.f32 %v8238, %v8526
  %v8528 = vpop.f32.mrf.mxu0
  %v8529 = vpop.f32.mrf.mxu0
  %v8530 = vadd.f32 %v8241, %v8529
  %v8531 = vpop.f32.mrf.mxu0
  %8532 = vmatprep.mubr.bf16.mxu0 %v4873
  %8533 = vmatmul.mubr.bf16.gmra.mxu0 %v4872
  %v8534 = vpop.f32.mrf.mxu0
  %v8535 = vadd.f32 %v8246, %v8534
  %v8536 = vpop.f32.mrf.mxu0
  %v8537 = vpop.f32.mrf.mxu0
  %v8538 = vadd.f32 %v8249, %v8537
  %v8539 = vpop.f32.mrf.mxu0
  %8540 = vmatprep.mubr.bf16.mxu0 %v4894
  %8541 = vmatmul.mubr.bf16.gmra.mxu0 %v4893
  %v8542 = vpop.f32.mrf.mxu0
  %v8543 = vadd.f32 %v8254, %v8542
  %v8544 = vpop.f32.mrf.mxu0
  %v8545 = vpop.f32.mrf.mxu0
  %v8546 = vadd.f32 %v8257, %v8545
  %v8547 = vpop.f32.mrf.mxu0
  %8548 = vmatprep.mubr.bf16.mxu0 %v4903
  %8549 = vmatmul.mubr.bf16.gmra.mxu0 %v4902
  %v8550 = vpop.f32.mrf.mxu0
  %v8551 = vadd.f32 %v8262, %v8550
  %v8552 = vpop.f32.mrf.mxu0
  %v8553 = vpop.f32.mrf.mxu0
  %v8554 = vadd.f32 %v8265, %v8553
  %v8555 = vpop.f32.mrf.mxu0
  %8556 = vmatprep.mubr.bf16.mxu0 %v4912
  %8557 = vmatmul.mubr.bf16.gmra.mxu0 %v4911
  %v8558 = vpop.f32.mrf.mxu0
  %v8559 = vadd.f32 %v8270, %v8558
  %v8560 = vpop.f32.mrf.mxu0
  %v8561 = vpop.f32.mrf.mxu0
  %v8562 = vadd.f32 %v8273, %v8561
  %v8563 = vpop.f32.mrf.mxu0
  %8564 = vmatprep.mubr.bf16.mxu0 %v4921
  %8565 = vmatmul.mubr.bf16.gmra.mxu0 %v4920
  %v8566 = vpop.f32.mrf.mxu0
  %v8567 = vadd.f32 %v8278, %v8566
  %v8568 = vpop.f32.mrf.mxu0
  %v8569 = vpop.f32.mrf.mxu0
  %v8570 = vadd.f32 %v8281, %v8569
  %v8571 = vpop.f32.mrf.mxu0
  %8572 = vmatprep.mubr.bf16.mxu0 %v4930
  %8573 = vmatmul.mubr.bf16.gmra.mxu0 %v4929
  %v8574 = vpop.f32.mrf.mxu0
  %v8575 = vadd.f32 %v8286, %v8574
  %v8576 = vpop.f32.mrf.mxu0
  %v8577 = vpop.f32.mrf.mxu0
  %v8578 = vadd.f32 %v8289, %v8577
  %v8579 = vpop.f32.mrf.mxu0
  %8580 = vmatprep.mubr.bf16.mxu0 %v4939
  %8581 = vmatmul.mubr.bf16.gmra.mxu0 %v4938
  %v8582 = vpop.f32.mrf.mxu0
  %v8583 = vadd.f32 %v8294, %v8582
  %v8584 = vpop.f32.mrf.mxu0
  %v8585 = vpop.f32.mrf.mxu0
  %v8586 = vadd.f32 %v8297, %v8585
  %v8587 = vpop.f32.mrf.mxu0
  %8588 = vmatprep.mubr.bf16.mxu0 %v4948
  %8589 = vmatmul.mubr.bf16.gmra.mxu0 %v4947
  %v8590 = vpop.f32.mrf.mxu0
  %v8591 = vadd.f32 %v8302, %v8590
  %v8592 = vpop.f32.mrf.mxu0
  %v8593 = vpop.f32.mrf.mxu0
  %v8594 = vadd.f32 %v8305, %v8593
  %v8595 = vpop.f32.mrf.mxu0
  %8596 = vdwg.mxu0
  %8597 = vmatprep.subr.bf16.mxu0 0
  %8598 = vmatpush1.bf16.msra.mxu0 %v6293
  %8599 = vmatprep.subr.bf16.mxu0 0
  %8600 = vmatpush1.bf16.msra.mxu0 %v6292
  %8601 = vmatprep.subr.bf16.mxu0 0
  %8602 = vmatpush1.bf16.msra.mxu0 %v6291
  %8603 = vmatprep.subr.bf16.mxu0 0
  %8604 = vmatpush1.bf16.msra.mxu0 %v6290
  %8605 = vmatprep.subr.bf16.mxu0 0
  %8606 = vmatpush1.bf16.msra.mxu0 %v6289
  %8607 = vmatprep.subr.bf16.mxu0 0
  %8608 = vmatpush1.bf16.msra.mxu0 %v6288
  %8609 = vmatprep.subr.bf16.mxu0 0
  %8610 = vmatpush1.bf16.msra.mxu0 %v6287
  %8611 = vmatprep.subr.bf16.mxu0 0
  %8612 = vmatpush1.bf16.msra.mxu0 %v6286
  %8613 = vmatprep.subr.bf16.mxu0 0
  %8614 = vmatpush2.bf16.msra.mxu0 %v6301
  %8615 = vmatprep.subr.bf16.mxu0 0
  %8616 = vmatpush2.bf16.msra.mxu0 %v6300
  %8617 = vmatprep.subr.bf16.mxu0 0
  %8618 = vmatpush2.bf16.msra.mxu0 %v6299
  %8619 = vmatprep.subr.bf16.mxu0 0
  %8620 = vmatpush2.bf16.msra.mxu0 %v6298
  %8621 = vmatprep.subr.bf16.mxu0 0
  %8622 = vmatpush2.bf16.msra.mxu0 %v6297
  %8623 = vmatprep.subr.bf16.mxu0 0
  %8624 = vmatpush2.bf16.msra.mxu0 %v6296
  %8625 = vmatprep.subr.bf16.mxu0 0
  %8626 = vmatpush2.bf16.msra.mxu0 %v6295
  %8627 = vmatprep.subr.bf16.mxu0 0
  %8628 = vmatpush2.bf16.msra.mxu0 %v6294
  %8629 = vmatprep.mubr.bf16.mxu0 %v4869
  %8630 = vmatmul.mubr.bf16.gmra.mxu0 %v4868
  %v8631 = vpop.f32.mrf.mxu0
  %v8632 = vadd.f32 %v8343, %v8631
  %v8633 = vpop.f32.mrf.mxu0
  %v8634 = vpop.f32.mrf.mxu0
  %v8635 = vadd.f32 %v8346, %v8634
  %v8636 = vpop.f32.mrf.mxu0
  %8637 = vmatprep.mubr.bf16.mxu0 %v4873
  %8638 = vmatmul.mubr.bf16.gmra.mxu0 %v4890
  %v8639 = vpop.f32.mrf.mxu0
  %v8640 = vadd.f32 %v8351, %v8639
  %v8641 = vpop.f32.mrf.mxu0
  %v8642 = vpop.f32.mrf.mxu0
  %v8643 = vadd.f32 %v8354, %v8642
  %v8644 = vpop.f32.mrf.mxu0
  %8645 = vmatprep.mubr.bf16.mxu0 %v4899
  %8646 = vmatmul.mubr.bf16.gmra.mxu0 %v4878
  %v8647 = vpop.f32.mrf.mxu0
  %v8648 = vadd.f32 %v8359, %v8647
  %v8649 = vpop.f32.mrf.mxu0
  %v8650 = vpop.f32.mrf.mxu0
  %v8651 = vadd.f32 %v8362, %v8650
  %v8652 = vpop.f32.mrf.mxu0
  %8653 = vmatprep.mubr.bf16.mxu0 %v4903
  %8654 = vmatmul.mubr.bf16.gmra.mxu0 %v4898
  %v8655 = vpop.f32.mrf.mxu0
  %v8656 = vadd.f32 %v8367, %v8655
  %v8657 = vpop.f32.mrf.mxu0
  %v8658 = vpop.f32.mrf.mxu0
  %v8659 = vadd.f32 %v8370, %v8658
  %v8660 = vpop.f32.mrf.mxu0
  %8661 = vmatprep.mubr.bf16.mxu0 %v4917
  %8662 = vmatmul.mubr.bf16.gmra.mxu0 %v4908
  %v8663 = vpop.f32.mrf.mxu0
  %v8664 = vadd.f32 %v8375, %v8663
  %v8665 = vpop.f32.mrf.mxu0
  %v8666 = vpop.f32.mrf.mxu0
  %v8667 = vadd.f32 %v8378, %v8666
  %v8668 = vpop.f32.mrf.mxu0
  %8669 = vmatprep.mubr.bf16.mxu0 %v4921
  %8670 = vmatmul.mubr.bf16.gmra.mxu0 %v4916
  %v8671 = vpop.f32.mrf.mxu0
  %v8672 = vadd.f32 %v8383, %v8671
  %v8673 = vpop.f32.mrf.mxu0
  %v8674 = vpop.f32.mrf.mxu0
  %v8675 = vadd.f32 %v8386, %v8674
  %v8676 = vpop.f32.mrf.mxu0
  %8677 = vmatprep.mubr.bf16.mxu0 %v4935
  %8678 = vmatmul.mubr.bf16.gmra.mxu0 %v4926
  %v8679 = vpop.f32.mrf.mxu0
  %v8680 = vadd.f32 %v8391, %v8679
  %v8681 = vpop.f32.mrf.mxu0
  %v8682 = vpop.f32.mrf.mxu0
  %v8683 = vadd.f32 %v8394, %v8682
  %v8684 = vpop.f32.mrf.mxu0
  %8685 = vmatprep.mubr.bf16.mxu0 %v4939
  %8686 = vmatmul.mubr.bf16.gmra.mxu0 %v4934
  %v8687 = vpop.f32.mrf.mxu0
  %v8688 = vadd.f32 %v8399, %v8687
  %v8689 = vpop.f32.mrf.mxu0
  %v8690 = vpop.f32.mrf.mxu0
  %v8691 = vadd.f32 %v8402, %v8690
  %v8692 = vpop.f32.mrf.mxu0
  %8693 = vmatprep.mubr.bf16.mxu0 %v4870
  %8694 = vmatmul.mubr.bf16.gmra.mxu0 %v4887
  %v8695 = vpop.f32.mrf.mxu0
  %v8696 = vadd.f32 %v8407, %v8695
  %v8697 = vpop.f32.mrf.mxu0
  %v8698 = vpop.f32.mrf.mxu0
  %v8699 = vadd.f32 %v8410, %v8698
  %v8700 = vpop.f32.mrf.mxu0
  %8701 = vmatprep.mubr.bf16.mxu0 %v4891
  %8702 = vmatmul.mubr.bf16.gmra.mxu0 %v4955
  %v8703 = vpop.f32.mrf.mxu0
  %v8704 = vadd.f32 %v8415, %v8703
  %v8705 = vpop.f32.mrf.mxu0
  %v8706 = vpop.f32.mrf.mxu0
  %v8707 = vadd.f32 %v8418, %v8706
  %v8708 = vpop.f32.mrf.mxu0
  %8709 = vmatprep.mubr.bf16.mxu0 %v4900
  %8710 = vmatmul.mubr.bf16.gmra.mxu0 %v4895
  %v8711 = vpop.f32.mrf.mxu0
  %v8712 = vadd.f32 %v8423, %v8711
  %v8713 = vpop.f32.mrf.mxu0
  %v8714 = vpop.f32.mrf.mxu0
  %v8715 = vadd.f32 %v8426, %v8714
  %v8716 = vpop.f32.mrf.mxu0
  %8717 = vmatprep.mubr.bf16.mxu0 %v4909
  %8718 = vmatmul.mubr.bf16.gmra.mxu0 %v4957
  %v8719 = vpop.f32.mrf.mxu0
  %v8720 = vadd.f32 %v8431, %v8719
  %v8721 = vpop.f32.mrf.mxu0
  %v8722 = vpop.f32.mrf.mxu0
  %v8723 = vadd.f32 %v8434, %v8722
  %v8724 = vpop.f32.mrf.mxu0
  %8725 = vmatprep.mubr.bf16.mxu0 %v4918
  %8726 = vmatmul.mubr.bf16.gmra.mxu0 %v4913
  %v8727 = vpop.f32.mrf.mxu0
  %v8728 = vadd.f32 %v8439, %v8727
  %v8729 = vpop.f32.mrf.mxu0
  %v8730 = vpop.f32.mrf.mxu0
  %v8731 = vadd.f32 %v8442, %v8730
  %v8732 = vpop.f32.mrf.mxu0
  %8733 = vmatprep.mubr.bf16.mxu0 %v4927
  %8734 = vmatmul.mubr.bf16.gmra.mxu0 %v4959
  %v8735 = vpop.f32.mrf.mxu0
  %v8736 = vadd.f32 %v8447, %v8735
  %v8737 = vpop.f32.mrf.mxu0
  %v8738 = vpop.f32.mrf.mxu0
  %v8739 = vadd.f32 %v8450, %v8738
  %v8740 = vpop.f32.mrf.mxu0
  %8741 = vmatprep.mubr.bf16.mxu0 %v4936
  %8742 = vmatmul.mubr.bf16.gmra.mxu0 %v4931
  %v8743 = vpop.f32.mrf.mxu0
  %v8744 = vadd.f32 %v8455, %v8743
  %v8745 = vpop.f32.mrf.mxu0
  %v8746 = vpop.f32.mrf.mxu0
  %v8747 = vadd.f32 %v8458, %v8746
  %v8748 = vpop.f32.mrf.mxu0
  %8749 = vmatprep.mubr.bf16.mxu0 %v4945
  %8750 = vmatmul.mubr.bf16.gmra.mxu0 %v4961
  %v8751 = vpop.f32.mrf.mxu0
  %v8752 = vadd.f32 %v8463, %v8751
  %v8753 = vpop.f32.mrf.mxu0
  %v8754 = vpop.f32.mrf.mxu0
  %v8755 = vadd.f32 %v8466, %v8754
  %v8756 = vpop.f32.mrf.mxu0
  %8757 = vmatprep.mubr.bf16.mxu0 %v4874
  %8758 = vmatmul.mubr.bf16.gmra.mxu0 %v4873
  %v8759 = vpop.f32.mrf.mxu0
  %v8760 = vadd.f32 %v8471, %v8759
  %v8761 = vpop.f32.mrf.mxu0
  %v8762 = vpop.f32.mrf.mxu0
  %v8763 = vadd.f32 %v8474, %v8762
  %v8764 = vpop.f32.mrf.mxu0
  %8765 = vmatprep.mubr.bf16.mxu0 %v4878
  %8766 = vmatmul.mubr.bf16.gmra.mxu0 %v4894
  %v8767 = vpop.f32.mrf.mxu0
  %v8768 = vadd.f32 %v8479, %v8767
  %v8769 = vpop.f32.mrf.mxu0
  %v8770 = vpop.f32.mrf.mxu0
  %v8771 = vadd.f32 %v8482, %v8770
  %v8772 = vpop.f32.mrf.mxu0
  %8773 = vmatprep.mubr.bf16.mxu0 %v4904
  %8774 = vmatmul.mubr.bf16.gmra.mxu0 %v4903
  %v8775 = vpop.f32.mrf.mxu0
  %v8776 = vadd.f32 %v8487, %v8775
  %v8777 = vpop.f32.mrf.mxu0
  %v8778 = vpop.f32.mrf.mxu0
  %v8779 = vadd.f32 %v8490, %v8778
  %v8780 = vpop.f32.mrf.mxu0
  %8781 = vmatprep.mubr.bf16.mxu0 %v4908
  %8782 = vmatmul.mubr.bf16.gmra.mxu0 %v4912
  %v8783 = vpop.f32.mrf.mxu0
  %v8784 = vadd.f32 %v8495, %v8783
  %v8785 = vpop.f32.mrf.mxu0
  %v8786 = vpop.f32.mrf.mxu0
  %v8787 = vadd.f32 %v8498, %v8786
  %v8788 = vpop.f32.mrf.mxu0
  %8789 = vmatprep.mubr.bf16.mxu0 %v4922
  %8790 = vmatmul.mubr.bf16.gmra.mxu0 %v4921
  %v8791 = vpop.f32.mrf.mxu0
  %v8792 = vadd.f32 %v8503, %v8791
  %v8793 = vpop.f32.mrf.mxu0
  %v8794 = vpop.f32.mrf.mxu0
  %v8795 = vadd.f32 %v8506, %v8794
  %v8796 = vpop.f32.mrf.mxu0
  %8797 = vmatprep.mubr.bf16.mxu0 %v4926
  %8798 = vmatmul.mubr.bf16.gmra.mxu0 %v4930
  %v8799 = vpop.f32.mrf.mxu0
  %v8800 = vadd.f32 %v8511, %v8799
  %v8801 = vpop.f32.mrf.mxu0
  %v8802 = vpop.f32.mrf.mxu0
  %v8803 = vadd.f32 %v8514, %v8802
  %v8804 = vpop.f32.mrf.mxu0
  %8805 = vmatprep.mubr.bf16.mxu0 %v4940
  %8806 = vmatmul.mubr.bf16.gmra.mxu0 %v4939
  %v8807 = vpop.f32.mrf.mxu0
  %v8808 = vadd.f32 %v8519, %v8807
  %v8809 = vpop.f32.mrf.mxu0
  %v8810 = vpop.f32.mrf.mxu0
  %v8811 = vadd.f32 %v8522, %v8810
  %v8812 = vpop.f32.mrf.mxu0
  %8813 = vmatprep.mubr.bf16.mxu0 %v4944
  %8814 = vmatmul.mubr.bf16.gmra.mxu0 %v4948
  %v8815 = vpop.f32.mrf.mxu0
  %v8816 = vadd.f32 %v8527, %v8815
  %v8817 = vpop.f32.mrf.mxu0
  %v8818 = vpop.f32.mrf.mxu0
  %v8819 = vadd.f32 %v8530, %v8818
  %v8820 = vpop.f32.mrf.mxu0
  %8821 = vmatprep.mubr.bf16.mxu0 %v4875
  %8822 = vmatmul.mubr.bf16.gmra.mxu0 %v4891
  %v8823 = vpop.f32.mrf.mxu0
  %v8824 = vadd.f32 %v8535, %v8823
  %v8825 = vpop.f32.mrf.mxu0
  %v8826 = vpop.f32.mrf.mxu0
  %v8827 = vadd.f32 %v8538, %v8826
  %v8828 = vpop.f32.mrf.mxu0
  %8829 = vmatprep.mubr.bf16.mxu0 %v4895
  %8830 = vmatmul.mubr.bf16.gmra.mxu0 %v4956
  %v8831 = vpop.f32.mrf.mxu0
  %v8832 = vadd.f32 %v8543, %v8831
  %v8833 = vpop.f32.mrf.mxu0
  %v8834 = vpop.f32.mrf.mxu0
  %v8835 = vadd.f32 %v8546, %v8834
  %v8836 = vpop.f32.mrf.mxu0
  %8837 = vmatprep.mubr.bf16.mxu0 %v4905
  %8838 = vmatmul.mubr.bf16.gmra.mxu0 %v4909
  %v8839 = vpop.f32.mrf.mxu0
  %v8840 = vadd.f32 %v8551, %v8839
  %v8841 = vpop.f32.mrf.mxu0
  %v8842 = vpop.f32.mrf.mxu0
  %v8843 = vadd.f32 %v8554, %v8842
  %v8844 = vpop.f32.mrf.mxu0
  %8845 = vmatprep.mubr.bf16.mxu0 %v4913
  %8846 = vmatmul.mubr.bf16.gmra.mxu0 %v4958
  %v8847 = vpop.f32.mrf.mxu0
  %v8848 = vadd.f32 %v8559, %v8847
  %v8849 = vpop.f32.mrf.mxu0
  %v8850 = vpop.f32.mrf.mxu0
  %v8851 = vadd.f32 %v8562, %v8850
  %v8852 = vpop.f32.mrf.mxu0
  %8853 = vmatprep.mubr.bf16.mxu0 %v4923
  %8854 = vmatmul.mubr.bf16.gmra.mxu0 %v4927
  %v8855 = vpop.f32.mrf.mxu0
  %v8856 = vadd.f32 %v8567, %v8855
  %v8857 = vpop.f32.mrf.mxu0
  %v8858 = vpop.f32.mrf.mxu0
  %v8859 = vadd.f32 %v8570, %v8858
  %v8860 = vpop.f32.mrf.mxu0
  %8861 = vmatprep.mubr.bf16.mxu0 %v4931
  %8862 = vmatmul.mubr.bf16.gmra.mxu0 %v4960
  %v8863 = vpop.f32.mrf.mxu0
  %v8864 = vadd.f32 %v8575, %v8863
  %v8865 = vpop.f32.mrf.mxu0
  %v8866 = vpop.f32.mrf.mxu0
  %v8867 = vadd.f32 %v8578, %v8866
  %v8868 = vpop.f32.mrf.mxu0
  %8869 = vmatprep.mubr.bf16.mxu0 %v4941
  %8870 = vmatmul.mubr.bf16.gmra.mxu0 %v4945
  %v8871 = vpop.f32.mrf.mxu0
  %v8872 = vadd.f32 %v8583, %v8871
  %v8873 = vpop.f32.mrf.mxu0
  %v8874 = vpop.f32.mrf.mxu0
  %v8875 = vadd.f32 %v8586, %v8874
  %v8876 = vpop.f32.mrf.mxu0
  %8877 = vmatprep.mubr.bf16.mxu0 %v4949
  %8878 = vmatmul.mubr.bf16.gmra.mxu0 %v4962
  %v8879 = vpop.f32.mrf.mxu0
  %v8880 = vadd.f32 %v8591, %v8879
  %v8881 = vpop.f32.mrf.mxu0
  %v8882 = vpop.f32.mrf.mxu0
  %v8883 = vadd.f32 %v8594, %v8882
  %v8884 = vpop.f32.mrf.mxu0
  %8885 = vdwg.mxu0
  %8886 = vmatprep.subr.bf16.mxu0 0
  %8887 = vmatpush1.bf16.msra.mxu0 %v6309
  %8888 = vmatprep.subr.bf16.mxu0 0
  %8889 = vmatpush1.bf16.msra.mxu0 %v6308
  %8890 = vmatprep.subr.bf16.mxu0 0
  %8891 = vmatpush1.bf16.msra.mxu0 %v6307
  %8892 = vmatprep.subr.bf16.mxu0 0
  %8893 = vmatpush1.bf16.msra.mxu0 %v6306
  %8894 = vmatprep.subr.bf16.mxu0 0
  %8895 = vmatpush1.bf16.msra.mxu0 %v6305
  %8896 = vmatprep.subr.bf16.mxu0 0
  %8897 = vmatpush1.bf16.msra.mxu0 %v6304
  %8898 = vmatprep.subr.bf16.mxu0 0
  %8899 = vmatpush1.bf16.msra.mxu0 %v6303
  %8900 = vmatprep.subr.bf16.mxu0 0
  %8901 = vmatpush1.bf16.msra.mxu0 %v6302
  %8902 = vmatprep.subr.bf16.mxu0 0
  %8903 = vmatpush2.bf16.msra.mxu0 %v6317
  %8904 = vmatprep.subr.bf16.mxu0 0
  %8905 = vmatpush2.bf16.msra.mxu0 %v6316
  %8906 = vmatprep.subr.bf16.mxu0 0
  %8907 = vmatpush2.bf16.msra.mxu0 %v6315
  %8908 = vmatprep.subr.bf16.mxu0 0
  %8909 = vmatpush2.bf16.msra.mxu0 %v6314
  %8910 = vmatprep.subr.bf16.mxu0 0
  %8911 = vmatpush2.bf16.msra.mxu0 %v6313
  %8912 = vmatprep.subr.bf16.mxu0 0
  %8913 = vmatpush2.bf16.msra.mxu0 %v6312
  %8914 = vmatprep.subr.bf16.mxu0 0
  %8915 = vmatpush2.bf16.msra.mxu0 %v6311
  %8916 = vmatprep.subr.bf16.mxu0 0
  %8917 = vmatpush2.bf16.msra.mxu0 %v6310
  %8918 = vmatprep.mubr.bf16.mxu0 %v4871
  %8919 = vmatmul.mubr.bf16.gmra.mxu0 %v4870
  %v8920 = vpop.f32.mrf.mxu0
  %v8921 = vadd.f32 %v8632, %v8920
  %v8922 = vpop.f32.mrf.mxu0
  %v8923 = vpop.f32.mrf.mxu0
  %v8924 = vadd.f32 %v8635, %v8923
  %v8925 = vpop.f32.mrf.mxu0
  %8926 = vmatprep.mubr.bf16.mxu0 %v4892
  %8927 = vmatmul.mubr.bf16.gmra.mxu0 %v4891
  %v8928 = vpop.f32.mrf.mxu0
  %v8929 = vadd.f32 %v8640, %v8928
  %v8930 = vpop.f32.mrf.mxu0
  %v8931 = vpop.f32.mrf.mxu0
  %v8932 = vadd.f32 %v8643, %v8931
  %v8933 = vpop.f32.mrf.mxu0
  %8934 = vmatprep.mubr.bf16.mxu0 %v4901
  %8935 = vmatmul.mubr.bf16.gmra.mxu0 %v4900
  %v8936 = vpop.f32.mrf.mxu0
  %v8937 = vadd.f32 %v8648, %v8936
  %v8938 = vpop.f32.mrf.mxu0
  %v8939 = vpop.f32.mrf.mxu0
  %v8940 = vadd.f32 %v8651, %v8939
  %v8941 = vpop.f32.mrf.mxu0
  %8942 = vmatprep.mubr.bf16.mxu0 %v4910
  %8943 = vmatmul.mubr.bf16.gmra.mxu0 %v4909
  %v8944 = vpop.f32.mrf.mxu0
  %v8945 = vadd.f32 %v8656, %v8944
  %v8946 = vpop.f32.mrf.mxu0
  %v8947 = vpop.f32.mrf.mxu0
  %v8948 = vadd.f32 %v8659, %v8947
  %v8949 = vpop.f32.mrf.mxu0
  %8950 = vmatprep.mubr.bf16.mxu0 %v4919
  %8951 = vmatmul.mubr.bf16.gmra.mxu0 %v4918
  %v8952 = vpop.f32.mrf.mxu0
  %v8953 = vadd.f32 %v8664, %v8952
  %v8954 = vpop.f32.mrf.mxu0
  %v8955 = vpop.f32.mrf.mxu0
  %v8956 = vadd.f32 %v8667, %v8955
  %v8957 = vpop.f32.mrf.mxu0
  %8958 = vmatprep.mubr.bf16.mxu0 %v4928
  %8959 = vmatmul.mubr.bf16.gmra.mxu0 %v4927
  %v8960 = vpop.f32.mrf.mxu0
  %v8961 = vadd.f32 %v8672, %v8960
  %v8962 = vpop.f32.mrf.mxu0
  %v8963 = vpop.f32.mrf.mxu0
  %v8964 = vadd.f32 %v8675, %v8963
  %v8965 = vpop.f32.mrf.mxu0
  %8966 = vmatprep.mubr.bf16.mxu0 %v4937
  %8967 = vmatmul.mubr.bf16.gmra.mxu0 %v4936
  %v8968 = vpop.f32.mrf.mxu0
  %v8969 = vadd.f32 %v8680, %v8968
  %v8970 = vpop.f32.mrf.mxu0
  %v8971 = vpop.f32.mrf.mxu0
  %v8972 = vadd.f32 %v8683, %v8971
  %v8973 = vpop.f32.mrf.mxu0
  %8974 = vmatprep.mubr.bf16.mxu0 %v4946
  %8975 = vmatmul.mubr.bf16.gmra.mxu0 %v4945
  %v8976 = vpop.f32.mrf.mxu0
  %v8977 = vadd.f32 %v8688, %v8976
  %v8978 = vpop.f32.mrf.mxu0
  %v8979 = vpop.f32.mrf.mxu0
  %v8980 = vadd.f32 %v8691, %v8979
  %v8981 = vpop.f32.mrf.mxu0
  %8982 = vmatprep.mubr.bf16.mxu0 %v4872
  %8983 = vmatmul.mubr.bf16.gmra.mxu0 %v4871
  %v8984 = vpop.f32.mrf.mxu0
  %v8985 = vadd.f32 %v8696, %v8984
  %v8986 = vpop.f32.mrf.mxu0
  %v8987 = vpop.f32.mrf.mxu0
  %v8988 = vadd.f32 %v8699, %v8987
  %v8989 = vpop.f32.mrf.mxu0
  %8990 = vmatprep.mubr.bf16.mxu0 %v4893
  %8991 = vmatmul.mubr.bf16.gmra.mxu0 %v4892
  %v8992 = vpop.f32.mrf.mxu0
  %v8993 = vadd.f32 %v8704, %v8992
  %v8994 = vpop.f32.mrf.mxu0
  %v8995 = vpop.f32.mrf.mxu0
  %v8996 = vadd.f32 %v8707, %v8995
  %v8997 = vpop.f32.mrf.mxu0
  %8998 = vmatprep.mubr.bf16.mxu0 %v4902
  %8999 = vmatmul.mubr.bf16.gmra.mxu0 %v4901
  %v9000 = vpop.f32.mrf.mxu0
  %v9001 = vadd.f32 %v8712, %v9000
  %v9002 = vpop.f32.mrf.mxu0
  %v9003 = vpop.f32.mrf.mxu0
  %v9004 = vadd.f32 %v8715, %v9003
  %v9005 = vpop.f32.mrf.mxu0
  %9006 = vmatprep.mubr.bf16.mxu0 %v4911
  %9007 = vmatmul.mubr.bf16.gmra.mxu0 %v4910
  %v9008 = vpop.f32.mrf.mxu0
  %v9009 = vadd.f32 %v8720, %v9008
  %v9010 = vpop.f32.mrf.mxu0
  %v9011 = vpop.f32.mrf.mxu0
  %v9012 = vadd.f32 %v8723, %v9011
  %v9013 = vpop.f32.mrf.mxu0
  %9014 = vmatprep.mubr.bf16.mxu0 %v4920
  %9015 = vmatmul.mubr.bf16.gmra.mxu0 %v4919
  %v9016 = vpop.f32.mrf.mxu0
  %v9017 = vadd.f32 %v8728, %v9016
  %v9018 = vpop.f32.mrf.mxu0
  %v9019 = vpop.f32.mrf.mxu0
  %v9020 = vadd.f32 %v8731, %v9019
  %v9021 = vpop.f32.mrf.mxu0
  %9022 = vmatprep.mubr.bf16.mxu0 %v4929
  %9023 = vmatmul.mubr.bf16.gmra.mxu0 %v4928
  %v9024 = vpop.f32.mrf.mxu0
  %v9025 = vadd.f32 %v8736, %v9024
  %v9026 = vpop.f32.mrf.mxu0
  %v9027 = vpop.f32.mrf.mxu0
  %v9028 = vadd.f32 %v8739, %v9027
  %v9029 = vpop.f32.mrf.mxu0
  %9030 = vmatprep.mubr.bf16.mxu0 %v4938
  %9031 = vmatmul.mubr.bf16.gmra.mxu0 %v4937
  %v9032 = vpop.f32.mrf.mxu0
  %v9033 = vadd.f32 %v8744, %v9032
  %v9034 = vpop.f32.mrf.mxu0
  %v9035 = vpop.f32.mrf.mxu0
  %v9036 = vadd.f32 %v8747, %v9035
  %v9037 = vpop.f32.mrf.mxu0
  %9038 = vmatprep.mubr.bf16.mxu0 %v4947
  %9039 = vmatmul.mubr.bf16.gmra.mxu0 %v4946
  %v9040 = vpop.f32.mrf.mxu0
  %v9041 = vadd.f32 %v8752, %v9040
  %v9042 = vpop.f32.mrf.mxu0
  %v9043 = vpop.f32.mrf.mxu0
  %v9044 = vadd.f32 %v8755, %v9043
  %v9045 = vpop.f32.mrf.mxu0
  %9046 = vmatprep.mubr.bf16.mxu0 %v4876
  %9047 = vmatmul.mubr.bf16.gmra.mxu0 %v4875
  %v9048 = vpop.f32.mrf.mxu0
  %v9049 = vadd.f32 %v8760, %v9048
  %v9050 = vpop.f32.mrf.mxu0
  %v9051 = vpop.f32.mrf.mxu0
  %v9052 = vadd.f32 %v8763, %v9051
  %v9053 = vpop.f32.mrf.mxu0
  %9054 = vmatprep.mubr.bf16.mxu0 %v4896
  %9055 = vmatmul.mubr.bf16.gmra.mxu0 %v4895
  %v9056 = vpop.f32.mrf.mxu0
  %v9057 = vadd.f32 %v8768, %v9056
  %v9058 = vpop.f32.mrf.mxu0
  %v9059 = vpop.f32.mrf.mxu0
  %v9060 = vadd.f32 %v8771, %v9059
  %v9061 = vpop.f32.mrf.mxu0
  %9062 = vmatprep.mubr.bf16.mxu0 %v4906
  %9063 = vmatmul.mubr.bf16.gmra.mxu0 %v4905
  %v9064 = vpop.f32.mrf.mxu0
  %v9065 = vadd.f32 %v8776, %v9064
  %v9066 = vpop.f32.mrf.mxu0
  %v9067 = vpop.f32.mrf.mxu0
  %v9068 = vadd.f32 %v8779, %v9067
  %v9069 = vpop.f32.mrf.mxu0
  %9070 = vmatprep.mubr.bf16.mxu0 %v4914
  %9071 = vmatmul.mubr.bf16.gmra.mxu0 %v4913
  %v9072 = vpop.f32.mrf.mxu0
  %v9073 = vadd.f32 %v8784, %v9072
  %v9074 = vpop.f32.mrf.mxu0
  %v9075 = vpop.f32.mrf.mxu0
  %v9076 = vadd.f32 %v8787, %v9075
  %v9077 = vpop.f32.mrf.mxu0
  %9078 = vmatprep.mubr.bf16.mxu0 %v4924
  %9079 = vmatmul.mubr.bf16.gmra.mxu0 %v4923
  %v9080 = vpop.f32.mrf.mxu0
  %v9081 = vadd.f32 %v8792, %v9080
  %v9082 = vpop.f32.mrf.mxu0
  %v9083 = vpop.f32.mrf.mxu0
  %v9084 = vadd.f32 %v8795, %v9083
  %v9085 = vpop.f32.mrf.mxu0
  %9086 = vmatprep.mubr.bf16.mxu0 %v4932
  %9087 = vmatmul.mubr.bf16.gmra.mxu0 %v4931
  %v9088 = vpop.f32.mrf.mxu0
  %v9089 = vadd.f32 %v8800, %v9088
  %v9090 = vpop.f32.mrf.mxu0
  %v9091 = vpop.f32.mrf.mxu0
  %v9092 = vadd.f32 %v8803, %v9091
  %v9093 = vpop.f32.mrf.mxu0
  %9094 = vmatprep.mubr.bf16.mxu0 %v4942
  %9095 = vmatmul.mubr.bf16.gmra.mxu0 %v4941
  %v9096 = vpop.f32.mrf.mxu0
  %v9097 = vadd.f32 %v8808, %v9096
  %v9098 = vpop.f32.mrf.mxu0
  %v9099 = vpop.f32.mrf.mxu0
  %v9100 = vadd.f32 %v8811, %v9099
  %v9101 = vpop.f32.mrf.mxu0
  %9102 = vmatprep.mubr.bf16.mxu0 %v4950
  %9103 = vmatmul.mubr.bf16.gmra.mxu0 %v4949
  %v9104 = vpop.f32.mrf.mxu0
  %v9105 = vadd.f32 %v8816, %v9104
  %v9106 = vpop.f32.mrf.mxu0
  %v9107 = vpop.f32.mrf.mxu0
  %v9108 = vadd.f32 %v8819, %v9107
  %v9109 = vpop.f32.mrf.mxu0
  %9110 = vmatprep.mubr.bf16.mxu0 %v4877
  %9111 = vmatmul.mubr.bf16.gmra.mxu0 %v4876
  %v9112 = vpop.f32.mrf.mxu0
  %v9113 = vadd.f32 %v8824, %v9112
  %v9114 = vpop.f32.mrf.mxu0
  %v9115 = vpop.f32.mrf.mxu0
  %v9116 = vadd.f32 %v8827, %v9115
  %v9117 = vpop.f32.mrf.mxu0
  %9118 = vmatprep.mubr.bf16.mxu0 %v4897
  %9119 = vmatmul.mubr.bf16.gmra.mxu0 %v4896
  %v9120 = vpop.f32.mrf.mxu0
  %v9121 = vadd.f32 %v8832, %v9120
  %v9122 = vpop.f32.mrf.mxu0
  %v9123 = vpop.f32.mrf.mxu0
  %v9124 = vadd.f32 %v8835, %v9123
  %v9125 = vpop.f32.mrf.mxu0
  %9126 = vmatprep.mubr.bf16.mxu0 %v4907
  %9127 = vmatmul.mubr.bf16.gmra.mxu0 %v4906
  %v9128 = vpop.f32.mrf.mxu0
  %v9129 = vadd.f32 %v8840, %v9128
  %v9130 = vpop.f32.mrf.mxu0
  %v9131 = vpop.f32.mrf.mxu0
  %v9132 = vadd.f32 %v8843, %v9131
  %v9133 = vpop.f32.mrf.mxu0
  %9134 = vmatprep.mubr.bf16.mxu0 %v4915
  %9135 = vmatmul.mubr.bf16.gmra.mxu0 %v4914
  %v9136 = vpop.f32.mrf.mxu0
  %v9137 = vadd.f32 %v8848, %v9136
  %v9138 = vpop.f32.mrf.mxu0
  %v9139 = vpop.f32.mrf.mxu0
  %v9140 = vadd.f32 %v8851, %v9139
  %v9141 = vpop.f32.mrf.mxu0
  %9142 = vmatprep.mubr.bf16.mxu0 %v4925
  %9143 = vmatmul.mubr.bf16.gmra.mxu0 %v4924
  %v9144 = vpop.f32.mrf.mxu0
  %v9145 = vadd.f32 %v8856, %v9144
  %v9146 = vpop.f32.mrf.mxu0
  %v9147 = vpop.f32.mrf.mxu0
  %v9148 = vadd.f32 %v8859, %v9147
  %v9149 = vpop.f32.mrf.mxu0
  %9150 = vmatprep.mubr.bf16.mxu0 %v4933
  %9151 = vmatmul.mubr.bf16.gmra.mxu0 %v4932
  %v9152 = vpop.f32.mrf.mxu0
  %v9153 = vadd.f32 %v8864, %v9152
  %v9154 = vpop.f32.mrf.mxu0
  %v9155 = vpop.f32.mrf.mxu0
  %v9156 = vadd.f32 %v8867, %v9155
  %v9157 = vpop.f32.mrf.mxu0
  %9158 = vmatprep.mubr.bf16.mxu0 %v4943
  %9159 = vmatmul.mubr.bf16.gmra.mxu0 %v4942
  %v9160 = vpop.f32.mrf.mxu0
  %v9161 = vadd.f32 %v8872, %v9160
  %v9162 = vpop.f32.mrf.mxu0
  %v9163 = vpop.f32.mrf.mxu0
  %v9164 = vadd.f32 %v8875, %v9163
  %v9165 = vpop.f32.mrf.mxu0
  %9166 = vmatprep.mubr.bf16.mxu0 %v4951
  %9167 = vmatmul.mubr.bf16.gmra.mxu0 %v4950
  %v9168 = vpop.f32.mrf.mxu0
  %v9169 = vadd.f32 %v8880, %v9168
  %v9170 = vpop.f32.mrf.mxu0
  %v9171 = vpop.f32.mrf.mxu0
  %v9172 = vadd.f32 %v8883, %v9171
  %v9173 = vpop.f32.mrf.mxu0
  %9174 = vdwg.mxu0
  %9175 = vmatprep.subr.bf16.mxu0 0
  %9176 = vmatpush1.bf16.msra.mxu0 %v6325
  %9177 = vmatprep.subr.bf16.mxu0 0
  %9178 = vmatpush1.bf16.msra.mxu0 %v6324
  %9179 = vmatprep.subr.bf16.mxu0 0
  %9180 = vmatpush1.bf16.msra.mxu0 %v6323
  %9181 = vmatprep.subr.bf16.mxu0 0
  %9182 = vmatpush1.bf16.msra.mxu0 %v6322
  %9183 = vmatprep.subr.bf16.mxu0 0
  %9184 = vmatpush1.bf16.msra.mxu0 %v6321
  %9185 = vmatprep.subr.bf16.mxu0 0
  %9186 = vmatpush1.bf16.msra.mxu0 %v6320
  %9187 = vmatprep.subr.bf16.mxu0 0
  %9188 = vmatpush1.bf16.msra.mxu0 %v6319
  %9189 = vmatprep.subr.bf16.mxu0 0
  %9190 = vmatpush1.bf16.msra.mxu0 %v6318
  %9191 = vmatprep.subr.bf16.mxu0 0
  %9192 = vmatpush2.bf16.msra.mxu0 %v6333
  %9193 = vmatprep.subr.bf16.mxu0 0
  %9194 = vmatpush2.bf16.msra.mxu0 %v6332
  %9195 = vmatprep.subr.bf16.mxu0 0
  %9196 = vmatpush2.bf16.msra.mxu0 %v6331
  %9197 = vmatprep.subr.bf16.mxu0 0
  %9198 = vmatpush2.bf16.msra.mxu0 %v6330
  %9199 = vmatprep.subr.bf16.mxu0 0
  %9200 = vmatpush2.bf16.msra.mxu0 %v6329
  %9201 = vmatprep.subr.bf16.mxu0 0
  %9202 = vmatpush2.bf16.msra.mxu0 %v6328
  %9203 = vmatprep.subr.bf16.mxu0 0
  %9204 = vmatpush2.bf16.msra.mxu0 %v6327
  %9205 = vmatprep.subr.bf16.mxu0 0
  %9206 = vmatpush2.bf16.msra.mxu0 %v6326
  %9207 = vmatprep.mubr.bf16.mxu0 %v4873
  %9208 = vmatmul.mubr.bf16.gmra.mxu0 %v4872
  %v9209 = vpop.f32.mrf.mxu0
  %v9210 = vadd.f32 %v8921, %v9209
  %v9211 = vpop.f32.mrf.mxu0
  %v9212 = vpop.f32.mrf.mxu0
  %v9213 = vadd.f32 %v8924, %v9212
  %v9214 = vpop.f32.mrf.mxu0
  %9215 = vmatprep.mubr.bf16.mxu0 %v4894
  %9216 = vmatmul.mubr.bf16.gmra.mxu0 %v4893
  %v9217 = vpop.f32.mrf.mxu0
  %v9218 = vadd.f32 %v8929, %v9217
  %v9219 = vpop.f32.mrf.mxu0
  %v9220 = vpop.f32.mrf.mxu0
  %v9221 = vadd.f32 %v8932, %v9220
  %v9222 = vpop.f32.mrf.mxu0
  %9223 = vmatprep.mubr.bf16.mxu0 %v4903
  %9224 = vmatmul.mubr.bf16.gmra.mxu0 %v4902
  %v9225 = vpop.f32.mrf.mxu0
  %v9226 = vadd.f32 %v8937, %v9225
  %v9227 = vpop.f32.mrf.mxu0
  %v9228 = vpop.f32.mrf.mxu0
  %v9229 = vadd.f32 %v8940, %v9228
  %v9230 = vpop.f32.mrf.mxu0
  %9231 = vmatprep.mubr.bf16.mxu0 %v4912
  %9232 = vmatmul.mubr.bf16.gmra.mxu0 %v4911
  %v9233 = vpop.f32.mrf.mxu0
  %v9234 = vadd.f32 %v8945, %v9233
  %v9235 = vpop.f32.mrf.mxu0
  %v9236 = vpop.f32.mrf.mxu0
  %v9237 = vadd.f32 %v8948, %v9236
  %v9238 = vpop.f32.mrf.mxu0
  %9239 = vmatprep.mubr.bf16.mxu0 %v4921
  %9240 = vmatmul.mubr.bf16.gmra.mxu0 %v4920
  %v9241 = vpop.f32.mrf.mxu0
  %v9242 = vadd.f32 %v8953, %v9241
  %v9243 = vpop.f32.mrf.mxu0
  %v9244 = vpop.f32.mrf.mxu0
  %v9245 = vadd.f32 %v8956, %v9244
  %v9246 = vpop.f32.mrf.mxu0
  %9247 = vmatprep.mubr.bf16.mxu0 %v4930
  %9248 = vmatmul.mubr.bf16.gmra.mxu0 %v4929
  %v9249 = vpop.f32.mrf.mxu0
  %v9250 = vadd.f32 %v8961, %v9249
  %v9251 = vpop.f32.mrf.mxu0
  %v9252 = vpop.f32.mrf.mxu0
  %v9253 = vadd.f32 %v8964, %v9252
  %v9254 = vpop.f32.mrf.mxu0
  %9255 = vmatprep.mubr.bf16.mxu0 %v4939
  %9256 = vmatmul.mubr.bf16.gmra.mxu0 %v4938
  %v9257 = vpop.f32.mrf.mxu0
  %v9258 = vadd.f32 %v8969, %v9257
  %v9259 = vpop.f32.mrf.mxu0
  %v9260 = vpop.f32.mrf.mxu0
  %v9261 = vadd.f32 %v8972, %v9260
  %v9262 = vpop.f32.mrf.mxu0
  %9263 = vmatprep.mubr.bf16.mxu0 %v4948
  %9264 = vmatmul.mubr.bf16.gmra.mxu0 %v4947
  %v9265 = vpop.f32.mrf.mxu0
  %v9266 = vadd.f32 %v8977, %v9265
  %v9267 = vpop.f32.mrf.mxu0
  %v9268 = vpop.f32.mrf.mxu0
  %v9269 = vadd.f32 %v8980, %v9268
  %v9270 = vpop.f32.mrf.mxu0
  %9271 = vmatprep.mubr.bf16.mxu0 %v4891
  %9272 = vmatmul.mubr.bf16.gmra.mxu0 %v4873
  %v9273 = vpop.f32.mrf.mxu0
  %v9274 = vadd.f32 %v8985, %v9273
  %v9275 = vpop.f32.mrf.mxu0
  %v9276 = vpop.f32.mrf.mxu0
  %v9277 = vadd.f32 %v8988, %v9276
  %v9278 = vpop.f32.mrf.mxu0
  %9279 = vmatprep.mubr.bf16.mxu0 %v4956
  %9280 = vmatmul.mubr.bf16.gmra.mxu0 %v4894
  %v9281 = vpop.f32.mrf.mxu0
  %v9282 = vadd.f32 %v8993, %v9281
  %v9283 = vpop.f32.mrf.mxu0
  %v9284 = vpop.f32.mrf.mxu0
  %v9285 = vadd.f32 %v8996, %v9284
  %v9286 = vpop.f32.mrf.mxu0
  %9287 = vmatprep.mubr.bf16.mxu0 %v4909
  %9288 = vmatmul.mubr.bf16.gmra.mxu0 %v4903
  %v9289 = vpop.f32.mrf.mxu0
  %v9290 = vadd.f32 %v9001, %v9289
  %v9291 = vpop.f32.mrf.mxu0
  %v9292 = vpop.f32.mrf.mxu0
  %v9293 = vadd.f32 %v9004, %v9292
  %v9294 = vpop.f32.mrf.mxu0
  %9295 = vmatprep.mubr.bf16.mxu0 %v4958
  %9296 = vmatmul.mubr.bf16.gmra.mxu0 %v4912
  %v9297 = vpop.f32.mrf.mxu0
  %v9298 = vadd.f32 %v9009, %v9297
  %v9299 = vpop.f32.mrf.mxu0
  %v9300 = vpop.f32.mrf.mxu0
  %v9301 = vadd.f32 %v9012, %v9300
  %v9302 = vpop.f32.mrf.mxu0
  %9303 = vmatprep.mubr.bf16.mxu0 %v4927
  %9304 = vmatmul.mubr.bf16.gmra.mxu0 %v4921
  %v9305 = vpop.f32.mrf.mxu0
  %v9306 = vadd.f32 %v9017, %v9305
  %v9307 = vpop.f32.mrf.mxu0
  %v9308 = vpop.f32.mrf.mxu0
  %v9309 = vadd.f32 %v9020, %v9308
  %v9310 = vpop.f32.mrf.mxu0
  %9311 = vmatprep.mubr.bf16.mxu0 %v4960
  %9312 = vmatmul.mubr.bf16.gmra.mxu0 %v4930
  %v9313 = vpop.f32.mrf.mxu0
  %v9314 = vadd.f32 %v9025, %v9313
  %v9315 = vpop.f32.mrf.mxu0
  %v9316 = vpop.f32.mrf.mxu0
  %v9317 = vadd.f32 %v9028, %v9316
  %v9318 = vpop.f32.mrf.mxu0
  %9319 = vmatprep.mubr.bf16.mxu0 %v4945
  %9320 = vmatmul.mubr.bf16.gmra.mxu0 %v4939
  %v9321 = vpop.f32.mrf.mxu0
  %v9322 = vadd.f32 %v9033, %v9321
  %v9323 = vpop.f32.mrf.mxu0
  %v9324 = vpop.f32.mrf.mxu0
  %v9325 = vadd.f32 %v9036, %v9324
  %v9326 = vpop.f32.mrf.mxu0
  %9327 = vmatprep.mubr.bf16.mxu0 %v4962
  %9328 = vmatmul.mubr.bf16.gmra.mxu0 %v4948
  %v9329 = vpop.f32.mrf.mxu0
  %v9330 = vadd.f32 %v9041, %v9329
  %v9331 = vpop.f32.mrf.mxu0
  %v9332 = vpop.f32.mrf.mxu0
  %v9333 = vadd.f32 %v9044, %v9332
  %v9334 = vpop.f32.mrf.mxu0
  %9335 = vmatprep.mubr.bf16.mxu0 %v4878
  %9336 = vmatmul.mubr.bf16.gmra.mxu0 %v4877
  %v9337 = vpop.f32.mrf.mxu0
  %v9338 = vadd.f32 %v9049, %v9337
  %v9339 = vpop.f32.mrf.mxu0
  %v9340 = vpop.f32.mrf.mxu0
  %v9341 = vadd.f32 %v9052, %v9340
  %v9342 = vpop.f32.mrf.mxu0
  %9343 = vmatprep.mubr.bf16.mxu0 %v4898
  %9344 = vmatmul.mubr.bf16.gmra.mxu0 %v4897
  %v9345 = vpop.f32.mrf.mxu0
  %v9346 = vadd.f32 %v9057, %v9345
  %v9347 = vpop.f32.mrf.mxu0
  %v9348 = vpop.f32.mrf.mxu0
  %v9349 = vadd.f32 %v9060, %v9348
  %v9350 = vpop.f32.mrf.mxu0
  %9351 = vmatprep.mubr.bf16.mxu0 %v4908
  %9352 = vmatmul.mubr.bf16.gmra.mxu0 %v4907
  %v9353 = vpop.f32.mrf.mxu0
  %v9354 = vadd.f32 %v9065, %v9353
  %v9355 = vpop.f32.mrf.mxu0
  %v9356 = vpop.f32.mrf.mxu0
  %v9357 = vadd.f32 %v9068, %v9356
  %v9358 = vpop.f32.mrf.mxu0
  %9359 = vmatprep.mubr.bf16.mxu0 %v4916
  %9360 = vmatmul.mubr.bf16.gmra.mxu0 %v4915
  %v9361 = vpop.f32.mrf.mxu0
  %v9362 = vadd.f32 %v9073, %v9361
  %v9363 = vpop.f32.mrf.mxu0
  %v9364 = vpop.f32.mrf.mxu0
  %v9365 = vadd.f32 %v9076, %v9364
  %v9366 = vpop.f32.mrf.mxu0
  %9367 = vmatprep.mubr.bf16.mxu0 %v4926
  %9368 = vmatmul.mubr.bf16.gmra.mxu0 %v4925
  %v9369 = vpop.f32.mrf.mxu0
  %v9370 = vadd.f32 %v9081, %v9369
  %v9371 = vpop.f32.mrf.mxu0
  %v9372 = vpop.f32.mrf.mxu0
  %v9373 = vadd.f32 %v9084, %v9372
  %v9374 = vpop.f32.mrf.mxu0
  %9375 = vmatprep.mubr.bf16.mxu0 %v4934
  %9376 = vmatmul.mubr.bf16.gmra.mxu0 %v4933
  %v9377 = vpop.f32.mrf.mxu0
  %v9378 = vadd.f32 %v9089, %v9377
  %v9379 = vpop.f32.mrf.mxu0
  %v9380 = vpop.f32.mrf.mxu0
  %v9381 = vadd.f32 %v9092, %v9380
  %v9382 = vpop.f32.mrf.mxu0
  %9383 = vmatprep.mubr.bf16.mxu0 %v4944
  %9384 = vmatmul.mubr.bf16.gmra.mxu0 %v4943
  %v9385 = vpop.f32.mrf.mxu0
  %v9386 = vadd.f32 %v9097, %v9385
  %v9387 = vpop.f32.mrf.mxu0
  %v9388 = vpop.f32.mrf.mxu0
  %v9389 = vadd.f32 %v9100, %v9388
  %v9390 = vpop.f32.mrf.mxu0
  %9391 = vmatprep.mubr.bf16.mxu0 %v4952
  %9392 = vmatmul.mubr.bf16.gmra.mxu0 %v4951
  %v9393 = vpop.f32.mrf.mxu0
  %v9394 = vadd.f32 %v9105, %v9393
  %v9395 = vpop.f32.mrf.mxu0
  %v9396 = vpop.f32.mrf.mxu0
  %v9397 = vadd.f32 %v9108, %v9396
  %v9398 = vpop.f32.mrf.mxu0
  %9399 = vmatprep.mubr.bf16.mxu0 %v4895
  %9400 = vmatmul.mubr.bf16.gmra.mxu0 %v4878
  %v9401 = vpop.f32.mrf.mxu0
  %v9402 = vadd.f32 %v9113, %v9401
  %v9403 = vpop.f32.mrf.mxu0
  %v9404 = vpop.f32.mrf.mxu0
  %v9405 = vadd.f32 %v9116, %v9404
  %v9406 = vpop.f32.mrf.mxu0
  %9407 = vmatprep.mubr.bf16.mxu0 %v4957
  %9408 = vmatmul.mubr.bf16.gmra.mxu0 %v4898
  %v9409 = vpop.f32.mrf.mxu0
  %v9410 = vadd.f32 %v9121, %v9409
  %v9411 = vpop.f32.mrf.mxu0
  %v9412 = vpop.f32.mrf.mxu0
  %v9413 = vadd.f32 %v9124, %v9412
  %v9414 = vpop.f32.mrf.mxu0
  %9415 = vmatprep.mubr.bf16.mxu0 %v4913
  %9416 = vmatmul.mubr.bf16.gmra.mxu0 %v4908
  %v9417 = vpop.f32.mrf.mxu0
  %v9418 = vadd.f32 %v9129, %v9417
  %v9419 = vpop.f32.mrf.mxu0
  %v9420 = vpop.f32.mrf.mxu0
  %v9421 = vadd.f32 %v9132, %v9420
  %v9422 = vpop.f32.mrf.mxu0
  %9423 = vmatprep.mubr.bf16.mxu0 %v4959
  %9424 = vmatmul.mubr.bf16.gmra.mxu0 %v4916
  %v9425 = vpop.f32.mrf.mxu0
  %v9426 = vadd.f32 %v9137, %v9425
  %v9427 = vpop.f32.mrf.mxu0
  %v9428 = vpop.f32.mrf.mxu0
  %v9429 = vadd.f32 %v9140, %v9428
  %v9430 = vpop.f32.mrf.mxu0
  %9431 = vmatprep.mubr.bf16.mxu0 %v4931
  %9432 = vmatmul.mubr.bf16.gmra.mxu0 %v4926
  %v9433 = vpop.f32.mrf.mxu0
  %v9434 = vadd.f32 %v9145, %v9433
  %v9435 = vpop.f32.mrf.mxu0
  %v9436 = vpop.f32.mrf.mxu0
  %v9437 = vadd.f32 %v9148, %v9436
  %v9438 = vpop.f32.mrf.mxu0
  %9439 = vmatprep.mubr.bf16.mxu0 %v4961
  %9440 = vmatmul.mubr.bf16.gmra.mxu0 %v4934
  %v9441 = vpop.f32.mrf.mxu0
  %v9442 = vadd.f32 %v9153, %v9441
  %v9443 = vpop.f32.mrf.mxu0
  %v9444 = vpop.f32.mrf.mxu0
  %v9445 = vadd.f32 %v9156, %v9444
  %v9446 = vpop.f32.mrf.mxu0
  %9447 = vmatprep.mubr.bf16.mxu0 %v4949
  %9448 = vmatmul.mubr.bf16.gmra.mxu0 %v4944
  %v9449 = vpop.f32.mrf.mxu0
  %v9450 = vadd.f32 %v9161, %v9449
  %v9451 = vpop.f32.mrf.mxu0
  %v9452 = vpop.f32.mrf.mxu0
  %v9453 = vadd.f32 %v9164, %v9452
  %v9454 = vpop.f32.mrf.mxu0
  %9455 = vmatprep.mubr.bf16.mxu0 %v4963
  %9456 = vmatmul.mubr.bf16.gmra.mxu0 %v4952
  %v9457 = vpop.f32.mrf.mxu0
  %v9458 = vadd.f32 %v9169, %v9457
  %v9459 = vpop.f32.mrf.mxu0
  %v9460 = vpop.f32.mrf.mxu0
  %v9461 = vadd.f32 %v9172, %v9460
  %v9462 = vpop.f32.mrf.mxu0
  %9463 = vdwg.mxu0
  %9464 = vmatprep.subr.bf16.mxu0 0
  %9465 = vmatpush1.bf16.msra.mxu0 %v6341
  %9466 = vmatprep.subr.bf16.mxu0 0
  %9467 = vmatpush1.bf16.msra.mxu0 %v6340
  %9468 = vmatprep.subr.bf16.mxu0 0
  %9469 = vmatpush1.bf16.msra.mxu0 %v6339
  %9470 = vmatprep.subr.bf16.mxu0 0
  %9471 = vmatpush1.bf16.msra.mxu0 %v6338
  %9472 = vmatprep.subr.bf16.mxu0 0
  %9473 = vmatpush1.bf16.msra.mxu0 %v6337
  %9474 = vmatprep.subr.bf16.mxu0 0
  %9475 = vmatpush1.bf16.msra.mxu0 %v6336
  %9476 = vmatprep.subr.bf16.mxu0 0
  %9477 = vmatpush1.bf16.msra.mxu0 %v6335
  %9478 = vmatprep.subr.bf16.mxu0 0
  %9479 = vmatpush1.bf16.msra.mxu0 %v6334
  %9480 = vmatprep.subr.bf16.mxu0 0
  %9481 = vmatpush2.bf16.msra.mxu0 %v6349
  %9482 = vmatprep.subr.bf16.mxu0 0
  %9483 = vmatpush2.bf16.msra.mxu0 %v6348
  %9484 = vmatprep.subr.bf16.mxu0 0
  %9485 = vmatpush2.bf16.msra.mxu0 %v6347
  %9486 = vmatprep.subr.bf16.mxu0 0
  %9487 = vmatpush2.bf16.msra.mxu0 %v6346
  %9488 = vmatprep.subr.bf16.mxu0 0
  %9489 = vmatpush2.bf16.msra.mxu0 %v6345
  %9490 = vmatprep.subr.bf16.mxu0 0
  %9491 = vmatpush2.bf16.msra.mxu0 %v6344
  %9492 = vmatprep.subr.bf16.mxu0 0
  %9493 = vmatpush2.bf16.msra.mxu0 %v6343
  %9494 = vmatprep.subr.bf16.mxu0 0
  %9495 = vmatpush2.bf16.msra.mxu0 %v6342
  %9496 = vmatprep.mubr.bf16.mxu0 %v4875
  %9497 = vmatmul.mubr.bf16.gmra.mxu0 %v4874
  %v9498 = vpop.f32.mrf.mxu0
  %v9499 = vadd.f32 %v9210, %v9498
  %v9500 = vpop.f32.mrf.mxu0
  %v9501 = vpop.f32.mrf.mxu0
  %v9502 = vadd.f32 %v9213, %v9501
  %v9503 = vpop.f32.mrf.mxu0
  %9504 = vmatprep.mubr.bf16.mxu0 %v4895
  %9505 = vmatmul.mubr.bf16.gmra.mxu0 %v4878
  %v9506 = vpop.f32.mrf.mxu0
  %v9507 = vadd.f32 %v9218, %v9506
  %v9508 = vpop.f32.mrf.mxu0
  %v9509 = vpop.f32.mrf.mxu0
  %v9510 = vadd.f32 %v9221, %v9509
  %v9511 = vpop.f32.mrf.mxu0
  %9512 = vmatprep.mubr.bf16.mxu0 %v4905
  %9513 = vmatmul.mubr.bf16.gmra.mxu0 %v4904
  %v9514 = vpop.f32.mrf.mxu0
  %v9515 = vadd.f32 %v9226, %v9514
  %v9516 = vpop.f32.mrf.mxu0
  %v9517 = vpop.f32.mrf.mxu0
  %v9518 = vadd.f32 %v9229, %v9517
  %v9519 = vpop.f32.mrf.mxu0
  %9520 = vmatprep.mubr.bf16.mxu0 %v4913
  %9521 = vmatmul.mubr.bf16.gmra.mxu0 %v4908
  %v9522 = vpop.f32.mrf.mxu0
  %v9523 = vadd.f32 %v9234, %v9522
  %v9524 = vpop.f32.mrf.mxu0
  %v9525 = vpop.f32.mrf.mxu0
  %v9526 = vadd.f32 %v9237, %v9525
  %v9527 = vpop.f32.mrf.mxu0
  %9528 = vmatprep.mubr.bf16.mxu0 %v4923
  %9529 = vmatmul.mubr.bf16.gmra.mxu0 %v4922
  %v9530 = vpop.f32.mrf.mxu0
  %v9531 = vadd.f32 %v9242, %v9530
  %v9532 = vpop.f32.mrf.mxu0
  %v9533 = vpop.f32.mrf.mxu0
  %v9534 = vadd.f32 %v9245, %v9533
  %v9535 = vpop.f32.mrf.mxu0
  %9536 = vmatprep.mubr.bf16.mxu0 %v4931
  %9537 = vmatmul.mubr.bf16.gmra.mxu0 %v4926
  %v9538 = vpop.f32.mrf.mxu0
  %v9539 = vadd.f32 %v9250, %v9538
  %v9540 = vpop.f32.mrf.mxu0
  %v9541 = vpop.f32.mrf.mxu0
  %v9542 = vadd.f32 %v9253, %v9541
  %v9543 = vpop.f32.mrf.mxu0
  %9544 = vmatprep.mubr.bf16.mxu0 %v4941
  %9545 = vmatmul.mubr.bf16.gmra.mxu0 %v4940
  %v9546 = vpop.f32.mrf.mxu0
  %v9547 = vadd.f32 %v9258, %v9546
  %v9548 = vpop.f32.mrf.mxu0
  %v9549 = vpop.f32.mrf.mxu0
  %v9550 = vadd.f32 %v9261, %v9549
  %v9551 = vpop.f32.mrf.mxu0
  %9552 = vmatprep.mubr.bf16.mxu0 %v4949
  %9553 = vmatmul.mubr.bf16.gmra.mxu0 %v4944
  %v9554 = vpop.f32.mrf.mxu0
  %v9555 = vadd.f32 %v9266, %v9554
  %v9556 = vpop.f32.mrf.mxu0
  %v9557 = vpop.f32.mrf.mxu0
  %v9558 = vadd.f32 %v9269, %v9557
  %v9559 = vpop.f32.mrf.mxu0
  %9560 = vmatprep.mubr.bf16.mxu0 %v4876
  %9561 = vmatmul.mubr.bf16.gmra.mxu0 %v4875
  %v9562 = vpop.f32.mrf.mxu0
  %v9563 = vadd.f32 %v9274, %v9562
  %v9564 = vpop.f32.mrf.mxu0
  %v9565 = vpop.f32.mrf.mxu0
  %v9566 = vadd.f32 %v9277, %v9565
  %v9567 = vpop.f32.mrf.mxu0
  %9568 = vmatprep.mubr.bf16.mxu0 %v4896
  %9569 = vmatmul.mubr.bf16.gmra.mxu0 %v4895
  %v9570 = vpop.f32.mrf.mxu0
  %v9571 = vadd.f32 %v9282, %v9570
  %v9572 = vpop.f32.mrf.mxu0
  %v9573 = vpop.f32.mrf.mxu0
  %v9574 = vadd.f32 %v9285, %v9573
  %v9575 = vpop.f32.mrf.mxu0
  %9576 = vmatprep.mubr.bf16.mxu0 %v4906
  %9577 = vmatmul.mubr.bf16.gmra.mxu0 %v4905
  %v9578 = vpop.f32.mrf.mxu0
  %v9579 = vadd.f32 %v9290, %v9578
  %v9580 = vpop.f32.mrf.mxu0
  %v9581 = vpop.f32.mrf.mxu0
  %v9582 = vadd.f32 %v9293, %v9581
  %v9583 = vpop.f32.mrf.mxu0
  %9584 = vmatprep.mubr.bf16.mxu0 %v4914
  %9585 = vmatmul.mubr.bf16.gmra.mxu0 %v4913
  %v9586 = vpop.f32.mrf.mxu0
  %v9587 = vadd.f32 %v9298, %v9586
  %v9588 = vpop.f32.mrf.mxu0
  %v9589 = vpop.f32.mrf.mxu0
  %v9590 = vadd.f32 %v9301, %v9589
  %v9591 = vpop.f32.mrf.mxu0
  %9592 = vmatprep.mubr.bf16.mxu0 %v4924
  %9593 = vmatmul.mubr.bf16.gmra.mxu0 %v4923
  %v9594 = vpop.f32.mrf.mxu0
  %v9595 = vadd.f32 %v9306, %v9594
  %v9596 = vpop.f32.mrf.mxu0
  %v9597 = vpop.f32.mrf.mxu0
  %v9598 = vadd.f32 %v9309, %v9597
  %v9599 = vpop.f32.mrf.mxu0
  %9600 = vmatprep.mubr.bf16.mxu0 %v4932
  %9601 = vmatmul.mubr.bf16.gmra.mxu0 %v4931
  %v9602 = vpop.f32.mrf.mxu0
  %v9603 = vadd.f32 %v9314, %v9602
  %v9604 = vpop.f32.mrf.mxu0
  %v9605 = vpop.f32.mrf.mxu0
  %v9606 = vadd.f32 %v9317, %v9605
  %v9607 = vpop.f32.mrf.mxu0
  %9608 = vmatprep.mubr.bf16.mxu0 %v4942
  %9609 = vmatmul.mubr.bf16.gmra.mxu0 %v4941
  %v9610 = vpop.f32.mrf.mxu0
  %v9611 = vadd.f32 %v9322, %v9610
  %v9612 = vpop.f32.mrf.mxu0
  %v9613 = vpop.f32.mrf.mxu0
  %v9614 = vadd.f32 %v9325, %v9613
  %v9615 = vpop.f32.mrf.mxu0
  %9616 = vmatprep.mubr.bf16.mxu0 %v4950
  %9617 = vmatmul.mubr.bf16.gmra.mxu0 %v4949
  %v9618 = vpop.f32.mrf.mxu0
  %v9619 = vadd.f32 %v9330, %v9618
  %v9620 = vpop.f32.mrf.mxu0
  %v9621 = vpop.f32.mrf.mxu0
  %v9622 = vadd.f32 %v9333, %v9621
  %v9623 = vpop.f32.mrf.mxu0
  %9624 = vmatprep.mubr.bf16.mxu0 %v4900
  %9625 = vmatmul.mubr.bf16.gmra.mxu0 %v4899
  %v9626 = vpop.f32.mrf.mxu0
  %v9627 = vadd.f32 %v9338, %v9626
  %v9628 = vpop.f32.mrf.mxu0
  %v9629 = vpop.f32.mrf.mxu0
  %v9630 = vadd.f32 %v9341, %v9629
  %v9631 = vpop.f32.mrf.mxu0
  %9632 = vmatprep.mubr.bf16.mxu0 %v4909
  %9633 = vmatmul.mubr.bf16.gmra.mxu0 %v4903
  %v9634 = vpop.f32.mrf.mxu0
  %v9635 = vadd.f32 %v9346, %v9634
  %v9636 = vpop.f32.mrf.mxu0
  %v9637 = vpop.f32.mrf.mxu0
  %v9638 = vadd.f32 %v9349, %v9637
  %v9639 = vpop.f32.mrf.mxu0
  %9640 = vmatprep.mubr.bf16.mxu0 %v4918
  %9641 = vmatmul.mubr.bf16.gmra.mxu0 %v4917
  %v9642 = vpop.f32.mrf.mxu0
  %v9643 = vadd.f32 %v9354, %v9642
  %v9644 = vpop.f32.mrf.mxu0
  %v9645 = vpop.f32.mrf.mxu0
  %v9646 = vadd.f32 %v9357, %v9645
  %v9647 = vpop.f32.mrf.mxu0
  %9648 = vmatprep.mubr.bf16.mxu0 %v4927
  %9649 = vmatmul.mubr.bf16.gmra.mxu0 %v4921
  %v9650 = vpop.f32.mrf.mxu0
  %v9651 = vadd.f32 %v9362, %v9650
  %v9652 = vpop.f32.mrf.mxu0
  %v9653 = vpop.f32.mrf.mxu0
  %v9654 = vadd.f32 %v9365, %v9653
  %v9655 = vpop.f32.mrf.mxu0
  %9656 = vmatprep.mubr.bf16.mxu0 %v4936
  %9657 = vmatmul.mubr.bf16.gmra.mxu0 %v4935
  %v9658 = vpop.f32.mrf.mxu0
  %v9659 = vadd.f32 %v9370, %v9658
  %v9660 = vpop.f32.mrf.mxu0
  %v9661 = vpop.f32.mrf.mxu0
  %v9662 = vadd.f32 %v9373, %v9661
  %v9663 = vpop.f32.mrf.mxu0
  %9664 = vmatprep.mubr.bf16.mxu0 %v4945
  %9665 = vmatmul.mubr.bf16.gmra.mxu0 %v4939
  %v9666 = vpop.f32.mrf.mxu0
  %v9667 = vadd.f32 %v9378, %v9666
  %v9668 = vpop.f32.mrf.mxu0
  %v9669 = vpop.f32.mrf.mxu0
  %v9670 = vadd.f32 %v9381, %v9669
  %v9671 = vpop.f32.mrf.mxu0
  %9672 = vmatprep.mubr.bf16.mxu0 %v4965
  %9673 = vmatmul.mubr.bf16.gmra.mxu0 %v4964
  %v9674 = vpop.f32.mrf.mxu0
  %v9675 = vadd.f32 %v9386, %v9674
  %v9676 = vpop.f32.mrf.mxu0
  %v9677 = vpop.f32.mrf.mxu0
  %v9678 = vadd.f32 %v9389, %v9677
  %v9679 = vpop.f32.mrf.mxu0
  %9680 = vmatprep.mubr.bf16.mxu0 %v4969
  %9681 = vmatmul.mubr.bf16.gmra.mxu0 %v4968
  %v9682 = vpop.f32.mrf.mxu0
  %v9683 = vadd.f32 %v9394, %v9682
  %v9684 = vpop.f32.mrf.mxu0
  %v9685 = vpop.f32.mrf.mxu0
  %v9686 = vadd.f32 %v9397, %v9685
  %v9687 = vpop.f32.mrf.mxu0
  %9688 = vmatprep.mubr.bf16.mxu0 %v4901
  %9689 = vmatmul.mubr.bf16.gmra.mxu0 %v4900
  %v9690 = vpop.f32.mrf.mxu0
  %v9691 = vadd.f32 %v9402, %v9690
  %v9692 = vpop.f32.mrf.mxu0
  %v9693 = vpop.f32.mrf.mxu0
  %v9694 = vadd.f32 %v9405, %v9693
  %v9695 = vpop.f32.mrf.mxu0
  %9696 = vmatprep.mubr.bf16.mxu0 %v4910
  %9697 = vmatmul.mubr.bf16.gmra.mxu0 %v4909
  %v9698 = vpop.f32.mrf.mxu0
  %v9699 = vadd.f32 %v9410, %v9698
  %v9700 = vpop.f32.mrf.mxu0
  %v9701 = vpop.f32.mrf.mxu0
  %v9702 = vadd.f32 %v9413, %v9701
  %v9703 = vpop.f32.mrf.mxu0
  %9704 = vmatprep.mubr.bf16.mxu0 %v4919
  %9705 = vmatmul.mubr.bf16.gmra.mxu0 %v4918
  %v9706 = vpop.f32.mrf.mxu0
  %v9707 = vadd.f32 %v9418, %v9706
  %v9708 = vpop.f32.mrf.mxu0
  %v9709 = vpop.f32.mrf.mxu0
  %v9710 = vadd.f32 %v9421, %v9709
  %v9711 = vpop.f32.mrf.mxu0
  %9712 = vmatprep.mubr.bf16.mxu0 %v4928
  %9713 = vmatmul.mubr.bf16.gmra.mxu0 %v4927
  %v9714 = vpop.f32.mrf.mxu0
  %v9715 = vadd.f32 %v9426, %v9714
  %v9716 = vpop.f32.mrf.mxu0
  %v9717 = vpop.f32.mrf.mxu0
  %v9718 = vadd.f32 %v9429, %v9717
  %v9719 = vpop.f32.mrf.mxu0
  %9720 = vmatprep.mubr.bf16.mxu0 %v4937
  %9721 = vmatmul.mubr.bf16.gmra.mxu0 %v4936
  %v9722 = vpop.f32.mrf.mxu0
  %v9723 = vadd.f32 %v9434, %v9722
  %v9724 = vpop.f32.mrf.mxu0
  %v9725 = vpop.f32.mrf.mxu0
  %v9726 = vadd.f32 %v9437, %v9725
  %v9727 = vpop.f32.mrf.mxu0
  %9728 = vmatprep.mubr.bf16.mxu0 %v4946
  %9729 = vmatmul.mubr.bf16.gmra.mxu0 %v4945
  %v9730 = vpop.f32.mrf.mxu0
  %v9731 = vadd.f32 %v9442, %v9730
  %v9732 = vpop.f32.mrf.mxu0
  %v9733 = vpop.f32.mrf.mxu0
  %v9734 = vadd.f32 %v9445, %v9733
  %v9735 = vpop.f32.mrf.mxu0
  %9736 = vmatprep.mubr.bf16.mxu0 %v4966
  %9737 = vmatmul.mubr.bf16.gmra.mxu0 %v4965
  %v9738 = vpop.f32.mrf.mxu0
  %v9739 = vadd.f32 %v9450, %v9738
  %v9740 = vpop.f32.mrf.mxu0
  %v9741 = vpop.f32.mrf.mxu0
  %v9742 = vadd.f32 %v9453, %v9741
  %v9743 = vpop.f32.mrf.mxu0
  %9744 = vmatprep.mubr.bf16.mxu0 %v4970
  %9745 = vmatmul.mubr.bf16.gmra.mxu0 %v4969
  %v9746 = vpop.f32.mrf.mxu0
  %v9747 = vadd.f32 %v9458, %v9746
  %v9748 = vpop.f32.mrf.mxu0
  %v9749 = vpop.f32.mrf.mxu0
  %v9750 = vadd.f32 %v9461, %v9749
  %v9751 = vpop.f32.mrf.mxu0
  %9752 = vdwg.mxu0
  %9753 = vmatprep.subr.bf16.mxu0 0
  %9754 = vmatpush1.bf16.msra.mxu0 %v6357
  %9755 = vmatprep.subr.bf16.mxu0 0
  %9756 = vmatpush1.bf16.msra.mxu0 %v6356
  %9757 = vmatprep.subr.bf16.mxu0 0
  %9758 = vmatpush1.bf16.msra.mxu0 %v6355
  %9759 = vmatprep.subr.bf16.mxu0 0
  %9760 = vmatpush1.bf16.msra.mxu0 %v6354
  %9761 = vmatprep.subr.bf16.mxu0 0
  %9762 = vmatpush1.bf16.msra.mxu0 %v6353
  %9763 = vmatprep.subr.bf16.mxu0 0
  %9764 = vmatpush1.bf16.msra.mxu0 %v6352
  %9765 = vmatprep.subr.bf16.mxu0 0
  %9766 = vmatpush1.bf16.msra.mxu0 %v6351
  %9767 = vmatprep.subr.bf16.mxu0 0
  %9768 = vmatpush1.bf16.msra.mxu0 %v6350
  %9769 = vmatprep.subr.bf16.mxu0 0
  %9770 = vmatpush2.bf16.msra.mxu0 %v6365
  %9771 = vmatprep.subr.bf16.mxu0 0
  %9772 = vmatpush2.bf16.msra.mxu0 %v6364
  %9773 = vmatprep.subr.bf16.mxu0 0
  %9774 = vmatpush2.bf16.msra.mxu0 %v6363
  %9775 = vmatprep.subr.bf16.mxu0 0
  %9776 = vmatpush2.bf16.msra.mxu0 %v6362
  %9777 = vmatprep.subr.bf16.mxu0 0
  %9778 = vmatpush2.bf16.msra.mxu0 %v6361
  %9779 = vmatprep.subr.bf16.mxu0 0
  %9780 = vmatpush2.bf16.msra.mxu0 %v6360
  %9781 = vmatprep.subr.bf16.mxu0 0
  %9782 = vmatpush2.bf16.msra.mxu0 %v6359
  %9783 = vmatprep.subr.bf16.mxu0 0
  %9784 = vmatpush2.bf16.msra.mxu0 %v6358
  %9785 = vmatprep.mubr.bf16.mxu0 %v4877
  %9786 = vmatmul.mubr.bf16.gmra.mxu0 %v4876
  %v9787 = vpop.f32.mrf.mxu0
  %v9788 = vadd.f32 %v9499, %v9787
  %v9789 = vpop.f32.mrf.mxu0
  %v9790 = vpop.f32.mrf.mxu0
  %v9791 = vadd.f32 %v9502, %v9790
  %v9792 = vpop.f32.mrf.mxu0
  %9793 = vmatprep.mubr.bf16.mxu0 %v4897
  %9794 = vmatmul.mubr.bf16.gmra.mxu0 %v4896
  %v9795 = vpop.f32.mrf.mxu0
  %v9796 = vadd.f32 %v9507, %v9795
  %v9797 = vpop.f32.mrf.mxu0
  %v9798 = vpop.f32.mrf.mxu0
  %v9799 = vadd.f32 %v9510, %v9798
  %v9800 = vpop.f32.mrf.mxu0
  %9801 = vmatprep.mubr.bf16.mxu0 %v4907
  %9802 = vmatmul.mubr.bf16.gmra.mxu0 %v4906
  %v9803 = vpop.f32.mrf.mxu0
  %v9804 = vadd.f32 %v9515, %v9803
  %v9805 = vpop.f32.mrf.mxu0
  %v9806 = vpop.f32.mrf.mxu0
  %v9807 = vadd.f32 %v9518, %v9806
  %v9808 = vpop.f32.mrf.mxu0
  %9809 = vmatprep.mubr.bf16.mxu0 %v4915
  %9810 = vmatmul.mubr.bf16.gmra.mxu0 %v4914
  %v9811 = vpop.f32.mrf.mxu0
  %v9812 = vadd.f32 %v9523, %v9811
  %v9813 = vpop.f32.mrf.mxu0
  %v9814 = vpop.f32.mrf.mxu0
  %v9815 = vadd.f32 %v9526, %v9814
  %v9816 = vpop.f32.mrf.mxu0
  %9817 = vmatprep.mubr.bf16.mxu0 %v4925
  %9818 = vmatmul.mubr.bf16.gmra.mxu0 %v4924
  %v9819 = vpop.f32.mrf.mxu0
  %v9820 = vadd.f32 %v9531, %v9819
  %v9821 = vpop.f32.mrf.mxu0
  %v9822 = vpop.f32.mrf.mxu0
  %v9823 = vadd.f32 %v9534, %v9822
  %v9824 = vpop.f32.mrf.mxu0
  %9825 = vmatprep.mubr.bf16.mxu0 %v4933
  %9826 = vmatmul.mubr.bf16.gmra.mxu0 %v4932
  %v9827 = vpop.f32.mrf.mxu0
  %v9828 = vadd.f32 %v9539, %v9827
  %v9829 = vpop.f32.mrf.mxu0
  %v9830 = vpop.f32.mrf.mxu0
  %v9831 = vadd.f32 %v9542, %v9830
  %v9832 = vpop.f32.mrf.mxu0
  %9833 = vmatprep.mubr.bf16.mxu0 %v4943
  %9834 = vmatmul.mubr.bf16.gmra.mxu0 %v4942
  %v9835 = vpop.f32.mrf.mxu0
  %v9836 = vadd.f32 %v9547, %v9835
  %v9837 = vpop.f32.mrf.mxu0
  %v9838 = vpop.f32.mrf.mxu0
  %v9839 = vadd.f32 %v9550, %v9838
  %v9840 = vpop.f32.mrf.mxu0
  %9841 = vmatprep.mubr.bf16.mxu0 %v4951
  %9842 = vmatmul.mubr.bf16.gmra.mxu0 %v4950
  %v9843 = vpop.f32.mrf.mxu0
  %v9844 = vadd.f32 %v9555, %v9843
  %v9845 = vpop.f32.mrf.mxu0
  %v9846 = vpop.f32.mrf.mxu0
  %v9847 = vadd.f32 %v9558, %v9846
  %v9848 = vpop.f32.mrf.mxu0
  %9849 = vmatprep.mubr.bf16.mxu0 %v4878
  %9850 = vmatmul.mubr.bf16.gmra.mxu0 %v4877
  %v9851 = vpop.f32.mrf.mxu0
  %v9852 = vadd.f32 %v9563, %v9851
  %v9853 = vpop.f32.mrf.mxu0
  %v9854 = vpop.f32.mrf.mxu0
  %v9855 = vadd.f32 %v9566, %v9854
  %v9856 = vpop.f32.mrf.mxu0
  %9857 = vmatprep.mubr.bf16.mxu0 %v4898
  %9858 = vmatmul.mubr.bf16.gmra.mxu0 %v4897
  %v9859 = vpop.f32.mrf.mxu0
  %v9860 = vadd.f32 %v9571, %v9859
  %v9861 = vpop.f32.mrf.mxu0
  %v9862 = vpop.f32.mrf.mxu0
  %v9863 = vadd.f32 %v9574, %v9862
  %v9864 = vpop.f32.mrf.mxu0
  %9865 = vmatprep.mubr.bf16.mxu0 %v4908
  %9866 = vmatmul.mubr.bf16.gmra.mxu0 %v4907
  %v9867 = vpop.f32.mrf.mxu0
  %v9868 = vadd.f32 %v9579, %v9867
  %v9869 = vpop.f32.mrf.mxu0
  %v9870 = vpop.f32.mrf.mxu0
  %v9871 = vadd.f32 %v9582, %v9870
  %v9872 = vpop.f32.mrf.mxu0
  %9873 = vmatprep.mubr.bf16.mxu0 %v4916
  %9874 = vmatmul.mubr.bf16.gmra.mxu0 %v4915
  %v9875 = vpop.f32.mrf.mxu0
  %v9876 = vadd.f32 %v9587, %v9875
  %v9877 = vpop.f32.mrf.mxu0
  %v9878 = vpop.f32.mrf.mxu0
  %v9879 = vadd.f32 %v9590, %v9878
  %v9880 = vpop.f32.mrf.mxu0
  %9881 = vmatprep.mubr.bf16.mxu0 %v4926
  %9882 = vmatmul.mubr.bf16.gmra.mxu0 %v4925
  %v9883 = vpop.f32.mrf.mxu0
  %v9884 = vadd.f32 %v9595, %v9883
  %v9885 = vpop.f32.mrf.mxu0
  %v9886 = vpop.f32.mrf.mxu0
  %v9887 = vadd.f32 %v9598, %v9886
  %v9888 = vpop.f32.mrf.mxu0
  %9889 = vmatprep.mubr.bf16.mxu0 %v4934
  %9890 = vmatmul.mubr.bf16.gmra.mxu0 %v4933
  %v9891 = vpop.f32.mrf.mxu0
  %v9892 = vadd.f32 %v9603, %v9891
  %v9893 = vpop.f32.mrf.mxu0
  %v9894 = vpop.f32.mrf.mxu0
  %v9895 = vadd.f32 %v9606, %v9894
  %v9896 = vpop.f32.mrf.mxu0
  %9897 = vmatprep.mubr.bf16.mxu0 %v4944
  %9898 = vmatmul.mubr.bf16.gmra.mxu0 %v4943
  %v9899 = vpop.f32.mrf.mxu0
  %v9900 = vadd.f32 %v9611, %v9899
  %v9901 = vpop.f32.mrf.mxu0
  %v9902 = vpop.f32.mrf.mxu0
  %v9903 = vadd.f32 %v9614, %v9902
  %v9904 = vpop.f32.mrf.mxu0
  %9905 = vmatprep.mubr.bf16.mxu0 %v4952
  %9906 = vmatmul.mubr.bf16.gmra.mxu0 %v4951
  %v9907 = vpop.f32.mrf.mxu0
  %v9908 = vadd.f32 %v9619, %v9907
  %v9909 = vpop.f32.mrf.mxu0
  %v9910 = vpop.f32.mrf.mxu0
  %v9911 = vadd.f32 %v9622, %v9910
  %v9912 = vpop.f32.mrf.mxu0
  %9913 = vmatprep.mubr.bf16.mxu0 %v4902
  %9914 = vmatmul.mubr.bf16.gmra.mxu0 %v4901
  %v9915 = vpop.f32.mrf.mxu0
  %v9916 = vadd.f32 %v9627, %v9915
  %v9917 = vpop.f32.mrf.mxu0
  %v9918 = vpop.f32.mrf.mxu0
  %v9919 = vadd.f32 %v9630, %v9918
  %v9920 = vpop.f32.mrf.mxu0
  %9921 = vmatprep.mubr.bf16.mxu0 %v4911
  %9922 = vmatmul.mubr.bf16.gmra.mxu0 %v4910
  %v9923 = vpop.f32.mrf.mxu0
  %v9924 = vadd.f32 %v9635, %v9923
  %v9925 = vpop.f32.mrf.mxu0
  %v9926 = vpop.f32.mrf.mxu0
  %v9927 = vadd.f32 %v9638, %v9926
  %v9928 = vpop.f32.mrf.mxu0
  %9929 = vmatprep.mubr.bf16.mxu0 %v4920
  %9930 = vmatmul.mubr.bf16.gmra.mxu0 %v4919
  %v9931 = vpop.f32.mrf.mxu0
  %v9932 = vadd.f32 %v9643, %v9931
  %v9933 = vpop.f32.mrf.mxu0
  %v9934 = vpop.f32.mrf.mxu0
  %v9935 = vadd.f32 %v9646, %v9934
  %v9936 = vpop.f32.mrf.mxu0
  %9937 = vmatprep.mubr.bf16.mxu0 %v4929
  %9938 = vmatmul.mubr.bf16.gmra.mxu0 %v4928
  %v9939 = vpop.f32.mrf.mxu0
  %v9940 = vadd.f32 %v9651, %v9939
  %v9941 = vpop.f32.mrf.mxu0
  %v9942 = vpop.f32.mrf.mxu0
  %v9943 = vadd.f32 %v9654, %v9942
  %v9944 = vpop.f32.mrf.mxu0
  %9945 = vmatprep.mubr.bf16.mxu0 %v4938
  %9946 = vmatmul.mubr.bf16.gmra.mxu0 %v4937
  %v9947 = vpop.f32.mrf.mxu0
  %v9948 = vadd.f32 %v9659, %v9947
  %v9949 = vpop.f32.mrf.mxu0
  %v9950 = vpop.f32.mrf.mxu0
  %v9951 = vadd.f32 %v9662, %v9950
  %v9952 = vpop.f32.mrf.mxu0
  %9953 = vmatprep.mubr.bf16.mxu0 %v4947
  %9954 = vmatmul.mubr.bf16.gmra.mxu0 %v4946
  %v9955 = vpop.f32.mrf.mxu0
  %v9956 = vadd.f32 %v9667, %v9955
  %v9957 = vpop.f32.mrf.mxu0
  %v9958 = vpop.f32.mrf.mxu0
  %v9959 = vadd.f32 %v9670, %v9958
  %v9960 = vpop.f32.mrf.mxu0
  %9961 = vmatprep.mubr.bf16.mxu0 %v4967
  %9962 = vmatmul.mubr.bf16.gmra.mxu0 %v4966
  %v9963 = vpop.f32.mrf.mxu0
  %v9964 = vadd.f32 %v9675, %v9963
  %v9965 = vpop.f32.mrf.mxu0
  %v9966 = vpop.f32.mrf.mxu0
  %v9967 = vadd.f32 %v9678, %v9966
  %v9968 = vpop.f32.mrf.mxu0
  %9969 = vmatprep.mubr.bf16.mxu0 %v4971
  %9970 = vmatmul.mubr.bf16.gmra.mxu0 %v4970
  %v9971 = vpop.f32.mrf.mxu0
  %v9972 = vadd.f32 %v9683, %v9971
  %v9973 = vpop.f32.mrf.mxu0
  %v9974 = vpop.f32.mrf.mxu0
  %v9975 = vadd.f32 %v9686, %v9974
  %v9976 = vpop.f32.mrf.mxu0
  %9977 = vmatprep.mubr.bf16.mxu0 %v4903
  %9978 = vmatmul.mubr.bf16.gmra.mxu0 %v4902
  %v9979 = vpop.f32.mrf.mxu0
  %v9980 = vadd.f32 %v9691, %v9979
  %v9981 = vpop.f32.mrf.mxu0
  %v9982 = vpop.f32.mrf.mxu0
  %v9983 = vadd.f32 %v9694, %v9982
  %v9984 = vpop.f32.mrf.mxu0
  %9985 = vmatprep.mubr.bf16.mxu0 %v4912
  %9986 = vmatmul.mubr.bf16.gmra.mxu0 %v4911
  %v9987 = vpop.f32.mrf.mxu0
  %v9988 = vadd.f32 %v9699, %v9987
  %v9989 = vpop.f32.mrf.mxu0
  %v9990 = vpop.f32.mrf.mxu0
  %v9991 = vadd.f32 %v9702, %v9990
  %v9992 = vpop.f32.mrf.mxu0
  %9993 = vmatprep.mubr.bf16.mxu0 %v4921
  %9994 = vmatmul.mubr.bf16.gmra.mxu0 %v4920
  %v9995 = vpop.f32.mrf.mxu0
  %v9996 = vadd.f32 %v9707, %v9995
  %v9997 = vpop.f32.mrf.mxu0
  %v9998 = vpop.f32.mrf.mxu0
  %v9999 = vadd.f32 %v9710, %v9998
  %v10000 = vpop.f32.mrf.mxu0
  %10001 = vmatprep.mubr.bf16.mxu0 %v4930
  %10002 = vmatmul.mubr.bf16.gmra.mxu0 %v4929
  %v10003 = vpop.f32.mrf.mxu0
  %v10004 = vadd.f32 %v9715, %v10003
  %v10005 = vpop.f32.mrf.mxu0
  %v10006 = vpop.f32.mrf.mxu0
  %v10007 = vadd.f32 %v9718, %v10006
  %v10008 = vpop.f32.mrf.mxu0
  %10009 = vmatprep.mubr.bf16.mxu0 %v4939
  %10010 = vmatmul.mubr.bf16.gmra.mxu0 %v4938
  %v10011 = vpop.f32.mrf.mxu0
  %v10012 = vadd.f32 %v9723, %v10011
  %v10013 = vpop.f32.mrf.mxu0
  %v10014 = vpop.f32.mrf.mxu0
  %v10015 = vadd.f32 %v9726, %v10014
  %v10016 = vpop.f32.mrf.mxu0
  %10017 = vmatprep.mubr.bf16.mxu0 %v4948
  %10018 = vmatmul.mubr.bf16.gmra.mxu0 %v4947
  %v10019 = vpop.f32.mrf.mxu0
  %v10020 = vadd.f32 %v9731, %v10019
  %v10021 = vpop.f32.mrf.mxu0
  %v10022 = vpop.f32.mrf.mxu0
  %v10023 = vadd.f32 %v9734, %v10022
  %v10024 = vpop.f32.mrf.mxu0
  %10025 = vmatprep.mubr.bf16.mxu0 %v4968
  %10026 = vmatmul.mubr.bf16.gmra.mxu0 %v4967
  %v10027 = vpop.f32.mrf.mxu0
  %v10028 = vadd.f32 %v9739, %v10027
  %v10029 = vpop.f32.mrf.mxu0
  %v10030 = vpop.f32.mrf.mxu0
  %v10031 = vadd.f32 %v9742, %v10030
  %v10032 = vpop.f32.mrf.mxu0
  %10033 = vmatprep.mubr.bf16.mxu0 %v4972
  %10034 = vmatmul.mubr.bf16.gmra.mxu0 %v4971
  %v10035 = vpop.f32.mrf.mxu0
  %v10036 = vadd.f32 %v9747, %v10035
  %v10037 = vpop.f32.mrf.mxu0
  %v10038 = vpop.f32.mrf.mxu0
  %v10039 = vadd.f32 %v9750, %v10038
  %v10040 = vpop.f32.mrf.mxu0
  %10041 = vdwg.mxu0
  %10042 = vmatprep.subr.bf16.mxu0 0
  %10043 = vmatpush1.bf16.msra.mxu0 %v6373
  %10044 = vmatprep.subr.bf16.mxu0 0
  %10045 = vmatpush1.bf16.msra.mxu0 %v6372
  %10046 = vmatprep.subr.bf16.mxu0 0
  %10047 = vmatpush1.bf16.msra.mxu0 %v6371
  %10048 = vmatprep.subr.bf16.mxu0 0
  %10049 = vmatpush1.bf16.msra.mxu0 %v6370
  %10050 = vmatprep.subr.bf16.mxu0 0
  %10051 = vmatpush1.bf16.msra.mxu0 %v6369
  %10052 = vmatprep.subr.bf16.mxu0 0
  %10053 = vmatpush1.bf16.msra.mxu0 %v6368
  %10054 = vmatprep.subr.bf16.mxu0 0
  %10055 = vmatpush1.bf16.msra.mxu0 %v6367
  %10056 = vmatprep.subr.bf16.mxu0 0
  %10057 = vmatpush1.bf16.msra.mxu0 %v6366
  %10058 = vmatprep.subr.bf16.mxu0 0
  %10059 = vmatpush2.bf16.msra.mxu0 0
  %10060 = vmatprep.subr.bf16.mxu0 0
  %10061 = vmatpush2.bf16.msra.mxu0 0
  %10062 = vmatprep.subr.bf16.mxu0 0
  %10063 = vmatpush2.bf16.msra.mxu0 0
  %10064 = vmatprep.subr.bf16.mxu0 0
  %10065 = vmatpush2.bf16.msra.mxu0 0
  %10066 = vmatprep.subr.bf16.mxu0 0
  %10067 = vmatpush2.bf16.msra.mxu0 0
  %10068 = vmatprep.subr.bf16.mxu0 0
  %10069 = vmatpush2.bf16.msra.mxu0 0
  %10070 = vmatprep.subr.bf16.mxu0 0
  %10071 = vmatpush2.bf16.msra.mxu0 0
  %10072 = vmatprep.subr.bf16.mxu0 0
  %10073 = vmatpush2.bf16.msra.mxu0 0
  %10074 = vmatprep.mubr.bf16.mxu0 0
  %10075 = vmatmul.mubr.bf16.gmra.mxu0 %v4878
  %v10076 = vpop.f32.mrf.mxu0
  %v10077 = vadd.f32 %v9788, %v10076
  %v10078 = vpop.f32.mrf.mxu0
  %v10079 = vpop.f32.mrf.mxu0
  %v10080 = vadd.f32 %v9791, %v10079
  %v10081 = vpop.f32.mrf.mxu0
  %10082 = vmatprep.mubr.bf16.mxu0 0
  %10083 = vmatmul.mubr.bf16.gmra.mxu0 %v4898
  %v10084 = vpop.f32.mrf.mxu0
  %v10085 = vadd.f32 %v9796, %v10084
  %v10086 = vpop.f32.mrf.mxu0
  %v10087 = vpop.f32.mrf.mxu0
  %v10088 = vadd.f32 %v9799, %v10087
  %v10089 = vpop.f32.mrf.mxu0
  %10090 = vmatprep.mubr.bf16.mxu0 0
  %10091 = vmatmul.mubr.bf16.gmra.mxu0 %v4908
  %v10092 = vpop.f32.mrf.mxu0
  %v10093 = vadd.f32 %v9804, %v10092
  %v10094 = vpop.f32.mrf.mxu0
  %v10095 = vpop.f32.mrf.mxu0
  %v10096 = vadd.f32 %v9807, %v10095
  %v10097 = vpop.f32.mrf.mxu0
  %10098 = vmatprep.mubr.bf16.mxu0 0
  %10099 = vmatmul.mubr.bf16.gmra.mxu0 %v4916
  %v10100 = vpop.f32.mrf.mxu0
  %v10101 = vadd.f32 %v9812, %v10100
  %v10102 = vpop.f32.mrf.mxu0
  %v10103 = vpop.f32.mrf.mxu0
  %v10104 = vadd.f32 %v9815, %v10103
  %v10105 = vpop.f32.mrf.mxu0
  %10106 = vmatprep.mubr.bf16.mxu0 0
  %10107 = vmatmul.mubr.bf16.gmra.mxu0 %v4926
  %v10108 = vpop.f32.mrf.mxu0
  %v10109 = vadd.f32 %v9820, %v10108
  %v10110 = vpop.f32.mrf.mxu0
  %v10111 = vpop.f32.mrf.mxu0
  %v10112 = vadd.f32 %v9823, %v10111
  %v10113 = vpop.f32.mrf.mxu0
  %10114 = vmatprep.mubr.bf16.mxu0 0
  %10115 = vmatmul.mubr.bf16.gmra.mxu0 %v4934
  %v10116 = vpop.f32.mrf.mxu0
  %v10117 = vadd.f32 %v9828, %v10116
  %v10118 = vpop.f32.mrf.mxu0
  %v10119 = vpop.f32.mrf.mxu0
  %v10120 = vadd.f32 %v9831, %v10119
  %v10121 = vpop.f32.mrf.mxu0
  %10122 = vmatprep.mubr.bf16.mxu0 0
  %10123 = vmatmul.mubr.bf16.gmra.mxu0 %v4944
  %v10124 = vpop.f32.mrf.mxu0
  %v10125 = vadd.f32 %v9836, %v10124
  %v10126 = vpop.f32.mrf.mxu0
  %v10127 = vpop.f32.mrf.mxu0
  %v10128 = vadd.f32 %v9839, %v10127
  %v10129 = vpop.f32.mrf.mxu0
  %10130 = vmatprep.mubr.bf16.mxu0 0
  %10131 = vmatmul.mubr.bf16.gmra.mxu0 %v4952
  %v10132 = vpop.f32.mrf.mxu0
  %v10133 = vadd.f32 %v9844, %v10132
  %v10134 = vpop.f32.mrf.mxu0
  %v10135 = vpop.f32.mrf.mxu0
  %v10136 = vadd.f32 %v9847, %v10135
  %v10137 = vpop.f32.mrf.mxu0
  %10138 = vmatprep.mubr.bf16.mxu0 0
  %10139 = vmatmul.mubr.bf16.gmra.mxu0 %v4895
  %v10140 = vpop.f32.mrf.mxu0
  %v10141 = vadd.f32 %v9852, %v10140
  %v10142 = vpop.f32.mrf.mxu0
  %v10143 = vpop.f32.mrf.mxu0
  %v10144 = vadd.f32 %v9855, %v10143
  %v10145 = vpop.f32.mrf.mxu0
  %10146 = vmatprep.mubr.bf16.mxu0 0
  %10147 = vmatmul.mubr.bf16.gmra.mxu0 %v4957
  %v10148 = vpop.f32.mrf.mxu0
  %v10149 = vadd.f32 %v9860, %v10148
  %v10150 = vpop.f32.mrf.mxu0
  %v10151 = vpop.f32.mrf.mxu0
  %v10152 = vadd.f32 %v9863, %v10151
  %v10153 = vpop.f32.mrf.mxu0
  %10154 = vmatprep.mubr.bf16.mxu0 0
  %10155 = vmatmul.mubr.bf16.gmra.mxu0 %v4913
  %v10156 = vpop.f32.mrf.mxu0
  %v10157 = vadd.f32 %v9868, %v10156
  %v10158 = vpop.f32.mrf.mxu0
  %v10159 = vpop.f32.mrf.mxu0
  %v10160 = vadd.f32 %v9871, %v10159
  %v10161 = vpop.f32.mrf.mxu0
  %10162 = vmatprep.mubr.bf16.mxu0 0
  %10163 = vmatmul.mubr.bf16.gmra.mxu0 %v4959
  %v10164 = vpop.f32.mrf.mxu0
  %v10165 = vadd.f32 %v9876, %v10164
  %v10166 = vpop.f32.mrf.mxu0
  %v10167 = vpop.f32.mrf.mxu0
  %v10168 = vadd.f32 %v9879, %v10167
  %v10169 = vpop.f32.mrf.mxu0
  %10170 = vmatprep.mubr.bf16.mxu0 0
  %10171 = vmatmul.mubr.bf16.gmra.mxu0 %v4931
  %v10172 = vpop.f32.mrf.mxu0
  %v10173 = vadd.f32 %v9884, %v10172
  %v10174 = vpop.f32.mrf.mxu0
  %v10175 = vpop.f32.mrf.mxu0
  %v10176 = vadd.f32 %v9887, %v10175
  %v10177 = vpop.f32.mrf.mxu0
  %10178 = vmatprep.mubr.bf16.mxu0 0
  %10179 = vmatmul.mubr.bf16.gmra.mxu0 %v4961
  %v10180 = vpop.f32.mrf.mxu0
  %v10181 = vadd.f32 %v9892, %v10180
  %v10182 = vpop.f32.mrf.mxu0
  %v10183 = vpop.f32.mrf.mxu0
  %v10184 = vadd.f32 %v9895, %v10183
  %v10185 = vpop.f32.mrf.mxu0
  %10186 = vmatprep.mubr.bf16.mxu0 0
  %10187 = vmatmul.mubr.bf16.gmra.mxu0 %v4949
  %v10188 = vpop.f32.mrf.mxu0
  %v10189 = vadd.f32 %v9900, %v10188
  %v10190 = vpop.f32.mrf.mxu0
  %v10191 = vpop.f32.mrf.mxu0
  %v10192 = vadd.f32 %v9903, %v10191
  %v10193 = vpop.f32.mrf.mxu0
  %10194 = vmatprep.mubr.bf16.mxu0 0
  %10195 = vmatmul.mubr.bf16.gmra.mxu0 %v4963
  %v10196 = vpop.f32.mrf.mxu0
  %v10197 = vadd.f32 %v9908, %v10196
  %v10198 = vpop.f32.mrf.mxu0
  %v10199 = vpop.f32.mrf.mxu0
  %v10200 = vadd.f32 %v9911, %v10199
  %v10201 = vpop.f32.mrf.mxu0
  %10202 = vmatprep.mubr.bf16.mxu0 0
  %10203 = vmatmul.mubr.bf16.gmra.mxu0 %v4903
  %v10204 = vpop.f32.mrf.mxu0
  %v10205 = vadd.f32 %v9916, %v10204
  %v10206 = vpop.f32.mrf.mxu0
  %v10207 = vpop.f32.mrf.mxu0
  %v10208 = vadd.f32 %v9919, %v10207
  %v10209 = vpop.f32.mrf.mxu0
  %10210 = vmatprep.mubr.bf16.mxu0 0
  %10211 = vmatmul.mubr.bf16.gmra.mxu0 %v4912
  %v10212 = vpop.f32.mrf.mxu0
  %v10213 = vadd.f32 %v9924, %v10212
  %v10214 = vpop.f32.mrf.mxu0
  %v10215 = vpop.f32.mrf.mxu0
  %v10216 = vadd.f32 %v9927, %v10215
  %v10217 = vpop.f32.mrf.mxu0
  %10218 = vmatprep.mubr.bf16.mxu0 0
  %10219 = vmatmul.mubr.bf16.gmra.mxu0 %v4921
  %v10220 = vpop.f32.mrf.mxu0
  %v10221 = vadd.f32 %v9932, %v10220
  %v10222 = vpop.f32.mrf.mxu0
  %v10223 = vpop.f32.mrf.mxu0
  %v10224 = vadd.f32 %v9935, %v10223
  %v10225 = vpop.f32.mrf.mxu0
  %10226 = vmatprep.mubr.bf16.mxu0 0
  %10227 = vmatmul.mubr.bf16.gmra.mxu0 %v4930
  %v10228 = vpop.f32.mrf.mxu0
  %v10229 = vadd.f32 %v9940, %v10228
  %v10230 = vpop.f32.mrf.mxu0
  %v10231 = vpop.f32.mrf.mxu0
  %v10232 = vadd.f32 %v9943, %v10231
  %v10233 = vpop.f32.mrf.mxu0
  %10234 = vmatprep.mubr.bf16.mxu0 0
  %10235 = vmatmul.mubr.bf16.gmra.mxu0 %v4939
  %v10236 = vpop.f32.mrf.mxu0
  %v10237 = vadd.f32 %v9948, %v10236
  %v10238 = vpop.f32.mrf.mxu0
  %v10239 = vpop.f32.mrf.mxu0
  %v10240 = vadd.f32 %v9951, %v10239
  %v10241 = vpop.f32.mrf.mxu0
  %10242 = vmatprep.mubr.bf16.mxu0 0
  %10243 = vmatmul.mubr.bf16.gmra.mxu0 %v4948
  %v10244 = vpop.f32.mrf.mxu0
  %v10245 = vadd.f32 %v9956, %v10244
  %v10246 = vpop.f32.mrf.mxu0
  %v10247 = vpop.f32.mrf.mxu0
  %v10248 = vadd.f32 %v9959, %v10247
  %v10249 = vpop.f32.mrf.mxu0
  %10250 = vmatprep.mubr.bf16.mxu0 0
  %10251 = vmatmul.mubr.bf16.gmra.mxu0 %v4968
  %v10252 = vpop.f32.mrf.mxu0
  %v10253 = vadd.f32 %v9964, %v10252
  %v10254 = vpop.f32.mrf.mxu0
  %v10255 = vpop.f32.mrf.mxu0
  %v10256 = vadd.f32 %v9967, %v10255
  %v10257 = vpop.f32.mrf.mxu0
  %10258 = vmatprep.mubr.bf16.mxu0 0
  %10259 = vmatmul.mubr.bf16.gmra.mxu0 %v4972
  %v10260 = vpop.f32.mrf.mxu0
  %v10261 = vadd.f32 %v9972, %v10260
  %v10262 = vpop.f32.mrf.mxu0
  %v10263 = vpop.f32.mrf.mxu0
  %v10264 = vadd.f32 %v9975, %v10263
  %v10265 = vpop.f32.mrf.mxu0
  %10266 = vmatprep.mubr.bf16.mxu0 0
  %10267 = vmatmul.mubr.bf16.gmra.mxu0 %v4909
  %v10268 = vpop.f32.mrf.mxu0
  %v10269 = vadd.f32 %v9980, %v10268
  %v10270 = vpop.f32.mrf.mxu0
  %v10271 = vpop.f32.mrf.mxu0
  %v10272 = vadd.f32 %v9983, %v10271
  %v10273 = vpop.f32.mrf.mxu0
  %10274 = vmatprep.mubr.bf16.mxu0 0
  %10275 = vmatmul.mubr.bf16.gmra.mxu0 %v4958
  %v10276 = vpop.f32.mrf.mxu0
  %v10277 = vadd.f32 %v9988, %v10276
  %v10278 = vpop.f32.mrf.mxu0
  %v10279 = vpop.f32.mrf.mxu0
  %v10280 = vadd.f32 %v9991, %v10279
  %v10281 = vpop.f32.mrf.mxu0
  %10282 = vmatprep.mubr.bf16.mxu0 0
  %10283 = vmatmul.mubr.bf16.gmra.mxu0 %v4927
  %v10284 = vpop.f32.mrf.mxu0
  %v10285 = vadd.f32 %v9996, %v10284
  %v10286 = vpop.f32.mrf.mxu0
  %v10287 = vpop.f32.mrf.mxu0
  %v10288 = vadd.f32 %v9999, %v10287
  %v10289 = vpop.f32.mrf.mxu0
  %10290 = vmatprep.mubr.bf16.mxu0 0
  %10291 = vmatmul.mubr.bf16.gmra.mxu0 %v4960
  %v10292 = vpop.f32.mrf.mxu0
  %v10293 = vadd.f32 %v10004, %v10292
  %v10294 = vpop.f32.mrf.mxu0
  %v10295 = vpop.f32.mrf.mxu0
  %v10296 = vadd.f32 %v10007, %v10295
  %v10297 = vpop.f32.mrf.mxu0
  %10298 = vmatprep.mubr.bf16.mxu0 0
  %10299 = vmatmul.mubr.bf16.gmra.mxu0 %v4945
  %v10300 = vpop.f32.mrf.mxu0
  %v10301 = vadd.f32 %v10012, %v10300
  %v10302 = vpop.f32.mrf.mxu0
  %v10303 = vpop.f32.mrf.mxu0
  %v10304 = vadd.f32 %v10015, %v10303
  %v10305 = vpop.f32.mrf.mxu0
  %10306 = vmatprep.mubr.bf16.mxu0 0
  %10307 = vmatmul.mubr.bf16.gmra.mxu0 %v4962
  %v10308 = vpop.f32.mrf.mxu0
  %v10309 = vadd.f32 %v10020, %v10308
  %v10310 = vpop.f32.mrf.mxu0
  %v10311 = vpop.f32.mrf.mxu0
  %v10312 = vadd.f32 %v10023, %v10311
  %v10313 = vpop.f32.mrf.mxu0
  %10314 = vmatprep.mubr.bf16.mxu0 0
  %10315 = vmatmul.mubr.bf16.gmra.mxu0 %v4969
  %v10316 = vpop.f32.mrf.mxu0
  %v10317 = vadd.f32 %v10028, %v10316
  %v10318 = vpop.f32.mrf.mxu0
  %v10319 = vpop.f32.mrf.mxu0
  %v10320 = vadd.f32 %v10031, %v10319
  %v10321 = vpop.f32.mrf.mxu0
  %10322 = vmatprep.mubr.bf16.mxu0 0
  %10323 = vmatmul.mubr.bf16.gmra.mxu0 %v4973
  %v10324 = vpop.f32.mrf.mxu0
  %v10325 = vadd.f32 %v10036, %v10324
  %v10326 = vpop.f32.mrf.mxu0
  %v10327 = vpop.f32.mrf.mxu0
  %v10328 = vadd.f32 %v10039, %v10327
  %v10329 = vpop.f32.mrf.mxu0
  %10330 = vdwg.mxu0
  %v10331 = vmax.f32 %v10077, %v10141
  %v10332 = vmax.f32 %v10080, %v10144
  %v10333 = vmax.f32 %v10085, %v10149
  %v10334 = vmax.f32 %v10088, %v10152
  %v10335 = vmax.f32 %v10093, %v10157
  %v10336 = vmax.f32 %v10096, %v10160
  %v10337 = vmax.f32 %v10101, %v10165
  %v10338 = vmax.f32 %v10104, %v10168
  %v10339 = vmax.f32 %v10109, %v10173
  %v10340 = vmax.f32 %v10112, %v10176
  %v10341 = vmax.f32 %v10117, %v10181
  %v10342 = vmax.f32 %v10120, %v10184
  %v10343 = vmax.f32 %v10125, %v10189
  %v10344 = vmax.f32 %v10128, %v10192
  %v10345 = vmax.f32 %v10133, %v10197
  %v10346 = vmax.f32 %v10136, %v10200
  %v10347 = vmax.f32 %v10205, %v10269
  %v10348 = vmax.f32 %v10208, %v10272
  %v10349 = vmax.f32 %v10213, %v10277
  %v10350 = vmax.f32 %v10216, %v10280
  %v10351 = vmax.f32 %v10221, %v10285
  %v10352 = vmax.f32 %v10224, %v10288
  %v10353 = vmax.f32 %v10229, %v10293
  %v10354 = vmax.f32 %v10232, %v10296
  %v10355 = vmax.f32 %v10237, %v10301
  %v10356 = vmax.f32 %v10240, %v10304
  %v10357 = vmax.f32 %v10245, %v10309
  %v10358 = vmax.f32 %v10248, %v10312
  %v10359 = vmax.f32 %v10253, %v10317
  %v10360 = vmax.f32 %v10256, %v10320
  %v10361 = vmax.f32 %v10261, %v10325
  %v10362 = vmax.f32 %v10264, %v10328
  %v10363 = vmax.f32 %v10331, %v10347
  %v10364 = vmax.f32 %v10332, %v10348
  %v10365 = vmax.f32 %v10333, %v10349
  %v10366 = vmax.f32 %v10334, %v10350
  %v10367 = vmax.f32 %v10335, %v10351
  %v10368 = vmax.f32 %v10336, %v10352
  %v10369 = vmax.f32 %v10337, %v10353
  %v10370 = vmax.f32 %v10338, %v10354
  %v10371 = vmax.f32 %v10339, %v10355
  %v10372 = vmax.f32 %v10340, %v10356
  %v10373 = vmax.f32 %v10341, %v10357
  %v10374 = vmax.f32 %v10342, %v10358
  %v10375 = vmax.f32 %v10343, %v10359
  %v10376 = vmax.f32 %v10344, %v10360
  %v10377 = vmax.f32 %v10345, %v10361
  %v10378 = vmax.f32 %v10346, %v10362
  %v10379 = vld [vmem:[%s4] sm:$0x1]
  %v10381 = vlaneseq
  %v10382 = vshrl.u32 %v10381, 7
  %v10383 = vsub.s32 0, %v10382
  %v10384 = vrot.slane %v10379, %v10383
  %v10386 = vadd.f32 %v10363, %v10384
  %v10387 = vadd.f32 %v10364, %v10384
  %v10388 = vadd.f32 %v10365, %v10384
  %v10389 = vadd.f32 %v10366, %v10384
  %v10390 = vadd.f32 %v10367, %v10384
  %v10391 = vadd.f32 %v10368, %v10384
  %v10392 = vadd.f32 %v10369, %v10384
  %v10393 = vadd.f32 %v10370, %v10384
  %v10394 = vadd.f32 %v10371, %v10384
  %v10395 = vadd.f32 %v10372, %v10384
  %v10396 = vadd.f32 %v10373, %v10384
  %v10397 = vadd.f32 %v10374, %v10384
  %v10398 = vadd.f32 %v10375, %v10384
  %v10399 = vadd.f32 %v10376, %v10384
  %v10400 = vadd.f32 %v10377, %v10384
  %v10401 = vadd.f32 %v10378, %v10384
  %v10402 = vmax.f32 %v10386, 0.0
  %v10403 = vmax.f32 %v10387, 0.0
  %v10404 = vmax.f32 %v10388, 0.0
  %v10405 = vmax.f32 %v10389, 0.0
  %v10406 = vmax.f32 %v10390, 0.0
  %v10407 = vmax.f32 %v10391, 0.0
  %v10408 = vmax.f32 %v10392, 0.0
  %v10409 = vmax.f32 %v10393, 0.0
  %v10410 = vmax.f32 %v10394, 0.0
  %v10411 = vmax.f32 %v10395, 0.0
  %v10412 = vmax.f32 %v10396, 0.0
  %v10413 = vmax.f32 %v10397, 0.0
  %v10414 = vmax.f32 %v10398, 0.0
  %v10415 = vmax.f32 %v10399, 0.0
  %v10416 = vmax.f32 %v10400, 0.0
  %v10417 = vmax.f32 %v10401, 0.0
  %v10418 = vld [vmem:[%s5] sm:$0xff]
  %v10419 = vld [vmem:[%s5 + $0x8] sm:$0xff]
  %v10420 = vld [vmem:[%s5 + $0x10] sm:$0xff]
  %v10421 = vld [vmem:[%s5 + $0x18] sm:$0xff]
  %v10422 = vld [vmem:[%s5 + $0x20] sm:$0xff]
  %v10423 = vld [vmem:[%s5 + $0x28] sm:$0xff]
  %v10424 = vld [vmem:[%s5 + $0x30] sm:$0xff]
  %v10425 = vld [vmem:[%s5 + $0x38] sm:$0xff]
  %v10426 = vld [vmem:[%s5 + $0x40] sm:$0xff]
  %v10427 = vld [vmem:[%s5 + $0x48] sm:$0xff]
  %v10428 = vld [vmem:[%s5 + $0x50] sm:$0xff]
  %v10429 = vld [vmem:[%s5 + $0x58] sm:$0xff]
  %v10430 = vld [vmem:[%s5 + $0x60] sm:$0xff]
  %v10431 = vld [vmem:[%s5 + $0x68] sm:$0xff]
  %v10432 = vld [vmem:[%s5 + $0x70] sm:$0xff]
  %v10433 = vld [vmem:[%s5 + $0x78] sm:$0xff]
  %v10434 = vld [vmem:[%s5 + $0x80] sm:$0xff]
  %v10435 = vld [vmem:[%s5 + $0x88] sm:$0xff]
  %v10436 = vld [vmem:[%s5 + $0x90] sm:$0xff]
  %v10437 = vld [vmem:[%s5 + $0x98] sm:$0xff]
  %v10438 = vld [vmem:[%s5 + $0xa0] sm:$0xff]
  %v10439 = vld [vmem:[%s5 + $0xa8] sm:$0xff]
  %v10440 = vld [vmem:[%s5 + $0xb0] sm:$0xff]
  %v10441 = vld [vmem:[%s5 + $0xb8] sm:$0xff]
  %v10442 = vld [vmem:[%s5 + $0xc0] sm:$0xff]
  %v10443 = vld [vmem:[%s5 + $0xc8] sm:$0xff]
  %v10444 = vld [vmem:[%s5 + $0xd0] sm:$0xff]
  %v10445 = vld [vmem:[%s5 + $0xd8] sm:$0xff]
  %v10446 = vld [vmem:[%s5 + $0xe0] sm:$0xff]
  %v10447 = vld [vmem:[%s5 + $0xe8] sm:$0xff]
  %v10448 = vld [vmem:[%s5 + $0xf0] sm:$0xff]
  %v10449 = vld [vmem:[%s5 + $0xf8] sm:$0xff]
  %v10450 = vld [vmem:[%s5 + $0x100] sm:$0xff]
  %v10451 = vld [vmem:[%s5 + $0x108] sm:$0xff]
  %v10452 = vld [vmem:[%s5 + $0x110] sm:$0xff]
  %v10453 = vld [vmem:[%s5 + $0x118] sm:$0xff]
  %v10454 = vld [vmem:[%s5 + $0x120] sm:$0xff]
  %v10455 = vld [vmem:[%s5 + $0x128] sm:$0xff]
  %v10456 = vld [vmem:[%s5 + $0x130] sm:$0xff]
  %v10457 = vld [vmem:[%s5 + $0x138] sm:$0xff]
  %v10458 = vld [vmem:[%s5 + $0x140] sm:$0xff]
  %v10459 = vld [vmem:[%s5 + $0x148] sm:$0xff]
  %v10460 = vld [vmem:[%s5 + $0x150] sm:$0xff]
  %v10461 = vld [vmem:[%s5 + $0x158] sm:$0xff]
  %v10462 = vld [vmem:[%s5 + $0x160] sm:$0xff]
  %v10463 = vld [vmem:[%s5 + $0x168] sm:$0xff]
  %v10464 = vld [vmem:[%s5 + $0x170] sm:$0xff]
  %v10465 = vld [vmem:[%s5 + $0x178] sm:$0xff]
  %v10466 = vld [vmem:[%s5 + $0x180] sm:$0xff]
  %v10467 = vld [vmem:[%s5 + $0x188] sm:$0xff]
  %v10468 = vld [vmem:[%s5 + $0x190] sm:$0xff]
  %v10469 = vld [vmem:[%s5 + $0x198] sm:$0xff]
  %v10470 = vld [vmem:[%s5 + $0x1a0] sm:$0xff]
  %v10471 = vld [vmem:[%s5 + $0x1a8] sm:$0xff]
  %v10472 = vld [vmem:[%s5 + $0x1b0] sm:$0xff]
  %v10473 = vld [vmem:[%s5 + $0x1b8] sm:$0xff]
  %v10474 = vld [vmem:[%s5 + $0x1c0] sm:$0xff]
  %v10475 = vld [vmem:[%s5 + $0x1c8] sm:$0xff]
  %v10476 = vld [vmem:[%s5 + $0x1d0] sm:$0xff]
  %v10477 = vld [vmem:[%s5 + $0x1d8] sm:$0xff]
  %v10478 = vld [vmem:[%s5 + $0x1e0] sm:$0xff]
  %v10479 = vld [vmem:[%s5 + $0x1e8] sm:$0xff]
  %v10480 = vld [vmem:[%s5 + $0x1f0] sm:$0xff]
  %v10481 = vld [vmem:[%s5 + $0x1f8] sm:$0xff]
  %v10482 = vld [vmem:[%s5 + $0x200] sm:$0xff]
  %v10483 = vld [vmem:[%s5 + $0x208] sm:$0xff]
  %v10484 = vld [vmem:[%s5 + $0x210] sm:$0xff]
  %v10485 = vld [vmem:[%s5 + $0x218] sm:$0xff]
  %v10486 = vld [vmem:[%s5 + $0x220] sm:$0xff]
  %v10487 = vld [vmem:[%s5 + $0x228] sm:$0xff]
  %v10488 = vld [vmem:[%s5 + $0x230] sm:$0xff]
  %v10489 = vld [vmem:[%s5 + $0x238] sm:$0xff]
  %v10490 = vld [vmem:[%s5 + $0x240] sm:$0xff]
  %v10491 = vld [vmem:[%s5 + $0x248] sm:$0xff]
  %v10492 = vld [vmem:[%s5 + $0x250] sm:$0xff]
  %v10493 = vld [vmem:[%s5 + $0x258] sm:$0xff]
  %v10494 = vld [vmem:[%s5 + $0x260] sm:$0xff]
  %v10495 = vld [vmem:[%s5 + $0x268] sm:$0xff]
  %v10496 = vld [vmem:[%s5 + $0x270] sm:$0xff]
  %v10497 = vld [vmem:[%s5 + $0x278] sm:$0xff]
  %v10498 = vld [vmem:[%s5 + $0x280] sm:$0xff]
  %v10499 = vld [vmem:[%s5 + $0x288] sm:$0xff]
  %v10500 = vld [vmem:[%s5 + $0x290] sm:$0xff]
  %v10501 = vld [vmem:[%s5 + $0x298] sm:$0xff]
  %v10502 = vld [vmem:[%s5 + $0x2a0] sm:$0xff]
  %v10503 = vld [vmem:[%s5 + $0x2a8] sm:$0xff]
  %v10504 = vld [vmem:[%s5 + $0x2b0] sm:$0xff]
  %v10505 = vld [vmem:[%s5 + $0x2b8] sm:$0xff]
  %v10506 = vld [vmem:[%s5 + $0x2c0] sm:$0xff]
  %v10507 = vld [vmem:[%s5 + $0x2c8] sm:$0xff]
  %v10508 = vld [vmem:[%s5 + $0x2d0] sm:$0xff]
  %v10509 = vld [vmem:[%s5 + $0x2d8] sm:$0xff]
  %v10510 = vld [vmem:[%s5 + $0x2e0] sm:$0xff]
  %v10511 = vld [vmem:[%s5 + $0x2e8] sm:$0xff]
  %v10512 = vld [vmem:[%s5 + $0x2f0] sm:$0xff]
  %v10513 = vld [vmem:[%s5 + $0x2f8] sm:$0xff]
  %v10514 = vld [vmem:[%s5 + $0x300] sm:$0xff]
  %v10515 = vld [vmem:[%s5 + $0x308] sm:$0xff]
  %v10516 = vld [vmem:[%s5 + $0x310] sm:$0xff]
  %v10517 = vld [vmem:[%s5 + $0x318] sm:$0xff]
  %v10518 = vld [vmem:[%s5 + $0x320] sm:$0xff]
  %v10519 = vld [vmem:[%s5 + $0x328] sm:$0xff]
  %v10520 = vld [vmem:[%s5 + $0x330] sm:$0xff]
  %v10521 = vld [vmem:[%s5 + $0x338] sm:$0xff]
  %v10522 = vld [vmem:[%s5 + $0x340] sm:$0xff]
  %v10523 = vld [vmem:[%s5 + $0x348] sm:$0xff]
  %v10524 = vld [vmem:[%s5 + $0x350] sm:$0xff]
  %v10525 = vld [vmem:[%s5 + $0x358] sm:$0xff]
  %v10526 = vld [vmem:[%s5 + $0x360] sm:$0xff]
  %v10527 = vld [vmem:[%s5 + $0x368] sm:$0xff]
  %v10528 = vld [vmem:[%s5 + $0x370] sm:$0xff]
  %v10529 = vld [vmem:[%s5 + $0x378] sm:$0xff]
  %v10530 = vld [vmem:[%s5 + $0x380] sm:$0xff]
  %v10531 = vld [vmem:[%s5 + $0x388] sm:$0xff]
  %v10532 = vld [vmem:[%s5 + $0x390] sm:$0xff]
  %v10533 = vld [vmem:[%s5 + $0x398] sm:$0xff]
  %v10534 = vld [vmem:[%s5 + $0x3a0] sm:$0xff]
  %v10535 = vld [vmem:[%s5 + $0x3a8] sm:$0xff]
  %v10536 = vld [vmem:[%s5 + $0x3b0] sm:$0xff]
  %v10537 = vld [vmem:[%s5 + $0x3b8] sm:$0xff]
  %v10538 = vld [vmem:[%s5 + $0x3c0] sm:$0xff]
  %v10539 = vld [vmem:[%s5 + $0x3c8] sm:$0xff]
  %v10540 = vld [vmem:[%s5 + $0x3d0] sm:$0xff]
  %v10541 = vld [vmem:[%s5 + $0x3d8] sm:$0xff]
  %v10542 = vld [vmem:[%s5 + $0x3e0] sm:$0xff]
  %v10543 = vld [vmem:[%s5 + $0x3e8] sm:$0xff]
  %v10544 = vld [vmem:[%s5 + $0x3f0] sm:$0xff]
  %v10545 = vld [vmem:[%s5 + $0x3f8] sm:$0xff]
  %v10546 = vld [vmem:[%s5 + $0x400] sm:$0xff]
  %v10547 = vld [vmem:[%s5 + $0x408] sm:$0xff]
  %v10548 = vld [vmem:[%s5 + $0x410] sm:$0xff]
  %v10549 = vld [vmem:[%s5 + $0x418] sm:$0xff]
  %v10550 = vld [vmem:[%s5 + $0x420] sm:$0xff]
  %v10551 = vld [vmem:[%s5 + $0x428] sm:$0xff]
  %v10552 = vld [vmem:[%s5 + $0x430] sm:$0xff]
  %v10553 = vld [vmem:[%s5 + $0x438] sm:$0xff]
  %v10554 = vld [vmem:[%s5 + $0x440] sm:$0xff]
  %v10555 = vld [vmem:[%s5 + $0x448] sm:$0xff]
  %v10556 = vld [vmem:[%s5 + $0x450] sm:$0xff]
  %v10557 = vld [vmem:[%s5 + $0x458] sm:$0xff]
  %v10558 = vld [vmem:[%s5 + $0x460] sm:$0xff]
  %v10559 = vld [vmem:[%s5 + $0x468] sm:$0xff]
  %v10560 = vld [vmem:[%s5 + $0x470] sm:$0xff]
  %v10561 = vld [vmem:[%s5 + $0x478] sm:$0xff]
  %v10562 = vld [vmem:[%s5 + $0x480] sm:$0xff]
  %v10563 = vld [vmem:[%s5 + $0x488] sm:$0xff]
  %v10564 = vld [vmem:[%s5 + $0x490] sm:$0xff]
  %v10565 = vld [vmem:[%s5 + $0x498] sm:$0xff]
  %v10566 = vld [vmem:[%s5 + $0x4a0] sm:$0xff]
  %v10567 = vld [vmem:[%s5 + $0x4a8] sm:$0xff]
  %v10568 = vld [vmem:[%s5 + $0x4b0] sm:$0xff]
  %v10569 = vld [vmem:[%s5 + $0x4b8] sm:$0xff]
  %v10570 = vld [vmem:[%s5 + $0x4c0] sm:$0xff]
  %v10571 = vld [vmem:[%s5 + $0x4c8] sm:$0xff]
  %v10572 = vld [vmem:[%s5 + $0x4d0] sm:$0xff]
  %v10573 = vld [vmem:[%s5 + $0x4d8] sm:$0xff]
  %v10574 = vld [vmem:[%s5 + $0x4e0] sm:$0xff]
  %v10575 = vld [vmem:[%s5 + $0x4e8] sm:$0xff]
  %v10576 = vld [vmem:[%s5 + $0x4f0] sm:$0xff]
  %v10577 = vld [vmem:[%s5 + $0x4f8] sm:$0xff]
  %v10578 = vld [vmem:[%s5 + $0x500] sm:$0xff]
  %v10579 = vld [vmem:[%s5 + $0x508] sm:$0xff]
  %v10580 = vld [vmem:[%s5 + $0x510] sm:$0xff]
  %v10581 = vld [vmem:[%s5 + $0x518] sm:$0xff]
  %v10582 = vld [vmem:[%s5 + $0x520] sm:$0xff]
  %v10583 = vld [vmem:[%s5 + $0x528] sm:$0xff]
  %v10584 = vld [vmem:[%s5 + $0x530] sm:$0xff]
  %v10585 = vld [vmem:[%s5 + $0x538] sm:$0xff]
  %v10586 = vld [vmem:[%s5 + $0x540] sm:$0xff]
  %v10587 = vld [vmem:[%s5 + $0x548] sm:$0xff]
  %v10588 = vld [vmem:[%s5 + $0x550] sm:$0xff]
  %v10589 = vld [vmem:[%s5 + $0x558] sm:$0xff]
  %v10590 = vld [vmem:[%s5 + $0x560] sm:$0xff]
  %v10591 = vld [vmem:[%s5 + $0x568] sm:$0xff]
  %v10592 = vld [vmem:[%s5 + $0x570] sm:$0xff]
  %v10593 = vld [vmem:[%s5 + $0x578] sm:$0xff]
  %v10594 = vld [vmem:[%s5 + $0x580] sm:$0xff]
  %v10595 = vld [vmem:[%s5 + $0x588] sm:$0xff]
  %v10596 = vld [vmem:[%s5 + $0x590] sm:$0xff]
  %v10597 = vld [vmem:[%s5 + $0x598] sm:$0xff]
  %v10598 = vld [vmem:[%s5 + $0x5a0] sm:$0xff]
  %v10599 = vld [vmem:[%s5 + $0x5a8] sm:$0xff]
  %v10600 = vld [vmem:[%s5 + $0x5b0] sm:$0xff]
  %v10601 = vld [vmem:[%s5 + $0x5b8] sm:$0xff]
  %v10602 = vld [vmem:[%s5 + $0x5c0] sm:$0xff]
  %v10603 = vld [vmem:[%s5 + $0x5c8] sm:$0xff]
  %v10604 = vld [vmem:[%s5 + $0x5d0] sm:$0xff]
  %v10605 = vld [vmem:[%s5 + $0x5d8] sm:$0xff]
  %v10606 = vld [vmem:[%s5 + $0x5e0] sm:$0xff]
  %v10607 = vld [vmem:[%s5 + $0x5e8] sm:$0xff]
  %v10608 = vld [vmem:[%s5 + $0x5f0] sm:$0xff]
  %v10609 = vld [vmem:[%s5 + $0x5f8] sm:$0xff]
  %v10610 = vld [vmem:[%s5 + $0x600] sm:$0xff]
  %v10611 = vld [vmem:[%s5 + $0x608] sm:$0xff]
  %v10612 = vld [vmem:[%s5 + $0x610] sm:$0xff]
  %v10613 = vld [vmem:[%s5 + $0x618] sm:$0xff]
  %v10614 = vld [vmem:[%s5 + $0x620] sm:$0xff]
  %v10615 = vld [vmem:[%s5 + $0x628] sm:$0xff]
  %v10616 = vld [vmem:[%s5 + $0x630] sm:$0xff]
  %v10617 = vld [vmem:[%s5 + $0x638] sm:$0xff]
  %v10618 = vld [vmem:[%s5 + $0x640] sm:$0xff]
  %v10619 = vld [vmem:[%s5 + $0x648] sm:$0xff]
  %v10620 = vld [vmem:[%s5 + $0x650] sm:$0xff]
  %v10621 = vld [vmem:[%s5 + $0x658] sm:$0xff]
  %v10622 = vld [vmem:[%s5 + $0x660] sm:$0xff]
  %v10623 = vld [vmem:[%s5 + $0x668] sm:$0xff]
  %v10624 = vld [vmem:[%s5 + $0x670] sm:$0xff]
  %v10625 = vld [vmem:[%s5 + $0x678] sm:$0xff]
  %v10626 = vld [vmem:[%s5 + $0x680] sm:$0xff]
  %v10627 = vld [vmem:[%s5 + $0x688] sm:$0xff]
  %v10628 = vld [vmem:[%s5 + $0x690] sm:$0xff]
  %v10629 = vld [vmem:[%s5 + $0x698] sm:$0xff]
  %v10630 = vld [vmem:[%s5 + $0x6a0] sm:$0xff]
  %v10631 = vld [vmem:[%s5 + $0x6a8] sm:$0xff]
  %v10632 = vld [vmem:[%s5 + $0x6b0] sm:$0xff]
  %v10633 = vld [vmem:[%s5 + $0x6b8] sm:$0xff]
  %v10634 = vld [vmem:[%s5 + $0x6c0] sm:$0xff]
  %v10635 = vld [vmem:[%s5 + $0x6c8] sm:$0xff]
  %v10636 = vld [vmem:[%s5 + $0x6d0] sm:$0xff]
  %v10637 = vld [vmem:[%s5 + $0x6d8] sm:$0xff]
  %v10638 = vld [vmem:[%s5 + $0x6e0] sm:$0xff]
  %v10639 = vld [vmem:[%s5 + $0x6e8] sm:$0xff]
  %v10640 = vld [vmem:[%s5 + $0x6f0] sm:$0xff]
  %v10641 = vld [vmem:[%s5 + $0x6f8] sm:$0xff]
  %v10642 = vld [vmem:[%s5 + $0x700] sm:$0xff]
  %v10643 = vld [vmem:[%s5 + $0x708] sm:$0xff]
  %v10644 = vld [vmem:[%s5 + $0x710] sm:$0xff]
  %v10645 = vld [vmem:[%s5 + $0x718] sm:$0xff]
  %v10646 = vld [vmem:[%s5 + $0x720] sm:$0xff]
  %v10647 = vld [vmem:[%s5 + $0x728] sm:$0xff]
  %v10648 = vld [vmem:[%s5 + $0x730] sm:$0xff]
  %v10649 = vld [vmem:[%s5 + $0x738] sm:$0xff]
  %v10650 = vld [vmem:[%s5 + $0x740] sm:$0xff]
  %v10651 = vld [vmem:[%s5 + $0x748] sm:$0xff]
  %v10652 = vld [vmem:[%s5 + $0x750] sm:$0xff]
  %v10653 = vld [vmem:[%s5 + $0x758] sm:$0xff]
  %v10654 = vld [vmem:[%s5 + $0x760] sm:$0xff]
  %v10655 = vld [vmem:[%s5 + $0x768] sm:$0xff]
  %v10656 = vld [vmem:[%s5 + $0x770] sm:$0xff]
  %v10657 = vld [vmem:[%s5 + $0x778] sm:$0xff]
  %v10658 = vld [vmem:[%s5 + $0x780] sm:$0xff]
  %v10659 = vld [vmem:[%s5 + $0x788] sm:$0xff]
  %v10660 = vld [vmem:[%s5 + $0x790] sm:$0xff]
  %v10661 = vld [vmem:[%s5 + $0x798] sm:$0xff]
  %v10662 = vld [vmem:[%s5 + $0x7a0] sm:$0xff]
  %v10663 = vld [vmem:[%s5 + $0x7a8] sm:$0xff]
  %v10664 = vld [vmem:[%s5 + $0x7b0] sm:$0xff]
  %v10665 = vld [vmem:[%s5 + $0x7b8] sm:$0xff]
  %v10666 = vld [vmem:[%s5 + $0x7c0] sm:$0xff]
  %v10667 = vld [vmem:[%s5 + $0x7c8] sm:$0xff]
  %v10668 = vld [vmem:[%s5 + $0x7d0] sm:$0xff]
  %v10669 = vld [vmem:[%s5 + $0x7d8] sm:$0xff]
  %v10670 = vld [vmem:[%s5 + $0x7e0] sm:$0xff]
  %v10671 = vld [vmem:[%s5 + $0x7e8] sm:$0xff]
  %v10672 = vld [vmem:[%s5 + $0x7f0] sm:$0xff]
  %v10673 = vld [vmem:[%s5 + $0x7f8] sm:$0xff]
  %v10674 = vld [vmem:[%s6] sm:$0x1]
  %v10676 = vlaneseq
  %v10677 = vshrl.u32 %v10676, 7
  %v10678 = vsub.s32 0, %v10677
  %v10679 = vrot.slane %v10674, %v10678
  %10681 = vmatprep.subr.mxu0 0.0
  %10682 = vmatpush1.msra.mxu0 %v10433
  %10683 = vmatprep.subr.mxu0 0.0
  %10684 = vmatpush1.msra.mxu0 %v10432
  %10685 = vmatprep.subr.mxu0 0.0
  %10686 = vmatpush1.msra.mxu0 %v10431
  %10687 = vmatprep.subr.mxu0 0.0
  %10688 = vmatpush1.msra.mxu0 %v10430
  %10689 = vmatprep.subr.mxu0 0.0
  %10690 = vmatpush1.msra.mxu0 %v10429
  %10691 = vmatprep.subr.mxu0 0.0
  %10692 = vmatpush1.msra.mxu0 %v10428
  %10693 = vmatprep.subr.mxu0 0.0
  %10694 = vmatpush1.msra.mxu0 %v10427
  %10695 = vmatprep.subr.mxu0 0.0
  %10696 = vmatpush1.msra.mxu0 %v10426
  %10697 = vmatprep.subr.mxu0 0.0
  %10698 = vmatpush1.msra.mxu0 %v10425
  %10699 = vmatprep.subr.mxu0 0.0
  %10700 = vmatpush1.msra.mxu0 %v10424
  %10701 = vmatprep.subr.mxu0 0.0
  %10702 = vmatpush1.msra.mxu0 %v10423
  %10703 = vmatprep.subr.mxu0 0.0
  %10704 = vmatpush1.msra.mxu0 %v10422
  %10705 = vmatprep.subr.mxu0 0.0
  %10706 = vmatpush1.msra.mxu0 %v10421
  %10707 = vmatprep.subr.mxu0 0.0
  %10708 = vmatpush1.msra.mxu0 %v10420
  %10709 = vmatprep.subr.mxu0 0.0
  %10710 = vmatpush1.msra.mxu0 %v10419
  %10711 = vmatprep.subr.mxu0 0.0
  %10712 = vmatpush1.msra.mxu0 %v10418
  %10713 = vmatprep.subr.mxu0 0.0
  %10714 = vmatpush2.msra.mxu0 %v10449
  %10715 = vmatprep.subr.mxu0 0.0
  %10716 = vmatpush2.msra.mxu0 %v10448
  %10717 = vmatprep.subr.mxu0 0.0
  %10718 = vmatpush2.msra.mxu0 %v10447
  %10719 = vmatprep.subr.mxu0 0.0
  %10720 = vmatpush2.msra.mxu0 %v10446
  %10721 = vmatprep.subr.mxu0 0.0
  %10722 = vmatpush2.msra.mxu0 %v10445
  %10723 = vmatprep.subr.mxu0 0.0
  %10724 = vmatpush2.msra.mxu0 %v10444
  %10725 = vmatprep.subr.mxu0 0.0
  %10726 = vmatpush2.msra.mxu0 %v10443
  %10727 = vmatprep.subr.mxu0 0.0
  %10728 = vmatpush2.msra.mxu0 %v10442
  %10729 = vmatprep.subr.mxu0 0.0
  %10730 = vmatpush2.msra.mxu0 %v10441
  %10731 = vmatprep.subr.mxu0 0.0
  %10732 = vmatpush2.msra.mxu0 %v10440
  %10733 = vmatprep.subr.mxu0 0.0
  %10734 = vmatpush2.msra.mxu0 %v10439
  %10735 = vmatprep.subr.mxu0 0.0
  %10736 = vmatpush2.msra.mxu0 %v10438
  %10737 = vmatprep.subr.mxu0 0.0
  %10738 = vmatpush2.msra.mxu0 %v10437
  %10739 = vmatprep.subr.mxu0 0.0
  %10740 = vmatpush2.msra.mxu0 %v10436
  %10741 = vmatprep.subr.mxu0 0.0
  %10742 = vmatpush2.msra.mxu0 %v10435
  %10743 = vmatprep.subr.mxu0 0.0
  %10744 = vmatpush2.msra.mxu0 %v10434
  %10745 = vmatprep.mubr.f32.mxu0 %v10403
  %10746 = vmatmul.mubr.f32.gmra.mxu0 %v10402
  %v10747 = vpop.f32.mrf.mxu0
  %v10748 = vadd.f32 %v10679, %v10747
  %v10749 = vpop.f32.mrf.mxu0
  %10750 = vdwg.mxu0
  %10751 = vmatprep.subr.mxu0 0.0
  %10752 = vmatpush1.msra.mxu0 %v10465
  %10753 = vmatprep.subr.mxu0 0.0
  %10754 = vmatpush1.msra.mxu0 %v10464
  %10755 = vmatprep.subr.mxu0 0.0
  %10756 = vmatpush1.msra.mxu0 %v10463
  %10757 = vmatprep.subr.mxu0 0.0
  %10758 = vmatpush1.msra.mxu0 %v10462
  %10759 = vmatprep.subr.mxu0 0.0
  %10760 = vmatpush1.msra.mxu0 %v10461
  %10761 = vmatprep.subr.mxu0 0.0
  %10762 = vmatpush1.msra.mxu0 %v10460
  %10763 = vmatprep.subr.mxu0 0.0
  %10764 = vmatpush1.msra.mxu0 %v10459
  %10765 = vmatprep.subr.mxu0 0.0
  %10766 = vmatpush1.msra.mxu0 %v10458
  %10767 = vmatprep.subr.mxu0 0.0
  %10768 = vmatpush1.msra.mxu0 %v10457
  %10769 = vmatprep.subr.mxu0 0.0
  %10770 = vmatpush1.msra.mxu0 %v10456
  %10771 = vmatprep.subr.mxu0 0.0
  %10772 = vmatpush1.msra.mxu0 %v10455
  %10773 = vmatprep.subr.mxu0 0.0
  %10774 = vmatpush1.msra.mxu0 %v10454
  %10775 = vmatprep.subr.mxu0 0.0
  %10776 = vmatpush1.msra.mxu0 %v10453
  %10777 = vmatprep.subr.mxu0 0.0
  %10778 = vmatpush1.msra.mxu0 %v10452
  %10779 = vmatprep.subr.mxu0 0.0
  %10780 = vmatpush1.msra.mxu0 %v10451
  %10781 = vmatprep.subr.mxu0 0.0
  %10782 = vmatpush1.msra.mxu0 %v10450
  %10783 = vmatprep.subr.mxu0 0.0
  %10784 = vmatpush2.msra.mxu0 %v10481
  %10785 = vmatprep.subr.mxu0 0.0
  %10786 = vmatpush2.msra.mxu0 %v10480
  %10787 = vmatprep.subr.mxu0 0.0
  %10788 = vmatpush2.msra.mxu0 %v10479
  %10789 = vmatprep.subr.mxu0 0.0
  %10790 = vmatpush2.msra.mxu0 %v10478
  %10791 = vmatprep.subr.mxu0 0.0
  %10792 = vmatpush2.msra.mxu0 %v10477
  %10793 = vmatprep.subr.mxu0 0.0
  %10794 = vmatpush2.msra.mxu0 %v10476
  %10795 = vmatprep.subr.mxu0 0.0
  %10796 = vmatpush2.msra.mxu0 %v10475
  %10797 = vmatprep.subr.mxu0 0.0
  %10798 = vmatpush2.msra.mxu0 %v10474
  %10799 = vmatprep.subr.mxu0 0.0
  %10800 = vmatpush2.msra.mxu0 %v10473
  %10801 = vmatprep.subr.mxu0 0.0
  %10802 = vmatpush2.msra.mxu0 %v10472
  %10803 = vmatprep.subr.mxu0 0.0
  %10804 = vmatpush2.msra.mxu0 %v10471
  %10805 = vmatprep.subr.mxu0 0.0
  %10806 = vmatpush2.msra.mxu0 %v10470
  %10807 = vmatprep.subr.mxu0 0.0
  %10808 = vmatpush2.msra.mxu0 %v10469
  %10809 = vmatprep.subr.mxu0 0.0
  %10810 = vmatpush2.msra.mxu0 %v10468
  %10811 = vmatprep.subr.mxu0 0.0
  %10812 = vmatpush2.msra.mxu0 %v10467
  %10813 = vmatprep.subr.mxu0 0.0
  %10814 = vmatpush2.msra.mxu0 %v10466
  %10815 = vmatprep.mubr.f32.mxu0 %v10405
  %10816 = vmatmul.mubr.f32.gmra.mxu0 %v10404
  %v10817 = vpop.f32.mrf.mxu0
  %v10818 = vadd.f32 %v10748, %v10817
  %v10819 = vpop.f32.mrf.mxu0
  %10820 = vdwg.mxu0
  %10821 = vmatprep.subr.mxu0 0.0
  %10822 = vmatpush1.msra.mxu0 %v10497
  %10823 = vmatprep.subr.mxu0 0.0
  %10824 = vmatpush1.msra.mxu0 %v10496
  %10825 = vmatprep.subr.mxu0 0.0
  %10826 = vmatpush1.msra.mxu0 %v10495
  %10827 = vmatprep.subr.mxu0 0.0
  %10828 = vmatpush1.msra.mxu0 %v10494
  %10829 = vmatprep.subr.mxu0 0.0
  %10830 = vmatpush1.msra.mxu0 %v10493
  %10831 = vmatprep.subr.mxu0 0.0
  %10832 = vmatpush1.msra.mxu0 %v10492
  %10833 = vmatprep.subr.mxu0 0.0
  %10834 = vmatpush1.msra.mxu0 %v10491
  %10835 = vmatprep.subr.mxu0 0.0
  %10836 = vmatpush1.msra.mxu0 %v10490
  %10837 = vmatprep.subr.mxu0 0.0
  %10838 = vmatpush1.msra.mxu0 %v10489
  %10839 = vmatprep.subr.mxu0 0.0
  %10840 = vmatpush1.msra.mxu0 %v10488
  %10841 = vmatprep.subr.mxu0 0.0
  %10842 = vmatpush1.msra.mxu0 %v10487
  %10843 = vmatprep.subr.mxu0 0.0
  %10844 = vmatpush1.msra.mxu0 %v10486
  %10845 = vmatprep.subr.mxu0 0.0
  %10846 = vmatpush1.msra.mxu0 %v10485
  %10847 = vmatprep.subr.mxu0 0.0
  %10848 = vmatpush1.msra.mxu0 %v10484
  %10849 = vmatprep.subr.mxu0 0.0
  %10850 = vmatpush1.msra.mxu0 %v10483
  %10851 = vmatprep.subr.mxu0 0.0
  %10852 = vmatpush1.msra.mxu0 %v10482
  %10853 = vmatprep.subr.mxu0 0.0
  %10854 = vmatpush2.msra.mxu0 %v10513
  %10855 = vmatprep.subr.mxu0 0.0
  %10856 = vmatpush2.msra.mxu0 %v10512
  %10857 = vmatprep.subr.mxu0 0.0
  %10858 = vmatpush2.msra.mxu0 %v10511
  %10859 = vmatprep.subr.mxu0 0.0
  %10860 = vmatpush2.msra.mxu0 %v10510
  %10861 = vmatprep.subr.mxu0 0.0
  %10862 = vmatpush2.msra.mxu0 %v10509
  %10863 = vmatprep.subr.mxu0 0.0
  %10864 = vmatpush2.msra.mxu0 %v10508
  %10865 = vmatprep.subr.mxu0 0.0
  %10866 = vmatpush2.msra.mxu0 %v10507
  %10867 = vmatprep.subr.mxu0 0.0
  %10868 = vmatpush2.msra.mxu0 %v10506
  %10869 = vmatprep.subr.mxu0 0.0
  %10870 = vmatpush2.msra.mxu0 %v10505
  %10871 = vmatprep.subr.mxu0 0.0
  %10872 = vmatpush2.msra.mxu0 %v10504
  %10873 = vmatprep.subr.mxu0 0.0
  %10874 = vmatpush2.msra.mxu0 %v10503
  %10875 = vmatprep.subr.mxu0 0.0
  %10876 = vmatpush2.msra.mxu0 %v10502
  %10877 = vmatprep.subr.mxu0 0.0
  %10878 = vmatpush2.msra.mxu0 %v10501
  %10879 = vmatprep.subr.mxu0 0.0
  %10880 = vmatpush2.msra.mxu0 %v10500
  %10881 = vmatprep.subr.mxu0 0.0
  %10882 = vmatpush2.msra.mxu0 %v10499
  %10883 = vmatprep.subr.mxu0 0.0
  %10884 = vmatpush2.msra.mxu0 %v10498
  %10885 = vmatprep.mubr.f32.mxu0 %v10407
  %10886 = vmatmul.mubr.f32.gmra.mxu0 %v10406
  %v10887 = vpop.f32.mrf.mxu0
  %v10888 = vadd.f32 %v10818, %v10887
  %v10889 = vpop.f32.mrf.mxu0
  %10890 = vdwg.mxu0
  %10891 = vmatprep.subr.mxu0 0.0
  %10892 = vmatpush1.msra.mxu0 %v10529
  %10893 = vmatprep.subr.mxu0 0.0
  %10894 = vmatpush1.msra.mxu0 %v10528
  %10895 = vmatprep.subr.mxu0 0.0
  %10896 = vmatpush1.msra.mxu0 %v10527
  %10897 = vmatprep.subr.mxu0 0.0
  %10898 = vmatpush1.msra.mxu0 %v10526
  %10899 = vmatprep.subr.mxu0 0.0
  %10900 = vmatpush1.msra.mxu0 %v10525
  %10901 = vmatprep.subr.mxu0 0.0
  %10902 = vmatpush1.msra.mxu0 %v10524
  %10903 = vmatprep.subr.mxu0 0.0
  %10904 = vmatpush1.msra.mxu0 %v10523
  %10905 = vmatprep.subr.mxu0 0.0
  %10906 = vmatpush1.msra.mxu0 %v10522
  %10907 = vmatprep.subr.mxu0 0.0
  %10908 = vmatpush1.msra.mxu0 %v10521
  %10909 = vmatprep.subr.mxu0 0.0
  %10910 = vmatpush1.msra.mxu0 %v10520
  %10911 = vmatprep.subr.mxu0 0.0
  %10912 = vmatpush1.msra.mxu0 %v10519
  %10913 = vmatprep.subr.mxu0 0.0
  %10914 = vmatpush1.msra.mxu0 %v10518
  %10915 = vmatprep.subr.mxu0 0.0
  %10916 = vmatpush1.msra.mxu0 %v10517
  %10917 = vmatprep.subr.mxu0 0.0
  %10918 = vmatpush1.msra.mxu0 %v10516
  %10919 = vmatprep.subr.mxu0 0.0
  %10920 = vmatpush1.msra.mxu0 %v10515
  %10921 = vmatprep.subr.mxu0 0.0
  %10922 = vmatpush1.msra.mxu0 %v10514
  %10923 = vmatprep.subr.mxu0 0.0
  %10924 = vmatpush2.msra.mxu0 %v10545
  %10925 = vmatprep.subr.mxu0 0.0
  %10926 = vmatpush2.msra.mxu0 %v10544
  %10927 = vmatprep.subr.mxu0 0.0
  %10928 = vmatpush2.msra.mxu0 %v10543
  %10929 = vmatprep.subr.mxu0 0.0
  %10930 = vmatpush2.msra.mxu0 %v10542
  %10931 = vmatprep.subr.mxu0 0.0
  %10932 = vmatpush2.msra.mxu0 %v10541
  %10933 = vmatprep.subr.mxu0 0.0
  %10934 = vmatpush2.msra.mxu0 %v10540
  %10935 = vmatprep.subr.mxu0 0.0
  %10936 = vmatpush2.msra.mxu0 %v10539
  %10937 = vmatprep.subr.mxu0 0.0
  %10938 = vmatpush2.msra.mxu0 %v10538
  %10939 = vmatprep.subr.mxu0 0.0
  %10940 = vmatpush2.msra.mxu0 %v10537
  %10941 = vmatprep.subr.mxu0 0.0
  %10942 = vmatpush2.msra.mxu0 %v10536
  %10943 = vmatprep.subr.mxu0 0.0
  %10944 = vmatpush2.msra.mxu0 %v10535
  %10945 = vmatprep.subr.mxu0 0.0
  %10946 = vmatpush2.msra.mxu0 %v10534
  %10947 = vmatprep.subr.mxu0 0.0
  %10948 = vmatpush2.msra.mxu0 %v10533
  %10949 = vmatprep.subr.mxu0 0.0
  %10950 = vmatpush2.msra.mxu0 %v10532
  %10951 = vmatprep.subr.mxu0 0.0
  %10952 = vmatpush2.msra.mxu0 %v10531
  %10953 = vmatprep.subr.mxu0 0.0
  %10954 = vmatpush2.msra.mxu0 %v10530
  %10955 = vmatprep.mubr.f32.mxu0 %v10409
  %10956 = vmatmul.mubr.f32.gmra.mxu0 %v10408
  %v10957 = vpop.f32.mrf.mxu0
  %v10958 = vadd.f32 %v10888, %v10957
  %v10959 = vpop.f32.mrf.mxu0
  %10960 = vdwg.mxu0
  %10961 = vmatprep.subr.mxu0 0.0
  %10962 = vmatpush1.msra.mxu0 %v10561
  %10963 = vmatprep.subr.mxu0 0.0
  %10964 = vmatpush1.msra.mxu0 %v10560
  %10965 = vmatprep.subr.mxu0 0.0
  %10966 = vmatpush1.msra.mxu0 %v10559
  %10967 = vmatprep.subr.mxu0 0.0
  %10968 = vmatpush1.msra.mxu0 %v10558
  %10969 = vmatprep.subr.mxu0 0.0
  %10970 = vmatpush1.msra.mxu0 %v10557
  %10971 = vmatprep.subr.mxu0 0.0
  %10972 = vmatpush1.msra.mxu0 %v10556
  %10973 = vmatprep.subr.mxu0 0.0
  %10974 = vmatpush1.msra.mxu0 %v10555
  %10975 = vmatprep.subr.mxu0 0.0
  %10976 = vmatpush1.msra.mxu0 %v10554
  %10977 = vmatprep.subr.mxu0 0.0
  %10978 = vmatpush1.msra.mxu0 %v10553
  %10979 = vmatprep.subr.mxu0 0.0
  %10980 = vmatpush1.msra.mxu0 %v10552
  %10981 = vmatprep.subr.mxu0 0.0
  %10982 = vmatpush1.msra.mxu0 %v10551
  %10983 = vmatprep.subr.mxu0 0.0
  %10984 = vmatpush1.msra.mxu0 %v10550
  %10985 = vmatprep.subr.mxu0 0.0
  %10986 = vmatpush1.msra.mxu0 %v10549
  %10987 = vmatprep.subr.mxu0 0.0
  %10988 = vmatpush1.msra.mxu0 %v10548
  %10989 = vmatprep.subr.mxu0 0.0
  %10990 = vmatpush1.msra.mxu0 %v10547
  %10991 = vmatprep.subr.mxu0 0.0
  %10992 = vmatpush1.msra.mxu0 %v10546
  %10993 = vmatprep.subr.mxu0 0.0
  %10994 = vmatpush2.msra.mxu0 %v10577
  %10995 = vmatprep.subr.mxu0 0.0
  %10996 = vmatpush2.msra.mxu0 %v10576
  %10997 = vmatprep.subr.mxu0 0.0
  %10998 = vmatpush2.msra.mxu0 %v10575
  %10999 = vmatprep.subr.mxu0 0.0
  %11000 = vmatpush2.msra.mxu0 %v10574
  %11001 = vmatprep.subr.mxu0 0.0
  %11002 = vmatpush2.msra.mxu0 %v10573
  %11003 = vmatprep.subr.mxu0 0.0
  %11004 = vmatpush2.msra.mxu0 %v10572
  %11005 = vmatprep.subr.mxu0 0.0
  %11006 = vmatpush2.msra.mxu0 %v10571
  %11007 = vmatprep.subr.mxu0 0.0
  %11008 = vmatpush2.msra.mxu0 %v10570
  %11009 = vmatprep.subr.mxu0 0.0
  %11010 = vmatpush2.msra.mxu0 %v10569
  %11011 = vmatprep.subr.mxu0 0.0
  %11012 = vmatpush2.msra.mxu0 %v10568
  %11013 = vmatprep.subr.mxu0 0.0
  %11014 = vmatpush2.msra.mxu0 %v10567
  %11015 = vmatprep.subr.mxu0 0.0
  %11016 = vmatpush2.msra.mxu0 %v10566
  %11017 = vmatprep.subr.mxu0 0.0
  %11018 = vmatpush2.msra.mxu0 %v10565
  %11019 = vmatprep.subr.mxu0 0.0
  %11020 = vmatpush2.msra.mxu0 %v10564
  %11021 = vmatprep.subr.mxu0 0.0
  %11022 = vmatpush2.msra.mxu0 %v10563
  %11023 = vmatprep.subr.mxu0 0.0
  %11024 = vmatpush2.msra.mxu0 %v10562
  %11025 = vmatprep.mubr.f32.mxu0 %v10411
  %11026 = vmatmul.mubr.f32.gmra.mxu0 %v10410
  %v11027 = vpop.f32.mrf.mxu0
  %v11028 = vadd.f32 %v10958, %v11027
  %v11029 = vpop.f32.mrf.mxu0
  %11030 = vdwg.mxu0
  %11031 = vmatprep.subr.mxu0 0.0
  %11032 = vmatpush1.msra.mxu0 %v10593
  %11033 = vmatprep.subr.mxu0 0.0
  %11034 = vmatpush1.msra.mxu0 %v10592
  %11035 = vmatprep.subr.mxu0 0.0
  %11036 = vmatpush1.msra.mxu0 %v10591
  %11037 = vmatprep.subr.mxu0 0.0
  %11038 = vmatpush1.msra.mxu0 %v10590
  %11039 = vmatprep.subr.mxu0 0.0
  %11040 = vmatpush1.msra.mxu0 %v10589
  %11041 = vmatprep.subr.mxu0 0.0
  %11042 = vmatpush1.msra.mxu0 %v10588
  %11043 = vmatprep.subr.mxu0 0.0
  %11044 = vmatpush1.msra.mxu0 %v10587
  %11045 = vmatprep.subr.mxu0 0.0
  %11046 = vmatpush1.msra.mxu0 %v10586
  %11047 = vmatprep.subr.mxu0 0.0
  %11048 = vmatpush1.msra.mxu0 %v10585
  %11049 = vmatprep.subr.mxu0 0.0
  %11050 = vmatpush1.msra.mxu0 %v10584
  %11051 = vmatprep.subr.mxu0 0.0
  %11052 = vmatpush1.msra.mxu0 %v10583
  %11053 = vmatprep.subr.mxu0 0.0
  %11054 = vmatpush1.msra.mxu0 %v10582
  %11055 = vmatprep.subr.mxu0 0.0
  %11056 = vmatpush1.msra.mxu0 %v10581
  %11057 = vmatprep.subr.mxu0 0.0
  %11058 = vmatpush1.msra.mxu0 %v10580
  %11059 = vmatprep.subr.mxu0 0.0
  %11060 = vmatpush1.msra.mxu0 %v10579
  %11061 = vmatprep.subr.mxu0 0.0
  %11062 = vmatpush1.msra.mxu0 %v10578
  %11063 = vmatprep.subr.mxu0 0.0
  %11064 = vmatpush2.msra.mxu0 %v10609
  %11065 = vmatprep.subr.mxu0 0.0
  %11066 = vmatpush2.msra.mxu0 %v10608
  %11067 = vmatprep.subr.mxu0 0.0
  %11068 = vmatpush2.msra.mxu0 %v10607
  %11069 = vmatprep.subr.mxu0 0.0
  %11070 = vmatpush2.msra.mxu0 %v10606
  %11071 = vmatprep.subr.mxu0 0.0
  %11072 = vmatpush2.msra.mxu0 %v10605
  %11073 = vmatprep.subr.mxu0 0.0
  %11074 = vmatpush2.msra.mxu0 %v10604
  %11075 = vmatprep.subr.mxu0 0.0
  %11076 = vmatpush2.msra.mxu0 %v10603
  %11077 = vmatprep.subr.mxu0 0.0
  %11078 = vmatpush2.msra.mxu0 %v10602
  %11079 = vmatprep.subr.mxu0 0.0
  %11080 = vmatpush2.msra.mxu0 %v10601
  %11081 = vmatprep.subr.mxu0 0.0
  %11082 = vmatpush2.msra.mxu0 %v10600
  %11083 = vmatprep.subr.mxu0 0.0
  %11084 = vmatpush2.msra.mxu0 %v10599
  %11085 = vmatprep.subr.mxu0 0.0
  %11086 = vmatpush2.msra.mxu0 %v10598
  %11087 = vmatprep.subr.mxu0 0.0
  %11088 = vmatpush2.msra.mxu0 %v10597
  %11089 = vmatprep.subr.mxu0 0.0
  %11090 = vmatpush2.msra.mxu0 %v10596
  %11091 = vmatprep.subr.mxu0 0.0
  %11092 = vmatpush2.msra.mxu0 %v10595
  %11093 = vmatprep.subr.mxu0 0.0
  %11094 = vmatpush2.msra.mxu0 %v10594
  %11095 = vmatprep.mubr.f32.mxu0 %v10413
  %11096 = vmatmul.mubr.f32.gmra.mxu0 %v10412
  %v11097 = vpop.f32.mrf.mxu0
  %v11098 = vadd.f32 %v11028, %v11097
  %v11099 = vpop.f32.mrf.mxu0
  %11100 = vdwg.mxu0
  %11101 = vmatprep.subr.mxu0 0.0
  %11102 = vmatpush1.msra.mxu0 %v10625
  %11103 = vmatprep.subr.mxu0 0.0
  %11104 = vmatpush1.msra.mxu0 %v10624
  %11105 = vmatprep.subr.mxu0 0.0
  %11106 = vmatpush1.msra.mxu0 %v10623
  %11107 = vmatprep.subr.mxu0 0.0
  %11108 = vmatpush1.msra.mxu0 %v10622
  %11109 = vmatprep.subr.mxu0 0.0
  %11110 = vmatpush1.msra.mxu0 %v10621
  %11111 = vmatprep.subr.mxu0 0.0
  %11112 = vmatpush1.msra.mxu0 %v10620
  %11113 = vmatprep.subr.mxu0 0.0
  %11114 = vmatpush1.msra.mxu0 %v10619
  %11115 = vmatprep.subr.mxu0 0.0
  %11116 = vmatpush1.msra.mxu0 %v10618
  %11117 = vmatprep.subr.mxu0 0.0
  %11118 = vmatpush1.msra.mxu0 %v10617
  %11119 = vmatprep.subr.mxu0 0.0
  %11120 = vmatpush1.msra.mxu0 %v10616
  %11121 = vmatprep.subr.mxu0 0.0
  %11122 = vmatpush1.msra.mxu0 %v10615
  %11123 = vmatprep.subr.mxu0 0.0
  %11124 = vmatpush1.msra.mxu0 %v10614
  %11125 = vmatprep.subr.mxu0 0.0
  %11126 = vmatpush1.msra.mxu0 %v10613
  %11127 = vmatprep.subr.mxu0 0.0
  %11128 = vmatpush1.msra.mxu0 %v10612
  %11129 = vmatprep.subr.mxu0 0.0
  %11130 = vmatpush1.msra.mxu0 %v10611
  %11131 = vmatprep.subr.mxu0 0.0
  %11132 = vmatpush1.msra.mxu0 %v10610
  %11133 = vmatprep.subr.mxu0 0.0
  %11134 = vmatpush2.msra.mxu0 %v10641
  %11135 = vmatprep.subr.mxu0 0.0
  %11136 = vmatpush2.msra.mxu0 %v10640
  %11137 = vmatprep.subr.mxu0 0.0
  %11138 = vmatpush2.msra.mxu0 %v10639
  %11139 = vmatprep.subr.mxu0 0.0
  %11140 = vmatpush2.msra.mxu0 %v10638
  %11141 = vmatprep.subr.mxu0 0.0
  %11142 = vmatpush2.msra.mxu0 %v10637
  %11143 = vmatprep.subr.mxu0 0.0
  %11144 = vmatpush2.msra.mxu0 %v10636
  %11145 = vmatprep.subr.mxu0 0.0
  %11146 = vmatpush2.msra.mxu0 %v10635
  %11147 = vmatprep.subr.mxu0 0.0
  %11148 = vmatpush2.msra.mxu0 %v10634
  %11149 = vmatprep.subr.mxu0 0.0
  %11150 = vmatpush2.msra.mxu0 %v10633
  %11151 = vmatprep.subr.mxu0 0.0
  %11152 = vmatpush2.msra.mxu0 %v10632
  %11153 = vmatprep.subr.mxu0 0.0
  %11154 = vmatpush2.msra.mxu0 %v10631
  %11155 = vmatprep.subr.mxu0 0.0
  %11156 = vmatpush2.msra.mxu0 %v10630
  %11157 = vmatprep.subr.mxu0 0.0
  %11158 = vmatpush2.msra.mxu0 %v10629
  %11159 = vmatprep.subr.mxu0 0.0
  %11160 = vmatpush2.msra.mxu0 %v10628
  %11161 = vmatprep.subr.mxu0 0.0
  %11162 = vmatpush2.msra.mxu0 %v10627
  %11163 = vmatprep.subr.mxu0 0.0
  %11164 = vmatpush2.msra.mxu0 %v10626
  %11165 = vmatprep.mubr.f32.mxu0 %v10415
  %11166 = vmatmul.mubr.f32.gmra.mxu0 %v10414
  %v11167 = vpop.f32.mrf.mxu0
  %v11168 = vadd.f32 %v11098, %v11167
  %v11169 = vpop.f32.mrf.mxu0
  %11170 = vdwg.mxu0
  %11171 = vmatprep.subr.mxu0 0.0
  %11172 = vmatpush1.msra.mxu0 %v10657
  %11173 = vmatprep.subr.mxu0 0.0
  %11174 = vmatpush1.msra.mxu0 %v10656
  %11175 = vmatprep.subr.mxu0 0.0
  %11176 = vmatpush1.msra.mxu0 %v10655
  %11177 = vmatprep.subr.mxu0 0.0
  %11178 = vmatpush1.msra.mxu0 %v10654
  %11179 = vmatprep.subr.mxu0 0.0
  %11180 = vmatpush1.msra.mxu0 %v10653
  %11181 = vmatprep.subr.mxu0 0.0
  %11182 = vmatpush1.msra.mxu0 %v10652
  %11183 = vmatprep.subr.mxu0 0.0
  %11184 = vmatpush1.msra.mxu0 %v10651
  %11185 = vmatprep.subr.mxu0 0.0
  %11186 = vmatpush1.msra.mxu0 %v10650
  %11187 = vmatprep.subr.mxu0 0.0
  %11188 = vmatpush1.msra.mxu0 %v10649
  %11189 = vmatprep.subr.mxu0 0.0
  %11190 = vmatpush1.msra.mxu0 %v10648
  %11191 = vmatprep.subr.mxu0 0.0
  %11192 = vmatpush1.msra.mxu0 %v10647
  %11193 = vmatprep.subr.mxu0 0.0
  %11194 = vmatpush1.msra.mxu0 %v10646
  %11195 = vmatprep.subr.mxu0 0.0
  %11196 = vmatpush1.msra.mxu0 %v10645
  %11197 = vmatprep.subr.mxu0 0.0
  %11198 = vmatpush1.msra.mxu0 %v10644
  %11199 = vmatprep.subr.mxu0 0.0
  %11200 = vmatpush1.msra.mxu0 %v10643
  %11201 = vmatprep.subr.mxu0 0.0
  %11202 = vmatpush1.msra.mxu0 %v10642
  %11203 = vmatprep.subr.mxu0 0.0
  %11204 = vmatpush2.msra.mxu0 %v10673
  %11205 = vmatprep.subr.mxu0 0.0
  %11206 = vmatpush2.msra.mxu0 %v10672
  %11207 = vmatprep.subr.mxu0 0.0
  %11208 = vmatpush2.msra.mxu0 %v10671
  %11209 = vmatprep.subr.mxu0 0.0
  %11210 = vmatpush2.msra.mxu0 %v10670
  %11211 = vmatprep.subr.mxu0 0.0
  %11212 = vmatpush2.msra.mxu0 %v10669
  %11213 = vmatprep.subr.mxu0 0.0
  %11214 = vmatpush2.msra.mxu0 %v10668
  %11215 = vmatprep.subr.mxu0 0.0
  %11216 = vmatpush2.msra.mxu0 %v10667
  %11217 = vmatprep.subr.mxu0 0.0
  %11218 = vmatpush2.msra.mxu0 %v10666
  %11219 = vmatprep.subr.mxu0 0.0
  %11220 = vmatpush2.msra.mxu0 %v10665
  %11221 = vmatprep.subr.mxu0 0.0
  %11222 = vmatpush2.msra.mxu0 %v10664
  %11223 = vmatprep.subr.mxu0 0.0
  %11224 = vmatpush2.msra.mxu0 %v10663
  %11225 = vmatprep.subr.mxu0 0.0
  %11226 = vmatpush2.msra.mxu0 %v10662
  %11227 = vmatprep.subr.mxu0 0.0
  %11228 = vmatpush2.msra.mxu0 %v10661
  %11229 = vmatprep.subr.mxu0 0.0
  %11230 = vmatpush2.msra.mxu0 %v10660
  %11231 = vmatprep.subr.mxu0 0.0
  %11232 = vmatpush2.msra.mxu0 %v10659
  %11233 = vmatprep.subr.mxu0 0.0
  %11234 = vmatpush2.msra.mxu0 %v10658
  %11235 = vmatprep.mubr.f32.mxu0 %v10417
  %11236 = vmatmul.mubr.f32.gmra.mxu0 %v10416
  %v11237 = vpop.f32.mrf.mxu0
  %v11238 = vadd.f32 %v11168, %v11237
  %v11239 = vpop.f32.mrf.mxu0
  %11240 = vdwg.mxu0
  %v11241 = vmax.f32 %v11238, 0.0
  %v11242 = vld [vmem:[%s7] sm:$0xff]
  %v11243 = vld [vmem:[%s7 + $0x8] sm:$0xff]
  %v11244 = vld [vmem:[%s7 + $0x10] sm:$0xff]
  %v11245 = vld [vmem:[%s7 + $0x18] sm:$0xff]
  %v11246 = vld [vmem:[%s7 + $0x20] sm:$0xff]
  %v11247 = vld [vmem:[%s7 + $0x28] sm:$0xff]
  %v11248 = vld [vmem:[%s7 + $0x30] sm:$0xff]
  %v11249 = vld [vmem:[%s7 + $0x38] sm:$0xff]
  %v11250 = vld [vmem:[%s7 + $0x40] sm:$0xff]
  %v11251 = vld [vmem:[%s7 + $0x48] sm:$0xff]
  %v11252 = vld [vmem:[%s7 + $0x50] sm:$0xff]
  %v11253 = vld [vmem:[%s7 + $0x58] sm:$0xff]
  %v11254 = vld [vmem:[%s7 + $0x60] sm:$0xff]
  %v11255 = vld [vmem:[%s7 + $0x68] sm:$0xff]
  %v11256 = vld [vmem:[%s7 + $0x70] sm:$0xff]
  %v11257 = vld [vmem:[%s7 + $0x78] sm:$0xff]
  %v11258 = vld [vmem:[%s8] sm:$0x1]
  %v11260 = vlaneseq
  %v11261 = vshrl.u32 %v11260, 7
  %v11262 = vsub.s32 0, %v11261
  %v11263 = vrot.slane %v11258, %v11262
  %11265 = vmatprep.subr.mxu0 0.0
  %11266 = vmatpush1.msra.mxu0 %v11257
  %11267 = vmatprep.subr.mxu0 0.0
  %11268 = vmatpush1.msra.mxu0 %v11256
  %11269 = vmatprep.subr.mxu0 0.0
  %11270 = vmatpush1.msra.mxu0 %v11255
  %11271 = vmatprep.subr.mxu0 0.0
  %11272 = vmatpush1.msra.mxu0 %v11254
  %11273 = vmatprep.subr.mxu0 0.0
  %11274 = vmatpush1.msra.mxu0 %v11253
  %11275 = vmatprep.subr.mxu0 0.0
  %11276 = vmatpush1.msra.mxu0 %v11252
  %11277 = vmatprep.subr.mxu0 0.0
  %11278 = vmatpush1.msra.mxu0 %v11251
  %11279 = vmatprep.subr.mxu0 0.0
  %11280 = vmatpush1.msra.mxu0 %v11250
  %11281 = vmatprep.subr.mxu0 0.0
  %11282 = vmatpush1.msra.mxu0 %v11249
  %11283 = vmatprep.subr.mxu0 0.0
  %11284 = vmatpush1.msra.mxu0 %v11248
  %11285 = vmatprep.subr.mxu0 0.0
  %11286 = vmatpush1.msra.mxu0 %v11247
  %11287 = vmatprep.subr.mxu0 0.0
  %11288 = vmatpush1.msra.mxu0 %v11246
  %11289 = vmatprep.subr.mxu0 0.0
  %11290 = vmatpush1.msra.mxu0 %v11245
  %11291 = vmatprep.subr.mxu0 0.0
  %11292 = vmatpush1.msra.mxu0 %v11244
  %11293 = vmatprep.subr.mxu0 0.0
  %11294 = vmatpush1.msra.mxu0 %v11243
  %11295 = vmatprep.subr.mxu0 0.0
  %11296 = vmatpush1.msra.mxu0 %v11242
  %11297 = vmatprep.subr.mxu0 0.0
  %11298 = vmatpush2.msra.mxu0 0.0
  %11299 = vmatprep.subr.mxu0 0.0
  %11300 = vmatpush2.msra.mxu0 0.0
  %11301 = vmatprep.subr.mxu0 0.0
  %11302 = vmatpush2.msra.mxu0 0.0
  %11303 = vmatprep.subr.mxu0 0.0
  %11304 = vmatpush2.msra.mxu0 0.0
  %11305 = vmatprep.subr.mxu0 0.0
  %11306 = vmatpush2.msra.mxu0 0.0
  %11307 = vmatprep.subr.mxu0 0.0
  %11308 = vmatpush2.msra.mxu0 0.0
  %11309 = vmatprep.subr.mxu0 0.0
  %11310 = vmatpush2.msra.mxu0 0.0
  %11311 = vmatprep.subr.mxu0 0.0
  %11312 = vmatpush2.msra.mxu0 0.0
  %11313 = vmatprep.subr.mxu0 0.0
  %11314 = vmatpush2.msra.mxu0 0.0
  %11315 = vmatprep.subr.mxu0 0.0
  %11316 = vmatpush2.msra.mxu0 0.0
  %11317 = vmatprep.subr.mxu0 0.0
  %11318 = vmatpush2.msra.mxu0 0.0
  %11319 = vmatprep.subr.mxu0 0.0
  %11320 = vmatpush2.msra.mxu0 0.0
  %11321 = vmatprep.subr.mxu0 0.0
  %11322 = vmatpush2.msra.mxu0 0.0
  %11323 = vmatprep.subr.mxu0 0.0
  %11324 = vmatpush2.msra.mxu0 0.0
  %11325 = vmatprep.subr.mxu0 0.0
  %11326 = vmatpush2.msra.mxu0 0.0
  %11327 = vmatprep.subr.mxu0 0.0
  %11328 = vmatpush2.msra.mxu0 0.0
  %11329 = vmatprep.mubr.f32.mxu0 0.0
  %11330 = vmatmul.mubr.f32.gmra.mxu0 %v11241
  %v11331 = vpop.f32.mrf.mxu0
  %v11332 = vadd.f32 %v11263, %v11331
  %v11333 = vpop.f32.mrf.mxu0
  %11334 = vdwg.mxu0
  %v11335 = vmax.f32 %v11332, 0.0
  %v11336 = vld [vmem:[%s9] sm:$0xff]
  %v11337 = vld [vmem:[%s9 + $0x8] sm:$0xff]
  %v11338 = vld [vmem:[%s9 + $0x10] sm:$0xff]
  %v11339 = vld [vmem:[%s9 + $0x18] sm:$0xff]
  %v11340 = vld [vmem:[%s9 + $0x20] sm:$0xff]
  %v11341 = vld [vmem:[%s9 + $0x28] sm:$0xff]
  %v11342 = vld [vmem:[%s9 + $0x30] sm:$0xff]
  %v11343 = vld [vmem:[%s9 + $0x38] sm:$0xff]
  %v11344 = vld [vmem:[%s9 + $0x40] sm:$0xff]
  %v11345 = vld [vmem:[%s9 + $0x48] sm:$0xff]
  %v11346 = vld [vmem:[%s9 + $0x50] sm:$0xff]
  %v11347 = vld [vmem:[%s9 + $0x58] sm:$0xff]
  %v11348 = vld [vmem:[%s9 + $0x60] sm:$0xff]
  %v11349 = vld [vmem:[%s9 + $0x68] sm:$0xff]
  %v11350 = vld [vmem:[%s9 + $0x70] sm:$0xff]
  %v11351 = vld [vmem:[%s9 + $0x78] sm:$0xff]
  %v11352 = vld [vmem:[%s10] sm:$0x1]
  %v11354 = vlaneseq
  %v11355 = vshrl.u32 %v11354, 7
  %v11356 = vsub.s32 0, %v11355
  %v11357 = vrot.slane %v11352, %v11356
  %11359 = vmatprep.subr.mxu0 0.0
  %11360 = vmatpush1.msra.mxu0 %v11351
  %11361 = vmatprep.subr.mxu0 0.0
  %11362 = vmatpush1.msra.mxu0 %v11350
  %11363 = vmatprep.subr.mxu0 0.0
  %11364 = vmatpush1.msra.mxu0 %v11349
  %11365 = vmatprep.subr.mxu0 0.0
  %11366 = vmatpush1.msra.mxu0 %v11348
  %11367 = vmatprep.subr.mxu0 0.0
  %11368 = vmatpush1.msra.mxu0 %v11347
  %11369 = vmatprep.subr.mxu0 0.0
  %11370 = vmatpush1.msra.mxu0 %v11346
  %11371 = vmatprep.subr.mxu0 0.0
  %11372 = vmatpush1.msra.mxu0 %v11345
  %11373 = vmatprep.subr.mxu0 0.0
  %11374 = vmatpush1.msra.mxu0 %v11344
  %11375 = vmatprep.subr.mxu0 0.0
  %11376 = vmatpush1.msra.mxu0 %v11343
  %11377 = vmatprep.subr.mxu0 0.0
  %11378 = vmatpush1.msra.mxu0 %v11342
  %11379 = vmatprep.subr.mxu0 0.0
  %11380 = vmatpush1.msra.mxu0 %v11341
  %11381 = vmatprep.subr.mxu0 0.0
  %11382 = vmatpush1.msra.mxu0 %v11340
  %11383 = vmatprep.subr.mxu0 0.0
  %11384 = vmatpush1.msra.mxu0 %v11339
  %11385 = vmatprep.subr.mxu0 0.0
  %11386 = vmatpush1.msra.mxu0 %v11338
  %11387 = vmatprep.subr.mxu0 0.0
  %11388 = vmatpush1.msra.mxu0 %v11337
  %11389 = vmatprep.subr.mxu0 0.0
  %11390 = vmatpush1.msra.mxu0 %v11336
  %11391 = vmatprep.subr.mxu0 0.0
  %11392 = vmatpush2.msra.mxu0 0.0
  %11393 = vmatprep.subr.mxu0 0.0
  %11394 = vmatpush2.msra.mxu0 0.0
  %11395 = vmatprep.subr.mxu0 0.0
  %11396 = vmatpush2.msra.mxu0 0.0
  %11397 = vmatprep.subr.mxu0 0.0
  %11398 = vmatpush2.msra.mxu0 0.0
  %11399 = vmatprep.subr.mxu0 0.0
  %11400 = vmatpush2.msra.mxu0 0.0
  %11401 = vmatprep.subr.mxu0 0.0
  %11402 = vmatpush2.msra.mxu0 0.0
  %11403 = vmatprep.subr.mxu0 0.0
  %11404 = vmatpush2.msra.mxu0 0.0
  %11405 = vmatprep.subr.mxu0 0.0
  %11406 = vmatpush2.msra.mxu0 0.0
  %11407 = vmatprep.subr.mxu0 0.0
  %11408 = vmatpush2.msra.mxu0 0.0
  %11409 = vmatprep.subr.mxu0 0.0
  %11410 = vmatpush2.msra.mxu0 0.0
  %11411 = vmatprep.subr.mxu0 0.0
  %11412 = vmatpush2.msra.mxu0 0.0
  %11413 = vmatprep.subr.mxu0 0.0
  %11414 = vmatpush2.msra.mxu0 0.0
  %11415 = vmatprep.subr.mxu0 0.0
  %11416 = vmatpush2.msra.mxu0 0.0
  %11417 = vmatprep.subr.mxu0 0.0
  %11418 = vmatpush2.msra.mxu0 0.0
  %11419 = vmatprep.subr.mxu0 0.0
  %11420 = vmatpush2.msra.mxu0 0.0
  %11421 = vmatprep.subr.mxu0 0.0
  %11422 = vmatpush2.msra.mxu0 0.0
  %11423 = vmatprep.mubr.f32.mxu0 0.0
  %11424 = vmatmul.mubr.f32.gmra.mxu0 %v11335
  %v11425 = vpop.f32.mrf.mxu0
  %v11426 = vadd.f32 %v11357, %v11425
  %v11427 = vpop.f32.mrf.mxu0
  %11428 = vdwg.mxu0
  %v11429 = vsub.f32 0.0, %v11426
  %v11430 = vmul.f32 %v11429, 1.442695
  %v11431 = vpow.pop %v11430
  %v11432 = vadd.f32 %v11431, 1.0
  %v11433 = vrcp.pop %v11432
  %11434 = vst [vmem:[%s11] sm:$0xff] %v11433
  // Predicated region
  $region46: #{gate_cnn_fashion_forward.1} parent=0 // pred_check
    _
  $region47: #{gate_cnn_fashion_forward.1} parent=0 // pred_check_branch
    %11436 = sbr.rel (0) target = $region49
  $region48: #{gate_cnn_fashion_forward.1} parent=0 // pred_region
    _
  $region49: #{gate_cnn_fashion_forward.1} parent=0 // pred_fallthru
    _
  // Predicated region
  $region50: #{gate_cnn_fashion_forward.1} parent=0 // pred_check
    _
  $region51: #{gate_cnn_fashion_forward.1} parent=0 // pred_check_branch
    %11438 = sbr.rel (0) target = $region53
  $region52: #{gate_cnn_fashion_forward.1} parent=0 // pred_region
    _
  $region53: #{gate_cnn_fashion_forward.1} parent=0 // pred_fallthru
    _

</llo_original>
